<compile_context>
chip_gen: v7x
topology: tpu7x:2x2x1
jax: 0.10.0
libtpu: 0.0.40
codegen_flags: <defaults>
</compile_context>

<pallas_src>
import numpy as np
import jax
import jax.numpy as jnp
from jax.experimental import pallas as pl
from jax.experimental.pallas import tpu as pltpu


def _round_up(x, m):
    return ((x + m - 1) // m) * m


# ----------------------------------------------------------------------------
# Wrapper-side (trace-time) weight preparation
# ----------------------------------------------------------------------------

def _conv_toeplitz(w_hwio, in_w, out_w, lane_block):
    """Width-Toeplitz ("lowered") conv weight.

    Input rows reach the kernel as (in_w * Cin) lanes (channel minor) zero-padded to
    `lane_block`; the conv is computed as sum over kh of LHS_kh @ B_kh where
      B[kh*lane_block + cc*Cin + ci, c*Cout + co] = w[kh, cc - c, ci, co], 0 <= cc-c < KW.
    Returns (KH * lane_block, out_w * Cout).
    """
    KH, KW, Cin, Cout = w_hwio.shape
    cc = jnp.arange(in_w)[:, None]            # input column
    c = jnp.arange(out_w)[None, :]            # output column
    k = cc - c
    valid = ((k >= 0) & (k < KW)).astype(w_hwio.dtype)
    kc = jnp.clip(k, 0, KW - 1)
    wt = w_hwio[:, kc, :, :] * valid[None, :, :, None, None]     # (KH, in_w, out_w, Cin, Cout)
    wt = jnp.transpose(wt, (0, 1, 3, 2, 4))                      # (KH, in_w, Cin, out_w, Cout)
    wt = wt.reshape(KH, in_w * Cin, out_w * Cout)
    wt = jnp.pad(wt, ((0, 0), (0, lane_block - in_w * Cin), (0, 0)))
    return wt.reshape(KH * lane_block, out_w * Cout)


def _pool_col_select(in_cols, cout, out_lanes):
    """0/1 matrices (in_cols*cout, out_lanes) selecting even / odd column groups."""
    pw = in_cols // 2
    eye = jnp.eye(cout, dtype=jnp.float32)

    def make(offset):
        pick = (jnp.arange(in_cols)[:, None] ==
                (2 * jnp.arange(pw)[None, :] + offset)).astype(jnp.float32)   # (in_cols, pw)
        sel = jnp.kron(pick, eye)                                             # (in_cols*cout, pw*cout)
        return jnp.pad(sel, ((0, 0), (0, out_lanes - pw * cout)))

    return make(0), make(1)


def _fc1_weight(wf1):
    """fc1 weight with the PyTorch NCHW flatten folded in.

    Rows are permuted from torch CHW-flatten order to the kernel's (row, col, chan)
    layout, each 5x16 row block is lane-padded 80 -> 128 (matching the pooled-map lane
    padding) and the output is lane-padded 120 -> 128.  Result: (640, 128).
    """
    r = jnp.arange(5)
    c = jnp.arange(5)
    co = jnp.arange(16)
    idx = (co[None, None, :] * 25 + r[:, None, None] * 5 + c[None, :, None]).reshape(-1)
    w = wf1[idx, :].reshape(5, 80, 120)
    w = jnp.pad(w, ((0, 0), (0, 48), (0, 8)))
    return w.reshape(640, 128)


# ----------------------------------------------------------------------------
# Fused kernel: conv1 -> pool -> conv2 -> pool -> fc1 -> fc2   (B images / grid step)
#
# Activation row layout inside a batch tile: row index = image_row * B + image, so a
# conv kernel-row slab is rows [kh*B, (rows_out+kh)*B), pool row pairs are adjacent
# B-row groups, and fc1's flattened rows are groups [r*B, (r+1)*B).
# ----------------------------------------------------------------------------

def _lenet_kernel(x_ref, w1_ref, b1_ref, se1_ref, so1_ref,
                  w2_ref, b2_ref, se2_ref, so2_ref,
                  wf1_ref, bf1_ref, wf2_ref, bf2_ref,
                  o_ref, s_c1, s_r1, s_p1, s_c2, s_r2, s_p2):
    f32 = jnp.float32
    bf16 = jnp.bfloat16
    B = o_ref.shape[0]

    # ---- conv1 (5x5, 3->6) on 32x32: K-block accumulation over the 5 kernel rows ----
    acc = None
    for kh in range(5):
        d = jnp.dot(x_ref[kh * B:(28 + kh) * B, :],            # (28B, 128) bf16
                    w1_ref[kh * 128:(kh + 1) * 128, :],        # (128, 168) bf16
                    preferred_element_type=f32)
        acc = d if acc is None else acc + d
    s_c1[...] = jnp.maximum(acc + b1_ref[...], 0.0).astype(bf16)          # (28B, 168)

    # ---- 2x2 max pool #1: adjacent B-row groups, then even/odd column-select matmuls ----
    for r in range(14):
        s_r1[r * B:(r + 1) * B, :] = jnp.maximum(
            s_c1[(2 * r) * B:(2 * r + 1) * B, :],
            s_c1[(2 * r + 1) * B:(2 * r + 2) * B, :])
    r1 = s_r1[...]                                                         # (14B, 168)
    p1 = jnp.maximum(jnp.dot(r1, se1_ref[...], preferred_element_type=f32),
                     jnp.dot(r1, so1_ref[...], preferred_element_type=f32))
    s_p1[...] = p1.astype(bf16)                                            # (14B, 128)

    # ---- conv2 (5x5, 6->16) on the pooled 14x14 map ----
    acc = None
    for kh in range(5):
        d = jnp.dot(s_p1[kh * B:(10 + kh) * B, :],             # (10B, 128) bf16
                    w2_ref[kh * 128:(kh + 1) * 128, :],        # (128, 160) bf16
                    preferred_element_type=f32)
        acc = d if acc is None else acc + d
    s_c2[...] = jnp.maximum(acc + b2_ref[...], 0.0).astype(bf16)          # (10B, 160)

    # ---- 2x2 max pool #2 ----
    for r in range(5):
        s_r2[r * B:(r + 1) * B, :] = jnp.maximum(
            s_c2[(2 * r) * B:(2 * r + 1) * B, :],
            s_c2[(2 * r + 1) * B:(2 * r + 2) * B, :])
    r2 = s_r2[...]                                                         # (5B, 160)
    p2 = jnp.maximum(jnp.dot(r2, se2_ref[...], preferred_element_type=f32),
                     jnp.dot(r2, so2_ref[...], preferred_element_type=f32))
    s_p2[...] = p2.astype(bf16)                                            # (5B, 128)

    # ---- fc1 (flatten folded into the permuted weight, K-block accumulation) + fc2 ----
    acc = None
    for r in range(5):
        d = jnp.dot(s_p2[r * B:(r + 1) * B, :],                # (B, 128) bf16
                    wf1_ref[r * 128:(r + 1) * 128, :],         # (128, 128) bf16
                    preferred_element_type=f32)
        acc = d if acc is None else acc + d
    h1 = jnp.maximum(acc + bf1_ref[...], 0.0).astype(bf16)                 # (B, 128)

    h2 = jnp.maximum(jnp.dot(h1, wf2_ref[...], preferred_element_type=f32)
                     + bf2_ref[...], 0.0)                                  # (B, 128)
    o_ref[...] = h2


def conv_module_forward(x_nchw, params, batch_tile=64):
    N = x_nchw.shape[0]
    batch_tile = _round_up(batch_tile, 16)
    # Batch tile; multiple of 16 so all in-kernel slice starts are bf16-tile aligned.
    B = min(batch_tile, _round_up(N, 16))
    Np = _round_up(N, B)
    nb = Np // B

    # NCHW -> NHWC -> (Np, 32, 96) rows with (col, chan) on lanes, pad lanes to 128,
    # then interleave images inside each batch tile: row index = image_row * B + image.
    x = jnp.transpose(x_nchw, (0, 2, 3, 1)).astype(jnp.float32)
    x = x.reshape(N, 32, 96)
    x = jnp.pad(x, ((0, Np - N), (0, 0), (0, 32)))                         # (Np, 32, 128)
    x = x.reshape(nb, B, 32, 128).transpose(0, 2, 1, 3).reshape(nb * 32 * B, 128)
    x = x.astype(jnp.bfloat16)

    bf16 = jnp.bfloat16
    w1t = _conv_toeplitz(params["w1"], in_w=32, out_w=28, lane_block=128).astype(bf16)   # (640,168)
    w2t = _conv_toeplitz(params["w2"], in_w=14, out_w=10, lane_block=128).astype(bf16)   # (640,160)
    se1, so1 = _pool_col_select(28, 6, 128)
    se2, so2 = _pool_col_select(10, 16, 128)
    se1, so1, se2, so2 = se1.astype(bf16), so1.astype(bf16), se2.astype(bf16), so2.astype(bf16)
    b1t = jnp.tile(params["b1"], 28)[None, :]                              # (1, 168) f32
    b2t = jnp.tile(params["b2"], 10)[None, :]                              # (1, 160) f32
    wf1p = _fc1_weight(params["wf1"]).astype(bf16)                         # (640, 128)
    bf1 = jnp.pad(params["bf1"], (0, 8))[None, :]                          # (1, 128) f32
    wf2p = jnp.pad(params["wf2"], ((0, 8), (0, 44))).astype(bf16)          # (128, 128)
    bf2 = jnp.pad(params["bf2"], (0, 44))[None, :]                         # (1, 128) f32

    out = pl.pallas_call(
        _lenet_kernel,
        out_shape=jax.ShapeDtypeStruct((Np, 128), jnp.float32),            # lane-dense output
        grid=(nb,),
        in_specs=[
            pl.BlockSpec((32 * B, 128), lambda i: (i, 0)),   # batched image rows
            pl.BlockSpec((640, 168), lambda i: (0, 0)),      # conv1 Toeplitz weight
            pl.BlockSpec((1, 168), lambda i: (0, 0)),        # conv1 bias (tiled)
            pl.BlockSpec((168, 128), lambda i: (0, 0)),      # pool1 even-col select
            pl.BlockSpec((168, 128), lambda i: (0, 0)),      # pool1 odd-col select
            pl.BlockSpec((640, 160), lambda i: (0, 0)),      # conv2 Toeplitz weight
            pl.BlockSpec((1, 160), lambda i: (0, 0)),        # conv2 bias (tiled)
            pl.BlockSpec((160, 128), lambda i: (0, 0)),      # pool2 even-col select
            pl.BlockSpec((160, 128), lambda i: (0, 0)),      # pool2 odd-col select
            pl.BlockSpec((640, 128), lambda i: (0, 0)),      # fc1 weight (permuted+padded)
            pl.BlockSpec((1, 128), lambda i: (0, 0)),        # fc1 bias (padded)
            pl.BlockSpec((128, 128), lambda i: (0, 0)),      # fc2 weight (padded)
            pl.BlockSpec((1, 128), lambda i: (0, 0)),        # fc2 bias (padded)
        ],
        out_specs=pl.BlockSpec((B, 128), lambda i: (i, 0)),
        scratch_shapes=[
            pltpu.VMEM((28 * B, 168), jnp.bfloat16),   # conv1 relu output
            pltpu.VMEM((14 * B, 168), jnp.bfloat16),   # pool1 row-maxed
            pltpu.VMEM((14 * B, 128), jnp.bfloat16),   # pooled1
            pltpu.VMEM((10 * B, 160), jnp.bfloat16),   # conv2 relu output
            pltpu.VMEM((5 * B, 160), jnp.bfloat16),    # pool2 row-maxed
            pltpu.VMEM((5 * B, 128), jnp.bfloat16),    # pooled2
        ],
        compiler_params=pltpu.CompilerParams(dimension_semantics=("parallel",)),
    )(x, w1t, b1t, se1, so1, w2t, b2t, se2, so2, wf1p, bf1, wf2p, bf2)

    return out[:N, :84]


# ----------------------------------------------------------------------------
# Pure-JAX/XLA reference and test harness
# ----------------------------------------------------------------------------

def reference_forward(x_nchw, params):
    x = jnp.transpose(x_nchw, (0, 2, 3, 1)).astype(jnp.float32)

    def block(x, w, b):
        y = jax.lax.conv_general_dilated(
            x, w, window_strides=(1, 1), padding="VALID",
            dimension_numbers=("NHWC", "HWIO", "NHWC"))
        y = jnp.maximum(y + b, 0.0)
        return jax.lax.reduce_window(
            y, -jnp.inf, jax.lax.max, (1, 2, 2, 1), (1, 2, 2, 1), "VALID")

    x = block(x, params["w1"], params["b1"])
    x = block(x, params["w2"], params["b2"])
    x = jnp.transpose(x, (0, 3, 1, 2)).reshape(x.shape[0], -1)   # PyTorch NCHW flatten
    x = jnp.maximum(x @ params["wf1"] + params["bf1"], 0.0)
    x = jnp.maximum(x @ params["wf2"] + params["bf2"], 0.0)
    return x


def init_params(key):
    ks = jax.random.split(key, 8)

    def u(k, shape, fan_in):
        bound = 1.0 / np.sqrt(fan_in)
        return jax.random.uniform(k, shape, jnp.float32, -bound, bound)

    return dict(
        w1=u(ks[0], (5, 5, 3, 6), 3 * 5 * 5),    # conv1, HWIO
        b1=u(ks[1], (6,), 3 * 5 * 5),
        w2=u(ks[2], (5, 5, 6, 16), 6 * 5 * 5),   # conv2, HWIO
        b2=u(ks[3], (16,), 6 * 5 * 5),
        wf1=u(ks[4], (400, 120), 400),           # fc1, stored (in, out), torch CHW row order
        bf1=u(ks[5], (120,), 400),
        wf2=u(ks[6], (120, 84), 120),            # fc2, stored (in, out)
        bf2=u(ks[7], (84,), 120),
    )


if __name__ == "__main__":
    key = jax.random.PRNGKey(0)
    pkey, xkey = jax.random.split(key)
    params = init_params(pkey)
    # PyTorch conv input is NCHW; 32x32 is implied by fc1 = Linear(16*5*5, 120).
    x = jax.random.normal(xkey, (2, 3, 32, 32), jnp.float32)

    fwd = jax.jit(conv_module_forward)
    out = jax.block_until_ready(fwd(x, params))
    assert out.shape == (2, 84), out.shape

    ref = jax.block_until_ready(reference_forward(x, params))
    err = float(np.max(np.abs(np.asarray(out) - np.asarray(ref))))
    # bf16 MXU inputs with f32 accumulation: tolerance relaxed vs. the all-f32 version.
    assert err < 2e-2, "max abs err = %g" % err

    print("KERNEL_OK")
</pallas_src>

<mosaic_0001>
module attributes {stable_mosaic.version = 11 : i64} {
  func.func @_lenet_kernel(%arg0: i32, %arg1: memref<512x128xbf16, #tpu.memory_space<vmem>>, %arg2: memref<640x168xbf16, #tpu.memory_space<vmem>>, %arg3: memref<1x168xf32, #tpu.memory_space<vmem>>, %arg4: memref<168x128xbf16, #tpu.memory_space<vmem>>, %arg5: memref<168x128xbf16, #tpu.memory_space<vmem>>, %arg6: memref<640x160xbf16, #tpu.memory_space<vmem>>, %arg7: memref<1x160xf32, #tpu.memory_space<vmem>>, %arg8: memref<160x128xbf16, #tpu.memory_space<vmem>>, %arg9: memref<160x128xbf16, #tpu.memory_space<vmem>>, %arg10: memref<640x128xbf16, #tpu.memory_space<vmem>>, %arg11: memref<1x128xf32, #tpu.memory_space<vmem>>, %arg12: memref<128x128xbf16, #tpu.memory_space<vmem>>, %arg13: memref<1x128xf32, #tpu.memory_space<vmem>>, %arg14: memref<16x128xf32, #tpu.memory_space<vmem>>, %arg15: memref<448x168xbf16, #tpu.memory_space<vmem>>, %arg16: memref<224x168xbf16, #tpu.memory_space<vmem>>, %arg17: memref<224x128xbf16, #tpu.memory_space<vmem>>, %arg18: memref<160x160xbf16, #tpu.memory_space<vmem>>, %arg19: memref<80x160xbf16, #tpu.memory_space<vmem>>, %arg20: memref<80x128xbf16, #tpu.memory_space<vmem>>) attributes {dimension_semantics = [#tpu.dimension_semantics<parallel>], iteration_bounds = array<i64: 1>, scalar_prefetch = 0 : i64, scratch_operands = 6 : i64, tpu.core_type = #tpu.core_type<tc>, window_params = [{transform_indices = @transform_0, window_bounds = array<i64: 512, 128>}, {pipeline_mode = #tpu.pipeline_mode<synchronous>, transform_indices = @transform_1, window_bounds = array<i64: 640, 168>}, {pipeline_mode = #tpu.pipeline_mode<synchronous>, transform_indices = @transform_2, window_bounds = array<i64: 1, 168>}, {pipeline_mode = #tpu.pipeline_mode<synchronous>, transform_indices = @transform_3, window_bounds = array<i64: 168, 128>}, {pipeline_mode = #tpu.pipeline_mode<synchronous>, transform_indices = @transform_4, window_bounds = array<i64: 168, 128>}, {pipeline_mode = #tpu.pipeline_mode<synchronous>, transform_indices = @transform_5, window_bounds = array<i64: 640, 160>}, {pipeline_mode = #tpu.pipeline_mode<synchronous>, transform_indices = @transform_6, window_bounds = array<i64: 1, 160>}, {pipeline_mode = #tpu.pipeline_mode<synchronous>, transform_indices = @transform_7, window_bounds = array<i64: 160, 128>}, {pipeline_mode = #tpu.pipeline_mode<synchronous>, transform_indices = @transform_8, window_bounds = array<i64: 160, 128>}, {pipeline_mode = #tpu.pipeline_mode<synchronous>, transform_indices = @transform_9, window_bounds = array<i64: 640, 128>}, {pipeline_mode = #tpu.pipeline_mode<synchronous>, transform_indices = @transform_10, window_bounds = array<i64: 1, 128>}, {pipeline_mode = #tpu.pipeline_mode<synchronous>, transform_indices = @transform_11, window_bounds = array<i64: 128, 128>}, {pipeline_mode = #tpu.pipeline_mode<synchronous>, transform_indices = @transform_12, window_bounds = array<i64: 1, 128>}, {transform_indices = @transform_13, window_bounds = array<i64: 16, 128>}]} {
    %c0 = arith.constant 0 : index
    %c0_0 = arith.constant 0 : index
    %0 = vector.load %arg1[%c0, %c0_0] : memref<512x128xbf16, #tpu.memory_space<vmem>>, vector<448x128xbf16>
    %c0_1 = arith.constant 0 : index
    %c0_2 = arith.constant 0 : index
    %1 = vector.load %arg2[%c0_1, %c0_2] : memref<640x168xbf16, #tpu.memory_space<vmem>>, vector<128x168xbf16>
    %cst = arith.constant dense<0.000000e+00> : vector<448x168xf32>
    %2 = tpu.matmul %0, %1, %cst {dimension_numbers = #tpu.dot_dimension_numbers<[1], [0], [0], [1], [0, 0, 1, 1], [], []>} : vector<448x128xbf16>, vector<128x168xbf16>, vector<448x168xf32> -> vector<448x168xf32>
    %c16 = arith.constant 16 : index
    %c0_3 = arith.constant 0 : index
    %3 = vector.load %arg1[%c16, %c0_3] : memref<512x128xbf16, #tpu.memory_space<vmem>>, vector<448x128xbf16>
    %c128 = arith.constant 128 : index
    %c0_4 = arith.constant 0 : index
    %4 = vector.load %arg2[%c128, %c0_4] : memref<640x168xbf16, #tpu.memory_space<vmem>>, vector<128x168xbf16>
    %cst_5 = arith.constant dense<0.000000e+00> : vector<448x168xf32>
    %5 = tpu.matmul %3, %4, %cst_5 {dimension_numbers = #tpu.dot_dimension_numbers<[1], [0], [0], [1], [0, 0, 1, 1], [], []>} : vector<448x128xbf16>, vector<128x168xbf16>, vector<448x168xf32> -> vector<448x168xf32>
    %6 = arith.addf %2, %5 : vector<448x168xf32>
    %c32 = arith.constant 32 : index
    %c0_6 = arith.constant 0 : index
    %7 = vector.load %arg1[%c32, %c0_6] : memref<512x128xbf16, #tpu.memory_space<vmem>>, vector<448x128xbf16>
    %c256 = arith.constant 256 : index
    %c0_7 = arith.constant 0 : index
    %8 = vector.load %arg2[%c256, %c0_7] : memref<640x168xbf16, #tpu.memory_space<vmem>>, vector<128x168xbf16>
    %cst_8 = arith.constant dense<0.000000e+00> : vector<448x168xf32>
    %9 = tpu.matmul %7, %8, %cst_8 {dimension_numbers = #tpu.dot_dimension_numbers<[1], [0], [0], [1], [0, 0, 1, 1], [], []>} : vector<448x128xbf16>, vector<128x168xbf16>, vector<448x168xf32> -> vector<448x168xf32>
    %10 = arith.addf %6, %9 : vector<448x168xf32>
    %c48 = arith.constant 48 : index
    %c0_9 = arith.constant 0 : index
    %11 = vector.load %arg1[%c48, %c0_9] : memref<512x128xbf16, #tpu.memory_space<vmem>>, vector<448x128xbf16>
    %c384 = arith.constant 384 : index
    %c0_10 = arith.constant 0 : index
    %12 = vector.load %arg2[%c384, %c0_10] : memref<640x168xbf16, #tpu.memory_space<vmem>>, vector<128x168xbf16>
    %cst_11 = arith.constant dense<0.000000e+00> : vector<448x168xf32>
    %13 = tpu.matmul %11, %12, %cst_11 {dimension_numbers = #tpu.dot_dimension_numbers<[1], [0], [0], [1], [0, 0, 1, 1], [], []>} : vector<448x128xbf16>, vector<128x168xbf16>, vector<448x168xf32> -> vector<448x168xf32>
    %14 = arith.addf %10, %13 : vector<448x168xf32>
    %c64 = arith.constant 64 : index
    %c0_12 = arith.constant 0 : index
    %15 = vector.load %arg1[%c64, %c0_12] : memref<512x128xbf16, #tpu.memory_space<vmem>>, vector<448x128xbf16>
    %c512 = arith.constant 512 : index
    %c0_13 = arith.constant 0 : index
    %16 = vector.load %arg2[%c512, %c0_13] : memref<640x168xbf16, #tpu.memory_space<vmem>>, vector<128x168xbf16>
    %cst_14 = arith.constant dense<0.000000e+00> : vector<448x168xf32>
    %17 = tpu.matmul %15, %16, %cst_14 {dimension_numbers = #tpu.dot_dimension_numbers<[1], [0], [0], [1], [0, 0, 1, 1], [], []>} : vector<448x128xbf16>, vector<128x168xbf16>, vector<448x168xf32> -> vector<448x168xf32>
    %18 = arith.addf %14, %17 : vector<448x168xf32>
    %c0_15 = arith.constant 0 : index
    %c0_16 = arith.constant 0 : index
    %19 = vector.load %arg3[%c0_15, %c0_16] : memref<1x168xf32, #tpu.memory_space<vmem>>, vector<1x168xf32>
    %20 = vector.broadcast %19 : vector<1x168xf32> to vector<448x168xf32>
    %21 = arith.addf %18, %20 : vector<448x168xf32>
    %cst_17 = arith.constant 0.000000e+00 : f32
    %22 = vector.broadcast %cst_17 : f32 to vector<448x168xf32>
    %23 = arith.maximumf %21, %22 : vector<448x168xf32>
    %24 = arith.truncf %23 : vector<448x168xf32> to vector<448x168xbf16>
    %c0_18 = arith.constant 0 : index
    %c0_19 = arith.constant 0 : index
    %25 = vector.load %arg15[%c0_18, %c0_19] : memref<448x168xbf16, #tpu.memory_space<vmem>>, vector<448x168xbf16>
    tpu.vector_store %arg15[%c0_18, %c0_19], %24 {strides = array<i32>} : memref<448x168xbf16, #tpu.memory_space<vmem>>, vector<448x168xbf16>,
    %c0_20 = arith.constant 0 : index
    %c0_21 = arith.constant 0 : index
    %26 = vector.load %arg15[%c0_20, %c0_21] : memref<448x168xbf16, #tpu.memory_space<vmem>>, vector<16x168xbf16>
    %c16_22 = arith.constant 16 : index
    %c0_23 = arith.constant 0 : index
    %27 = vector.load %arg15[%c16_22, %c0_23] : memref<448x168xbf16, #tpu.memory_space<vmem>>, vector<16x168xbf16>
    %28 = arith.maximumf %26, %27 : vector<16x168xbf16>
    %c0_24 = arith.constant 0 : index
    %c0_25 = arith.constant 0 : index
    %29 = vector.load %arg16[%c0_24, %c0_25] : memref<224x168xbf16, #tpu.memory_space<vmem>>, vector<16x168xbf16>
    tpu.vector_store %arg16[%c0_24, %c0_25], %28 {strides = array<i32>} : memref<224x168xbf16, #tpu.memory_space<vmem>>, vector<16x168xbf16>,
    %c32_26 = arith.constant 32 : index
    %c0_27 = arith.constant 0 : index
    %30 = vector.load %arg15[%c32_26, %c0_27] : memref<448x168xbf16, #tpu.memory_space<vmem>>, vector<16x168xbf16>
    %c48_28 = arith.constant 48 : index
    %c0_29 = arith.constant 0 : index
    %31 = vector.load %arg15[%c48_28, %c0_29] : memref<448x168xbf16, #tpu.memory_space<vmem>>, vector<16x168xbf16>
    %32 = arith.maximumf %30, %31 : vector<16x168xbf16>
    %c16_30 = arith.constant 16 : index
    %c0_31 = arith.constant 0 : index
    %33 = vector.load %arg16[%c16_30, %c0_31] : memref<224x168xbf16, #tpu.memory_space<vmem>>, vector<16x168xbf16>
    tpu.vector_store %arg16[%c16_30, %c0_31], %32 {strides = array<i32>} : memref<224x168xbf16, #tpu.memory_space<vmem>>, vector<16x168xbf16>,
    %c64_32 = arith.constant 64 : index
    %c0_33 = arith.constant 0 : index
    %34 = vector.load %arg15[%c64_32, %c0_33] : memref<448x168xbf16, #tpu.memory_space<vmem>>, vector<16x168xbf16>
    %c80 = arith.constant 80 : index
    %c0_34 = arith.constant 0 : index
    %35 = vector.load %arg15[%c80, %c0_34] : memref<448x168xbf16, #tpu.memory_space<vmem>>, vector<16x168xbf16>
    %36 = arith.maximumf %34, %35 : vector<16x168xbf16>
    %c32_35 = arith.constant 32 : index
    %c0_36 = arith.constant 0 : index
    %37 = vector.load %arg16[%c32_35, %c0_36] : memref<224x168xbf16, #tpu.memory_space<vmem>>, vector<16x168xbf16>
    tpu.vector_store %arg16[%c32_35, %c0_36], %36 {strides = array<i32>} : memref<224x168xbf16, #tpu.memory_space<vmem>>, vector<16x168xbf16>,
    %c96 = arith.constant 96 : index
    %c0_37 = arith.constant 0 : index
    %38 = vector.load %arg15[%c96, %c0_37] : memref<448x168xbf16, #tpu.memory_space<vmem>>, vector<16x168xbf16>
    %c112 = arith.constant 112 : index
    %c0_38 = arith.constant 0 : index
    %39 = vector.load %arg15[%c112, %c0_38] : memref<448x168xbf16, #tpu.memory_space<vmem>>, vector<16x168xbf16>
    %40 = arith.maximumf %38, %39 : vector<16x168xbf16>
    %c48_39 = arith.constant 48 : index
    %c0_40 = arith.constant 0 : index
    %41 = vector.load %arg16[%c48_39, %c0_40] : memref<224x168xbf16, #tpu.memory_space<vmem>>, vector<16x168xbf16>
    tpu.vector_store %arg16[%c48_39, %c0_40], %40 {strides = array<i32>} : memref<224x168xbf16, #tpu.memory_space<vmem>>, vector<16x168xbf16>,
    %c128_41 = arith.constant 128 : index
    %c0_42 = arith.constant 0 : index
    %42 = vector.load %arg15[%c128_41, %c0_42] : memref<448x168xbf16, #tpu.memory_space<vmem>>, vector<16x168xbf16>
    %c144 = arith.constant 144 : index
    %c0_43 = arith.constant 0 : index
    %43 = vector.load %arg15[%c144, %c0_43] : memref<448x168xbf16, #tpu.memory_space<vmem>>, vector<16x168xbf16>
    %44 = arith.maximumf %42, %43 : vector<16x168xbf16>
    %c64_44 = arith.constant 64 : index
    %c0_45 = arith.constant 0 : index
    %45 = vector.load %arg16[%c64_44, %c0_45] : memref<224x168xbf16, #tpu.memory_space<vmem>>, vector<16x168xbf16>
    tpu.vector_store %arg16[%c64_44, %c0_45], %44 {strides = array<i32>} : memref<224x168xbf16, #tpu.memory_space<vmem>>, vector<16x168xbf16>,
    %c160 = arith.constant 160 : index
    %c0_46 = arith.constant 0 : index
    %46 = vector.load %arg15[%c160, %c0_46] : memref<448x168xbf16, #tpu.memory_space<vmem>>, vector<16x168xbf16>
    %c176 = arith.constant 176 : index
    %c0_47 = arith.constant 0 : index
    %47 = vector.load %arg15[%c176, %c0_47] : memref<448x168xbf16, #tpu.memory_space<vmem>>, vector<16x168xbf16>
    %48 = arith.maximumf %46, %47 : vector<16x168xbf16>
    %c80_48 = arith.constant 80 : index
    %c0_49 = arith.constant 0 : index
    %49 = vector.load %arg16[%c80_48, %c0_49] : memref<224x168xbf16, #tpu.memory_space<vmem>>, vector<16x168xbf16>
    tpu.vector_store %arg16[%c80_48, %c0_49], %48 {strides = array<i32>} : memref<224x168xbf16, #tpu.memory_space<vmem>>, vector<16x168xbf16>,
    %c192 = arith.constant 192 : index
    %c0_50 = arith.constant 0 : index
    %50 = vector.load %arg15[%c192, %c0_50] : memref<448x168xbf16, #tpu.memory_space<vmem>>, vector<16x168xbf16>
    %c208 = arith.constant 208 : index
    %c0_51 = arith.constant 0 : index
    %51 = vector.load %arg15[%c208, %c0_51] : memref<448x168xbf16, #tpu.memory_space<vmem>>, vector<16x168xbf16>
    %52 = arith.maximumf %50, %51 : vector<16x168xbf16>
    %c96_52 = arith.constant 96 : index
    %c0_53 = arith.constant 0 : index
    %53 = vector.load %arg16[%c96_52, %c0_53] : memref<224x168xbf16, #tpu.memory_space<vmem>>, vector<16x168xbf16>
    tpu.vector_store %arg16[%c96_52, %c0_53], %52 {strides = array<i32>} : memref<224x168xbf16, #tpu.memory_space<vmem>>, vector<16x168xbf16>,
    %c224 = arith.constant 224 : index
    %c0_54 = arith.constant 0 : index
    %54 = vector.load %arg15[%c224, %c0_54] : memref<448x168xbf16, #tpu.memory_space<vmem>>, vector<16x168xbf16>
    %c240 = arith.constant 240 : index
    %c0_55 = arith.constant 0 : index
    %55 = vector.load %arg15[%c240, %c0_55] : memref<448x168xbf16, #tpu.memory_space<vmem>>, vector<16x168xbf16>
    %56 = arith.maximumf %54, %55 : vector<16x168xbf16>
    %c112_56 = arith.constant 112 : index
    %c0_57 = arith.constant 0 : index
    %57 = vector.load %arg16[%c112_56, %c0_57] : memref<224x168xbf16, #tpu.memory_space<vmem>>, vector<16x168xbf16>
    tpu.vector_store %arg16[%c112_56, %c0_57], %56 {strides = array<i32>} : memref<224x168xbf16, #tpu.memory_space<vmem>>, vector<16x168xbf16>,
    %c256_58 = arith.constant 256 : index
    %c0_59 = arith.constant 0 : index
    %58 = vector.load %arg15[%c256_58, %c0_59] : memref<448x168xbf16, #tpu.memory_space<vmem>>, vector<16x168xbf16>
    %c272 = arith.constant 272 : index
    %c0_60 = arith.constant 0 : index
    %59 = vector.load %arg15[%c272, %c0_60] : memref<448x168xbf16, #tpu.memory_space<vmem>>, vector<16x168xbf16>
    %60 = arith.maximumf %58, %59 : vector<16x168xbf16>
    %c128_61 = arith.constant 128 : index
    %c0_62 = arith.constant 0 : index
    %61 = vector.load %arg16[%c128_61, %c0_62] : memref<224x168xbf16, #tpu.memory_space<vmem>>, vector<16x168xbf16>
    tpu.vector_store %arg16[%c128_61, %c0_62], %60 {strides = array<i32>} : memref<224x168xbf16, #tpu.memory_space<vmem>>, vector<16x168xbf16>,
    %c288 = arith.constant 288 : index
    %c0_63 = arith.constant 0 : index
    %62 = vector.load %arg15[%c288, %c0_63] : memref<448x168xbf16, #tpu.memory_space<vmem>>, vector<16x168xbf16>
    %c304 = arith.constant 304 : index
    %c0_64 = arith.constant 0 : index
    %63 = vector.load %arg15[%c304, %c0_64] : memref<448x168xbf16, #tpu.memory_space<vmem>>, vector<16x168xbf16>
    %64 = arith.maximumf %62, %63 : vector<16x168xbf16>
    %c144_65 = arith.constant 144 : index
    %c0_66 = arith.constant 0 : index
    %65 = vector.load %arg16[%c144_65, %c0_66] : memref<224x168xbf16, #tpu.memory_space<vmem>>, vector<16x168xbf16>
    tpu.vector_store %arg16[%c144_65, %c0_66], %64 {strides = array<i32>} : memref<224x168xbf16, #tpu.memory_space<vmem>>, vector<16x168xbf16>,
    %c320 = arith.constant 320 : index
    %c0_67 = arith.constant 0 : index
    %66 = vector.load %arg15[%c320, %c0_67] : memref<448x168xbf16, #tpu.memory_space<vmem>>, vector<16x168xbf16>
    %c336 = arith.constant 336 : index
    %c0_68 = arith.constant 0 : index
    %67 = vector.load %arg15[%c336, %c0_68] : memref<448x168xbf16, #tpu.memory_space<vmem>>, vector<16x168xbf16>
    %68 = arith.maximumf %66, %67 : vector<16x168xbf16>
    %c160_69 = arith.constant 160 : index
    %c0_70 = arith.constant 0 : index
    %69 = vector.load %arg16[%c160_69, %c0_70] : memref<224x168xbf16, #tpu.memory_space<vmem>>, vector<16x168xbf16>
    tpu.vector_store %arg16[%c160_69, %c0_70], %68 {strides = array<i32>} : memref<224x168xbf16, #tpu.memory_space<vmem>>, vector<16x168xbf16>,
    %c352 = arith.constant 352 : index
    %c0_71 = arith.constant 0 : index
    %70 = vector.load %arg15[%c352, %c0_71] : memref<448x168xbf16, #tpu.memory_space<vmem>>, vector<16x168xbf16>
    %c368 = arith.constant 368 : index
    %c0_72 = arith.constant 0 : index
    %71 = vector.load %arg15[%c368, %c0_72] : memref<448x168xbf16, #tpu.memory_space<vmem>>, vector<16x168xbf16>
    %72 = arith.maximumf %70, %71 : vector<16x168xbf16>
    %c176_73 = arith.constant 176 : index
    %c0_74 = arith.constant 0 : index
    %73 = vector.load %arg16[%c176_73, %c0_74] : memref<224x168xbf16, #tpu.memory_space<vmem>>, vector<16x168xbf16>
    tpu.vector_store %arg16[%c176_73, %c0_74], %72 {strides = array<i32>} : memref<224x168xbf16, #tpu.memory_space<vmem>>, vector<16x168xbf16>,
    %c384_75 = arith.constant 384 : index
    %c0_76 = arith.constant 0 : index
    %74 = vector.load %arg15[%c384_75, %c0_76] : memref<448x168xbf16, #tpu.memory_space<vmem>>, vector<16x168xbf16>
    %c400 = arith.constant 400 : index
    %c0_77 = arith.constant 0 : index
    %75 = vector.load %arg15[%c400, %c0_77] : memref<448x168xbf16, #tpu.memory_space<vmem>>, vector<16x168xbf16>
    %76 = arith.maximumf %74, %75 : vector<16x168xbf16>
    %c192_78 = arith.constant 192 : index
    %c0_79 = arith.constant 0 : index
    %77 = vector.load %arg16[%c192_78, %c0_79] : memref<224x168xbf16, #tpu.memory_space<vmem>>, vector<16x168xbf16>
    tpu.vector_store %arg16[%c192_78, %c0_79], %76 {strides = array<i32>} : memref<224x168xbf16, #tpu.memory_space<vmem>>, vector<16x168xbf16>,
    %c416 = arith.constant 416 : index
    %c0_80 = arith.constant 0 : index
    %78 = vector.load %arg15[%c416, %c0_80] : memref<448x168xbf16, #tpu.memory_space<vmem>>, vector<16x168xbf16>
    %c432 = arith.constant 432 : index
    %c0_81 = arith.constant 0 : index
    %79 = vector.load %arg15[%c432, %c0_81] : memref<448x168xbf16, #tpu.memory_space<vmem>>, vector<16x168xbf16>
    %80 = arith.maximumf %78, %79 : vector<16x168xbf16>
    %c208_82 = arith.constant 208 : index
    %c0_83 = arith.constant 0 : index
    %81 = vector.load %arg16[%c208_82, %c0_83] : memref<224x168xbf16, #tpu.memory_space<vmem>>, vector<16x168xbf16>
    tpu.vector_store %arg16[%c208_82, %c0_83], %80 {strides = array<i32>} : memref<224x168xbf16, #tpu.memory_space<vmem>>, vector<16x168xbf16>,
    %c0_84 = arith.constant 0 : index
    %c0_85 = arith.constant 0 : index
    %82 = vector.load %arg16[%c0_84, %c0_85] : memref<224x168xbf16, #tpu.memory_space<vmem>>, vector<224x168xbf16>
    %c0_86 = arith.constant 0 : index
    %c0_87 = arith.constant 0 : index
    %83 = vector.load %arg4[%c0_86, %c0_87] : memref<168x128xbf16, #tpu.memory_space<vmem>>, vector<168x128xbf16>
    %cst_88 = arith.constant dense<0.000000e+00> : vector<224x128xf32>
    %84 = tpu.matmul %82, %83, %cst_88 {dimension_numbers = #tpu.dot_dimension_numbers<[1], [0], [0], [1], [0, 0, 1, 1], [], []>} : vector<224x168xbf16>, vector<168x128xbf16>, vector<224x128xf32> -> vector<224x128xf32>
    %c0_89 = arith.constant 0 : index
    %c0_90 = arith.constant 0 : index
    %85 = vector.load %arg5[%c0_89, %c0_90] : memref<168x128xbf16, #tpu.memory_space<vmem>>, vector<168x128xbf16>
    %cst_91 = arith.constant dense<0.000000e+00> : vector<224x128xf32>
    %86 = tpu.matmul %82, %85, %cst_91 {dimension_numbers = #tpu.dot_dimension_numbers<[1], [0], [0], [1], [0, 0, 1, 1], [], []>} : vector<224x168xbf16>, vector<168x128xbf16>, vector<224x128xf32> -> vector<224x128xf32>
    %87 = arith.maximumf %84, %86 : vector<224x128xf32>
    %88 = arith.truncf %87 : vector<224x128xf32> to vector<224x128xbf16>
    %c0_92 = arith.constant 0 : index
    %c0_93 = arith.constant 0 : index
    %89 = vector.load %arg17[%c0_92, %c0_93] : memref<224x128xbf16, #tpu.memory_space<vmem>>, vector<224x128xbf16>
    tpu.vector_store %arg17[%c0_92, %c0_93], %88 {strides = array<i32>} : memref<224x128xbf16, #tpu.memory_space<vmem>>, vector<224x128xbf16>,
    %c0_94 = arith.constant 0 : index
    %c0_95 = arith.constant 0 : index
    %90 = vector.load %arg17[%c0_94, %c0_95] : memref<224x128xbf16, #tpu.memory_space<vmem>>, vector<160x128xbf16>
    %c0_96 = arith.constant 0 : index
    %c0_97 = arith.constant 0 : index
    %91 = vector.load %arg6[%c0_96, %c0_97] : memref<640x160xbf16, #tpu.memory_space<vmem>>, vector<128x160xbf16>
    %cst_98 = arith.constant dense<0.000000e+00> : vector<160x160xf32>
    %92 = tpu.matmul %90, %91, %cst_98 {dimension_numbers = #tpu.dot_dimension_numbers<[1], [0], [0], [1], [0, 0, 1, 1], [], []>} : vector<160x128xbf16>, vector<128x160xbf16>, vector<160x160xf32> -> vector<160x160xf32>
    %c16_99 = arith.constant 16 : index
    %c0_100 = arith.constant 0 : index
    %93 = vector.load %arg17[%c16_99, %c0_100] : memref<224x128xbf16, #tpu.memory_space<vmem>>, vector<160x128xbf16>
    %c128_101 = arith.constant 128 : index
    %c0_102 = arith.constant 0 : index
    %94 = vector.load %arg6[%c128_101, %c0_102] : memref<640x160xbf16, #tpu.memory_space<vmem>>, vector<128x160xbf16>
    %cst_103 = arith.constant dense<0.000000e+00> : vector<160x160xf32>
    %95 = tpu.matmul %93, %94, %cst_103 {dimension_numbers = #tpu.dot_dimension_numbers<[1], [0], [0], [1], [0, 0, 1, 1], [], []>} : vector<160x128xbf16>, vector<128x160xbf16>, vector<160x160xf32> -> vector<160x160xf32>
    %96 = arith.addf %92, %95 : vector<160x160xf32>
    %c32_104 = arith.constant 32 : index
    %c0_105 = arith.constant 0 : index
    %97 = vector.load %arg17[%c32_104, %c0_105] : memref<224x128xbf16, #tpu.memory_space<vmem>>, vector<160x128xbf16>
    %c256_106 = arith.constant 256 : index
    %c0_107 = arith.constant 0 : index
    %98 = vector.load %arg6[%c256_106, %c0_107] : memref<640x160xbf16, #tpu.memory_space<vmem>>, vector<128x160xbf16>
    %cst_108 = arith.constant dense<0.000000e+00> : vector<160x160xf32>
    %99 = tpu.matmul %97, %98, %cst_108 {dimension_numbers = #tpu.dot_dimension_numbers<[1], [0], [0], [1], [0, 0, 1, 1], [], []>} : vector<160x128xbf16>, vector<128x160xbf16>, vector<160x160xf32> -> vector<160x160xf32>
    %100 = arith.addf %96, %99 : vector<160x160xf32>
    %c48_109 = arith.constant 48 : index
    %c0_110 = arith.constant 0 : index
    %101 = vector.load %arg17[%c48_109, %c0_110] : memref<224x128xbf16, #tpu.memory_space<vmem>>, vector<160x128xbf16>
    %c384_111 = arith.constant 384 : index
    %c0_112 = arith.constant 0 : index
    %102 = vector.load %arg6[%c384_111, %c0_112] : memref<640x160xbf16, #tpu.memory_space<vmem>>, vector<128x160xbf16>
    %cst_113 = arith.constant dense<0.000000e+00> : vector<160x160xf32>
    %103 = tpu.matmul %101, %102, %cst_113 {dimension_numbers = #tpu.dot_dimension_numbers<[1], [0], [0], [1], [0, 0, 1, 1], [], []>} : vector<160x128xbf16>, vector<128x160xbf16>, vector<160x160xf32> -> vector<160x160xf32>
    %104 = arith.addf %100, %103 : vector<160x160xf32>
    %c64_114 = arith.constant 64 : index
    %c0_115 = arith.constant 0 : index
    %105 = vector.load %arg17[%c64_114, %c0_115] : memref<224x128xbf16, #tpu.memory_space<vmem>>, vector<160x128xbf16>
    %c512_116 = arith.constant 512 : index
    %c0_117 = arith.constant 0 : index
    %106 = vector.load %arg6[%c512_116, %c0_117] : memref<640x160xbf16, #tpu.memory_space<vmem>>, vector<128x160xbf16>
    %cst_118 = arith.constant dense<0.000000e+00> : vector<160x160xf32>
    %107 = tpu.matmul %105, %106, %cst_118 {dimension_numbers = #tpu.dot_dimension_numbers<[1], [0], [0], [1], [0, 0, 1, 1], [], []>} : vector<160x128xbf16>, vector<128x160xbf16>, vector<160x160xf32> -> vector<160x160xf32>
    %108 = arith.addf %104, %107 : vector<160x160xf32>
    %c0_119 = arith.constant 0 : index
    %c0_120 = arith.constant 0 : index
    %109 = vector.load %arg7[%c0_119, %c0_120] : memref<1x160xf32, #tpu.memory_space<vmem>>, vector<1x160xf32>
    %110 = vector.broadcast %109 : vector<1x160xf32> to vector<160x160xf32>
    %111 = arith.addf %108, %110 : vector<160x160xf32>
    %cst_121 = arith.constant 0.000000e+00 : f32
    %112 = vector.broadcast %cst_121 : f32 to vector<160x160xf32>
    %113 = arith.maximumf %111, %112 : vector<160x160xf32>
    %114 = arith.truncf %113 : vector<160x160xf32> to vector<160x160xbf16>
    %c0_122 = arith.constant 0 : index
    %c0_123 = arith.constant 0 : index
    %115 = vector.load %arg18[%c0_122, %c0_123] : memref<160x160xbf16, #tpu.memory_space<vmem>>, vector<160x160xbf16>
    tpu.vector_store %arg18[%c0_122, %c0_123], %114 {strides = array<i32>} : memref<160x160xbf16, #tpu.memory_space<vmem>>, vector<160x160xbf16>,
    %c0_124 = arith.constant 0 : index
    %c0_125 = arith.constant 0 : index
    %116 = vector.load %arg18[%c0_124, %c0_125] : memref<160x160xbf16, #tpu.memory_space<vmem>>, vector<16x160xbf16>
    %c16_126 = arith.constant 16 : index
    %c0_127 = arith.constant 0 : index
    %117 = vector.load %arg18[%c16_126, %c0_127] : memref<160x160xbf16, #tpu.memory_space<vmem>>, vector<16x160xbf16>
    %118 = arith.maximumf %116, %117 : vector<16x160xbf16>
    %c0_128 = arith.constant 0 : index
    %c0_129 = arith.constant 0 : index
    %119 = vector.load %arg19[%c0_128, %c0_129] : memref<80x160xbf16, #tpu.memory_space<vmem>>, vector<16x160xbf16>
    tpu.vector_store %arg19[%c0_128, %c0_129], %118 {strides = array<i32>} : memref<80x160xbf16, #tpu.memory_space<vmem>>, vector<16x160xbf16>,
    %c32_130 = arith.constant 32 : index
    %c0_131 = arith.constant 0 : index
    %120 = vector.load %arg18[%c32_130, %c0_131] : memref<160x160xbf16, #tpu.memory_space<vmem>>, vector<16x160xbf16>
    %c48_132 = arith.constant 48 : index
    %c0_133 = arith.constant 0 : index
    %121 = vector.load %arg18[%c48_132, %c0_133] : memref<160x160xbf16, #tpu.memory_space<vmem>>, vector<16x160xbf16>
    %122 = arith.maximumf %120, %121 : vector<16x160xbf16>
    %c16_134 = arith.constant 16 : index
    %c0_135 = arith.constant 0 : index
    %123 = vector.load %arg19[%c16_134, %c0_135] : memref<80x160xbf16, #tpu.memory_space<vmem>>, vector<16x160xbf16>
    tpu.vector_store %arg19[%c16_134, %c0_135], %122 {strides = array<i32>} : memref<80x160xbf16, #tpu.memory_space<vmem>>, vector<16x160xbf16>,
    %c64_136 = arith.constant 64 : index
    %c0_137 = arith.constant 0 : index
    %124 = vector.load %arg18[%c64_136, %c0_137] : memref<160x160xbf16, #tpu.memory_space<vmem>>, vector<16x160xbf16>
    %c80_138 = arith.constant 80 : index
    %c0_139 = arith.constant 0 : index
    %125 = vector.load %arg18[%c80_138, %c0_139] : memref<160x160xbf16, #tpu.memory_space<vmem>>, vector<16x160xbf16>
    %126 = arith.maximumf %124, %125 : vector<16x160xbf16>
    %c32_140 = arith.constant 32 : index
    %c0_141 = arith.constant 0 : index
    %127 = vector.load %arg19[%c32_140, %c0_141] : memref<80x160xbf16, #tpu.memory_space<vmem>>, vector<16x160xbf16>
    tpu.vector_store %arg19[%c32_140, %c0_141], %126 {strides = array<i32>} : memref<80x160xbf16, #tpu.memory_space<vmem>>, vector<16x160xbf16>,
    %c96_142 = arith.constant 96 : index
    %c0_143 = arith.constant 0 : index
    %128 = vector.load %arg18[%c96_142, %c0_143] : memref<160x160xbf16, #tpu.memory_space<vmem>>, vector<16x160xbf16>
    %c112_144 = arith.constant 112 : index
    %c0_145 = arith.constant 0 : index
    %129 = vector.load %arg18[%c112_144, %c0_145] : memref<160x160xbf16, #tpu.memory_space<vmem>>, vector<16x160xbf16>
    %130 = arith.maximumf %128, %129 : vector<16x160xbf16>
    %c48_146 = arith.constant 48 : index
    %c0_147 = arith.constant 0 : index
    %131 = vector.load %arg19[%c48_146, %c0_147] : memref<80x160xbf16, #tpu.memory_space<vmem>>, vector<16x160xbf16>
    tpu.vector_store %arg19[%c48_146, %c0_147], %130 {strides = array<i32>} : memref<80x160xbf16, #tpu.memory_space<vmem>>, vector<16x160xbf16>,
    %c128_148 = arith.constant 128 : index
    %c0_149 = arith.constant 0 : index
    %132 = vector.load %arg18[%c128_148, %c0_149] : memref<160x160xbf16, #tpu.memory_space<vmem>>, vector<16x160xbf16>
    %c144_150 = arith.constant 144 : index
    %c0_151 = arith.constant 0 : index
    %133 = vector.load %arg18[%c144_150, %c0_151] : memref<160x160xbf16, #tpu.memory_space<vmem>>, vector<16x160xbf16>
    %134 = arith.maximumf %132, %133 : vector<16x160xbf16>
    %c64_152 = arith.constant 64 : index
    %c0_153 = arith.constant 0 : index
    %135 = vector.load %arg19[%c64_152, %c0_153] : memref<80x160xbf16, #tpu.memory_space<vmem>>, vector<16x160xbf16>
    tpu.vector_store %arg19[%c64_152, %c0_153], %134 {strides = array<i32>} : memref<80x160xbf16, #tpu.memory_space<vmem>>, vector<16x160xbf16>,
    %c0_154 = arith.constant 0 : index
    %c0_155 = arith.constant 0 : index
    %136 = vector.load %arg19[%c0_154, %c0_155] : memref<80x160xbf16, #tpu.memory_space<vmem>>, vector<80x160xbf16>
    %c0_156 = arith.constant 0 : index
    %c0_157 = arith.constant 0 : index
    %137 = vector.load %arg8[%c0_156, %c0_157] : memref<160x128xbf16, #tpu.memory_space<vmem>>, vector<160x128xbf16>
    %cst_158 = arith.constant dense<0.000000e+00> : vector<80x128xf32>
    %138 = tpu.matmul %136, %137, %cst_158 {dimension_numbers = #tpu.dot_dimension_numbers<[1], [0], [0], [1], [0, 0, 1, 1], [], []>} : vector<80x160xbf16>, vector<160x128xbf16>, vector<80x128xf32> -> vector<80x128xf32>
    %c0_159 = arith.constant 0 : index
    %c0_160 = arith.constant 0 : index
    %139 = vector.load %arg9[%c0_159, %c0_160] : memref<160x128xbf16, #tpu.memory_space<vmem>>, vector<160x128xbf16>
    %cst_161 = arith.constant dense<0.000000e+00> : vector<80x128xf32>
    %140 = tpu.matmul %136, %139, %cst_161 {dimension_numbers = #tpu.dot_dimension_numbers<[1], [0], [0], [1], [0, 0, 1, 1], [], []>} : vector<80x160xbf16>, vector<160x128xbf16>, vector<80x128xf32> -> vector<80x128xf32>
    %141 = arith.maximumf %138, %140 : vector<80x128xf32>
    %142 = arith.truncf %141 : vector<80x128xf32> to vector<80x128xbf16>
    %c0_162 = arith.constant 0 : index
    %c0_163 = arith.constant 0 : index
    %143 = vector.load %arg20[%c0_162, %c0_163] : memref<80x128xbf16, #tpu.memory_space<vmem>>, vector<80x128xbf16>
    tpu.vector_store %arg20[%c0_162, %c0_163], %142 {strides = array<i32>} : memref<80x128xbf16, #tpu.memory_space<vmem>>, vector<80x128xbf16>,
    %c0_164 = arith.constant 0 : index
    %c0_165 = arith.constant 0 : index
    %144 = vector.load %arg20[%c0_164, %c0_165] : memref<80x128xbf16, #tpu.memory_space<vmem>>, vector<16x128xbf16>
    %c0_166 = arith.constant 0 : index
    %c0_167 = arith.constant 0 : index
    %145 = vector.load %arg10[%c0_166, %c0_167] : memref<640x128xbf16, #tpu.memory_space<vmem>>, vector<128x128xbf16>
    %cst_168 = arith.constant dense<0.000000e+00> : vector<16x128xf32>
    %146 = tpu.matmul %144, %145, %cst_168 {dimension_numbers = #tpu.dot_dimension_numbers<[1], [0], [0], [1], [0, 0, 1, 1], [], []>} : vector<16x128xbf16>, vector<128x128xbf16>, vector<16x128xf32> -> vector<16x128xf32>
    %c16_169 = arith.constant 16 : index
    %c0_170 = arith.constant 0 : index
    %147 = vector.load %arg20[%c16_169, %c0_170] : memref<80x128xbf16, #tpu.memory_space<vmem>>, vector<16x128xbf16>
    %c128_171 = arith.constant 128 : index
    %c0_172 = arith.constant 0 : index
    %148 = vector.load %arg10[%c128_171, %c0_172] : memref<640x128xbf16, #tpu.memory_space<vmem>>, vector<128x128xbf16>
    %cst_173 = arith.constant dense<0.000000e+00> : vector<16x128xf32>
    %149 = tpu.matmul %147, %148, %cst_173 {dimension_numbers = #tpu.dot_dimension_numbers<[1], [0], [0], [1], [0, 0, 1, 1], [], []>} : vector<16x128xbf16>, vector<128x128xbf16>, vector<16x128xf32> -> vector<16x128xf32>
    %150 = arith.addf %146, %149 : vector<16x128xf32>
    %c32_174 = arith.constant 32 : index
    %c0_175 = arith.constant 0 : index
    %151 = vector.load %arg20[%c32_174, %c0_175] : memref<80x128xbf16, #tpu.memory_space<vmem>>, vector<16x128xbf16>
    %c256_176 = arith.constant 256 : index
    %c0_177 = arith.constant 0 : index
    %152 = vector.load %arg10[%c256_176, %c0_177] : memref<640x128xbf16, #tpu.memory_space<vmem>>, vector<128x128xbf16>
    %cst_178 = arith.constant dense<0.000000e+00> : vector<16x128xf32>
    %153 = tpu.matmul %151, %152, %cst_178 {dimension_numbers = #tpu.dot_dimension_numbers<[1], [0], [0], [1], [0, 0, 1, 1], [], []>} : vector<16x128xbf16>, vector<128x128xbf16>, vector<16x128xf32> -> vector<16x128xf32>
    %154 = arith.addf %150, %153 : vector<16x128xf32>
    %c48_179 = arith.constant 48 : index
    %c0_180 = arith.constant 0 : index
    %155 = vector.load %arg20[%c48_179, %c0_180] : memref<80x128xbf16, #tpu.memory_space<vmem>>, vector<16x128xbf16>
    %c384_181 = arith.constant 384 : index
    %c0_182 = arith.constant 0 : index
    %156 = vector.load %arg10[%c384_181, %c0_182] : memref<640x128xbf16, #tpu.memory_space<vmem>>, vector<128x128xbf16>
    %cst_183 = arith.constant dense<0.000000e+00> : vector<16x128xf32>
    %157 = tpu.matmul %155, %156, %cst_183 {dimension_numbers = #tpu.dot_dimension_numbers<[1], [0], [0], [1], [0, 0, 1, 1], [], []>} : vector<16x128xbf16>, vector<128x128xbf16>, vector<16x128xf32> -> vector<16x128xf32>
    %158 = arith.addf %154, %157 : vector<16x128xf32>
    %c64_184 = arith.constant 64 : index
    %c0_185 = arith.constant 0 : index
    %159 = vector.load %arg20[%c64_184, %c0_185] : memref<80x128xbf16, #tpu.memory_space<vmem>>, vector<16x128xbf16>
    %c512_186 = arith.constant 512 : index
    %c0_187 = arith.constant 0 : index
    %160 = vector.load %arg10[%c512_186, %c0_187] : memref<640x128xbf16, #tpu.memory_space<vmem>>, vector<128x128xbf16>
    %cst_188 = arith.constant dense<0.000000e+00> : vector<16x128xf32>
    %161 = tpu.matmul %159, %160, %cst_188 {dimension_numbers = #tpu.dot_dimension_numbers<[1], [0], [0], [1], [0, 0, 1, 1], [], []>} : vector<16x128xbf16>, vector<128x128xbf16>, vector<16x128xf32> -> vector<16x128xf32>
    %162 = arith.addf %158, %161 : vector<16x128xf32>
    %c0_189 = arith.constant 0 : index
    %c0_190 = arith.constant 0 : index
    %163 = vector.load %arg11[%c0_189, %c0_190] : memref<1x128xf32, #tpu.memory_space<vmem>>, vector<1x128xf32>
    %164 = vector.broadcast %163 : vector<1x128xf32> to vector<16x128xf32>
    %165 = arith.addf %162, %164 : vector<16x128xf32>
    %cst_191 = arith.constant 0.000000e+00 : f32
    %166 = vector.broadcast %cst_191 : f32 to vector<16x128xf32>
    %167 = arith.maximumf %165, %166 : vector<16x128xf32>
    %168 = arith.truncf %167 : vector<16x128xf32> to vector<16x128xbf16>
    %c0_192 = arith.constant 0 : index
    %c0_193 = arith.constant 0 : index
    %169 = vector.load %arg12[%c0_192, %c0_193] : memref<128x128xbf16, #tpu.memory_space<vmem>>, vector<128x128xbf16>
    %cst_194 = arith.constant dense<0.000000e+00> : vector<16x128xf32>
    %170 = tpu.matmul %168, %169, %cst_194 {dimension_numbers = #tpu.dot_dimension_numbers<[1], [0], [0], [1], [0, 0, 1, 1], [], []>} : vector<16x128xbf16>, vector<128x128xbf16>, vector<16x128xf32> -> vector<16x128xf32>
    %c0_195 = arith.constant 0 : index
    %c0_196 = arith.constant 0 : index
    %171 = vector.load %arg13[%c0_195, %c0_196] : memref<1x128xf32, #tpu.memory_space<vmem>>, vector<1x128xf32>
    %172 = vector.broadcast %171 : vector<1x128xf32> to vector<16x128xf32>
    %173 = arith.addf %170, %172 : vector<16x128xf32>
    %cst_197 = arith.constant 0.000000e+00 : f32
    %174 = vector.broadcast %cst_197 : f32 to vector<16x128xf32>
    %175 = arith.maximumf %173, %174 : vector<16x128xf32>
    %c0_198 = arith.constant 0 : index
    %c0_199 = arith.constant 0 : index
    %176 = vector.load %arg14[%c0_198, %c0_199] : memref<16x128xf32, #tpu.memory_space<vmem>>, vector<16x128xf32>
    tpu.vector_store %arg14[%c0_198, %c0_199], %175 {strides = array<i32>} : memref<16x128xf32, #tpu.memory_space<vmem>>, vector<16x128xf32>,
    return
  }
  func.func @transform_0(%arg0: i32) -> (i32, i32) {
    %c0_i32 = arith.constant 0 : i32
    %c0_i32_0 = arith.constant 0 : i32
    return %arg0, %c0_i32 : i32, i32
  }
  func.func @transform_1(%arg0: i32) -> (i32, i32) {
    %c0_i32 = arith.constant 0 : i32
    %c0_i32_0 = arith.constant 0 : i32
    %c0_i32_1 = arith.constant 0 : i32
    return %c0_i32, %c0_i32_0 : i32, i32
  }
  func.func @transform_2(%arg0: i32) -> (i32, i32) {
    %c0_i32 = arith.constant 0 : i32
    %c0_i32_0 = arith.constant 0 : i32
    %c0_i32_1 = arith.constant 0 : i32
    return %c0_i32, %c0_i32_0 : i32, i32
  }
  func.func @transform_3(%arg0: i32) -> (i32, i32) {
    %c0_i32 = arith.constant 0 : i32
    %c0_i32_0 = arith.constant 0 : i32
    %c0_i32_1 = arith.constant 0 : i32
    return %c0_i32, %c0_i32_0 : i32, i32
  }
  func.func @transform_4(%arg0: i32) -> (i32, i32) {
    %c0_i32 = arith.constant 0 : i32
    %c0_i32_0 = arith.constant 0 : i32
    %c0_i32_1 = arith.constant 0 : i32
    return %c0_i32, %c0_i32_0 : i32, i32
  }
  func.func @transform_5(%arg0: i32) -> (i32, i32) {
    %c0_i32 = arith.constant 0 : i32
    %c0_i32_0 = arith.constant 0 : i32
    %c0_i32_1 = arith.constant 0 : i32
    return %c0_i32, %c0_i32_0 : i32, i32
  }
  func.func @transform_6(%arg0: i32) -> (i32, i32) {
    %c0_i32 = arith.constant 0 : i32
    %c0_i32_0 = arith.constant 0 : i32
    %c0_i32_1 = arith.constant 0 : i32
    return %c0_i32, %c0_i32_0 : i32, i32
  }
  func.func @transform_7(%arg0: i32) -> (i32, i32) {
    %c0_i32 = arith.constant 0 : i32
    %c0_i32_0 = arith.constant 0 : i32
    %c0_i32_1 = arith.constant 0 : i32
    return %c0_i32, %c0_i32_0 : i32, i32
  }
  func.func @transform_8(%arg0: i32) -> (i32, i32) {
    %c0_i32 = arith.constant 0 : i32
    %c0_i32_0 = arith.constant 0 : i32
    %c0_i32_1 = arith.constant 0 : i32
    return %c0_i32, %c0_i32_0 : i32, i32
  }
  func.func @transform_9(%arg0: i32) -> (i32, i32) {
    %c0_i32 = arith.constant 0 : i32
    %c0_i32_0 = arith.constant 0 : i32
    %c0_i32_1 = arith.constant 0 : i32
    return %c0_i32, %c0_i32_0 : i32, i32
  }
  func.func @transform_10(%arg0: i32) -> (i32, i32) {
    %c0_i32 = arith.constant 0 : i32
    %c0_i32_0 = arith.constant 0 : i32
    %c0_i32_1 = arith.constant 0 : i32
    return %c0_i32, %c0_i32_0 : i32, i32
  }
  func.func @transform_11(%arg0: i32) -> (i32, i32) {
    %c0_i32 = arith.constant 0 : i32
    %c0_i32_0 = arith.constant 0 : i32
    %c0_i32_1 = arith.constant 0 : i32
    return %c0_i32, %c0_i32_0 : i32, i32
  }
  func.func @transform_12(%arg0: i32) -> (i32, i32) {
    %c0_i32 = arith.constant 0 : i32
    %c0_i32_0 = arith.constant 0 : i32
    %c0_i32_1 = arith.constant 0 : i32
    return %c0_i32, %c0_i32_0 : i32, i32
  }
  func.func @transform_13(%arg0: i32) -> (i32, i32) {
    %c0_i32 = arith.constant 0 : i32
    %c0_i32_0 = arith.constant 0 : i32
    return %arg0, %c0_i32 : i32, i32
  }
}

</mosaic_0001>

<llo_original>
// kernel: tile.13
$region0: #{tile.13}
  #allocation0 [shape = 's32[1]{0}', space=sflag, size = 0x4, scoped, tag = 'scoped memory for tile.13']
  %s0 = inlined_call_operand.vmem [shape: f32[6], index: 0, kind: input, shape index: {}]
  %s1 = inlined_call_operand.vmem [shape: f32[28,6], index: 1, kind: output, shape index: {}]
  // Predicated region
  $region2: #{tile.13} parent=0 // pred_check
    _
  $region3: #{tile.13} parent=0 // pred_check_branch
    %3 = sbr.rel (0) target = $region5
  $region4: #{tile.13} parent=0 // pred_region
    _
  $region5: #{tile.13} parent=0 // pred_fallthru
    _
  %v4 = vld [vmem:[%s0] ss:$0 sm:$0xff]
  %5 = vst [vmem:[%s1] sm:$0xff] %v4
  %s6 = scalar_lea.vmem %s1, 8
  %7 = vst [vmem:[%s6] sm:$0xff] %v4
  %s8 = scalar_lea.vmem %s1, 16
  %9 = vst [vmem:[%s8] sm:$0xff] %v4
  %s10 = scalar_lea.vmem %s1, 24
  %11 = vst [vmem:[%s10] sm:$0xff] %v4

// kernel: tile.14
$region0: #{tile.14}
  %s0 = inlined_call_operand.vmem [shape: f32[28,6], index: 0, kind: input, shape index: {}]
  %s1 = inlined_call_operand.vmem [shape: f32[1,168], index: 1, kind: output, shape index: {}]
  $region1: #{tile.14} parent=0
    #allocation0 [shape = 'u8[8192]{0}', space=vmem, size = 0x2000, scoped, tag = 'scoped mem for output reshape']
    %v2 = vld [vmem:[%s0] sm:$0x1]
    %vm3 = vcmask 48128
    %4 = vst.msk [vmem:[#allocation0] sm:$0x1] %vm3, %v2
    %s5 = scalar_lea.vmem %s0, 21
    %v6 = vld [vmem:[%s5] sm:$0x1]
    %s7 = scalar_lea.vmem %s0, 21
    %v8 = vld [vmem:[%s7] sm:$0x1]
    %vm9 = vcmask 15360
    %v10 = vsel %vm9, %v8, %v6
    %11 = vrot.lane.b32.xlu0 %v10, 126
    %v12 = vpop.permute.xlu0 %11
    %vm13 = vcmask 31744
    %s14 = scalar_lea.vmem [#allocation0], 8
    %15 = vst.msk [vmem:[%s14] sm:$0x1] %vm13, %v12
    %vm16 = vcmask 1048560
    %17 = vst.msk [vmem:[#allocation0] sm:$0x1] %vm16, %v12
    %s18 = scalar_lea.vmem %s0, 20
    %v19 = vld [vmem:[%s18] sm:$0x1]
    %20 = vrot.lane.b32.xlu0 %v19, 120
    %v21 = vpop.permute.xlu0 %20
    %vm22 = vcmask 1032128
    %23 = vst.msk [vmem:[#allocation0] sm:$0x1] %vm22, %v21
    %s24 = scalar_lea.vmem %s0, 19
    %v25 = vld [vmem:[%s24] sm:$0x1]
    %26 = vrot.lane.b32.xlu0 %v25, 114
    %v27 = vpop.permute.xlu0 %26
    %vm28 = vcmask 982928
    %29 = vst.msk [vmem:[#allocation0] sm:$0x1] %vm28, %v27
    %s30 = scalar_lea.vmem %s0, 18
    %v31 = vld [vmem:[%s30] sm:$0x1]
    %32 = vrot.lane.b32.xlu0 %v31, 108
    %v33 = vpop.permute.xlu0 %32
    %vm34 = vcmask 933728
    %35 = vst.msk [vmem:[#allocation0] sm:$0x1] %vm34, %v33
    %s36 = scalar_lea.vmem %s0, 17
    %v37 = vld [vmem:[%s36] sm:$0x1]
    %38 = vrot.lane.b32.xlu0 %v37, 102
    %v39 = vpop.permute.xlu0 %38
    %vm40 = vcmask 884528
    %41 = vst.msk [vmem:[#allocation0] sm:$0x1] %vm40, %v39
    %s42 = scalar_lea.vmem %s0, 16
    %v43 = vld [vmem:[%s42] sm:$0x1]
    %44 = vrot.lane.b32.xlu0 %v43, 96
    %v45 = vpop.permute.xlu0 %44
    %vm46 = vcmask 835328
    %47 = vst.msk [vmem:[#allocation0] sm:$0x1] %vm46, %v45
    %s48 = scalar_lea.vmem %s0, 15
    %v49 = vld [vmem:[%s48] sm:$0x1]
    %50 = vrot.lane.b32.xlu0 %v49, 90
    %v51 = vpop.permute.xlu0 %50
    %vm52 = vcmask 786128
    %53 = vst.msk [vmem:[#allocation0] sm:$0x1] %vm52, %v51
    %s54 = scalar_lea.vmem %s0, 14
    %v55 = vld [vmem:[%s54] sm:$0x1]
    %56 = vrot.lane.b32.xlu0 %v55, 84
    %v57 = vpop.permute.xlu0 %56
    %vm58 = vcmask 736928
    %59 = vst.msk [vmem:[#allocation0] sm:$0x1] %vm58, %v57
    %s60 = scalar_lea.vmem %s0, 13
    %v61 = vld [vmem:[%s60] sm:$0x1]
    %62 = vrot.lane.b32.xlu0 %v61, 78
    %v63 = vpop.permute.xlu0 %62
    %vm64 = vcmask 687728
    %65 = vst.msk [vmem:[#allocation0] sm:$0x1] %vm64, %v63
    %s66 = scalar_lea.vmem %s0, 12
    %v67 = vld [vmem:[%s66] sm:$0x1]
    %68 = vrot.lane.b32.xlu0 %v67, 72
    %v69 = vpop.permute.xlu0 %68
    %vm70 = vcmask 638528
    %71 = vst.msk [vmem:[#allocation0] sm:$0x1] %vm70, %v69
    %s72 = scalar_lea.vmem %s0, 11
    %v73 = vld [vmem:[%s72] sm:$0x1]
    %74 = vrot.lane.b32.xlu0 %v73, 66
    %v75 = vpop.permute.xlu0 %74
    %vm76 = vcmask 589328
    %77 = vst.msk [vmem:[#allocation0] sm:$0x1] %vm76, %v75
    %s78 = scalar_lea.vmem %s0, 10
    %v79 = vld [vmem:[%s78] sm:$0x1]
    %80 = vrot.lane.b32.xlu0 %v79, 60
    %v81 = vpop.permute.xlu0 %80
    %vm82 = vcmask 540128
    %83 = vst.msk [vmem:[#allocation0] sm:$0x1] %vm82, %v81
    %s84 = scalar_lea.vmem %s0, 9
    %v85 = vld [vmem:[%s84] sm:$0x1]
    %86 = vrot.lane.b32.xlu0 %v85, 54
    %v87 = vpop.permute.xlu0 %86
    %vm88 = vcmask 490928
    %89 = vst.msk [vmem:[#allocation0] sm:$0x1] %vm88, %v87
    %s90 = scalar_lea.vmem %s0, 8
    %v91 = vld [vmem:[%s90] sm:$0x1]
    %92 = vrot.lane.b32.xlu0 %v91, 48
    %v93 = vpop.permute.xlu0 %92
    %vm94 = vcmask 441728
    %95 = vst.msk [vmem:[#allocation0] sm:$0x1] %vm94, %v93
    %s96 = scalar_lea.vmem %s0, 7
    %v97 = vld [vmem:[%s96] sm:$0x1]
    %98 = vrot.lane.b32.xlu0 %v97, 42
    %v99 = vpop.permute.xlu0 %98
    %vm100 = vcmask 392528
    %101 = vst.msk [vmem:[#allocation0] sm:$0x1] %vm100, %v99
    %s102 = scalar_lea.vmem %s0, 6
    %v103 = vld [vmem:[%s102] sm:$0x1]
    %104 = vrot.lane.b32.xlu0 %v103, 36
    %v105 = vpop.permute.xlu0 %104
    %vm106 = vcmask 343328
    %107 = vst.msk [vmem:[#allocation0] sm:$0x1] %vm106, %v105
    %s108 = scalar_lea.vmem %s0, 27
    %v109 = vld [vmem:[%s108] sm:$0x1]
    %110 = vrot.lane.b32.xlu0 %v109, 34
    %v111 = vpop.permute.xlu0 %110
    %vm112 = vcmask 326928
    %s113 = scalar_lea.vmem [#allocation0], 8
    %114 = vst.msk [vmem:[%s113] sm:$0x1] %vm112, %v111
    %s115 = scalar_lea.vmem %s0, 5
    %v116 = vld [vmem:[%s115] sm:$0x1]
    %117 = vrot.lane.b32.xlu0 %v116, 30
    %v118 = vpop.permute.xlu0 %117
    %vm119 = vcmask 294128
    %120 = vst.msk [vmem:[#allocation0] sm:$0x1] %vm119, %v118
    %s121 = scalar_lea.vmem %s0, 26
    %v122 = vld [vmem:[%s121] sm:$0x1]
    %123 = vrot.lane.b32.xlu0 %v122, 28
    %v124 = vpop.permute.xlu0 %123
    %vm125 = vcmask 277728
    %s126 = scalar_lea.vmem [#allocation0], 8
    %127 = vst.msk [vmem:[%s126] sm:$0x1] %vm125, %v124
    %s128 = scalar_lea.vmem %s0, 4
    %v129 = vld [vmem:[%s128] sm:$0x1]
    %130 = vrot.lane.b32.xlu0 %v129, 24
    %v131 = vpop.permute.xlu0 %130
    %vm132 = vcmask 244928
    %133 = vst.msk [vmem:[#allocation0] sm:$0x1] %vm132, %v131
    %s134 = scalar_lea.vmem %s0, 25
    %v135 = vld [vmem:[%s134] sm:$0x1]
    %136 = vrot.lane.b32.xlu0 %v135, 22
    %v137 = vpop.permute.xlu0 %136
    %vm138 = vcmask 228528
    %s139 = scalar_lea.vmem [#allocation0], 8
    %140 = vst.msk [vmem:[%s139] sm:$0x1] %vm138, %v137
    %s141 = scalar_lea.vmem %s0, 3
    %v142 = vld [vmem:[%s141] sm:$0x1]
    %143 = vrot.lane.b32.xlu0 %v142, 18
    %v144 = vpop.permute.xlu0 %143
    %vm145 = vcmask 195728
    %146 = vst.msk [vmem:[#allocation0] sm:$0x1] %vm145, %v144
    %s147 = scalar_lea.vmem %s0, 24
    %v148 = vld [vmem:[%s147] sm:$0x1]
    %149 = vrot.lane.b32.xlu0 %v148, 16
    %v150 = vpop.permute.xlu0 %149
    %vm151 = vcmask 179328
    %s152 = scalar_lea.vmem [#allocation0], 8
    %153 = vst.msk [vmem:[%s152] sm:$0x1] %vm151, %v150
    %s154 = scalar_lea.vmem %s0, 2
    %v155 = vld [vmem:[%s154] sm:$0x1]
    %156 = vrot.lane.b32.xlu0 %v155, 12
    %v157 = vpop.permute.xlu0 %156
    %vm158 = vcmask 146528
    %159 = vst.msk [vmem:[#allocation0] sm:$0x1] %vm158, %v157
    %s160 = scalar_lea.vmem %s0, 23
    %v161 = vld [vmem:[%s160] sm:$0x1]
    %162 = vrot.lane.b32.xlu0 %v161, 10
    %v163 = vpop.permute.xlu0 %162
    %vm164 = vcmask 130128
    %s165 = scalar_lea.vmem [#allocation0], 8
    %166 = vst.msk [vmem:[%s165] sm:$0x1] %vm164, %v163
    %s167 = scalar_lea.vmem %s0, 1
    %v168 = vld [vmem:[%s167] sm:$0x1]
    %169 = vrot.lane.b32.xlu0 %v168, 6
    %v170 = vpop.permute.xlu0 %169
    %vm171 = vcmask 97328
    %172 = vst.msk [vmem:[#allocation0] sm:$0x1] %vm171, %v170
    %s173 = scalar_lea.vmem %s0, 22
    %v174 = vld [vmem:[%s173] sm:$0x1]
    %175 = vrot.lane.b32.xlu0 %v174, 4
    %v176 = vpop.permute.xlu0 %175
    %vm177 = vcmask 80928
    %s178 = scalar_lea.vmem [#allocation0], 8
    %179 = vst.msk [vmem:[%s178] sm:$0x1] %vm177, %v176
    %s181 = sshllo.u32 0, 1
    %v183 = vld [vmem:[#allocation0] sm:%s181]
    %s184 = sshllo.u32 0, 1
    %185 = vst [vmem:[%s1] sm:%s184] %v183
    %s186 = scalar_lea.vmem [#allocation0], 8
    %v187 = vld [vmem:[%s186] sm:%s181]
    %s188 = sshllo.u32 0, 1
    %s189 = scalar_lea.vmem %s1, 1
    %190 = vst [vmem:[%s189] sm:%s188] %v187

// kernel: tile.18
$region0: #{tile.18}
  #allocation0 [shape = 's32[1]{0}', space=sflag, size = 0x4, scoped, tag = 'scoped memory for tile.18']
  %s0 = inlined_call_operand.vmem [shape: f32[16], index: 0, kind: input, shape index: {}]
  %s1 = inlined_call_operand.vmem [shape: f32[10,16], index: 1, kind: output, shape index: {}]
  // Predicated region
  $region2: #{tile.18} parent=0 // pred_check
    _
  $region3: #{tile.18} parent=0 // pred_check_branch
    %3 = sbr.rel (0) target = $region5
  $region4: #{tile.18} parent=0 // pred_region
    _
  $region5: #{tile.18} parent=0 // pred_fallthru
    _
  %v4 = vld [vmem:[%s0] ss:$0 sm:$0xff]
  %5 = vst [vmem:[%s1] sm:$0xff] %v4
  %s6 = scalar_lea.vmem %s1, 8
  %7 = vst [vmem:[%s6] sm:$0xff] %v4

// kernel: tile.19
$region0: #{tile.19}
  %s0 = inlined_call_operand.vmem [shape: f32[10,16], index: 0, kind: input, shape index: {}]
  %s1 = inlined_call_operand.vmem [shape: f32[1,160], index: 1, kind: output, shape index: {}]
  $region1: #{tile.19} parent=0
    #allocation0 [shape = 'u8[8192]{0}', space=vmem, size = 0x2000, scoped, tag = 'scoped mem for output reshape']
    %s2 = smov 3
    %v3 = vld [vmem:[%s0] ss:$8 sm:%s2]
    %vm4 = vcmask 130048
    %5 = vst.msk [vmem:[#allocation0] ss:$8 sm:$0x3] %vm4, %v3
    %s6 = scalar_lea.vmem %s0, 7
    %v7 = vld [vmem:[%s6] sm:$0x1]
    %8 = vrot.lane.b32.xlu0 %v7, 112
    %v9 = vpop.permute.xlu0 %8
    %vm10 = vcmask 1048448
    %11 = vst.msk [vmem:[#allocation0] sm:$0x1] %vm10, %v9
    %s12 = scalar_lea.vmem %s0, 6
    %v13 = vld [vmem:[%s12] sm:$0x1]
    %14 = vrot.lane.b32.xlu0 %v13, 96
    %v15 = vpop.permute.xlu0 %14
    %vm16 = vcmask 917248
    %17 = vst.msk [vmem:[#allocation0] sm:$0x1] %vm16, %v15
    %s18 = scalar_lea.vmem %s0, 5
    %v19 = vld [vmem:[%s18] sm:$0x1]
    %20 = vrot.lane.b32.xlu0 %v19, 80
    %v21 = vpop.permute.xlu0 %20
    %vm22 = vcmask 786048
    %23 = vst.msk [vmem:[#allocation0] sm:$0x1] %vm22, %v21
    %s24 = scalar_lea.vmem %s0, 4
    %v25 = vld [vmem:[%s24] sm:$0x1]
    %26 = vrot.lane.b32.xlu0 %v25, 64
    %v27 = vpop.permute.xlu0 %26
    %vm28 = vcmask 654848
    %29 = vst.msk [vmem:[#allocation0] sm:$0x1] %vm28, %v27
    %s30 = scalar_lea.vmem %s0, 3
    %v31 = vld [vmem:[%s30] sm:$0x1]
    %32 = vrot.lane.b32.xlu0 %v31, 48
    %v33 = vpop.permute.xlu0 %32
    %vm34 = vcmask 523648
    %35 = vst.msk [vmem:[#allocation0] sm:$0x1] %vm34, %v33
    %s36 = scalar_lea.vmem %s0, 2
    %v37 = vld [vmem:[%s36] sm:$0x1]
    %38 = vrot.lane.b32.xlu0 %v37, 32
    %v39 = vpop.permute.xlu0 %38
    %vm40 = vcmask 392448
    %41 = vst.msk [vmem:[#allocation0] sm:$0x1] %vm40, %v39
    %s42 = scalar_lea.vmem %s0, 1
    %s43 = smov 3
    %v44 = vld [vmem:[%s42] ss:$8 sm:%s43]
    %45 = vrot.lane.b32.xlu0 %v44, 16
    %v46 = vpop.permute.xlu0 %45
    %vm47 = vcmask 261248
    %48 = vst.msk [vmem:[#allocation0] ss:$8 sm:$0x3] %vm47, %v46
    %s50 = sshllo.u32 0, 1
    %v52 = vld [vmem:[#allocation0] sm:%s50]
    %s53 = sshllo.u32 0, 1
    %54 = vst [vmem:[%s1] sm:%s53] %v52
    %s55 = scalar_lea.vmem [#allocation0], 8
    %v56 = vld [vmem:[%s55] sm:%s50]
    %s57 = sshllo.u32 0, 1
    %s58 = scalar_lea.vmem %s1, 1
    %59 = vst [vmem:[%s58] sm:%s57] %v56

// kernel: conv_module_forward.1
$region0: #{conv_module_forward.1}
  #allocation0 [shape = 'u32[]', space=smem, size = 0x4, offset = 0x4, fixed_abs, tag = 'smem constant byte address 0x4 - core index']
  #allocation1 [shape = 'u32[144,128]{1,0:T(1,128)}', space=vmem, size = 0x12000, scoped, tag = 'internal scratch']
  #allocation2 [shape = 'bf16[448,168]{1,0:T(16,128)(2,1)}', space=vmem, size = 0x38000, scoped, tag = 'scratch operand']
  #allocation3 [shape = 'bf16[224,168]{1,0:T(16,128)(2,1)}', space=vmem, size = 0x1c000, scoped, tag = 'scratch operand']
  #allocation4 [shape = 'bf16[224,128]{1,0:T(16,128)(2,1)}', space=vmem, size = 0xe000, scoped, tag = 'scratch operand']
  #allocation5 [shape = 'bf16[160,160]{1,0:T(16,128)(2,1)}', space=vmem, size = 0x14000, scoped, tag = 'scratch operand']
  #allocation6 [shape = 'bf16[80,160]{1,0:T(16,128)(2,1)}', space=vmem, size = 0xa000, scoped, tag = 'scratch operand']
  #allocation7 [shape = 'bf16[80,128]{1,0:T(16,128)(2,1)}', space=vmem, size = 0x5000, scoped, tag = 'scratch operand']
  %s0 = inlined_call_operand.vmem [shape: bf16[512,128], index: 0, kind: input, shape index: {}]
  %s1 = inlined_call_operand.vmem [shape: bf16[640,168], index: 1, kind: input, shape index: {}]
  %s2 = inlined_call_operand.vmem [shape: f32[1,168], index: 2, kind: input, shape index: {}]
  %s3 = inlined_call_operand.vmem [shape: bf16[168,128], index: 3, kind: input, shape index: {}]
  %s4 = inlined_call_operand.vmem [shape: bf16[168,128], index: 4, kind: input, shape index: {}]
  %s5 = inlined_call_operand.vmem [shape: bf16[640,160], index: 5, kind: input, shape index: {}]
  %s6 = inlined_call_operand.vmem [shape: f32[1,160], index: 6, kind: input, shape index: {}]
  %s7 = inlined_call_operand.vmem [shape: bf16[160,128], index: 7, kind: input, shape index: {}]
  %s8 = inlined_call_operand.vmem [shape: bf16[160,128], index: 8, kind: input, shape index: {}]
  %s9 = inlined_call_operand.vmem [shape: bf16[640,128], index: 9, kind: input, shape index: {}]
  %s10 = inlined_call_operand.vmem [shape: f32[1,128], index: 10, kind: input, shape index: {}]
  %s11 = inlined_call_operand.vmem [shape: bf16[128,128], index: 11, kind: input, shape index: {}]
  %s12 = inlined_call_operand.vmem [shape: f32[1,128], index: 12, kind: input, shape index: {}]
  %s13 = inlined_call_operand.vmem [shape: f32[16,128], index: 13, kind: output, shape index: {}]
  %s14 = sld [smem:[#allocation0]]
  $region62: #{conv_module_forward.1} parent=0
    _
  %s16 = ssub.s32 1, %s14
  %s17 = scalar_select 0, %s16, %s14
  // Predicated region
  $region2: #{conv_module_forward.1} parent=0 // pred_check
    _
  $region3: #{conv_module_forward.1} parent=0 // pred_check_branch
    %19 = sbr.rel (0) target = $region5
  $region4: #{conv_module_forward.1} parent=0 // pred_region
    _
  $region5: #{conv_module_forward.1} parent=0 // pred_fallthru
    _
  // Predicated region
  $region6: #{conv_module_forward.1} parent=0 // pred_check
    _
  $region7: #{conv_module_forward.1} parent=0 // pred_check_branch
    %21 = sbr.rel (0) target = $region9
  $region8: #{conv_module_forward.1} parent=0 // pred_region
    _
  $region9: #{conv_module_forward.1} parent=0 // pred_fallthru
    _
  // Predicated region
  $region10: #{conv_module_forward.1} parent=0 // pred_check
    _
  $region11: #{conv_module_forward.1} parent=0 // pred_check_branch
    %23 = sbr.rel (0) target = $region13
  $region12: #{conv_module_forward.1} parent=0 // pred_region
    _
  $region13: #{conv_module_forward.1} parent=0 // pred_fallthru
    _
  // Predicated region
  $region14: #{conv_module_forward.1} parent=0 // pred_check
    _
  $region15: #{conv_module_forward.1} parent=0 // pred_check_branch
    %25 = sbr.rel (0) target = $region17
  $region16: #{conv_module_forward.1} parent=0 // pred_region
    _
  $region17: #{conv_module_forward.1} parent=0 // pred_fallthru
    _
  // Predicated region
  $region18: #{conv_module_forward.1} parent=0 // pred_check
    _
  $region19: #{conv_module_forward.1} parent=0 // pred_check_branch
    %27 = sbr.rel (0) target = $region21
  $region20: #{conv_module_forward.1} parent=0 // pred_region
    _
  $region21: #{conv_module_forward.1} parent=0 // pred_fallthru
    _
  // Predicated region
  $region22: #{conv_module_forward.1} parent=0 // pred_check
    _
  $region23: #{conv_module_forward.1} parent=0 // pred_check_branch
    %29 = sbr.rel (0) target = $region25
  $region24: #{conv_module_forward.1} parent=0 // pred_region
    _
  $region25: #{conv_module_forward.1} parent=0 // pred_fallthru
    _
  // Predicated region
  $region26: #{conv_module_forward.1} parent=0 // pred_check
    _
  $region27: #{conv_module_forward.1} parent=0 // pred_check_branch
    %31 = sbr.rel (0) target = $region29
  $region28: #{conv_module_forward.1} parent=0 // pred_region
    _
  $region29: #{conv_module_forward.1} parent=0 // pred_fallthru
    _
  // Predicated region
  $region30: #{conv_module_forward.1} parent=0 // pred_check
    _
  $region31: #{conv_module_forward.1} parent=0 // pred_check_branch
    %33 = sbr.rel (0) target = $region33
  $region32: #{conv_module_forward.1} parent=0 // pred_region
    _
  $region33: #{conv_module_forward.1} parent=0 // pred_fallthru
    _
  // Predicated region
  $region34: #{conv_module_forward.1} parent=0 // pred_check
    _
  $region35: #{conv_module_forward.1} parent=0 // pred_check_branch
    %35 = sbr.rel (0) target = $region37
  $region36: #{conv_module_forward.1} parent=0 // pred_region
    _
  $region37: #{conv_module_forward.1} parent=0 // pred_fallthru
    _
  // Predicated region
  $region38: #{conv_module_forward.1} parent=0 // pred_check
    _
  $region39: #{conv_module_forward.1} parent=0 // pred_check_branch
    %37 = sbr.rel (0) target = $region41
  $region40: #{conv_module_forward.1} parent=0 // pred_region
    _
  $region41: #{conv_module_forward.1} parent=0 // pred_fallthru
    _
  // Predicated region
  $region42: #{conv_module_forward.1} parent=0 // pred_check
    _
  $region43: #{conv_module_forward.1} parent=0 // pred_check_branch
    %39 = sbr.rel (0) target = $region45
  $region44: #{conv_module_forward.1} parent=0 // pred_region
    _
  $region45: #{conv_module_forward.1} parent=0 // pred_fallthru
    _
  // Predicated region
  $region46: #{conv_module_forward.1} parent=0 // pred_check
    _
  $region47: #{conv_module_forward.1} parent=0 // pred_check_branch
    %41 = sbr.rel (0) target = $region49
  $region48: #{conv_module_forward.1} parent=0 // pred_region
    _
  $region49: #{conv_module_forward.1} parent=0 // pred_fallthru
    _
  // Predicated region
  $region50: #{conv_module_forward.1} parent=0 // pred_check
    _
  $region51: #{conv_module_forward.1} parent=0 // pred_check_branch
    %43 = sbr.rel (0) target = $region53
  $region52: #{conv_module_forward.1} parent=0 // pred_region
    _
  $region53: #{conv_module_forward.1} parent=0 // pred_fallthru
    _
  %v45 = vld [vmem:[%s0] sm:$0xf]
  %v46 = vld [vmem:[%s0 + $0x4] sm:$0xf]
  %v47 = vld [vmem:[%s0 + $0x8] sm:$0xf]
  %v48 = vld [vmem:[%s0 + $0xc] sm:$0xf]
  %v49 = vld [vmem:[%s0 + $0x10] sm:$0xf]
  %v50 = vld [vmem:[%s0 + $0x14] sm:$0xf]
  %v51 = vld [vmem:[%s0 + $0x18] sm:$0xf]
  %v52 = vld [vmem:[%s0 + $0x1c] sm:$0xf]
  %v53 = vld [vmem:[%s0 + $0x20] sm:$0xf]
  %v54 = vld [vmem:[%s0 + $0x24] sm:$0xf]
  %v55 = vld [vmem:[%s0 + $0x28] sm:$0xf]
  %v56 = vld [vmem:[%s0 + $0x2c] sm:$0xf]
  %v57 = vld [vmem:[%s0 + $0x30] sm:$0xf]
  %v58 = vld [vmem:[%s0 + $0x34] sm:$0xf]
  %v59 = vld [vmem:[%s0 + $0x38] sm:$0xf]
  %v60 = vld [vmem:[%s0 + $0x3c] sm:$0xf]
  %v61 = vld [vmem:[%s0 + $0x40] sm:$0xf]
  %v62 = vld [vmem:[%s0 + $0x44] sm:$0xf]
  %v63 = vld [vmem:[%s0 + $0x48] sm:$0xf]
  %v64 = vld [vmem:[%s0 + $0x4c] sm:$0xf]
  %v65 = vld [vmem:[%s0 + $0x50] sm:$0xf]
  %v66 = vld [vmem:[%s0 + $0x54] sm:$0xf]
  %v67 = vld [vmem:[%s0 + $0x58] sm:$0xf]
  %v68 = vld [vmem:[%s0 + $0x5c] sm:$0xf]
  %v69 = vld [vmem:[%s0 + $0x60] sm:$0xf]
  %v70 = vld [vmem:[%s0 + $0x64] sm:$0xf]
  %v71 = vld [vmem:[%s0 + $0x68] sm:$0xf]
  %v72 = vld [vmem:[%s0 + $0x6c] sm:$0xf]
  %v73 = vld [vmem:[%s0 + $0x70] sm:$0xf]
  %v74 = vld [vmem:[%s0 + $0x74] sm:$0xf]
  %v75 = vld [vmem:[%s0 + $0x78] sm:$0xf]
  %v76 = vld [vmem:[%s0 + $0x7c] sm:$0xf]
  %v77 = vld [vmem:[%s0 + $0x80] sm:$0xf]
  %v78 = vld [vmem:[%s0 + $0x84] sm:$0xf]
  %v79 = vld [vmem:[%s0 + $0x88] sm:$0xf]
  %v80 = vld [vmem:[%s0 + $0x8c] sm:$0xf]
  %v81 = vld [vmem:[%s0 + $0x90] sm:$0xf]
  %v82 = vld [vmem:[%s0 + $0x94] sm:$0xf]
  %v83 = vld [vmem:[%s0 + $0x98] sm:$0xf]
  %v84 = vld [vmem:[%s0 + $0x9c] sm:$0xf]
  %v85 = vld [vmem:[%s0 + $0xa0] sm:$0xf]
  %v86 = vld [vmem:[%s0 + $0xa4] sm:$0xf]
  %v87 = vld [vmem:[%s0 + $0xa8] sm:$0xf]
  %v88 = vld [vmem:[%s0 + $0xac] sm:$0xf]
  %v89 = vld [vmem:[%s0 + $0xb0] sm:$0xf]
  %v90 = vld [vmem:[%s0 + $0xb4] sm:$0xf]
  %v91 = vld [vmem:[%s0 + $0xb8] sm:$0xf]
  %v92 = vld [vmem:[%s0 + $0xbc] sm:$0xf]
  %v93 = vld [vmem:[%s0 + $0xc0] sm:$0xf]
  %v94 = vld [vmem:[%s0 + $0xc4] sm:$0xf]
  %v95 = vld [vmem:[%s0 + $0xc8] sm:$0xf]
  %v96 = vld [vmem:[%s0 + $0xcc] sm:$0xf]
  %v97 = vld [vmem:[%s0 + $0xd0] sm:$0xf]
  %v98 = vld [vmem:[%s0 + $0xd4] sm:$0xf]
  %v99 = vld [vmem:[%s0 + $0xd8] sm:$0xf]
  %v100 = vld [vmem:[%s0 + $0xdc] sm:$0xf]
  %v101 = vld [vmem:[%s1] sm:$0xff]
  %v102 = vld [vmem:[%s1 + $0x8] sm:$0xff]
  %v103 = vld [vmem:[%s1 + $0x10] sm:$0xff]
  %v104 = vld [vmem:[%s1 + $0x18] sm:$0xff]
  %v105 = vld [vmem:[%s1 + $0x20] sm:$0xff]
  %v106 = vld [vmem:[%s1 + $0x28] sm:$0xff]
  %v107 = vld [vmem:[%s1 + $0x30] sm:$0xff]
  %v108 = vld [vmem:[%s1 + $0x38] sm:$0xff]
  %v109 = vld [vmem:[%s1 + $0x40] sm:$0xff]
  %v110 = vld [vmem:[%s1 + $0x48] sm:$0xff]
  %v111 = vld [vmem:[%s1 + $0x50] sm:$0xff]
  %v112 = vld [vmem:[%s1 + $0x58] sm:$0xff]
  %v113 = vld [vmem:[%s1 + $0x60] sm:$0xff]
  %v114 = vld [vmem:[%s1 + $0x68] sm:$0xff]
  %v115 = vld [vmem:[%s1 + $0x70] sm:$0xff]
  %v116 = vld [vmem:[%s1 + $0x78] sm:$0xff]
  %v117 = vld [vmem:[%s0 + $0xe0] sm:$0xf]
  %v118 = vld [vmem:[%s0 + $0xe4] sm:$0xf]
  %v119 = vld [vmem:[%s1 + $0x80] sm:$0xff]
  %v120 = vld [vmem:[%s1 + $0x88] sm:$0xff]
  %v121 = vld [vmem:[%s1 + $0x90] sm:$0xff]
  %v122 = vld [vmem:[%s1 + $0x98] sm:$0xff]
  %v123 = vld [vmem:[%s1 + $0xa0] sm:$0xff]
  %v124 = vld [vmem:[%s1 + $0xa8] sm:$0xff]
  %v125 = vld [vmem:[%s1 + $0xb0] sm:$0xff]
  %v126 = vld [vmem:[%s1 + $0xb8] sm:$0xff]
  %v127 = vld [vmem:[%s1 + $0xc0] sm:$0xff]
  %v128 = vld [vmem:[%s1 + $0xc8] sm:$0xff]
  %v129 = vld [vmem:[%s1 + $0xd0] sm:$0xff]
  %v130 = vld [vmem:[%s1 + $0xd8] sm:$0xff]
  %v131 = vld [vmem:[%s1 + $0xe0] sm:$0xff]
  %v132 = vld [vmem:[%s1 + $0xe8] sm:$0xff]
  %v133 = vld [vmem:[%s1 + $0xf0] sm:$0xff]
  %v134 = vld [vmem:[%s1 + $0xf8] sm:$0xff]
  %v191 = vunpack.c.l.b16 %v47
  %v192 = vunpack.c.l.b16 %v48
  %v193 = vunpack.c.l.b16 %v49
  %v194 = vunpack.c.l.b16 %v50
  %v195 = vunpack.c.l.b16 %v51
  %v196 = vunpack.c.l.b16 %v52
  %v197 = vunpack.c.l.b16 %v53
  %v198 = vunpack.c.l.b16 %v54
  %v199 = vunpack.c.l.b16 %v55
  %v200 = vunpack.c.l.b16 %v56
  %v201 = vunpack.c.l.b16 %v57
  %v202 = vunpack.c.l.b16 %v58
  %v203 = vunpack.c.l.b16 %v59
  %v204 = vunpack.c.l.b16 %v60
  %v205 = vunpack.c.l.b16 %v61
  %v206 = vunpack.c.l.b16 %v62
  %v207 = vunpack.c.l.b16 %v63
  %v208 = vunpack.c.l.b16 %v64
  %v209 = vunpack.c.l.b16 %v65
  %v210 = vunpack.c.l.b16 %v66
  %v211 = vunpack.c.l.b16 %v67
  %v212 = vunpack.c.l.b16 %v68
  %v213 = vunpack.c.l.b16 %v69
  %v214 = vunpack.c.l.b16 %v70
  %v215 = vunpack.c.l.b16 %v71
  %v216 = vunpack.c.l.b16 %v72
  %v217 = vunpack.c.l.b16 %v73
  %v218 = vunpack.c.l.b16 %v74
  %v219 = vunpack.c.l.b16 %v75
  %v220 = vunpack.c.l.b16 %v76
  %v221 = vunpack.c.l.b16 %v77
  %v222 = vunpack.c.l.b16 %v78
  %v223 = vunpack.c.l.b16 %v79
  %v224 = vunpack.c.l.b16 %v80
  %v225 = vunpack.c.l.b16 %v81
  %v226 = vunpack.c.l.b16 %v82
  %v227 = vunpack.c.l.b16 %v83
  %v228 = vunpack.c.l.b16 %v84
  %v229 = vunpack.c.l.b16 %v85
  %v230 = vunpack.c.l.b16 %v86
  %v231 = vunpack.c.l.b16 %v87
  %v232 = vunpack.c.l.b16 %v88
  %v233 = vunpack.c.l.b16 %v89
  %v234 = vunpack.c.l.b16 %v90
  %v235 = vunpack.c.l.b16 %v91
  %v236 = vunpack.c.l.b16 %v92
  %v237 = vunpack.c.l.b16 %v93
  %v238 = vunpack.c.l.b16 %v94
  %v239 = vunpack.c.l.b16 %v95
  %v240 = vunpack.c.l.b16 %v96
  %v241 = vunpack.c.l.b16 %v97
  %v242 = vunpack.c.l.b16 %v98
  %v243 = vunpack.c.l.b16 %v99
  %v244 = vunpack.c.l.b16 %v100
  %v245 = vunpack.c.l.b16 %v117
  %v246 = vunpack.c.l.b16 %v118
  %v247 = vpack.c.b16 %v192, %v191
  %v248 = vpack.c.b16 %v194, %v193
  %v249 = vpack.c.b16 %v196, %v195
  %v250 = vpack.c.b16 %v198, %v197
  %v251 = vpack.c.b16 %v200, %v199
  %v252 = vpack.c.b16 %v202, %v201
  %v253 = vpack.c.b16 %v204, %v203
  %v254 = vpack.c.b16 %v206, %v205
  %v255 = vpack.c.b16 %v208, %v207
  %v256 = vpack.c.b16 %v210, %v209
  %v257 = vpack.c.b16 %v212, %v211
  %v258 = vpack.c.b16 %v214, %v213
  %v259 = vpack.c.b16 %v216, %v215
  %v260 = vpack.c.b16 %v218, %v217
  %v261 = vpack.c.b16 %v220, %v219
  %v262 = vpack.c.b16 %v222, %v221
  %v263 = vpack.c.b16 %v224, %v223
  %v264 = vpack.c.b16 %v226, %v225
  %v265 = vpack.c.b16 %v228, %v227
  %v266 = vpack.c.b16 %v230, %v229
  %v267 = vpack.c.b16 %v232, %v231
  %v268 = vpack.c.b16 %v234, %v233
  %v269 = vpack.c.b16 %v236, %v235
  %v270 = vpack.c.b16 %v238, %v237
  %v271 = vpack.c.b16 %v240, %v239
  %v272 = vpack.c.b16 %v242, %v241
  %v273 = vpack.c.b16 %v244, %v243
  %v274 = vpack.c.b16 %v246, %v245
  %v319 = vunpack.c.l.b16 %v119
  %v320 = vunpack.c.h.b16 %v119
  %v321 = vunpack.c.l.b16 %v120
  %v322 = vunpack.c.h.b16 %v120
  %v323 = vunpack.c.l.b16 %v121
  %v324 = vunpack.c.h.b16 %v121
  %v325 = vunpack.c.l.b16 %v122
  %v326 = vunpack.c.h.b16 %v122
  %v327 = vunpack.c.l.b16 %v123
  %v328 = vunpack.c.h.b16 %v123
  %v329 = vunpack.c.l.b16 %v124
  %v330 = vunpack.c.h.b16 %v124
  %v331 = vunpack.c.l.b16 %v125
  %v332 = vunpack.c.h.b16 %v125
  %v333 = vunpack.c.l.b16 %v126
  %v334 = vunpack.c.h.b16 %v126
  %v335 = vunpack.c.l.b16 %v127
  %v336 = vunpack.c.h.b16 %v127
  %v337 = vunpack.c.l.b16 %v128
  %v338 = vunpack.c.h.b16 %v128
  %v339 = vunpack.c.l.b16 %v129
  %v340 = vunpack.c.h.b16 %v129
  %v341 = vunpack.c.l.b16 %v130
  %v342 = vunpack.c.h.b16 %v130
  %v343 = vunpack.c.l.b16 %v131
  %v344 = vunpack.c.h.b16 %v131
  %v345 = vunpack.c.l.b16 %v132
  %v346 = vunpack.c.h.b16 %v132
  %v347 = vunpack.c.l.b16 %v133
  %v348 = vunpack.c.h.b16 %v133
  %v349 = vunpack.c.l.b16 %v134
  %v350 = vunpack.c.h.b16 %v134
  %v351 = vpack.c.b16 %v321, %v319
  %v352 = vpack.c.b16 %v322, %v320
  %v353 = vpack.c.b16 %v325, %v323
  %v354 = vpack.c.b16 %v326, %v324
  %v355 = vpack.c.b16 %v329, %v327
  %v356 = vpack.c.b16 %v330, %v328
  %v357 = vpack.c.b16 %v333, %v331
  %v358 = vpack.c.b16 %v334, %v332
  %v359 = vpack.c.b16 %v337, %v335
  %v360 = vpack.c.b16 %v338, %v336
  %v361 = vpack.c.b16 %v341, %v339
  %v362 = vpack.c.b16 %v342, %v340
  %v363 = vpack.c.b16 %v345, %v343
  %v364 = vpack.c.b16 %v346, %v344
  %v365 = vpack.c.b16 %v349, %v347
  %v366 = vpack.c.b16 %v350, %v348
  %383 = vmatprep.subr.bf16.mxu0 %v352
  %384 = vmatpush1.bf16.msra.mxu0 %v351
  %385 = vmatprep.subr.bf16.mxu0 %v354
  %386 = vmatpush1.bf16.msra.mxu0 %v353
  %387 = vmatprep.subr.bf16.mxu0 %v356
  %388 = vmatpush1.bf16.msra.mxu0 %v355
  %389 = vmatprep.subr.bf16.mxu0 %v358
  %390 = vmatpush1.bf16.msra.mxu0 %v357
  %391 = vmatprep.subr.bf16.mxu0 %v360
  %392 = vmatpush1.bf16.msra.mxu0 %v359
  %393 = vmatprep.subr.bf16.mxu0 %v362
  %394 = vmatpush1.bf16.msra.mxu0 %v361
  %395 = vmatprep.subr.bf16.mxu0 %v364
  %396 = vmatpush1.bf16.msra.mxu0 %v363
  %397 = vmatprep.subr.bf16.mxu0 %v366
  %398 = vmatpush1.bf16.msra.mxu0 %v365
  %399 = vmatprep.subr.bf16.mxu0 0
  %400 = vmatpush1.bf16.msra.mxu0 0
  %401 = vmatprep.subr.bf16.mxu0 0
  %402 = vmatpush1.bf16.msra.mxu0 0
  %403 = vmatprep.subr.bf16.mxu0 0
  %404 = vmatpush1.bf16.msra.mxu0 0
  %405 = vmatprep.subr.bf16.mxu0 0
  %406 = vmatpush1.bf16.msra.mxu0 0
  %407 = vmatprep.subr.bf16.mxu0 0
  %408 = vmatpush1.bf16.msra.mxu0 0
  %409 = vmatprep.subr.bf16.mxu0 0
  %410 = vmatpush1.bf16.msra.mxu0 0
  %411 = vmatprep.subr.bf16.mxu0 0
  %412 = vmatpush1.bf16.msra.mxu0 0
  %413 = vmatprep.subr.bf16.mxu0 0
  %414 = vmatpush1.bf16.msra.mxu0 0
  %415 = vmatprep.mubr.bf16.mxu0 0
  %416 = vmatmul.mubr.bf16.gmra.mrb[0].mxu0 %v247
  %v417 = vpop.f32.mrb[0].mxu0
  %v418 = vadd.f32 0.0, %v417
  %v419 = vpop.f32.mrb[0].mxu0
  %v420 = vadd.f32 0.0, %v419
  %v421 = vpop.f32.mrb[0].mxu0
  %v422 = vadd.f32 0.0, %v421
  %v423 = vpop.f32.mrb[0].mxu0
  %v424 = vadd.f32 0.0, %v423
  %425 = vmatprep.mubr.bf16.mxu0 0
  %426 = vmatmul.mubr.bf16.gmra.mrb[0].mxu0 %v248
  %v427 = vpop.f32.mrb[0].mxu0
  %v428 = vadd.f32 0.0, %v427
  %v429 = vpop.f32.mrb[0].mxu0
  %v430 = vadd.f32 0.0, %v429
  %v431 = vpop.f32.mrb[0].mxu0
  %v432 = vadd.f32 0.0, %v431
  %v433 = vpop.f32.mrb[0].mxu0
  %v434 = vadd.f32 0.0, %v433
  %435 = vmatprep.mubr.bf16.mxu0 0
  %436 = vmatmul.mubr.bf16.gmra.mrb[0].mxu0 %v249
  %v437 = vpop.f32.mrb[0].mxu0
  %v438 = vadd.f32 0.0, %v437
  %v439 = vpop.f32.mrb[0].mxu0
  %v440 = vadd.f32 0.0, %v439
  %v441 = vpop.f32.mrb[0].mxu0
  %v442 = vadd.f32 0.0, %v441
  %v443 = vpop.f32.mrb[0].mxu0
  %v444 = vadd.f32 0.0, %v443
  %445 = vmatprep.mubr.bf16.mxu0 0
  %446 = vmatmul.mubr.bf16.gmra.mrb[0].mxu0 %v250
  %v447 = vpop.f32.mrb[0].mxu0
  %v448 = vadd.f32 0.0, %v447
  %v449 = vpop.f32.mrb[0].mxu0
  %v450 = vadd.f32 0.0, %v449
  %v451 = vpop.f32.mrb[0].mxu0
  %v452 = vadd.f32 0.0, %v451
  %v453 = vpop.f32.mrb[0].mxu0
  %v454 = vadd.f32 0.0, %v453
  %455 = vmatprep.mubr.bf16.mxu0 0
  %456 = vmatmul.mubr.bf16.gmra.mrb[0].mxu0 %v251
  %v457 = vpop.f32.mrb[0].mxu0
  %v458 = vadd.f32 0.0, %v457
  %v459 = vpop.f32.mrb[0].mxu0
  %v460 = vadd.f32 0.0, %v459
  %v461 = vpop.f32.mrb[0].mxu0
  %v462 = vadd.f32 0.0, %v461
  %v463 = vpop.f32.mrb[0].mxu0
  %v464 = vadd.f32 0.0, %v463
  %465 = vmatprep.mubr.bf16.mxu0 0
  %466 = vmatmul.mubr.bf16.gmra.mrb[0].mxu0 %v252
  %v467 = vpop.f32.mrb[0].mxu0
  %v468 = vadd.f32 0.0, %v467
  %v469 = vpop.f32.mrb[0].mxu0
  %v470 = vadd.f32 0.0, %v469
  %v471 = vpop.f32.mrb[0].mxu0
  %v472 = vadd.f32 0.0, %v471
  %v473 = vpop.f32.mrb[0].mxu0
  %v474 = vadd.f32 0.0, %v473
  %475 = vmatprep.mubr.bf16.mxu0 0
  %476 = vmatmul.mubr.bf16.gmra.mrb[0].mxu0 %v253
  %v477 = vpop.f32.mrb[0].mxu0
  %v478 = vadd.f32 0.0, %v477
  %v479 = vpop.f32.mrb[0].mxu0
  %v480 = vadd.f32 0.0, %v479
  %v481 = vpop.f32.mrb[0].mxu0
  %v482 = vadd.f32 0.0, %v481
  %v483 = vpop.f32.mrb[0].mxu0
  %v484 = vadd.f32 0.0, %v483
  %485 = vmatprep.mubr.bf16.mxu0 0
  %486 = vmatmul.mubr.bf16.gmra.mrb[0].mxu0 %v254
  %v487 = vpop.f32.mrb[0].mxu0
  %v488 = vadd.f32 0.0, %v487
  %v489 = vpop.f32.mrb[0].mxu0
  %v490 = vadd.f32 0.0, %v489
  %v491 = vpop.f32.mrb[0].mxu0
  %v492 = vadd.f32 0.0, %v491
  %v493 = vpop.f32.mrb[0].mxu0
  %v494 = vadd.f32 0.0, %v493
  %495 = vmatprep.mubr.bf16.mxu0 0
  %496 = vmatmul.mubr.bf16.gmra.mrb[0].mxu0 %v255
  %v497 = vpop.f32.mrb[0].mxu0
  %v498 = vadd.f32 0.0, %v497
  %v499 = vpop.f32.mrb[0].mxu0
  %v500 = vadd.f32 0.0, %v499
  %v501 = vpop.f32.mrb[0].mxu0
  %v502 = vadd.f32 0.0, %v501
  %v503 = vpop.f32.mrb[0].mxu0
  %v504 = vadd.f32 0.0, %v503
  %505 = vmatprep.mubr.bf16.mxu0 0
  %506 = vmatmul.mubr.bf16.gmra.mrb[0].mxu0 %v256
  %v507 = vpop.f32.mrb[0].mxu0
  %v508 = vadd.f32 0.0, %v507
  %v509 = vpop.f32.mrb[0].mxu0
  %v510 = vadd.f32 0.0, %v509
  %v511 = vpop.f32.mrb[0].mxu0
  %v512 = vadd.f32 0.0, %v511
  %v513 = vpop.f32.mrb[0].mxu0
  %v514 = vadd.f32 0.0, %v513
  %515 = vmatprep.mubr.bf16.mxu0 0
  %516 = vmatmul.mubr.bf16.gmra.mrb[0].mxu0 %v257
  %v517 = vpop.f32.mrb[0].mxu0
  %v518 = vadd.f32 0.0, %v517
  %v519 = vpop.f32.mrb[0].mxu0
  %v520 = vadd.f32 0.0, %v519
  %v521 = vpop.f32.mrb[0].mxu0
  %v522 = vadd.f32 0.0, %v521
  %v523 = vpop.f32.mrb[0].mxu0
  %v524 = vadd.f32 0.0, %v523
  %525 = vmatprep.mubr.bf16.mxu0 0
  %526 = vmatmul.mubr.bf16.gmra.mrb[0].mxu0 %v258
  %v527 = vpop.f32.mrb[0].mxu0
  %v528 = vadd.f32 0.0, %v527
  %v529 = vpop.f32.mrb[0].mxu0
  %v530 = vadd.f32 0.0, %v529
  %v531 = vpop.f32.mrb[0].mxu0
  %v532 = vadd.f32 0.0, %v531
  %v533 = vpop.f32.mrb[0].mxu0
  %v534 = vadd.f32 0.0, %v533
  %535 = vmatprep.mubr.bf16.mxu0 0
  %536 = vmatmul.mubr.bf16.gmra.mrb[0].mxu0 %v259
  %v537 = vpop.f32.mrb[0].mxu0
  %v538 = vadd.f32 0.0, %v537
  %v539 = vpop.f32.mrb[0].mxu0
  %v540 = vadd.f32 0.0, %v539
  %v541 = vpop.f32.mrb[0].mxu0
  %v542 = vadd.f32 0.0, %v541
  %v543 = vpop.f32.mrb[0].mxu0
  %v544 = vadd.f32 0.0, %v543
  %545 = vmatprep.mubr.bf16.mxu0 0
  %546 = vmatmul.mubr.bf16.gmra.mrb[0].mxu0 %v260
  %v547 = vpop.f32.mrb[0].mxu0
  %v548 = vadd.f32 0.0, %v547
  %v549 = vpop.f32.mrb[0].mxu0
  %v550 = vadd.f32 0.0, %v549
  %v551 = vpop.f32.mrb[0].mxu0
  %v552 = vadd.f32 0.0, %v551
  %v553 = vpop.f32.mrb[0].mxu0
  %v554 = vadd.f32 0.0, %v553
  %555 = vmatprep.mubr.bf16.mxu0 0
  %556 = vmatmul.mubr.bf16.gmra.mrb[0].mxu0 %v261
  %v557 = vpop.f32.mrb[0].mxu0
  %v558 = vadd.f32 0.0, %v557
  %v559 = vpop.f32.mrb[0].mxu0
  %v560 = vadd.f32 0.0, %v559
  %v561 = vpop.f32.mrb[0].mxu0
  %v562 = vadd.f32 0.0, %v561
  %v563 = vpop.f32.mrb[0].mxu0
  %v564 = vadd.f32 0.0, %v563
  %565 = vmatprep.mubr.bf16.mxu0 0
  %566 = vmatmul.mubr.bf16.gmra.mrb[0].mxu0 %v262
  %v567 = vpop.f32.mrb[0].mxu0
  %v568 = vadd.f32 0.0, %v567
  %v569 = vpop.f32.mrb[0].mxu0
  %v570 = vadd.f32 0.0, %v569
  %v571 = vpop.f32.mrb[0].mxu0
  %v572 = vadd.f32 0.0, %v571
  %v573 = vpop.f32.mrb[0].mxu0
  %v574 = vadd.f32 0.0, %v573
  %575 = vmatprep.mubr.bf16.mxu0 0
  %576 = vmatmul.mubr.bf16.gmra.mrb[0].mxu0 %v263
  %v577 = vpop.f32.mrb[0].mxu0
  %v578 = vadd.f32 0.0, %v577
  %v579 = vpop.f32.mrb[0].mxu0
  %v580 = vadd.f32 0.0, %v579
  %v581 = vpop.f32.mrb[0].mxu0
  %v582 = vadd.f32 0.0, %v581
  %v583 = vpop.f32.mrb[0].mxu0
  %v584 = vadd.f32 0.0, %v583
  %585 = vmatprep.mubr.bf16.mxu0 0
  %586 = vmatmul.mubr.bf16.gmra.mrb[0].mxu0 %v264
  %v587 = vpop.f32.mrb[0].mxu0
  %v588 = vadd.f32 0.0, %v587
  %v589 = vpop.f32.mrb[0].mxu0
  %v590 = vadd.f32 0.0, %v589
  %v591 = vpop.f32.mrb[0].mxu0
  %v592 = vadd.f32 0.0, %v591
  %v593 = vpop.f32.mrb[0].mxu0
  %v594 = vadd.f32 0.0, %v593
  %595 = vmatprep.mubr.bf16.mxu0 0
  %596 = vmatmul.mubr.bf16.gmra.mrb[0].mxu0 %v265
  %v597 = vpop.f32.mrb[0].mxu0
  %v598 = vadd.f32 0.0, %v597
  %v599 = vpop.f32.mrb[0].mxu0
  %v600 = vadd.f32 0.0, %v599
  %v601 = vpop.f32.mrb[0].mxu0
  %v602 = vadd.f32 0.0, %v601
  %v603 = vpop.f32.mrb[0].mxu0
  %v604 = vadd.f32 0.0, %v603
  %605 = vmatprep.mubr.bf16.mxu0 0
  %606 = vmatmul.mubr.bf16.gmra.mrb[0].mxu0 %v266
  %v607 = vpop.f32.mrb[0].mxu0
  %v608 = vadd.f32 0.0, %v607
  %v609 = vpop.f32.mrb[0].mxu0
  %v610 = vadd.f32 0.0, %v609
  %v611 = vpop.f32.mrb[0].mxu0
  %v612 = vadd.f32 0.0, %v611
  %v613 = vpop.f32.mrb[0].mxu0
  %v614 = vadd.f32 0.0, %v613
  %615 = vmatprep.mubr.bf16.mxu0 0
  %616 = vmatmul.mubr.bf16.gmra.mrb[0].mxu0 %v267
  %v617 = vpop.f32.mrb[0].mxu0
  %v618 = vadd.f32 0.0, %v617
  %v619 = vpop.f32.mrb[0].mxu0
  %v620 = vadd.f32 0.0, %v619
  %v621 = vpop.f32.mrb[0].mxu0
  %v622 = vadd.f32 0.0, %v621
  %v623 = vpop.f32.mrb[0].mxu0
  %v624 = vadd.f32 0.0, %v623
  %625 = vmatprep.mubr.bf16.mxu0 0
  %626 = vmatmul.mubr.bf16.gmra.mrb[0].mxu0 %v268
  %v627 = vpop.f32.mrb[0].mxu0
  %v628 = vadd.f32 0.0, %v627
  %v629 = vpop.f32.mrb[0].mxu0
  %v630 = vadd.f32 0.0, %v629
  %v631 = vpop.f32.mrb[0].mxu0
  %v632 = vadd.f32 0.0, %v631
  %v633 = vpop.f32.mrb[0].mxu0
  %v634 = vadd.f32 0.0, %v633
  %635 = vmatprep.mubr.bf16.mxu0 0
  %636 = vmatmul.mubr.bf16.gmra.mrb[0].mxu0 %v269
  %v637 = vpop.f32.mrb[0].mxu0
  %v638 = vadd.f32 0.0, %v637
  %v639 = vpop.f32.mrb[0].mxu0
  %v640 = vadd.f32 0.0, %v639
  %v641 = vpop.f32.mrb[0].mxu0
  %v642 = vadd.f32 0.0, %v641
  %v643 = vpop.f32.mrb[0].mxu0
  %v644 = vadd.f32 0.0, %v643
  %645 = vmatprep.mubr.bf16.mxu0 0
  %646 = vmatmul.mubr.bf16.gmra.mrb[0].mxu0 %v270
  %v647 = vpop.f32.mrb[0].mxu0
  %v648 = vadd.f32 0.0, %v647
  %v649 = vpop.f32.mrb[0].mxu0
  %v650 = vadd.f32 0.0, %v649
  %v651 = vpop.f32.mrb[0].mxu0
  %v652 = vadd.f32 0.0, %v651
  %v653 = vpop.f32.mrb[0].mxu0
  %v654 = vadd.f32 0.0, %v653
  %655 = vmatprep.mubr.bf16.mxu0 0
  %656 = vmatmul.mubr.bf16.gmra.mrb[0].mxu0 %v271
  %v657 = vpop.f32.mrb[0].mxu0
  %v658 = vadd.f32 0.0, %v657
  %v659 = vpop.f32.mrb[0].mxu0
  %v660 = vadd.f32 0.0, %v659
  %v661 = vpop.f32.mrb[0].mxu0
  %v662 = vadd.f32 0.0, %v661
  %v663 = vpop.f32.mrb[0].mxu0
  %v664 = vadd.f32 0.0, %v663
  %665 = vmatprep.mubr.bf16.mxu0 0
  %666 = vmatmul.mubr.bf16.gmra.mrb[0].mxu0 %v272
  %v667 = vpop.f32.mrb[0].mxu0
  %v668 = vadd.f32 0.0, %v667
  %v669 = vpop.f32.mrb[0].mxu0
  %v670 = vadd.f32 0.0, %v669
  %v671 = vpop.f32.mrb[0].mxu0
  %v672 = vadd.f32 0.0, %v671
  %v673 = vpop.f32.mrb[0].mxu0
  %v674 = vadd.f32 0.0, %v673
  %675 = vmatprep.mubr.bf16.mxu0 0
  %676 = vmatmul.mubr.bf16.gmra.mrb[0].mxu0 %v273
  %v677 = vpop.f32.mrb[0].mxu0
  %v678 = vadd.f32 0.0, %v677
  %v679 = vpop.f32.mrb[0].mxu0
  %v680 = vadd.f32 0.0, %v679
  %v681 = vpop.f32.mrb[0].mxu0
  %v682 = vadd.f32 0.0, %v681
  %v683 = vpop.f32.mrb[0].mxu0
  %v684 = vadd.f32 0.0, %v683
  %685 = vmatprep.mubr.bf16.mxu0 0
  %686 = vmatmul.mubr.bf16.gmra.mrb[0].mxu0 %v274
  %v687 = vpop.f32.mrb[0].mxu0
  %v688 = vadd.f32 0.0, %v687
  %v689 = vpop.f32.mrb[0].mxu0
  %v690 = vadd.f32 0.0, %v689
  %v691 = vpop.f32.mrb[0].mxu0
  %v692 = vadd.f32 0.0, %v691
  %v693 = vpop.f32.mrb[0].mxu0
  %v694 = vadd.f32 0.0, %v693
  %695 = vdwg.mxu0
  %v698 = vunpack.c.l.b16 %v45
  %v699 = vunpack.c.l.b16 %v46
  %v700 = vpack.c.b16 %v699, %v698
  %v718 = vunpack.c.l.b16 %v101
  %v719 = vunpack.c.h.b16 %v101
  %v720 = vunpack.c.l.b16 %v102
  %v721 = vunpack.c.h.b16 %v102
  %v722 = vunpack.c.l.b16 %v103
  %v723 = vunpack.c.h.b16 %v103
  %v724 = vunpack.c.l.b16 %v104
  %v725 = vunpack.c.h.b16 %v104
  %v726 = vunpack.c.l.b16 %v105
  %v727 = vunpack.c.h.b16 %v105
  %v728 = vunpack.c.l.b16 %v106
  %v729 = vunpack.c.h.b16 %v106
  %v730 = vunpack.c.l.b16 %v107
  %v731 = vunpack.c.h.b16 %v107
  %v732 = vunpack.c.l.b16 %v108
  %v733 = vunpack.c.h.b16 %v108
  %v734 = vunpack.c.l.b16 %v109
  %v735 = vunpack.c.h.b16 %v109
  %v736 = vunpack.c.l.b16 %v110
  %v737 = vunpack.c.h.b16 %v110
  %v738 = vunpack.c.l.b16 %v111
  %v739 = vunpack.c.h.b16 %v111
  %v740 = vunpack.c.l.b16 %v112
  %v741 = vunpack.c.h.b16 %v112
  %v742 = vunpack.c.l.b16 %v113
  %v743 = vunpack.c.h.b16 %v113
  %v744 = vunpack.c.l.b16 %v114
  %v745 = vunpack.c.h.b16 %v114
  %v746 = vunpack.c.l.b16 %v115
  %v747 = vunpack.c.h.b16 %v115
  %v748 = vunpack.c.l.b16 %v116
  %v749 = vunpack.c.h.b16 %v116
  %v750 = vpack.c.b16 %v720, %v718
  %v751 = vpack.c.b16 %v721, %v719
  %v752 = vpack.c.b16 %v724, %v722
  %v753 = vpack.c.b16 %v725, %v723
  %v754 = vpack.c.b16 %v728, %v726
  %v755 = vpack.c.b16 %v729, %v727
  %v756 = vpack.c.b16 %v732, %v730
  %v757 = vpack.c.b16 %v733, %v731
  %v758 = vpack.c.b16 %v736, %v734
  %v759 = vpack.c.b16 %v737, %v735
  %v760 = vpack.c.b16 %v740, %v738
  %v761 = vpack.c.b16 %v741, %v739
  %v762 = vpack.c.b16 %v744, %v742
  %v763 = vpack.c.b16 %v745, %v743
  %v764 = vpack.c.b16 %v748, %v746
  %v765 = vpack.c.b16 %v749, %v747
  %782 = vmatprep.subr.bf16.mxu0 %v751
  %783 = vmatpush1.bf16.msra.mxu0 %v750
  %784 = vmatprep.subr.bf16.mxu0 %v753
  %785 = vmatpush1.bf16.msra.mxu0 %v752
  %786 = vmatprep.subr.bf16.mxu0 %v755
  %787 = vmatpush1.bf16.msra.mxu0 %v754
  %788 = vmatprep.subr.bf16.mxu0 %v757
  %789 = vmatpush1.bf16.msra.mxu0 %v756
  %790 = vmatprep.subr.bf16.mxu0 %v759
  %791 = vmatpush1.bf16.msra.mxu0 %v758
  %792 = vmatprep.subr.bf16.mxu0 %v761
  %793 = vmatpush1.bf16.msra.mxu0 %v760
  %794 = vmatprep.subr.bf16.mxu0 %v763
  %795 = vmatpush1.bf16.msra.mxu0 %v762
  %796 = vmatprep.subr.bf16.mxu0 %v765
  %797 = vmatpush1.bf16.msra.mxu0 %v764
  %798 = vmatprep.subr.bf16.mxu0 0
  %799 = vmatpush1.bf16.msra.mxu0 0
  %800 = vmatprep.subr.bf16.mxu0 0
  %801 = vmatpush1.bf16.msra.mxu0 0
  %802 = vmatprep.subr.bf16.mxu0 0
  %803 = vmatpush1.bf16.msra.mxu0 0
  %804 = vmatprep.subr.bf16.mxu0 0
  %805 = vmatpush1.bf16.msra.mxu0 0
  %806 = vmatprep.subr.bf16.mxu0 0
  %807 = vmatpush1.bf16.msra.mxu0 0
  %808 = vmatprep.subr.bf16.mxu0 0
  %809 = vmatpush1.bf16.msra.mxu0 0
  %810 = vmatprep.subr.bf16.mxu0 0
  %811 = vmatpush1.bf16.msra.mxu0 0
  %812 = vmatprep.subr.bf16.mxu0 0
  %813 = vmatpush1.bf16.msra.mxu0 0
  %814 = vmatprep.mubr.bf16.mxu0 0
  %815 = vmatmul.mubr.bf16.gmra.mrb[0].mxu0 %v700
  %v816 = vpop.f32.mrb[0].mxu0
  %v817 = vadd.f32 %v418, %v816
  %v818 = vpop.f32.mrb[0].mxu0
  %v819 = vadd.f32 %v420, %v818
  %v820 = vpop.f32.mrb[0].mxu0
  %v821 = vadd.f32 %v422, %v820
  %v822 = vpop.f32.mrb[0].mxu0
  %v823 = vadd.f32 %v424, %v822
  %824 = vmatprep.mubr.bf16.mxu0 0
  %825 = vmatmul.mubr.bf16.gmra.mrb[0].mxu0 %v247
  %v826 = vpop.f32.mrb[0].mxu0
  %v827 = vadd.f32 %v428, %v826
  %v828 = vpop.f32.mrb[0].mxu0
  %v829 = vadd.f32 %v430, %v828
  %v830 = vpop.f32.mrb[0].mxu0
  %v831 = vadd.f32 %v432, %v830
  %v832 = vpop.f32.mrb[0].mxu0
  %v833 = vadd.f32 %v434, %v832
  %834 = vmatprep.mubr.bf16.mxu0 0
  %835 = vmatmul.mubr.bf16.gmra.mrb[0].mxu0 %v248
  %v836 = vpop.f32.mrb[0].mxu0
  %v837 = vadd.f32 %v438, %v836
  %v838 = vpop.f32.mrb[0].mxu0
  %v839 = vadd.f32 %v440, %v838
  %v840 = vpop.f32.mrb[0].mxu0
  %v841 = vadd.f32 %v442, %v840
  %v842 = vpop.f32.mrb[0].mxu0
  %v843 = vadd.f32 %v444, %v842
  %844 = vmatprep.mubr.bf16.mxu0 0
  %845 = vmatmul.mubr.bf16.gmra.mrb[0].mxu0 %v249
  %v846 = vpop.f32.mrb[0].mxu0
  %v847 = vadd.f32 %v448, %v846
  %v848 = vpop.f32.mrb[0].mxu0
  %v849 = vadd.f32 %v450, %v848
  %v850 = vpop.f32.mrb[0].mxu0
  %v851 = vadd.f32 %v452, %v850
  %v852 = vpop.f32.mrb[0].mxu0
  %v853 = vadd.f32 %v454, %v852
  %854 = vmatprep.mubr.bf16.mxu0 0
  %855 = vmatmul.mubr.bf16.gmra.mrb[0].mxu0 %v250
  %v856 = vpop.f32.mrb[0].mxu0
  %v857 = vadd.f32 %v458, %v856
  %v858 = vpop.f32.mrb[0].mxu0
  %v859 = vadd.f32 %v460, %v858
  %v860 = vpop.f32.mrb[0].mxu0
  %v861 = vadd.f32 %v462, %v860
  %v862 = vpop.f32.mrb[0].mxu0
  %v863 = vadd.f32 %v464, %v862
  %864 = vmatprep.mubr.bf16.mxu0 0
  %865 = vmatmul.mubr.bf16.gmra.mrb[0].mxu0 %v251
  %v866 = vpop.f32.mrb[0].mxu0
  %v867 = vadd.f32 %v468, %v866
  %v868 = vpop.f32.mrb[0].mxu0
  %v869 = vadd.f32 %v470, %v868
  %v870 = vpop.f32.mrb[0].mxu0
  %v871 = vadd.f32 %v472, %v870
  %v872 = vpop.f32.mrb[0].mxu0
  %v873 = vadd.f32 %v474, %v872
  %874 = vmatprep.mubr.bf16.mxu0 0
  %875 = vmatmul.mubr.bf16.gmra.mrb[0].mxu0 %v252
  %v876 = vpop.f32.mrb[0].mxu0
  %v877 = vadd.f32 %v478, %v876
  %v878 = vpop.f32.mrb[0].mxu0
  %v879 = vadd.f32 %v480, %v878
  %v880 = vpop.f32.mrb[0].mxu0
  %v881 = vadd.f32 %v482, %v880
  %v882 = vpop.f32.mrb[0].mxu0
  %v883 = vadd.f32 %v484, %v882
  %884 = vmatprep.mubr.bf16.mxu0 0
  %885 = vmatmul.mubr.bf16.gmra.mrb[0].mxu0 %v253
  %v886 = vpop.f32.mrb[0].mxu0
  %v887 = vadd.f32 %v488, %v886
  %v888 = vpop.f32.mrb[0].mxu0
  %v889 = vadd.f32 %v490, %v888
  %v890 = vpop.f32.mrb[0].mxu0
  %v891 = vadd.f32 %v492, %v890
  %v892 = vpop.f32.mrb[0].mxu0
  %v893 = vadd.f32 %v494, %v892
  %894 = vmatprep.mubr.bf16.mxu0 0
  %895 = vmatmul.mubr.bf16.gmra.mrb[0].mxu0 %v254
  %v896 = vpop.f32.mrb[0].mxu0
  %v897 = vadd.f32 %v498, %v896
  %v898 = vpop.f32.mrb[0].mxu0
  %v899 = vadd.f32 %v500, %v898
  %v900 = vpop.f32.mrb[0].mxu0
  %v901 = vadd.f32 %v502, %v900
  %v902 = vpop.f32.mrb[0].mxu0
  %v903 = vadd.f32 %v504, %v902
  %904 = vmatprep.mubr.bf16.mxu0 0
  %905 = vmatmul.mubr.bf16.gmra.mrb[0].mxu0 %v255
  %v906 = vpop.f32.mrb[0].mxu0
  %v907 = vadd.f32 %v508, %v906
  %v908 = vpop.f32.mrb[0].mxu0
  %v909 = vadd.f32 %v510, %v908
  %v910 = vpop.f32.mrb[0].mxu0
  %v911 = vadd.f32 %v512, %v910
  %v912 = vpop.f32.mrb[0].mxu0
  %v913 = vadd.f32 %v514, %v912
  %914 = vmatprep.mubr.bf16.mxu0 0
  %915 = vmatmul.mubr.bf16.gmra.mrb[0].mxu0 %v256
  %v916 = vpop.f32.mrb[0].mxu0
  %v917 = vadd.f32 %v518, %v916
  %v918 = vpop.f32.mrb[0].mxu0
  %v919 = vadd.f32 %v520, %v918
  %v920 = vpop.f32.mrb[0].mxu0
  %v921 = vadd.f32 %v522, %v920
  %v922 = vpop.f32.mrb[0].mxu0
  %v923 = vadd.f32 %v524, %v922
  %924 = vmatprep.mubr.bf16.mxu0 0
  %925 = vmatmul.mubr.bf16.gmra.mrb[0].mxu0 %v257
  %v926 = vpop.f32.mrb[0].mxu0
  %v927 = vadd.f32 %v528, %v926
  %v928 = vpop.f32.mrb[0].mxu0
  %v929 = vadd.f32 %v530, %v928
  %v930 = vpop.f32.mrb[0].mxu0
  %v931 = vadd.f32 %v532, %v930
  %v932 = vpop.f32.mrb[0].mxu0
  %v933 = vadd.f32 %v534, %v932
  %934 = vmatprep.mubr.bf16.mxu0 0
  %935 = vmatmul.mubr.bf16.gmra.mrb[0].mxu0 %v258
  %v936 = vpop.f32.mrb[0].mxu0
  %v937 = vadd.f32 %v538, %v936
  %v938 = vpop.f32.mrb[0].mxu0
  %v939 = vadd.f32 %v540, %v938
  %v940 = vpop.f32.mrb[0].mxu0
  %v941 = vadd.f32 %v542, %v940
  %v942 = vpop.f32.mrb[0].mxu0
  %v943 = vadd.f32 %v544, %v942
  %944 = vmatprep.mubr.bf16.mxu0 0
  %945 = vmatmul.mubr.bf16.gmra.mrb[0].mxu0 %v259
  %v946 = vpop.f32.mrb[0].mxu0
  %v947 = vadd.f32 %v548, %v946
  %v948 = vpop.f32.mrb[0].mxu0
  %v949 = vadd.f32 %v550, %v948
  %v950 = vpop.f32.mrb[0].mxu0
  %v951 = vadd.f32 %v552, %v950
  %v952 = vpop.f32.mrb[0].mxu0
  %v953 = vadd.f32 %v554, %v952
  %954 = vmatprep.mubr.bf16.mxu0 0
  %955 = vmatmul.mubr.bf16.gmra.mrb[0].mxu0 %v260
  %v956 = vpop.f32.mrb[0].mxu0
  %v957 = vadd.f32 %v558, %v956
  %v958 = vpop.f32.mrb[0].mxu0
  %v959 = vadd.f32 %v560, %v958
  %v960 = vpop.f32.mrb[0].mxu0
  %v961 = vadd.f32 %v562, %v960
  %v962 = vpop.f32.mrb[0].mxu0
  %v963 = vadd.f32 %v564, %v962
  %964 = vmatprep.mubr.bf16.mxu0 0
  %965 = vmatmul.mubr.bf16.gmra.mrb[0].mxu0 %v261
  %v966 = vpop.f32.mrb[0].mxu0
  %v967 = vadd.f32 %v568, %v966
  %v968 = vpop.f32.mrb[0].mxu0
  %v969 = vadd.f32 %v570, %v968
  %v970 = vpop.f32.mrb[0].mxu0
  %v971 = vadd.f32 %v572, %v970
  %v972 = vpop.f32.mrb[0].mxu0
  %v973 = vadd.f32 %v574, %v972
  %974 = vmatprep.mubr.bf16.mxu0 0
  %975 = vmatmul.mubr.bf16.gmra.mrb[0].mxu0 %v262
  %v976 = vpop.f32.mrb[0].mxu0
  %v977 = vadd.f32 %v578, %v976
  %v978 = vpop.f32.mrb[0].mxu0
  %v979 = vadd.f32 %v580, %v978
  %v980 = vpop.f32.mrb[0].mxu0
  %v981 = vadd.f32 %v582, %v980
  %v982 = vpop.f32.mrb[0].mxu0
  %v983 = vadd.f32 %v584, %v982
  %984 = vmatprep.mubr.bf16.mxu0 0
  %985 = vmatmul.mubr.bf16.gmra.mrb[0].mxu0 %v263
  %v986 = vpop.f32.mrb[0].mxu0
  %v987 = vadd.f32 %v588, %v986
  %v988 = vpop.f32.mrb[0].mxu0
  %v989 = vadd.f32 %v590, %v988
  %v990 = vpop.f32.mrb[0].mxu0
  %v991 = vadd.f32 %v592, %v990
  %v992 = vpop.f32.mrb[0].mxu0
  %v993 = vadd.f32 %v594, %v992
  %994 = vmatprep.mubr.bf16.mxu0 0
  %995 = vmatmul.mubr.bf16.gmra.mrb[0].mxu0 %v264
  %v996 = vpop.f32.mrb[0].mxu0
  %v997 = vadd.f32 %v598, %v996
  %v998 = vpop.f32.mrb[0].mxu0
  %v999 = vadd.f32 %v600, %v998
  %v1000 = vpop.f32.mrb[0].mxu0
  %v1001 = vadd.f32 %v602, %v1000
  %v1002 = vpop.f32.mrb[0].mxu0
  %v1003 = vadd.f32 %v604, %v1002
  %1004 = vmatprep.mubr.bf16.mxu0 0
  %1005 = vmatmul.mubr.bf16.gmra.mrb[0].mxu0 %v265
  %v1006 = vpop.f32.mrb[0].mxu0
  %v1007 = vadd.f32 %v608, %v1006
  %v1008 = vpop.f32.mrb[0].mxu0
  %v1009 = vadd.f32 %v610, %v1008
  %v1010 = vpop.f32.mrb[0].mxu0
  %v1011 = vadd.f32 %v612, %v1010
  %v1012 = vpop.f32.mrb[0].mxu0
  %v1013 = vadd.f32 %v614, %v1012
  %1014 = vmatprep.mubr.bf16.mxu0 0
  %1015 = vmatmul.mubr.bf16.gmra.mrb[0].mxu0 %v266
  %v1016 = vpop.f32.mrb[0].mxu0
  %v1017 = vadd.f32 %v618, %v1016
  %v1018 = vpop.f32.mrb[0].mxu0
  %v1019 = vadd.f32 %v620, %v1018
  %v1020 = vpop.f32.mrb[0].mxu0
  %v1021 = vadd.f32 %v622, %v1020
  %v1022 = vpop.f32.mrb[0].mxu0
  %v1023 = vadd.f32 %v624, %v1022
  %1024 = vmatprep.mubr.bf16.mxu0 0
  %1025 = vmatmul.mubr.bf16.gmra.mrb[0].mxu0 %v267
  %v1026 = vpop.f32.mrb[0].mxu0
  %v1027 = vadd.f32 %v628, %v1026
  %v1028 = vpop.f32.mrb[0].mxu0
  %v1029 = vadd.f32 %v630, %v1028
  %v1030 = vpop.f32.mrb[0].mxu0
  %v1031 = vadd.f32 %v632, %v1030
  %v1032 = vpop.f32.mrb[0].mxu0
  %v1033 = vadd.f32 %v634, %v1032
  %1034 = vmatprep.mubr.bf16.mxu0 0
  %1035 = vmatmul.mubr.bf16.gmra.mrb[0].mxu0 %v268
  %v1036 = vpop.f32.mrb[0].mxu0
  %v1037 = vadd.f32 %v638, %v1036
  %v1038 = vpop.f32.mrb[0].mxu0
  %v1039 = vadd.f32 %v640, %v1038
  %v1040 = vpop.f32.mrb[0].mxu0
  %v1041 = vadd.f32 %v642, %v1040
  %v1042 = vpop.f32.mrb[0].mxu0
  %v1043 = vadd.f32 %v644, %v1042
  %1044 = vmatprep.mubr.bf16.mxu0 0
  %1045 = vmatmul.mubr.bf16.gmra.mrb[0].mxu0 %v269
  %v1046 = vpop.f32.mrb[0].mxu0
  %v1047 = vadd.f32 %v648, %v1046
  %v1048 = vpop.f32.mrb[0].mxu0
  %v1049 = vadd.f32 %v650, %v1048
  %v1050 = vpop.f32.mrb[0].mxu0
  %v1051 = vadd.f32 %v652, %v1050
  %v1052 = vpop.f32.mrb[0].mxu0
  %v1053 = vadd.f32 %v654, %v1052
  %1054 = vmatprep.mubr.bf16.mxu0 0
  %1055 = vmatmul.mubr.bf16.gmra.mrb[0].mxu0 %v270
  %v1056 = vpop.f32.mrb[0].mxu0
  %v1057 = vadd.f32 %v658, %v1056
  %v1058 = vpop.f32.mrb[0].mxu0
  %v1059 = vadd.f32 %v660, %v1058
  %v1060 = vpop.f32.mrb[0].mxu0
  %v1061 = vadd.f32 %v662, %v1060
  %v1062 = vpop.f32.mrb[0].mxu0
  %v1063 = vadd.f32 %v664, %v1062
  %1064 = vmatprep.mubr.bf16.mxu0 0
  %1065 = vmatmul.mubr.bf16.gmra.mrb[0].mxu0 %v271
  %v1066 = vpop.f32.mrb[0].mxu0
  %v1067 = vadd.f32 %v668, %v1066
  %v1068 = vpop.f32.mrb[0].mxu0
  %v1069 = vadd.f32 %v670, %v1068
  %v1070 = vpop.f32.mrb[0].mxu0
  %v1071 = vadd.f32 %v672, %v1070
  %v1072 = vpop.f32.mrb[0].mxu0
  %v1073 = vadd.f32 %v674, %v1072
  %1074 = vmatprep.mubr.bf16.mxu0 0
  %1075 = vmatmul.mubr.bf16.gmra.mrb[0].mxu0 %v272
  %v1076 = vpop.f32.mrb[0].mxu0
  %v1077 = vadd.f32 %v678, %v1076
  %v1078 = vpop.f32.mrb[0].mxu0
  %v1079 = vadd.f32 %v680, %v1078
  %v1080 = vpop.f32.mrb[0].mxu0
  %v1081 = vadd.f32 %v682, %v1080
  %v1082 = vpop.f32.mrb[0].mxu0
  %v1083 = vadd.f32 %v684, %v1082
  %1084 = vmatprep.mubr.bf16.mxu0 0
  %1085 = vmatmul.mubr.bf16.gmra.mrb[0].mxu0 %v273
  %v1086 = vpop.f32.mrb[0].mxu0
  %v1087 = vadd.f32 %v688, %v1086
  %v1088 = vpop.f32.mrb[0].mxu0
  %v1089 = vadd.f32 %v690, %v1088
  %v1090 = vpop.f32.mrb[0].mxu0
  %v1091 = vadd.f32 %v692, %v1090
  %v1092 = vpop.f32.mrb[0].mxu0
  %v1093 = vadd.f32 %v694, %v1092
  %1094 = vdwg.mxu0
  %v1095 = vld [vmem:[%s0 + $0x10] sm:$0xf]
  %v1096 = vld [vmem:[%s0 + $0x14] sm:$0xf]
  %v1097 = vld [vmem:[%s0 + $0x18] sm:$0xf]
  %v1098 = vld [vmem:[%s0 + $0x1c] sm:$0xf]
  %v1099 = vld [vmem:[%s0 + $0x20] sm:$0xf]
  %v1100 = vld [vmem:[%s0 + $0x24] sm:$0xf]
  %v1101 = vld [vmem:[%s0 + $0x28] sm:$0xf]
  %v1102 = vld [vmem:[%s0 + $0x2c] sm:$0xf]
  %v1103 = vld [vmem:[%s0 + $0x30] sm:$0xf]
  %v1104 = vld [vmem:[%s0 + $0x34] sm:$0xf]
  %v1105 = vld [vmem:[%s0 + $0x38] sm:$0xf]
  %v1106 = vld [vmem:[%s0 + $0x3c] sm:$0xf]
  %v1107 = vld [vmem:[%s0 + $0x40] sm:$0xf]
  %v1108 = vld [vmem:[%s0 + $0x44] sm:$0xf]
  %v1109 = vld [vmem:[%s0 + $0x48] sm:$0xf]
  %v1110 = vld [vmem:[%s0 + $0x4c] sm:$0xf]
  %v1111 = vld [vmem:[%s0 + $0x50] sm:$0xf]
  %v1112 = vld [vmem:[%s0 + $0x54] sm:$0xf]
  %v1113 = vld [vmem:[%s0 + $0x58] sm:$0xf]
  %v1114 = vld [vmem:[%s0 + $0x5c] sm:$0xf]
  %v1115 = vld [vmem:[%s0 + $0x60] sm:$0xf]
  %v1116 = vld [vmem:[%s0 + $0x64] sm:$0xf]
  %v1117 = vld [vmem:[%s0 + $0x68] sm:$0xf]
  %v1118 = vld [vmem:[%s0 + $0x6c] sm:$0xf]
  %v1119 = vld [vmem:[%s0 + $0x70] sm:$0xf]
  %v1120 = vld [vmem:[%s0 + $0x74] sm:$0xf]
  %v1121 = vld [vmem:[%s0 + $0x78] sm:$0xf]
  %v1122 = vld [vmem:[%s0 + $0x7c] sm:$0xf]
  %v1123 = vld [vmem:[%s0 + $0x80] sm:$0xf]
  %v1124 = vld [vmem:[%s0 + $0x84] sm:$0xf]
  %v1125 = vld [vmem:[%s0 + $0x88] sm:$0xf]
  %v1126 = vld [vmem:[%s0 + $0x8c] sm:$0xf]
  %v1127 = vld [vmem:[%s0 + $0x90] sm:$0xf]
  %v1128 = vld [vmem:[%s0 + $0x94] sm:$0xf]
  %v1129 = vld [vmem:[%s0 + $0x98] sm:$0xf]
  %v1130 = vld [vmem:[%s0 + $0x9c] sm:$0xf]
  %v1131 = vld [vmem:[%s0 + $0xa0] sm:$0xf]
  %v1132 = vld [vmem:[%s0 + $0xa4] sm:$0xf]
  %v1133 = vld [vmem:[%s0 + $0xa8] sm:$0xf]
  %v1134 = vld [vmem:[%s0 + $0xac] sm:$0xf]
  %v1135 = vld [vmem:[%s0 + $0xb0] sm:$0xf]
  %v1136 = vld [vmem:[%s0 + $0xb4] sm:$0xf]
  %v1137 = vld [vmem:[%s0 + $0xb8] sm:$0xf]
  %v1138 = vld [vmem:[%s0 + $0xbc] sm:$0xf]
  %v1139 = vld [vmem:[%s0 + $0xc0] sm:$0xf]
  %v1140 = vld [vmem:[%s0 + $0xc4] sm:$0xf]
  %v1141 = vld [vmem:[%s0 + $0xc8] sm:$0xf]
  %v1142 = vld [vmem:[%s0 + $0xcc] sm:$0xf]
  %v1143 = vld [vmem:[%s0 + $0xd0] sm:$0xf]
  %v1144 = vld [vmem:[%s0 + $0xd4] sm:$0xf]
  %v1145 = vld [vmem:[%s0 + $0xd8] sm:$0xf]
  %v1146 = vld [vmem:[%s0 + $0xdc] sm:$0xf]
  %v1147 = vld [vmem:[%s0 + $0xe0] sm:$0xf]
  %v1148 = vld [vmem:[%s0 + $0xe4] sm:$0xf]
  %v1149 = vld [vmem:[%s0 + $0xe8] sm:$0xf]
  %v1150 = vld [vmem:[%s0 + $0xec] sm:$0xf]
  %v1151 = vld [vmem:[%s1 + $0x100] sm:$0xff]
  %v1152 = vld [vmem:[%s1 + $0x108] sm:$0xff]
  %v1153 = vld [vmem:[%s1 + $0x110] sm:$0xff]
  %v1154 = vld [vmem:[%s1 + $0x118] sm:$0xff]
  %v1155 = vld [vmem:[%s1 + $0x120] sm:$0xff]
  %v1156 = vld [vmem:[%s1 + $0x128] sm:$0xff]
  %v1157 = vld [vmem:[%s1 + $0x130] sm:$0xff]
  %v1158 = vld [vmem:[%s1 + $0x138] sm:$0xff]
  %v1159 = vld [vmem:[%s1 + $0x140] sm:$0xff]
  %v1160 = vld [vmem:[%s1 + $0x148] sm:$0xff]
  %v1161 = vld [vmem:[%s1 + $0x150] sm:$0xff]
  %v1162 = vld [vmem:[%s1 + $0x158] sm:$0xff]
  %v1163 = vld [vmem:[%s1 + $0x160] sm:$0xff]
  %v1164 = vld [vmem:[%s1 + $0x168] sm:$0xff]
  %v1165 = vld [vmem:[%s1 + $0x170] sm:$0xff]
  %v1166 = vld [vmem:[%s1 + $0x178] sm:$0xff]
  %v1223 = vunpack.c.l.b16 %v1095
  %v1224 = vunpack.c.l.b16 %v1096
  %v1225 = vunpack.c.l.b16 %v1097
  %v1226 = vunpack.c.l.b16 %v1098
  %v1227 = vunpack.c.l.b16 %v1099
  %v1228 = vunpack.c.l.b16 %v1100
  %v1229 = vunpack.c.l.b16 %v1101
  %v1230 = vunpack.c.l.b16 %v1102
  %v1231 = vunpack.c.l.b16 %v1103
  %v1232 = vunpack.c.l.b16 %v1104
  %v1233 = vunpack.c.l.b16 %v1105
  %v1234 = vunpack.c.l.b16 %v1106
  %v1235 = vunpack.c.l.b16 %v1107
  %v1236 = vunpack.c.l.b16 %v1108
  %v1237 = vunpack.c.l.b16 %v1109
  %v1238 = vunpack.c.l.b16 %v1110
  %v1239 = vunpack.c.l.b16 %v1111
  %v1240 = vunpack.c.l.b16 %v1112
  %v1241 = vunpack.c.l.b16 %v1113
  %v1242 = vunpack.c.l.b16 %v1114
  %v1243 = vunpack.c.l.b16 %v1115
  %v1244 = vunpack.c.l.b16 %v1116
  %v1245 = vunpack.c.l.b16 %v1117
  %v1246 = vunpack.c.l.b16 %v1118
  %v1247 = vunpack.c.l.b16 %v1119
  %v1248 = vunpack.c.l.b16 %v1120
  %v1249 = vunpack.c.l.b16 %v1121
  %v1250 = vunpack.c.l.b16 %v1122
  %v1251 = vunpack.c.l.b16 %v1123
  %v1252 = vunpack.c.l.b16 %v1124
  %v1253 = vunpack.c.l.b16 %v1125
  %v1254 = vunpack.c.l.b16 %v1126
  %v1255 = vunpack.c.l.b16 %v1127
  %v1256 = vunpack.c.l.b16 %v1128
  %v1257 = vunpack.c.l.b16 %v1129
  %v1258 = vunpack.c.l.b16 %v1130
  %v1259 = vunpack.c.l.b16 %v1131
  %v1260 = vunpack.c.l.b16 %v1132
  %v1261 = vunpack.c.l.b16 %v1133
  %v1262 = vunpack.c.l.b16 %v1134
  %v1263 = vunpack.c.l.b16 %v1135
  %v1264 = vunpack.c.l.b16 %v1136
  %v1265 = vunpack.c.l.b16 %v1137
  %v1266 = vunpack.c.l.b16 %v1138
  %v1267 = vunpack.c.l.b16 %v1139
  %v1268 = vunpack.c.l.b16 %v1140
  %v1269 = vunpack.c.l.b16 %v1141
  %v1270 = vunpack.c.l.b16 %v1142
  %v1271 = vunpack.c.l.b16 %v1143
  %v1272 = vunpack.c.l.b16 %v1144
  %v1273 = vunpack.c.l.b16 %v1145
  %v1274 = vunpack.c.l.b16 %v1146
  %v1275 = vunpack.c.l.b16 %v1147
  %v1276 = vunpack.c.l.b16 %v1148
  %v1277 = vunpack.c.l.b16 %v1149
  %v1278 = vunpack.c.l.b16 %v1150
  %v1279 = vpack.c.b16 %v1224, %v1223
  %v1280 = vpack.c.b16 %v1226, %v1225
  %v1281 = vpack.c.b16 %v1228, %v1227
  %v1282 = vpack.c.b16 %v1230, %v1229
  %v1283 = vpack.c.b16 %v1232, %v1231
  %v1284 = vpack.c.b16 %v1234, %v1233
  %v1285 = vpack.c.b16 %v1236, %v1235
  %v1286 = vpack.c.b16 %v1238, %v1237
  %v1287 = vpack.c.b16 %v1240, %v1239
  %v1288 = vpack.c.b16 %v1242, %v1241
  %v1289 = vpack.c.b16 %v1244, %v1243
  %v1290 = vpack.c.b16 %v1246, %v1245
  %v1291 = vpack.c.b16 %v1248, %v1247
  %v1292 = vpack.c.b16 %v1250, %v1249
  %v1293 = vpack.c.b16 %v1252, %v1251
  %v1294 = vpack.c.b16 %v1254, %v1253
  %v1295 = vpack.c.b16 %v1256, %v1255
  %v1296 = vpack.c.b16 %v1258, %v1257
  %v1297 = vpack.c.b16 %v1260, %v1259
  %v1298 = vpack.c.b16 %v1262, %v1261
  %v1299 = vpack.c.b16 %v1264, %v1263
  %v1300 = vpack.c.b16 %v1266, %v1265
  %v1301 = vpack.c.b16 %v1268, %v1267
  %v1302 = vpack.c.b16 %v1270, %v1269
  %v1303 = vpack.c.b16 %v1272, %v1271
  %v1304 = vpack.c.b16 %v1274, %v1273
  %v1305 = vpack.c.b16 %v1276, %v1275
  %v1306 = vpack.c.b16 %v1278, %v1277
  %v1351 = vunpack.c.l.b16 %v1151
  %v1352 = vunpack.c.h.b16 %v1151
  %v1353 = vunpack.c.l.b16 %v1152
  %v1354 = vunpack.c.h.b16 %v1152
  %v1355 = vunpack.c.l.b16 %v1153
  %v1356 = vunpack.c.h.b16 %v1153
  %v1357 = vunpack.c.l.b16 %v1154
  %v1358 = vunpack.c.h.b16 %v1154
  %v1359 = vunpack.c.l.b16 %v1155
  %v1360 = vunpack.c.h.b16 %v1155
  %v1361 = vunpack.c.l.b16 %v1156
  %v1362 = vunpack.c.h.b16 %v1156
  %v1363 = vunpack.c.l.b16 %v1157
  %v1364 = vunpack.c.h.b16 %v1157
  %v1365 = vunpack.c.l.b16 %v1158
  %v1366 = vunpack.c.h.b16 %v1158
  %v1367 = vunpack.c.l.b16 %v1159
  %v1368 = vunpack.c.h.b16 %v1159
  %v1369 = vunpack.c.l.b16 %v1160
  %v1370 = vunpack.c.h.b16 %v1160
  %v1371 = vunpack.c.l.b16 %v1161
  %v1372 = vunpack.c.h.b16 %v1161
  %v1373 = vunpack.c.l.b16 %v1162
  %v1374 = vunpack.c.h.b16 %v1162
  %v1375 = vunpack.c.l.b16 %v1163
  %v1376 = vunpack.c.h.b16 %v1163
  %v1377 = vunpack.c.l.b16 %v1164
  %v1378 = vunpack.c.h.b16 %v1164
  %v1379 = vunpack.c.l.b16 %v1165
  %v1380 = vunpack.c.h.b16 %v1165
  %v1381 = vunpack.c.l.b16 %v1166
  %v1382 = vunpack.c.h.b16 %v1166
  %v1383 = vpack.c.b16 %v1353, %v1351
  %v1384 = vpack.c.b16 %v1354, %v1352
  %v1385 = vpack.c.b16 %v1357, %v1355
  %v1386 = vpack.c.b16 %v1358, %v1356
  %v1387 = vpack.c.b16 %v1361, %v1359
  %v1388 = vpack.c.b16 %v1362, %v1360
  %v1389 = vpack.c.b16 %v1365, %v1363
  %v1390 = vpack.c.b16 %v1366, %v1364
  %v1391 = vpack.c.b16 %v1369, %v1367
  %v1392 = vpack.c.b16 %v1370, %v1368
  %v1393 = vpack.c.b16 %v1373, %v1371
  %v1394 = vpack.c.b16 %v1374, %v1372
  %v1395 = vpack.c.b16 %v1377, %v1375
  %v1396 = vpack.c.b16 %v1378, %v1376
  %v1397 = vpack.c.b16 %v1381, %v1379
  %v1398 = vpack.c.b16 %v1382, %v1380
  %1415 = vmatprep.subr.bf16.mxu0 %v1384
  %1416 = vmatpush1.bf16.msra.mxu0 %v1383
  %1417 = vmatprep.subr.bf16.mxu0 %v1386
  %1418 = vmatpush1.bf16.msra.mxu0 %v1385
  %1419 = vmatprep.subr.bf16.mxu0 %v1388
  %1420 = vmatpush1.bf16.msra.mxu0 %v1387
  %1421 = vmatprep.subr.bf16.mxu0 %v1390
  %1422 = vmatpush1.bf16.msra.mxu0 %v1389
  %1423 = vmatprep.subr.bf16.mxu0 %v1392
  %1424 = vmatpush1.bf16.msra.mxu0 %v1391
  %1425 = vmatprep.subr.bf16.mxu0 %v1394
  %1426 = vmatpush1.bf16.msra.mxu0 %v1393
  %1427 = vmatprep.subr.bf16.mxu0 %v1396
  %1428 = vmatpush1.bf16.msra.mxu0 %v1395
  %1429 = vmatprep.subr.bf16.mxu0 %v1398
  %1430 = vmatpush1.bf16.msra.mxu0 %v1397
  %1431 = vmatprep.subr.bf16.mxu0 0
  %1432 = vmatpush1.bf16.msra.mxu0 0
  %1433 = vmatprep.subr.bf16.mxu0 0
  %1434 = vmatpush1.bf16.msra.mxu0 0
  %1435 = vmatprep.subr.bf16.mxu0 0
  %1436 = vmatpush1.bf16.msra.mxu0 0
  %1437 = vmatprep.subr.bf16.mxu0 0
  %1438 = vmatpush1.bf16.msra.mxu0 0
  %1439 = vmatprep.subr.bf16.mxu0 0
  %1440 = vmatpush1.bf16.msra.mxu0 0
  %1441 = vmatprep.subr.bf16.mxu0 0
  %1442 = vmatpush1.bf16.msra.mxu0 0
  %1443 = vmatprep.subr.bf16.mxu0 0
  %1444 = vmatpush1.bf16.msra.mxu0 0
  %1445 = vmatprep.subr.bf16.mxu0 0
  %1446 = vmatpush1.bf16.msra.mxu0 0
  %1447 = vmatprep.mubr.bf16.mxu0 0
  %1448 = vmatmul.mubr.bf16.gmra.mrb[0].mxu0 %v1279
  %v1449 = vpop.f32.mrb[0].mxu0
  %v1450 = vadd.f32 0.0, %v1449
  %v1451 = vpop.f32.mrb[0].mxu0
  %v1452 = vadd.f32 0.0, %v1451
  %v1453 = vpop.f32.mrb[0].mxu0
  %v1454 = vadd.f32 0.0, %v1453
  %v1455 = vpop.f32.mrb[0].mxu0
  %v1456 = vadd.f32 0.0, %v1455
  %1457 = vmatprep.mubr.bf16.mxu0 0
  %1458 = vmatmul.mubr.bf16.gmra.mrb[0].mxu0 %v1280
  %v1459 = vpop.f32.mrb[0].mxu0
  %v1460 = vadd.f32 0.0, %v1459
  %v1461 = vpop.f32.mrb[0].mxu0
  %v1462 = vadd.f32 0.0, %v1461
  %v1463 = vpop.f32.mrb[0].mxu0
  %v1464 = vadd.f32 0.0, %v1463
  %v1465 = vpop.f32.mrb[0].mxu0
  %v1466 = vadd.f32 0.0, %v1465
  %1467 = vmatprep.mubr.bf16.mxu0 0
  %1468 = vmatmul.mubr.bf16.gmra.mrb[0].mxu0 %v1281
  %v1469 = vpop.f32.mrb[0].mxu0
  %v1470 = vadd.f32 0.0, %v1469
  %v1471 = vpop.f32.mrb[0].mxu0
  %v1472 = vadd.f32 0.0, %v1471
  %v1473 = vpop.f32.mrb[0].mxu0
  %v1474 = vadd.f32 0.0, %v1473
  %v1475 = vpop.f32.mrb[0].mxu0
  %v1476 = vadd.f32 0.0, %v1475
  %1477 = vmatprep.mubr.bf16.mxu0 0
  %1478 = vmatmul.mubr.bf16.gmra.mrb[0].mxu0 %v1282
  %v1479 = vpop.f32.mrb[0].mxu0
  %v1480 = vadd.f32 0.0, %v1479
  %v1481 = vpop.f32.mrb[0].mxu0
  %v1482 = vadd.f32 0.0, %v1481
  %v1483 = vpop.f32.mrb[0].mxu0
  %v1484 = vadd.f32 0.0, %v1483
  %v1485 = vpop.f32.mrb[0].mxu0
  %v1486 = vadd.f32 0.0, %v1485
  %1487 = vmatprep.mubr.bf16.mxu0 0
  %1488 = vmatmul.mubr.bf16.gmra.mrb[0].mxu0 %v1283
  %v1489 = vpop.f32.mrb[0].mxu0
  %v1490 = vadd.f32 0.0, %v1489
  %v1491 = vpop.f32.mrb[0].mxu0
  %v1492 = vadd.f32 0.0, %v1491
  %v1493 = vpop.f32.mrb[0].mxu0
  %v1494 = vadd.f32 0.0, %v1493
  %v1495 = vpop.f32.mrb[0].mxu0
  %v1496 = vadd.f32 0.0, %v1495
  %1497 = vmatprep.mubr.bf16.mxu0 0
  %1498 = vmatmul.mubr.bf16.gmra.mrb[0].mxu0 %v1284
  %v1499 = vpop.f32.mrb[0].mxu0
  %v1500 = vadd.f32 0.0, %v1499
  %v1501 = vpop.f32.mrb[0].mxu0
  %v1502 = vadd.f32 0.0, %v1501
  %v1503 = vpop.f32.mrb[0].mxu0
  %v1504 = vadd.f32 0.0, %v1503
  %v1505 = vpop.f32.mrb[0].mxu0
  %v1506 = vadd.f32 0.0, %v1505
  %1507 = vmatprep.mubr.bf16.mxu0 0
  %1508 = vmatmul.mubr.bf16.gmra.mrb[0].mxu0 %v1285
  %v1509 = vpop.f32.mrb[0].mxu0
  %v1510 = vadd.f32 0.0, %v1509
  %v1511 = vpop.f32.mrb[0].mxu0
  %v1512 = vadd.f32 0.0, %v1511
  %v1513 = vpop.f32.mrb[0].mxu0
  %v1514 = vadd.f32 0.0, %v1513
  %v1515 = vpop.f32.mrb[0].mxu0
  %v1516 = vadd.f32 0.0, %v1515
  %1517 = vmatprep.mubr.bf16.mxu0 0
  %1518 = vmatmul.mubr.bf16.gmra.mrb[0].mxu0 %v1286
  %v1519 = vpop.f32.mrb[0].mxu0
  %v1520 = vadd.f32 0.0, %v1519
  %v1521 = vpop.f32.mrb[0].mxu0
  %v1522 = vadd.f32 0.0, %v1521
  %v1523 = vpop.f32.mrb[0].mxu0
  %v1524 = vadd.f32 0.0, %v1523
  %v1525 = vpop.f32.mrb[0].mxu0
  %v1526 = vadd.f32 0.0, %v1525
  %1527 = vmatprep.mubr.bf16.mxu0 0
  %1528 = vmatmul.mubr.bf16.gmra.mrb[0].mxu0 %v1287
  %v1529 = vpop.f32.mrb[0].mxu0
  %v1530 = vadd.f32 0.0, %v1529
  %v1531 = vpop.f32.mrb[0].mxu0
  %v1532 = vadd.f32 0.0, %v1531
  %v1533 = vpop.f32.mrb[0].mxu0
  %v1534 = vadd.f32 0.0, %v1533
  %v1535 = vpop.f32.mrb[0].mxu0
  %v1536 = vadd.f32 0.0, %v1535
  %1537 = vmatprep.mubr.bf16.mxu0 0
  %1538 = vmatmul.mubr.bf16.gmra.mrb[0].mxu0 %v1288
  %v1539 = vpop.f32.mrb[0].mxu0
  %v1540 = vadd.f32 0.0, %v1539
  %v1541 = vpop.f32.mrb[0].mxu0
  %v1542 = vadd.f32 0.0, %v1541
  %v1543 = vpop.f32.mrb[0].mxu0
  %v1544 = vadd.f32 0.0, %v1543
  %v1545 = vpop.f32.mrb[0].mxu0
  %v1546 = vadd.f32 0.0, %v1545
  %1547 = vmatprep.mubr.bf16.mxu0 0
  %1548 = vmatmul.mubr.bf16.gmra.mrb[0].mxu0 %v1289
  %v1549 = vpop.f32.mrb[0].mxu0
  %v1550 = vadd.f32 0.0, %v1549
  %v1551 = vpop.f32.mrb[0].mxu0
  %v1552 = vadd.f32 0.0, %v1551
  %v1553 = vpop.f32.mrb[0].mxu0
  %v1554 = vadd.f32 0.0, %v1553
  %v1555 = vpop.f32.mrb[0].mxu0
  %v1556 = vadd.f32 0.0, %v1555
  %1557 = vmatprep.mubr.bf16.mxu0 0
  %1558 = vmatmul.mubr.bf16.gmra.mrb[0].mxu0 %v1290
  %v1559 = vpop.f32.mrb[0].mxu0
  %v1560 = vadd.f32 0.0, %v1559
  %v1561 = vpop.f32.mrb[0].mxu0
  %v1562 = vadd.f32 0.0, %v1561
  %v1563 = vpop.f32.mrb[0].mxu0
  %v1564 = vadd.f32 0.0, %v1563
  %v1565 = vpop.f32.mrb[0].mxu0
  %v1566 = vadd.f32 0.0, %v1565
  %1567 = vmatprep.mubr.bf16.mxu0 0
  %1568 = vmatmul.mubr.bf16.gmra.mrb[0].mxu0 %v1291
  %v1569 = vpop.f32.mrb[0].mxu0
  %v1570 = vadd.f32 0.0, %v1569
  %v1571 = vpop.f32.mrb[0].mxu0
  %v1572 = vadd.f32 0.0, %v1571
  %v1573 = vpop.f32.mrb[0].mxu0
  %v1574 = vadd.f32 0.0, %v1573
  %v1575 = vpop.f32.mrb[0].mxu0
  %v1576 = vadd.f32 0.0, %v1575
  %1577 = vmatprep.mubr.bf16.mxu0 0
  %1578 = vmatmul.mubr.bf16.gmra.mrb[0].mxu0 %v1292
  %v1579 = vpop.f32.mrb[0].mxu0
  %v1580 = vadd.f32 0.0, %v1579
  %v1581 = vpop.f32.mrb[0].mxu0
  %v1582 = vadd.f32 0.0, %v1581
  %v1583 = vpop.f32.mrb[0].mxu0
  %v1584 = vadd.f32 0.0, %v1583
  %v1585 = vpop.f32.mrb[0].mxu0
  %v1586 = vadd.f32 0.0, %v1585
  %1587 = vmatprep.mubr.bf16.mxu0 0
  %1588 = vmatmul.mubr.bf16.gmra.mrb[0].mxu0 %v1293
  %v1589 = vpop.f32.mrb[0].mxu0
  %v1590 = vadd.f32 0.0, %v1589
  %v1591 = vpop.f32.mrb[0].mxu0
  %v1592 = vadd.f32 0.0, %v1591
  %v1593 = vpop.f32.mrb[0].mxu0
  %v1594 = vadd.f32 0.0, %v1593
  %v1595 = vpop.f32.mrb[0].mxu0
  %v1596 = vadd.f32 0.0, %v1595
  %1597 = vmatprep.mubr.bf16.mxu0 0
  %1598 = vmatmul.mubr.bf16.gmra.mrb[0].mxu0 %v1294
  %v1599 = vpop.f32.mrb[0].mxu0
  %v1600 = vadd.f32 0.0, %v1599
  %v1601 = vpop.f32.mrb[0].mxu0
  %v1602 = vadd.f32 0.0, %v1601
  %v1603 = vpop.f32.mrb[0].mxu0
  %v1604 = vadd.f32 0.0, %v1603
  %v1605 = vpop.f32.mrb[0].mxu0
  %v1606 = vadd.f32 0.0, %v1605
  %1607 = vmatprep.mubr.bf16.mxu0 0
  %1608 = vmatmul.mubr.bf16.gmra.mrb[0].mxu0 %v1295
  %v1609 = vpop.f32.mrb[0].mxu0
  %v1610 = vadd.f32 0.0, %v1609
  %v1611 = vpop.f32.mrb[0].mxu0
  %v1612 = vadd.f32 0.0, %v1611
  %v1613 = vpop.f32.mrb[0].mxu0
  %v1614 = vadd.f32 0.0, %v1613
  %v1615 = vpop.f32.mrb[0].mxu0
  %v1616 = vadd.f32 0.0, %v1615
  %1617 = vmatprep.mubr.bf16.mxu0 0
  %1618 = vmatmul.mubr.bf16.gmra.mrb[0].mxu0 %v1296
  %v1619 = vpop.f32.mrb[0].mxu0
  %v1620 = vadd.f32 0.0, %v1619
  %v1621 = vpop.f32.mrb[0].mxu0
  %v1622 = vadd.f32 0.0, %v1621
  %v1623 = vpop.f32.mrb[0].mxu0
  %v1624 = vadd.f32 0.0, %v1623
  %v1625 = vpop.f32.mrb[0].mxu0
  %v1626 = vadd.f32 0.0, %v1625
  %1627 = vmatprep.mubr.bf16.mxu0 0
  %1628 = vmatmul.mubr.bf16.gmra.mrb[0].mxu0 %v1297
  %v1629 = vpop.f32.mrb[0].mxu0
  %v1630 = vadd.f32 0.0, %v1629
  %v1631 = vpop.f32.mrb[0].mxu0
  %v1632 = vadd.f32 0.0, %v1631
  %v1633 = vpop.f32.mrb[0].mxu0
  %v1634 = vadd.f32 0.0, %v1633
  %v1635 = vpop.f32.mrb[0].mxu0
  %v1636 = vadd.f32 0.0, %v1635
  %1637 = vmatprep.mubr.bf16.mxu0 0
  %1638 = vmatmul.mubr.bf16.gmra.mrb[0].mxu0 %v1298
  %v1639 = vpop.f32.mrb[0].mxu0
  %v1640 = vadd.f32 0.0, %v1639
  %v1641 = vpop.f32.mrb[0].mxu0
  %v1642 = vadd.f32 0.0, %v1641
  %v1643 = vpop.f32.mrb[0].mxu0
  %v1644 = vadd.f32 0.0, %v1643
  %v1645 = vpop.f32.mrb[0].mxu0
  %v1646 = vadd.f32 0.0, %v1645
  %1647 = vmatprep.mubr.bf16.mxu0 0
  %1648 = vmatmul.mubr.bf16.gmra.mrb[0].mxu0 %v1299
  %v1649 = vpop.f32.mrb[0].mxu0
  %v1650 = vadd.f32 0.0, %v1649
  %v1651 = vpop.f32.mrb[0].mxu0
  %v1652 = vadd.f32 0.0, %v1651
  %v1653 = vpop.f32.mrb[0].mxu0
  %v1654 = vadd.f32 0.0, %v1653
  %v1655 = vpop.f32.mrb[0].mxu0
  %v1656 = vadd.f32 0.0, %v1655
  %1657 = vmatprep.mubr.bf16.mxu0 0
  %1658 = vmatmul.mubr.bf16.gmra.mrb[0].mxu0 %v1300
  %v1659 = vpop.f32.mrb[0].mxu0
  %v1660 = vadd.f32 0.0, %v1659
  %v1661 = vpop.f32.mrb[0].mxu0
  %v1662 = vadd.f32 0.0, %v1661
  %v1663 = vpop.f32.mrb[0].mxu0
  %v1664 = vadd.f32 0.0, %v1663
  %v1665 = vpop.f32.mrb[0].mxu0
  %v1666 = vadd.f32 0.0, %v1665
  %1667 = vmatprep.mubr.bf16.mxu0 0
  %1668 = vmatmul.mubr.bf16.gmra.mrb[0].mxu0 %v1301
  %v1669 = vpop.f32.mrb[0].mxu0
  %v1670 = vadd.f32 0.0, %v1669
  %v1671 = vpop.f32.mrb[0].mxu0
  %v1672 = vadd.f32 0.0, %v1671
  %v1673 = vpop.f32.mrb[0].mxu0
  %v1674 = vadd.f32 0.0, %v1673
  %v1675 = vpop.f32.mrb[0].mxu0
  %v1676 = vadd.f32 0.0, %v1675
  %1677 = vmatprep.mubr.bf16.mxu0 0
  %1678 = vmatmul.mubr.bf16.gmra.mrb[0].mxu0 %v1302
  %v1679 = vpop.f32.mrb[0].mxu0
  %v1680 = vadd.f32 0.0, %v1679
  %v1681 = vpop.f32.mrb[0].mxu0
  %v1682 = vadd.f32 0.0, %v1681
  %v1683 = vpop.f32.mrb[0].mxu0
  %v1684 = vadd.f32 0.0, %v1683
  %v1685 = vpop.f32.mrb[0].mxu0
  %v1686 = vadd.f32 0.0, %v1685
  %1687 = vmatprep.mubr.bf16.mxu0 0
  %1688 = vmatmul.mubr.bf16.gmra.mrb[0].mxu0 %v1303
  %v1689 = vpop.f32.mrb[0].mxu0
  %v1690 = vadd.f32 0.0, %v1689
  %v1691 = vpop.f32.mrb[0].mxu0
  %v1692 = vadd.f32 0.0, %v1691
  %v1693 = vpop.f32.mrb[0].mxu0
  %v1694 = vadd.f32 0.0, %v1693
  %v1695 = vpop.f32.mrb[0].mxu0
  %v1696 = vadd.f32 0.0, %v1695
  %1697 = vmatprep.mubr.bf16.mxu0 0
  %1698 = vmatmul.mubr.bf16.gmra.mrb[0].mxu0 %v1304
  %v1699 = vpop.f32.mrb[0].mxu0
  %v1700 = vadd.f32 0.0, %v1699
  %v1701 = vpop.f32.mrb[0].mxu0
  %v1702 = vadd.f32 0.0, %v1701
  %v1703 = vpop.f32.mrb[0].mxu0
  %v1704 = vadd.f32 0.0, %v1703
  %v1705 = vpop.f32.mrb[0].mxu0
  %v1706 = vadd.f32 0.0, %v1705
  %1707 = vmatprep.mubr.bf16.mxu0 0
  %1708 = vmatmul.mubr.bf16.gmra.mrb[0].mxu0 %v1305
  %v1709 = vpop.f32.mrb[0].mxu0
  %v1710 = vadd.f32 0.0, %v1709
  %v1711 = vpop.f32.mrb[0].mxu0
  %v1712 = vadd.f32 0.0, %v1711
  %v1713 = vpop.f32.mrb[0].mxu0
  %v1714 = vadd.f32 0.0, %v1713
  %v1715 = vpop.f32.mrb[0].mxu0
  %v1716 = vadd.f32 0.0, %v1715
  %1717 = vmatprep.mubr.bf16.mxu0 0
  %1718 = vmatmul.mubr.bf16.gmra.mrb[0].mxu0 %v1306
  %v1719 = vpop.f32.mrb[0].mxu0
  %v1720 = vadd.f32 0.0, %v1719
  %v1721 = vpop.f32.mrb[0].mxu0
  %v1722 = vadd.f32 0.0, %v1721
  %v1723 = vpop.f32.mrb[0].mxu0
  %v1724 = vadd.f32 0.0, %v1723
  %v1725 = vpop.f32.mrb[0].mxu0
  %v1726 = vadd.f32 0.0, %v1725
  %1727 = vdwg.mxu0
  %v1728 = vadd.f32 %v817, %v1450
  %v1729 = vadd.f32 %v819, %v1452
  %v1730 = vadd.f32 %v821, %v1454
  %v1731 = vadd.f32 %v823, %v1456
  %v1732 = vadd.f32 %v827, %v1460
  %v1733 = vadd.f32 %v829, %v1462
  %v1734 = vadd.f32 %v831, %v1464
  %v1735 = vadd.f32 %v833, %v1466
  %v1736 = vadd.f32 %v837, %v1470
  %v1737 = vadd.f32 %v839, %v1472
  %v1738 = vadd.f32 %v841, %v1474
  %v1739 = vadd.f32 %v843, %v1476
  %v1740 = vadd.f32 %v847, %v1480
  %v1741 = vadd.f32 %v849, %v1482
  %v1742 = vadd.f32 %v851, %v1484
  %v1743 = vadd.f32 %v853, %v1486
  %v1744 = vadd.f32 %v857, %v1490
  %v1745 = vadd.f32 %v859, %v1492
  %v1746 = vadd.f32 %v861, %v1494
  %v1747 = vadd.f32 %v863, %v1496
  %v1748 = vadd.f32 %v867, %v1500
  %v1749 = vadd.f32 %v869, %v1502
  %v1750 = vadd.f32 %v871, %v1504
  %v1751 = vadd.f32 %v873, %v1506
  %v1752 = vadd.f32 %v877, %v1510
  %v1753 = vadd.f32 %v879, %v1512
  %v1754 = vadd.f32 %v881, %v1514
  %v1755 = vadd.f32 %v883, %v1516
  %v1756 = vadd.f32 %v887, %v1520
  %v1757 = vadd.f32 %v889, %v1522
  %v1758 = vadd.f32 %v891, %v1524
  %v1759 = vadd.f32 %v893, %v1526
  %v1760 = vadd.f32 %v897, %v1530
  %v1761 = vadd.f32 %v899, %v1532
  %v1762 = vadd.f32 %v901, %v1534
  %v1763 = vadd.f32 %v903, %v1536
  %v1764 = vadd.f32 %v907, %v1540
  %v1765 = vadd.f32 %v909, %v1542
  %v1766 = vadd.f32 %v911, %v1544
  %v1767 = vadd.f32 %v913, %v1546
  %v1768 = vadd.f32 %v917, %v1550
  %v1769 = vadd.f32 %v919, %v1552
  %v1770 = vadd.f32 %v921, %v1554
  %v1771 = vadd.f32 %v923, %v1556
  %v1772 = vadd.f32 %v927, %v1560
  %v1773 = vadd.f32 %v929, %v1562
  %v1774 = vadd.f32 %v931, %v1564
  %v1775 = vadd.f32 %v933, %v1566
  %v1776 = vadd.f32 %v937, %v1570
  %v1777 = vadd.f32 %v939, %v1572
  %v1778 = vadd.f32 %v941, %v1574
  %v1779 = vadd.f32 %v943, %v1576
  %v1780 = vadd.f32 %v947, %v1580
  %v1781 = vadd.f32 %v949, %v1582
  %v1782 = vadd.f32 %v951, %v1584
  %v1783 = vadd.f32 %v953, %v1586
  %v1784 = vadd.f32 %v957, %v1590
  %v1785 = vadd.f32 %v959, %v1592
  %v1786 = vadd.f32 %v961, %v1594
  %v1787 = vadd.f32 %v963, %v1596
  %v1788 = vadd.f32 %v967, %v1600
  %v1789 = vadd.f32 %v969, %v1602
  %v1790 = vadd.f32 %v971, %v1604
  %v1791 = vadd.f32 %v973, %v1606
  %v1792 = vadd.f32 %v977, %v1610
  %v1793 = vadd.f32 %v979, %v1612
  %v1794 = vadd.f32 %v981, %v1614
  %v1795 = vadd.f32 %v983, %v1616
  %v1796 = vadd.f32 %v987, %v1620
  %v1797 = vadd.f32 %v989, %v1622
  %v1798 = vadd.f32 %v991, %v1624
  %v1799 = vadd.f32 %v993, %v1626
  %v1800 = vadd.f32 %v997, %v1630
  %v1801 = vadd.f32 %v999, %v1632
  %v1802 = vadd.f32 %v1001, %v1634
  %v1803 = vadd.f32 %v1003, %v1636
  %v1804 = vadd.f32 %v1007, %v1640
  %v1805 = vadd.f32 %v1009, %v1642
  %v1806 = vadd.f32 %v1011, %v1644
  %v1807 = vadd.f32 %v1013, %v1646
  %v1808 = vadd.f32 %v1017, %v1650
  %v1809 = vadd.f32 %v1019, %v1652
  %v1810 = vadd.f32 %v1021, %v1654
  %v1811 = vadd.f32 %v1023, %v1656
  %v1812 = vadd.f32 %v1027, %v1660
  %v1813 = vadd.f32 %v1029, %v1662
  %v1814 = vadd.f32 %v1031, %v1664
  %v1815 = vadd.f32 %v1033, %v1666
  %v1816 = vadd.f32 %v1037, %v1670
  %v1817 = vadd.f32 %v1039, %v1672
  %v1818 = vadd.f32 %v1041, %v1674
  %v1819 = vadd.f32 %v1043, %v1676
  %v1820 = vadd.f32 %v1047, %v1680
  %v1821 = vadd.f32 %v1049, %v1682
  %v1822 = vadd.f32 %v1051, %v1684
  %v1823 = vadd.f32 %v1053, %v1686
  %v1824 = vadd.f32 %v1057, %v1690
  %v1825 = vadd.f32 %v1059, %v1692
  %v1826 = vadd.f32 %v1061, %v1694
  %v1827 = vadd.f32 %v1063, %v1696
  %v1828 = vadd.f32 %v1067, %v1700
  %v1829 = vadd.f32 %v1069, %v1702
  %v1830 = vadd.f32 %v1071, %v1704
  %v1831 = vadd.f32 %v1073, %v1706
  %v1832 = vadd.f32 %v1077, %v1710
  %v1833 = vadd.f32 %v1079, %v1712
  %v1834 = vadd.f32 %v1081, %v1714
  %v1835 = vadd.f32 %v1083, %v1716
  %v1836 = vadd.f32 %v1087, %v1720
  %v1837 = vadd.f32 %v1089, %v1722
  %v1838 = vadd.f32 %v1091, %v1724
  %v1839 = vadd.f32 %v1093, %v1726
  %v1840 = vld [vmem:[%s0 + $0x18] sm:$0xf]
  %v1841 = vld [vmem:[%s0 + $0x1c] sm:$0xf]
  %v1842 = vld [vmem:[%s0 + $0x20] sm:$0xf]
  %v1843 = vld [vmem:[%s0 + $0x24] sm:$0xf]
  %v1844 = vld [vmem:[%s0 + $0x28] sm:$0xf]
  %v1845 = vld [vmem:[%s0 + $0x2c] sm:$0xf]
  %v1846 = vld [vmem:[%s0 + $0x30] sm:$0xf]
  %v1847 = vld [vmem:[%s0 + $0x34] sm:$0xf]
  %v1848 = vld [vmem:[%s0 + $0x38] sm:$0xf]
  %v1849 = vld [vmem:[%s0 + $0x3c] sm:$0xf]
  %v1850 = vld [vmem:[%s0 + $0x40] sm:$0xf]
  %v1851 = vld [vmem:[%s0 + $0x44] sm:$0xf]
  %v1852 = vld [vmem:[%s0 + $0x48] sm:$0xf]
  %v1853 = vld [vmem:[%s0 + $0x4c] sm:$0xf]
  %v1854 = vld [vmem:[%s0 + $0x50] sm:$0xf]
  %v1855 = vld [vmem:[%s0 + $0x54] sm:$0xf]
  %v1856 = vld [vmem:[%s0 + $0x58] sm:$0xf]
  %v1857 = vld [vmem:[%s0 + $0x5c] sm:$0xf]
  %v1858 = vld [vmem:[%s0 + $0x60] sm:$0xf]
  %v1859 = vld [vmem:[%s0 + $0x64] sm:$0xf]
  %v1860 = vld [vmem:[%s0 + $0x68] sm:$0xf]
  %v1861 = vld [vmem:[%s0 + $0x6c] sm:$0xf]
  %v1862 = vld [vmem:[%s0 + $0x70] sm:$0xf]
  %v1863 = vld [vmem:[%s0 + $0x74] sm:$0xf]
  %v1864 = vld [vmem:[%s0 + $0x78] sm:$0xf]
  %v1865 = vld [vmem:[%s0 + $0x7c] sm:$0xf]
  %v1866 = vld [vmem:[%s0 + $0x80] sm:$0xf]
  %v1867 = vld [vmem:[%s0 + $0x84] sm:$0xf]
  %v1868 = vld [vmem:[%s0 + $0x88] sm:$0xf]
  %v1869 = vld [vmem:[%s0 + $0x8c] sm:$0xf]
  %v1870 = vld [vmem:[%s0 + $0x90] sm:$0xf]
  %v1871 = vld [vmem:[%s0 + $0x94] sm:$0xf]
  %v1872 = vld [vmem:[%s0 + $0x98] sm:$0xf]
  %v1873 = vld [vmem:[%s0 + $0x9c] sm:$0xf]
  %v1874 = vld [vmem:[%s0 + $0xa0] sm:$0xf]
  %v1875 = vld [vmem:[%s0 + $0xa4] sm:$0xf]
  %v1876 = vld [vmem:[%s0 + $0xa8] sm:$0xf]
  %v1877 = vld [vmem:[%s0 + $0xac] sm:$0xf]
  %v1878 = vld [vmem:[%s0 + $0xb0] sm:$0xf]
  %v1879 = vld [vmem:[%s0 + $0xb4] sm:$0xf]
  %v1880 = vld [vmem:[%s0 + $0xb8] sm:$0xf]
  %v1881 = vld [vmem:[%s0 + $0xbc] sm:$0xf]
  %v1882 = vld [vmem:[%s0 + $0xc0] sm:$0xf]
  %v1883 = vld [vmem:[%s0 + $0xc4] sm:$0xf]
  %v1884 = vld [vmem:[%s0 + $0xc8] sm:$0xf]
  %v1885 = vld [vmem:[%s0 + $0xcc] sm:$0xf]
  %v1886 = vld [vmem:[%s0 + $0xd0] sm:$0xf]
  %v1887 = vld [vmem:[%s0 + $0xd4] sm:$0xf]
  %v1888 = vld [vmem:[%s0 + $0xd8] sm:$0xf]
  %v1889 = vld [vmem:[%s0 + $0xdc] sm:$0xf]
  %v1890 = vld [vmem:[%s0 + $0xe0] sm:$0xf]
  %v1891 = vld [vmem:[%s0 + $0xe4] sm:$0xf]
  %v1892 = vld [vmem:[%s0 + $0xe8] sm:$0xf]
  %v1893 = vld [vmem:[%s0 + $0xec] sm:$0xf]
  %v1894 = vld [vmem:[%s0 + $0xf0] sm:$0xf]
  %v1895 = vld [vmem:[%s0 + $0xf4] sm:$0xf]
  %v1896 = vld [vmem:[%s1 + $0x180] sm:$0xff]
  %v1897 = vld [vmem:[%s1 + $0x188] sm:$0xff]
  %v1898 = vld [vmem:[%s1 + $0x190] sm:$0xff]
  %v1899 = vld [vmem:[%s1 + $0x198] sm:$0xff]
  %v1900 = vld [vmem:[%s1 + $0x1a0] sm:$0xff]
  %v1901 = vld [vmem:[%s1 + $0x1a8] sm:$0xff]
  %v1902 = vld [vmem:[%s1 + $0x1b0] sm:$0xff]
  %v1903 = vld [vmem:[%s1 + $0x1b8] sm:$0xff]
  %v1904 = vld [vmem:[%s1 + $0x1c0] sm:$0xff]
  %v1905 = vld [vmem:[%s1 + $0x1c8] sm:$0xff]
  %v1906 = vld [vmem:[%s1 + $0x1d0] sm:$0xff]
  %v1907 = vld [vmem:[%s1 + $0x1d8] sm:$0xff]
  %v1908 = vld [vmem:[%s1 + $0x1e0] sm:$0xff]
  %v1909 = vld [vmem:[%s1 + $0x1e8] sm:$0xff]
  %v1910 = vld [vmem:[%s1 + $0x1f0] sm:$0xff]
  %v1911 = vld [vmem:[%s1 + $0x1f8] sm:$0xff]
  %v1968 = vunpack.c.l.b16 %v1840
  %v1969 = vunpack.c.l.b16 %v1841
  %v1970 = vunpack.c.l.b16 %v1842
  %v1971 = vunpack.c.l.b16 %v1843
  %v1972 = vunpack.c.l.b16 %v1844
  %v1973 = vunpack.c.l.b16 %v1845
  %v1974 = vunpack.c.l.b16 %v1846
  %v1975 = vunpack.c.l.b16 %v1847
  %v1976 = vunpack.c.l.b16 %v1848
  %v1977 = vunpack.c.l.b16 %v1849
  %v1978 = vunpack.c.l.b16 %v1850
  %v1979 = vunpack.c.l.b16 %v1851
  %v1980 = vunpack.c.l.b16 %v1852
  %v1981 = vunpack.c.l.b16 %v1853
  %v1982 = vunpack.c.l.b16 %v1854
  %v1983 = vunpack.c.l.b16 %v1855
  %v1984 = vunpack.c.l.b16 %v1856
  %v1985 = vunpack.c.l.b16 %v1857
  %v1986 = vunpack.c.l.b16 %v1858
  %v1987 = vunpack.c.l.b16 %v1859
  %v1988 = vunpack.c.l.b16 %v1860
  %v1989 = vunpack.c.l.b16 %v1861
  %v1990 = vunpack.c.l.b16 %v1862
  %v1991 = vunpack.c.l.b16 %v1863
  %v1992 = vunpack.c.l.b16 %v1864
  %v1993 = vunpack.c.l.b16 %v1865
  %v1994 = vunpack.c.l.b16 %v1866
  %v1995 = vunpack.c.l.b16 %v1867
  %v1996 = vunpack.c.l.b16 %v1868
  %v1997 = vunpack.c.l.b16 %v1869
  %v1998 = vunpack.c.l.b16 %v1870
  %v1999 = vunpack.c.l.b16 %v1871
  %v2000 = vunpack.c.l.b16 %v1872
  %v2001 = vunpack.c.l.b16 %v1873
  %v2002 = vunpack.c.l.b16 %v1874
  %v2003 = vunpack.c.l.b16 %v1875
  %v2004 = vunpack.c.l.b16 %v1876
  %v2005 = vunpack.c.l.b16 %v1877
  %v2006 = vunpack.c.l.b16 %v1878
  %v2007 = vunpack.c.l.b16 %v1879
  %v2008 = vunpack.c.l.b16 %v1880
  %v2009 = vunpack.c.l.b16 %v1881
  %v2010 = vunpack.c.l.b16 %v1882
  %v2011 = vunpack.c.l.b16 %v1883
  %v2012 = vunpack.c.l.b16 %v1884
  %v2013 = vunpack.c.l.b16 %v1885
  %v2014 = vunpack.c.l.b16 %v1886
  %v2015 = vunpack.c.l.b16 %v1887
  %v2016 = vunpack.c.l.b16 %v1888
  %v2017 = vunpack.c.l.b16 %v1889
  %v2018 = vunpack.c.l.b16 %v1890
  %v2019 = vunpack.c.l.b16 %v1891
  %v2020 = vunpack.c.l.b16 %v1892
  %v2021 = vunpack.c.l.b16 %v1893
  %v2022 = vunpack.c.l.b16 %v1894
  %v2023 = vunpack.c.l.b16 %v1895
  %v2024 = vpack.c.b16 %v1969, %v1968
  %v2025 = vpack.c.b16 %v1971, %v1970
  %v2026 = vpack.c.b16 %v1973, %v1972
  %v2027 = vpack.c.b16 %v1975, %v1974
  %v2028 = vpack.c.b16 %v1977, %v1976
  %v2029 = vpack.c.b16 %v1979, %v1978
  %v2030 = vpack.c.b16 %v1981, %v1980
  %v2031 = vpack.c.b16 %v1983, %v1982
  %v2032 = vpack.c.b16 %v1985, %v1984
  %v2033 = vpack.c.b16 %v1987, %v1986
  %v2034 = vpack.c.b16 %v1989, %v1988
  %v2035 = vpack.c.b16 %v1991, %v1990
  %v2036 = vpack.c.b16 %v1993, %v1992
  %v2037 = vpack.c.b16 %v1995, %v1994
  %v2038 = vpack.c.b16 %v1997, %v1996
  %v2039 = vpack.c.b16 %v1999, %v1998
  %v2040 = vpack.c.b16 %v2001, %v2000
  %v2041 = vpack.c.b16 %v2003, %v2002
  %v2042 = vpack.c.b16 %v2005, %v2004
  %v2043 = vpack.c.b16 %v2007, %v2006
  %v2044 = vpack.c.b16 %v2009, %v2008
  %v2045 = vpack.c.b16 %v2011, %v2010
  %v2046 = vpack.c.b16 %v2013, %v2012
  %v2047 = vpack.c.b16 %v2015, %v2014
  %v2048 = vpack.c.b16 %v2017, %v2016
  %v2049 = vpack.c.b16 %v2019, %v2018
  %v2050 = vpack.c.b16 %v2021, %v2020
  %v2051 = vpack.c.b16 %v2023, %v2022
  %v2096 = vunpack.c.l.b16 %v1896
  %v2097 = vunpack.c.h.b16 %v1896
  %v2098 = vunpack.c.l.b16 %v1897
  %v2099 = vunpack.c.h.b16 %v1897
  %v2100 = vunpack.c.l.b16 %v1898
  %v2101 = vunpack.c.h.b16 %v1898
  %v2102 = vunpack.c.l.b16 %v1899
  %v2103 = vunpack.c.h.b16 %v1899
  %v2104 = vunpack.c.l.b16 %v1900
  %v2105 = vunpack.c.h.b16 %v1900
  %v2106 = vunpack.c.l.b16 %v1901
  %v2107 = vunpack.c.h.b16 %v1901
  %v2108 = vunpack.c.l.b16 %v1902
  %v2109 = vunpack.c.h.b16 %v1902
  %v2110 = vunpack.c.l.b16 %v1903
  %v2111 = vunpack.c.h.b16 %v1903
  %v2112 = vunpack.c.l.b16 %v1904
  %v2113 = vunpack.c.h.b16 %v1904
  %v2114 = vunpack.c.l.b16 %v1905
  %v2115 = vunpack.c.h.b16 %v1905
  %v2116 = vunpack.c.l.b16 %v1906
  %v2117 = vunpack.c.h.b16 %v1906
  %v2118 = vunpack.c.l.b16 %v1907
  %v2119 = vunpack.c.h.b16 %v1907
  %v2120 = vunpack.c.l.b16 %v1908
  %v2121 = vunpack.c.h.b16 %v1908
  %v2122 = vunpack.c.l.b16 %v1909
  %v2123 = vunpack.c.h.b16 %v1909
  %v2124 = vunpack.c.l.b16 %v1910
  %v2125 = vunpack.c.h.b16 %v1910
  %v2126 = vunpack.c.l.b16 %v1911
  %v2127 = vunpack.c.h.b16 %v1911
  %v2128 = vpack.c.b16 %v2098, %v2096
  %v2129 = vpack.c.b16 %v2099, %v2097
  %v2130 = vpack.c.b16 %v2102, %v2100
  %v2131 = vpack.c.b16 %v2103, %v2101
  %v2132 = vpack.c.b16 %v2106, %v2104
  %v2133 = vpack.c.b16 %v2107, %v2105
  %v2134 = vpack.c.b16 %v2110, %v2108
  %v2135 = vpack.c.b16 %v2111, %v2109
  %v2136 = vpack.c.b16 %v2114, %v2112
  %v2137 = vpack.c.b16 %v2115, %v2113
  %v2138 = vpack.c.b16 %v2118, %v2116
  %v2139 = vpack.c.b16 %v2119, %v2117
  %v2140 = vpack.c.b16 %v2122, %v2120
  %v2141 = vpack.c.b16 %v2123, %v2121
  %v2142 = vpack.c.b16 %v2126, %v2124
  %v2143 = vpack.c.b16 %v2127, %v2125
  %2160 = vmatprep.subr.bf16.mxu0 %v2129
  %2161 = vmatpush1.bf16.msra.mxu0 %v2128
  %2162 = vmatprep.subr.bf16.mxu0 %v2131
  %2163 = vmatpush1.bf16.msra.mxu0 %v2130
  %2164 = vmatprep.subr.bf16.mxu0 %v2133
  %2165 = vmatpush1.bf16.msra.mxu0 %v2132
  %2166 = vmatprep.subr.bf16.mxu0 %v2135
  %2167 = vmatpush1.bf16.msra.mxu0 %v2134
  %2168 = vmatprep.subr.bf16.mxu0 %v2137
  %2169 = vmatpush1.bf16.msra.mxu0 %v2136
  %2170 = vmatprep.subr.bf16.mxu0 %v2139
  %2171 = vmatpush1.bf16.msra.mxu0 %v2138
  %2172 = vmatprep.subr.bf16.mxu0 %v2141
  %2173 = vmatpush1.bf16.msra.mxu0 %v2140
  %2174 = vmatprep.subr.bf16.mxu0 %v2143
  %2175 = vmatpush1.bf16.msra.mxu0 %v2142
  %2176 = vmatprep.subr.bf16.mxu0 0
  %2177 = vmatpush1.bf16.msra.mxu0 0
  %2178 = vmatprep.subr.bf16.mxu0 0
  %2179 = vmatpush1.bf16.msra.mxu0 0
  %2180 = vmatprep.subr.bf16.mxu0 0
  %2181 = vmatpush1.bf16.msra.mxu0 0
  %2182 = vmatprep.subr.bf16.mxu0 0
  %2183 = vmatpush1.bf16.msra.mxu0 0
  %2184 = vmatprep.subr.bf16.mxu0 0
  %2185 = vmatpush1.bf16.msra.mxu0 0
  %2186 = vmatprep.subr.bf16.mxu0 0
  %2187 = vmatpush1.bf16.msra.mxu0 0
  %2188 = vmatprep.subr.bf16.mxu0 0
  %2189 = vmatpush1.bf16.msra.mxu0 0
  %2190 = vmatprep.subr.bf16.mxu0 0
  %2191 = vmatpush1.bf16.msra.mxu0 0
  %2192 = vmatprep.mubr.bf16.mxu0 0
  %2193 = vmatmul.mubr.bf16.gmra.mrb[0].mxu0 %v2024
  %v2194 = vpop.f32.mrb[0].mxu0
  %v2195 = vadd.f32 0.0, %v2194
  %v2196 = vpop.f32.mrb[0].mxu0
  %v2197 = vadd.f32 0.0, %v2196
  %v2198 = vpop.f32.mrb[0].mxu0
  %v2199 = vadd.f32 0.0, %v2198
  %v2200 = vpop.f32.mrb[0].mxu0
  %v2201 = vadd.f32 0.0, %v2200
  %2202 = vmatprep.mubr.bf16.mxu0 0
  %2203 = vmatmul.mubr.bf16.gmra.mrb[0].mxu0 %v2025
  %v2204 = vpop.f32.mrb[0].mxu0
  %v2205 = vadd.f32 0.0, %v2204
  %v2206 = vpop.f32.mrb[0].mxu0
  %v2207 = vadd.f32 0.0, %v2206
  %v2208 = vpop.f32.mrb[0].mxu0
  %v2209 = vadd.f32 0.0, %v2208
  %v2210 = vpop.f32.mrb[0].mxu0
  %v2211 = vadd.f32 0.0, %v2210
  %2212 = vmatprep.mubr.bf16.mxu0 0
  %2213 = vmatmul.mubr.bf16.gmra.mrb[0].mxu0 %v2026
  %v2214 = vpop.f32.mrb[0].mxu0
  %v2215 = vadd.f32 0.0, %v2214
  %v2216 = vpop.f32.mrb[0].mxu0
  %v2217 = vadd.f32 0.0, %v2216
  %v2218 = vpop.f32.mrb[0].mxu0
  %v2219 = vadd.f32 0.0, %v2218
  %v2220 = vpop.f32.mrb[0].mxu0
  %v2221 = vadd.f32 0.0, %v2220
  %2222 = vmatprep.mubr.bf16.mxu0 0
  %2223 = vmatmul.mubr.bf16.gmra.mrb[0].mxu0 %v2027
  %v2224 = vpop.f32.mrb[0].mxu0
  %v2225 = vadd.f32 0.0, %v2224
  %v2226 = vpop.f32.mrb[0].mxu0
  %v2227 = vadd.f32 0.0, %v2226
  %v2228 = vpop.f32.mrb[0].mxu0
  %v2229 = vadd.f32 0.0, %v2228
  %v2230 = vpop.f32.mrb[0].mxu0
  %v2231 = vadd.f32 0.0, %v2230
  %2232 = vmatprep.mubr.bf16.mxu0 0
  %2233 = vmatmul.mubr.bf16.gmra.mrb[0].mxu0 %v2028
  %v2234 = vpop.f32.mrb[0].mxu0
  %v2235 = vadd.f32 0.0, %v2234
  %v2236 = vpop.f32.mrb[0].mxu0
  %v2237 = vadd.f32 0.0, %v2236
  %v2238 = vpop.f32.mrb[0].mxu0
  %v2239 = vadd.f32 0.0, %v2238
  %v2240 = vpop.f32.mrb[0].mxu0
  %v2241 = vadd.f32 0.0, %v2240
  %2242 = vmatprep.mubr.bf16.mxu0 0
  %2243 = vmatmul.mubr.bf16.gmra.mrb[0].mxu0 %v2029
  %v2244 = vpop.f32.mrb[0].mxu0
  %v2245 = vadd.f32 0.0, %v2244
  %v2246 = vpop.f32.mrb[0].mxu0
  %v2247 = vadd.f32 0.0, %v2246
  %v2248 = vpop.f32.mrb[0].mxu0
  %v2249 = vadd.f32 0.0, %v2248
  %v2250 = vpop.f32.mrb[0].mxu0
  %v2251 = vadd.f32 0.0, %v2250
  %2252 = vmatprep.mubr.bf16.mxu0 0
  %2253 = vmatmul.mubr.bf16.gmra.mrb[0].mxu0 %v2030
  %v2254 = vpop.f32.mrb[0].mxu0
  %v2255 = vadd.f32 0.0, %v2254
  %v2256 = vpop.f32.mrb[0].mxu0
  %v2257 = vadd.f32 0.0, %v2256
  %v2258 = vpop.f32.mrb[0].mxu0
  %v2259 = vadd.f32 0.0, %v2258
  %v2260 = vpop.f32.mrb[0].mxu0
  %v2261 = vadd.f32 0.0, %v2260
  %2262 = vmatprep.mubr.bf16.mxu0 0
  %2263 = vmatmul.mubr.bf16.gmra.mrb[0].mxu0 %v2031
  %v2264 = vpop.f32.mrb[0].mxu0
  %v2265 = vadd.f32 0.0, %v2264
  %v2266 = vpop.f32.mrb[0].mxu0
  %v2267 = vadd.f32 0.0, %v2266
  %v2268 = vpop.f32.mrb[0].mxu0
  %v2269 = vadd.f32 0.0, %v2268
  %v2270 = vpop.f32.mrb[0].mxu0
  %v2271 = vadd.f32 0.0, %v2270
  %2272 = vmatprep.mubr.bf16.mxu0 0
  %2273 = vmatmul.mubr.bf16.gmra.mrb[0].mxu0 %v2032
  %v2274 = vpop.f32.mrb[0].mxu0
  %v2275 = vadd.f32 0.0, %v2274
  %v2276 = vpop.f32.mrb[0].mxu0
  %v2277 = vadd.f32 0.0, %v2276
  %v2278 = vpop.f32.mrb[0].mxu0
  %v2279 = vadd.f32 0.0, %v2278
  %v2280 = vpop.f32.mrb[0].mxu0
  %v2281 = vadd.f32 0.0, %v2280
  %2282 = vmatprep.mubr.bf16.mxu0 0
  %2283 = vmatmul.mubr.bf16.gmra.mrb[0].mxu0 %v2033
  %v2284 = vpop.f32.mrb[0].mxu0
  %v2285 = vadd.f32 0.0, %v2284
  %v2286 = vpop.f32.mrb[0].mxu0
  %v2287 = vadd.f32 0.0, %v2286
  %v2288 = vpop.f32.mrb[0].mxu0
  %v2289 = vadd.f32 0.0, %v2288
  %v2290 = vpop.f32.mrb[0].mxu0
  %v2291 = vadd.f32 0.0, %v2290
  %2292 = vmatprep.mubr.bf16.mxu0 0
  %2293 = vmatmul.mubr.bf16.gmra.mrb[0].mxu0 %v2034
  %v2294 = vpop.f32.mrb[0].mxu0
  %v2295 = vadd.f32 0.0, %v2294
  %v2296 = vpop.f32.mrb[0].mxu0
  %v2297 = vadd.f32 0.0, %v2296
  %v2298 = vpop.f32.mrb[0].mxu0
  %v2299 = vadd.f32 0.0, %v2298
  %v2300 = vpop.f32.mrb[0].mxu0
  %v2301 = vadd.f32 0.0, %v2300
  %2302 = vmatprep.mubr.bf16.mxu0 0
  %2303 = vmatmul.mubr.bf16.gmra.mrb[0].mxu0 %v2035
  %v2304 = vpop.f32.mrb[0].mxu0
  %v2305 = vadd.f32 0.0, %v2304
  %v2306 = vpop.f32.mrb[0].mxu0
  %v2307 = vadd.f32 0.0, %v2306
  %v2308 = vpop.f32.mrb[0].mxu0
  %v2309 = vadd.f32 0.0, %v2308
  %v2310 = vpop.f32.mrb[0].mxu0
  %v2311 = vadd.f32 0.0, %v2310
  %2312 = vmatprep.mubr.bf16.mxu0 0
  %2313 = vmatmul.mubr.bf16.gmra.mrb[0].mxu0 %v2036
  %v2314 = vpop.f32.mrb[0].mxu0
  %v2315 = vadd.f32 0.0, %v2314
  %v2316 = vpop.f32.mrb[0].mxu0
  %v2317 = vadd.f32 0.0, %v2316
  %v2318 = vpop.f32.mrb[0].mxu0
  %v2319 = vadd.f32 0.0, %v2318
  %v2320 = vpop.f32.mrb[0].mxu0
  %v2321 = vadd.f32 0.0, %v2320
  %2322 = vmatprep.mubr.bf16.mxu0 0
  %2323 = vmatmul.mubr.bf16.gmra.mrb[0].mxu0 %v2037
  %v2324 = vpop.f32.mrb[0].mxu0
  %v2325 = vadd.f32 0.0, %v2324
  %v2326 = vpop.f32.mrb[0].mxu0
  %v2327 = vadd.f32 0.0, %v2326
  %v2328 = vpop.f32.mrb[0].mxu0
  %v2329 = vadd.f32 0.0, %v2328
  %v2330 = vpop.f32.mrb[0].mxu0
  %v2331 = vadd.f32 0.0, %v2330
  %2332 = vmatprep.mubr.bf16.mxu0 0
  %2333 = vmatmul.mubr.bf16.gmra.mrb[0].mxu0 %v2038
  %v2334 = vpop.f32.mrb[0].mxu0
  %v2335 = vadd.f32 0.0, %v2334
  %v2336 = vpop.f32.mrb[0].mxu0
  %v2337 = vadd.f32 0.0, %v2336
  %v2338 = vpop.f32.mrb[0].mxu0
  %v2339 = vadd.f32 0.0, %v2338
  %v2340 = vpop.f32.mrb[0].mxu0
  %v2341 = vadd.f32 0.0, %v2340
  %2342 = vmatprep.mubr.bf16.mxu0 0
  %2343 = vmatmul.mubr.bf16.gmra.mrb[0].mxu0 %v2039
  %v2344 = vpop.f32.mrb[0].mxu0
  %v2345 = vadd.f32 0.0, %v2344
  %v2346 = vpop.f32.mrb[0].mxu0
  %v2347 = vadd.f32 0.0, %v2346
  %v2348 = vpop.f32.mrb[0].mxu0
  %v2349 = vadd.f32 0.0, %v2348
  %v2350 = vpop.f32.mrb[0].mxu0
  %v2351 = vadd.f32 0.0, %v2350
  %2352 = vmatprep.mubr.bf16.mxu0 0
  %2353 = vmatmul.mubr.bf16.gmra.mrb[0].mxu0 %v2040
  %v2354 = vpop.f32.mrb[0].mxu0
  %v2355 = vadd.f32 0.0, %v2354
  %v2356 = vpop.f32.mrb[0].mxu0
  %v2357 = vadd.f32 0.0, %v2356
  %v2358 = vpop.f32.mrb[0].mxu0
  %v2359 = vadd.f32 0.0, %v2358
  %v2360 = vpop.f32.mrb[0].mxu0
  %v2361 = vadd.f32 0.0, %v2360
  %2362 = vmatprep.mubr.bf16.mxu0 0
  %2363 = vmatmul.mubr.bf16.gmra.mrb[0].mxu0 %v2041
  %v2364 = vpop.f32.mrb[0].mxu0
  %v2365 = vadd.f32 0.0, %v2364
  %v2366 = vpop.f32.mrb[0].mxu0
  %v2367 = vadd.f32 0.0, %v2366
  %v2368 = vpop.f32.mrb[0].mxu0
  %v2369 = vadd.f32 0.0, %v2368
  %v2370 = vpop.f32.mrb[0].mxu0
  %v2371 = vadd.f32 0.0, %v2370
  %2372 = vmatprep.mubr.bf16.mxu0 0
  %2373 = vmatmul.mubr.bf16.gmra.mrb[0].mxu0 %v2042
  %v2374 = vpop.f32.mrb[0].mxu0
  %v2375 = vadd.f32 0.0, %v2374
  %v2376 = vpop.f32.mrb[0].mxu0
  %v2377 = vadd.f32 0.0, %v2376
  %v2378 = vpop.f32.mrb[0].mxu0
  %v2379 = vadd.f32 0.0, %v2378
  %v2380 = vpop.f32.mrb[0].mxu0
  %v2381 = vadd.f32 0.0, %v2380
  %2382 = vmatprep.mubr.bf16.mxu0 0
  %2383 = vmatmul.mubr.bf16.gmra.mrb[0].mxu0 %v2043
  %v2384 = vpop.f32.mrb[0].mxu0
  %v2385 = vadd.f32 0.0, %v2384
  %v2386 = vpop.f32.mrb[0].mxu0
  %v2387 = vadd.f32 0.0, %v2386
  %v2388 = vpop.f32.mrb[0].mxu0
  %v2389 = vadd.f32 0.0, %v2388
  %v2390 = vpop.f32.mrb[0].mxu0
  %v2391 = vadd.f32 0.0, %v2390
  %2392 = vmatprep.mubr.bf16.mxu0 0
  %2393 = vmatmul.mubr.bf16.gmra.mrb[0].mxu0 %v2044
  %v2394 = vpop.f32.mrb[0].mxu0
  %v2395 = vadd.f32 0.0, %v2394
  %v2396 = vpop.f32.mrb[0].mxu0
  %v2397 = vadd.f32 0.0, %v2396
  %v2398 = vpop.f32.mrb[0].mxu0
  %v2399 = vadd.f32 0.0, %v2398
  %v2400 = vpop.f32.mrb[0].mxu0
  %v2401 = vadd.f32 0.0, %v2400
  %2402 = vmatprep.mubr.bf16.mxu0 0
  %2403 = vmatmul.mubr.bf16.gmra.mrb[0].mxu0 %v2045
  %v2404 = vpop.f32.mrb[0].mxu0
  %v2405 = vadd.f32 0.0, %v2404
  %v2406 = vpop.f32.mrb[0].mxu0
  %v2407 = vadd.f32 0.0, %v2406
  %v2408 = vpop.f32.mrb[0].mxu0
  %v2409 = vadd.f32 0.0, %v2408
  %v2410 = vpop.f32.mrb[0].mxu0
  %v2411 = vadd.f32 0.0, %v2410
  %2412 = vmatprep.mubr.bf16.mxu0 0
  %2413 = vmatmul.mubr.bf16.gmra.mrb[0].mxu0 %v2046
  %v2414 = vpop.f32.mrb[0].mxu0
  %v2415 = vadd.f32 0.0, %v2414
  %v2416 = vpop.f32.mrb[0].mxu0
  %v2417 = vadd.f32 0.0, %v2416
  %v2418 = vpop.f32.mrb[0].mxu0
  %v2419 = vadd.f32 0.0, %v2418
  %v2420 = vpop.f32.mrb[0].mxu0
  %v2421 = vadd.f32 0.0, %v2420
  %2422 = vmatprep.mubr.bf16.mxu0 0
  %2423 = vmatmul.mubr.bf16.gmra.mrb[0].mxu0 %v2047
  %v2424 = vpop.f32.mrb[0].mxu0
  %v2425 = vadd.f32 0.0, %v2424
  %v2426 = vpop.f32.mrb[0].mxu0
  %v2427 = vadd.f32 0.0, %v2426
  %v2428 = vpop.f32.mrb[0].mxu0
  %v2429 = vadd.f32 0.0, %v2428
  %v2430 = vpop.f32.mrb[0].mxu0
  %v2431 = vadd.f32 0.0, %v2430
  %2432 = vmatprep.mubr.bf16.mxu0 0
  %2433 = vmatmul.mubr.bf16.gmra.mrb[0].mxu0 %v2048
  %v2434 = vpop.f32.mrb[0].mxu0
  %v2435 = vadd.f32 0.0, %v2434
  %v2436 = vpop.f32.mrb[0].mxu0
  %v2437 = vadd.f32 0.0, %v2436
  %v2438 = vpop.f32.mrb[0].mxu0
  %v2439 = vadd.f32 0.0, %v2438
  %v2440 = vpop.f32.mrb[0].mxu0
  %v2441 = vadd.f32 0.0, %v2440
  %2442 = vmatprep.mubr.bf16.mxu0 0
  %2443 = vmatmul.mubr.bf16.gmra.mrb[0].mxu0 %v2049
  %v2444 = vpop.f32.mrb[0].mxu0
  %v2445 = vadd.f32 0.0, %v2444
  %v2446 = vpop.f32.mrb[0].mxu0
  %v2447 = vadd.f32 0.0, %v2446
  %v2448 = vpop.f32.mrb[0].mxu0
  %v2449 = vadd.f32 0.0, %v2448
  %v2450 = vpop.f32.mrb[0].mxu0
  %v2451 = vadd.f32 0.0, %v2450
  %2452 = vmatprep.mubr.bf16.mxu0 0
  %2453 = vmatmul.mubr.bf16.gmra.mrb[0].mxu0 %v2050
  %v2454 = vpop.f32.mrb[0].mxu0
  %v2455 = vadd.f32 0.0, %v2454
  %v2456 = vpop.f32.mrb[0].mxu0
  %v2457 = vadd.f32 0.0, %v2456
  %v2458 = vpop.f32.mrb[0].mxu0
  %v2459 = vadd.f32 0.0, %v2458
  %v2460 = vpop.f32.mrb[0].mxu0
  %v2461 = vadd.f32 0.0, %v2460
  %2462 = vmatprep.mubr.bf16.mxu0 0
  %2463 = vmatmul.mubr.bf16.gmra.mrb[0].mxu0 %v2051
  %v2464 = vpop.f32.mrb[0].mxu0
  %v2465 = vadd.f32 0.0, %v2464
  %v2466 = vpop.f32.mrb[0].mxu0
  %v2467 = vadd.f32 0.0, %v2466
  %v2468 = vpop.f32.mrb[0].mxu0
  %v2469 = vadd.f32 0.0, %v2468
  %v2470 = vpop.f32.mrb[0].mxu0
  %v2471 = vadd.f32 0.0, %v2470
  %2472 = vdwg.mxu0
  %v2473 = vadd.f32 %v1728, %v2195
  %v2474 = vadd.f32 %v1729, %v2197
  %v2475 = vadd.f32 %v1730, %v2199
  %v2476 = vadd.f32 %v1731, %v2201
  %v2477 = vadd.f32 %v1732, %v2205
  %v2478 = vadd.f32 %v1733, %v2207
  %v2479 = vadd.f32 %v1734, %v2209
  %v2480 = vadd.f32 %v1735, %v2211
  %v2481 = vadd.f32 %v1736, %v2215
  %v2482 = vadd.f32 %v1737, %v2217
  %v2483 = vadd.f32 %v1738, %v2219
  %v2484 = vadd.f32 %v1739, %v2221
  %v2485 = vadd.f32 %v1740, %v2225
  %v2486 = vadd.f32 %v1741, %v2227
  %v2487 = vadd.f32 %v1742, %v2229
  %v2488 = vadd.f32 %v1743, %v2231
  %v2489 = vadd.f32 %v1744, %v2235
  %v2490 = vadd.f32 %v1745, %v2237
  %v2491 = vadd.f32 %v1746, %v2239
  %v2492 = vadd.f32 %v1747, %v2241
  %v2493 = vadd.f32 %v1748, %v2245
  %v2494 = vadd.f32 %v1749, %v2247
  %v2495 = vadd.f32 %v1750, %v2249
  %v2496 = vadd.f32 %v1751, %v2251
  %v2497 = vadd.f32 %v1752, %v2255
  %v2498 = vadd.f32 %v1753, %v2257
  %v2499 = vadd.f32 %v1754, %v2259
  %v2500 = vadd.f32 %v1755, %v2261
  %v2501 = vadd.f32 %v1756, %v2265
  %v2502 = vadd.f32 %v1757, %v2267
  %v2503 = vadd.f32 %v1758, %v2269
  %v2504 = vadd.f32 %v1759, %v2271
  %v2505 = vadd.f32 %v1760, %v2275
  %v2506 = vadd.f32 %v1761, %v2277
  %v2507 = vadd.f32 %v1762, %v2279
  %v2508 = vadd.f32 %v1763, %v2281
  %v2509 = vadd.f32 %v1764, %v2285
  %v2510 = vadd.f32 %v1765, %v2287
  %v2511 = vadd.f32 %v1766, %v2289
  %v2512 = vadd.f32 %v1767, %v2291
  %v2513 = vadd.f32 %v1768, %v2295
  %v2514 = vadd.f32 %v1769, %v2297
  %v2515 = vadd.f32 %v1770, %v2299
  %v2516 = vadd.f32 %v1771, %v2301
  %v2517 = vadd.f32 %v1772, %v2305
  %v2518 = vadd.f32 %v1773, %v2307
  %v2519 = vadd.f32 %v1774, %v2309
  %v2520 = vadd.f32 %v1775, %v2311
  %v2521 = vadd.f32 %v1776, %v2315
  %v2522 = vadd.f32 %v1777, %v2317
  %v2523 = vadd.f32 %v1778, %v2319
  %v2524 = vadd.f32 %v1779, %v2321
  %v2525 = vadd.f32 %v1780, %v2325
  %v2526 = vadd.f32 %v1781, %v2327
  %v2527 = vadd.f32 %v1782, %v2329
  %v2528 = vadd.f32 %v1783, %v2331
  %v2529 = vadd.f32 %v1784, %v2335
  %v2530 = vadd.f32 %v1785, %v2337
  %v2531 = vadd.f32 %v1786, %v2339
  %v2532 = vadd.f32 %v1787, %v2341
  %v2533 = vadd.f32 %v1788, %v2345
  %v2534 = vadd.f32 %v1789, %v2347
  %v2535 = vadd.f32 %v1790, %v2349
  %v2536 = vadd.f32 %v1791, %v2351
  %v2537 = vadd.f32 %v1792, %v2355
  %v2538 = vadd.f32 %v1793, %v2357
  %v2539 = vadd.f32 %v1794, %v2359
  %v2540 = vadd.f32 %v1795, %v2361
  %v2541 = vadd.f32 %v1796, %v2365
  %v2542 = vadd.f32 %v1797, %v2367
  %v2543 = vadd.f32 %v1798, %v2369
  %v2544 = vadd.f32 %v1799, %v2371
  %v2545 = vadd.f32 %v1800, %v2375
  %v2546 = vadd.f32 %v1801, %v2377
  %v2547 = vadd.f32 %v1802, %v2379
  %v2548 = vadd.f32 %v1803, %v2381
  %v2549 = vadd.f32 %v1804, %v2385
  %v2550 = vadd.f32 %v1805, %v2387
  %v2551 = vadd.f32 %v1806, %v2389
  %v2552 = vadd.f32 %v1807, %v2391
  %v2553 = vadd.f32 %v1808, %v2395
  %v2554 = vadd.f32 %v1809, %v2397
  %v2555 = vadd.f32 %v1810, %v2399
  %v2556 = vadd.f32 %v1811, %v2401
  %v2557 = vadd.f32 %v1812, %v2405
  %v2558 = vadd.f32 %v1813, %v2407
  %v2559 = vadd.f32 %v1814, %v2409
  %v2560 = vadd.f32 %v1815, %v2411
  %v2561 = vadd.f32 %v1816, %v2415
  %v2562 = vadd.f32 %v1817, %v2417
  %v2563 = vadd.f32 %v1818, %v2419
  %v2564 = vadd.f32 %v1819, %v2421
  %v2565 = vadd.f32 %v1820, %v2425
  %v2566 = vadd.f32 %v1821, %v2427
  %v2567 = vadd.f32 %v1822, %v2429
  %v2568 = vadd.f32 %v1823, %v2431
  %v2569 = vadd.f32 %v1824, %v2435
  %v2570 = vadd.f32 %v1825, %v2437
  %v2571 = vadd.f32 %v1826, %v2439
  %v2572 = vadd.f32 %v1827, %v2441
  %v2573 = vadd.f32 %v1828, %v2445
  %v2574 = vadd.f32 %v1829, %v2447
  %v2575 = vadd.f32 %v1830, %v2449
  %v2576 = vadd.f32 %v1831, %v2451
  %v2577 = vadd.f32 %v1832, %v2455
  %v2578 = vadd.f32 %v1833, %v2457
  %v2579 = vadd.f32 %v1834, %v2459
  %v2580 = vadd.f32 %v1835, %v2461
  %v2581 = vadd.f32 %v1836, %v2465
  %v2582 = vadd.f32 %v1837, %v2467
  %v2583 = vadd.f32 %v1838, %v2469
  %v2584 = vadd.f32 %v1839, %v2471
  %v2585 = vld [vmem:[%s0 + $0x20] sm:$0xf]
  %v2586 = vld [vmem:[%s0 + $0x24] sm:$0xf]
  %v2587 = vld [vmem:[%s0 + $0x28] sm:$0xf]
  %v2588 = vld [vmem:[%s0 + $0x2c] sm:$0xf]
  %v2589 = vld [vmem:[%s0 + $0x30] sm:$0xf]
  %v2590 = vld [vmem:[%s0 + $0x34] sm:$0xf]
  %v2591 = vld [vmem:[%s0 + $0x38] sm:$0xf]
  %v2592 = vld [vmem:[%s0 + $0x3c] sm:$0xf]
  %v2593 = vld [vmem:[%s0 + $0x40] sm:$0xf]
  %v2594 = vld [vmem:[%s0 + $0x44] sm:$0xf]
  %v2595 = vld [vmem:[%s0 + $0x48] sm:$0xf]
  %v2596 = vld [vmem:[%s0 + $0x4c] sm:$0xf]
  %v2597 = vld [vmem:[%s0 + $0x50] sm:$0xf]
  %v2598 = vld [vmem:[%s0 + $0x54] sm:$0xf]
  %v2599 = vld [vmem:[%s0 + $0x58] sm:$0xf]
  %v2600 = vld [vmem:[%s0 + $0x5c] sm:$0xf]
  %v2601 = vld [vmem:[%s0 + $0x60] sm:$0xf]
  %v2602 = vld [vmem:[%s0 + $0x64] sm:$0xf]
  %v2603 = vld [vmem:[%s0 + $0x68] sm:$0xf]
  %v2604 = vld [vmem:[%s0 + $0x6c] sm:$0xf]
  %v2605 = vld [vmem:[%s0 + $0x70] sm:$0xf]
  %v2606 = vld [vmem:[%s0 + $0x74] sm:$0xf]
  %v2607 = vld [vmem:[%s0 + $0x78] sm:$0xf]
  %v2608 = vld [vmem:[%s0 + $0x7c] sm:$0xf]
  %v2609 = vld [vmem:[%s0 + $0x80] sm:$0xf]
  %v2610 = vld [vmem:[%s0 + $0x84] sm:$0xf]
  %v2611 = vld [vmem:[%s0 + $0x88] sm:$0xf]
  %v2612 = vld [vmem:[%s0 + $0x8c] sm:$0xf]
  %v2613 = vld [vmem:[%s0 + $0x90] sm:$0xf]
  %v2614 = vld [vmem:[%s0 + $0x94] sm:$0xf]
  %v2615 = vld [vmem:[%s0 + $0x98] sm:$0xf]
  %v2616 = vld [vmem:[%s0 + $0x9c] sm:$0xf]
  %v2617 = vld [vmem:[%s0 + $0xa0] sm:$0xf]
  %v2618 = vld [vmem:[%s0 + $0xa4] sm:$0xf]
  %v2619 = vld [vmem:[%s0 + $0xa8] sm:$0xf]
  %v2620 = vld [vmem:[%s0 + $0xac] sm:$0xf]
  %v2621 = vld [vmem:[%s0 + $0xb0] sm:$0xf]
  %v2622 = vld [vmem:[%s0 + $0xb4] sm:$0xf]
  %v2623 = vld [vmem:[%s0 + $0xb8] sm:$0xf]
  %v2624 = vld [vmem:[%s0 + $0xbc] sm:$0xf]
  %v2625 = vld [vmem:[%s0 + $0xc0] sm:$0xf]
  %v2626 = vld [vmem:[%s0 + $0xc4] sm:$0xf]
  %v2627 = vld [vmem:[%s0 + $0xc8] sm:$0xf]
  %v2628 = vld [vmem:[%s0 + $0xcc] sm:$0xf]
  %v2629 = vld [vmem:[%s0 + $0xd0] sm:$0xf]
  %v2630 = vld [vmem:[%s0 + $0xd4] sm:$0xf]
  %v2631 = vld [vmem:[%s0 + $0xd8] sm:$0xf]
  %v2632 = vld [vmem:[%s0 + $0xdc] sm:$0xf]
  %v2633 = vld [vmem:[%s0 + $0xe0] sm:$0xf]
  %v2634 = vld [vmem:[%s0 + $0xe4] sm:$0xf]
  %v2635 = vld [vmem:[%s0 + $0xe8] sm:$0xf]
  %v2636 = vld [vmem:[%s0 + $0xec] sm:$0xf]
  %v2637 = vld [vmem:[%s0 + $0xf0] sm:$0xf]
  %v2638 = vld [vmem:[%s0 + $0xf4] sm:$0xf]
  %v2639 = vld [vmem:[%s0 + $0xf8] sm:$0xf]
  %v2640 = vld [vmem:[%s0 + $0xfc] sm:$0xf]
  %v2641 = vld [vmem:[%s1 + $0x200] sm:$0xff]
  %v2642 = vld [vmem:[%s1 + $0x208] sm:$0xff]
  %v2643 = vld [vmem:[%s1 + $0x210] sm:$0xff]
  %v2644 = vld [vmem:[%s1 + $0x218] sm:$0xff]
  %v2645 = vld [vmem:[%s1 + $0x220] sm:$0xff]
  %v2646 = vld [vmem:[%s1 + $0x228] sm:$0xff]
  %v2647 = vld [vmem:[%s1 + $0x230] sm:$0xff]
  %v2648 = vld [vmem:[%s1 + $0x238] sm:$0xff]
  %v2649 = vld [vmem:[%s1 + $0x240] sm:$0xff]
  %v2650 = vld [vmem:[%s1 + $0x248] sm:$0xff]
  %v2651 = vld [vmem:[%s1 + $0x250] sm:$0xff]
  %v2652 = vld [vmem:[%s1 + $0x258] sm:$0xff]
  %v2653 = vld [vmem:[%s1 + $0x260] sm:$0xff]
  %v2654 = vld [vmem:[%s1 + $0x268] sm:$0xff]
  %v2655 = vld [vmem:[%s1 + $0x270] sm:$0xff]
  %v2656 = vld [vmem:[%s1 + $0x278] sm:$0xff]
  %v2713 = vunpack.c.l.b16 %v2585
  %v2714 = vunpack.c.l.b16 %v2586
  %v2715 = vunpack.c.l.b16 %v2587
  %v2716 = vunpack.c.l.b16 %v2588
  %v2717 = vunpack.c.l.b16 %v2589
  %v2718 = vunpack.c.l.b16 %v2590
  %v2719 = vunpack.c.l.b16 %v2591
  %v2720 = vunpack.c.l.b16 %v2592
  %v2721 = vunpack.c.l.b16 %v2593
  %v2722 = vunpack.c.l.b16 %v2594
  %v2723 = vunpack.c.l.b16 %v2595
  %v2724 = vunpack.c.l.b16 %v2596
  %v2725 = vunpack.c.l.b16 %v2597
  %v2726 = vunpack.c.l.b16 %v2598
  %v2727 = vunpack.c.l.b16 %v2599
  %v2728 = vunpack.c.l.b16 %v2600
  %v2729 = vunpack.c.l.b16 %v2601
  %v2730 = vunpack.c.l.b16 %v2602
  %v2731 = vunpack.c.l.b16 %v2603
  %v2732 = vunpack.c.l.b16 %v2604
  %v2733 = vunpack.c.l.b16 %v2605
  %v2734 = vunpack.c.l.b16 %v2606
  %v2735 = vunpack.c.l.b16 %v2607
  %v2736 = vunpack.c.l.b16 %v2608
  %v2737 = vunpack.c.l.b16 %v2609
  %v2738 = vunpack.c.l.b16 %v2610
  %v2739 = vunpack.c.l.b16 %v2611
  %v2740 = vunpack.c.l.b16 %v2612
  %v2741 = vunpack.c.l.b16 %v2613
  %v2742 = vunpack.c.l.b16 %v2614
  %v2743 = vunpack.c.l.b16 %v2615
  %v2744 = vunpack.c.l.b16 %v2616
  %v2745 = vunpack.c.l.b16 %v2617
  %v2746 = vunpack.c.l.b16 %v2618
  %v2747 = vunpack.c.l.b16 %v2619
  %v2748 = vunpack.c.l.b16 %v2620
  %v2749 = vunpack.c.l.b16 %v2621
  %v2750 = vunpack.c.l.b16 %v2622
  %v2751 = vunpack.c.l.b16 %v2623
  %v2752 = vunpack.c.l.b16 %v2624
  %v2753 = vunpack.c.l.b16 %v2625
  %v2754 = vunpack.c.l.b16 %v2626
  %v2755 = vunpack.c.l.b16 %v2627
  %v2756 = vunpack.c.l.b16 %v2628
  %v2757 = vunpack.c.l.b16 %v2629
  %v2758 = vunpack.c.l.b16 %v2630
  %v2759 = vunpack.c.l.b16 %v2631
  %v2760 = vunpack.c.l.b16 %v2632
  %v2761 = vunpack.c.l.b16 %v2633
  %v2762 = vunpack.c.l.b16 %v2634
  %v2763 = vunpack.c.l.b16 %v2635
  %v2764 = vunpack.c.l.b16 %v2636
  %v2765 = vunpack.c.l.b16 %v2637
  %v2766 = vunpack.c.l.b16 %v2638
  %v2767 = vunpack.c.l.b16 %v2639
  %v2768 = vunpack.c.l.b16 %v2640
  %v2769 = vpack.c.b16 %v2714, %v2713
  %v2770 = vpack.c.b16 %v2716, %v2715
  %v2771 = vpack.c.b16 %v2718, %v2717
  %v2772 = vpack.c.b16 %v2720, %v2719
  %v2773 = vpack.c.b16 %v2722, %v2721
  %v2774 = vpack.c.b16 %v2724, %v2723
  %v2775 = vpack.c.b16 %v2726, %v2725
  %v2776 = vpack.c.b16 %v2728, %v2727
  %v2777 = vpack.c.b16 %v2730, %v2729
  %v2778 = vpack.c.b16 %v2732, %v2731
  %v2779 = vpack.c.b16 %v2734, %v2733
  %v2780 = vpack.c.b16 %v2736, %v2735
  %v2781 = vpack.c.b16 %v2738, %v2737
  %v2782 = vpack.c.b16 %v2740, %v2739
  %v2783 = vpack.c.b16 %v2742, %v2741
  %v2784 = vpack.c.b16 %v2744, %v2743
  %v2785 = vpack.c.b16 %v2746, %v2745
  %v2786 = vpack.c.b16 %v2748, %v2747
  %v2787 = vpack.c.b16 %v2750, %v2749
  %v2788 = vpack.c.b16 %v2752, %v2751
  %v2789 = vpack.c.b16 %v2754, %v2753
  %v2790 = vpack.c.b16 %v2756, %v2755
  %v2791 = vpack.c.b16 %v2758, %v2757
  %v2792 = vpack.c.b16 %v2760, %v2759
  %v2793 = vpack.c.b16 %v2762, %v2761
  %v2794 = vpack.c.b16 %v2764, %v2763
  %v2795 = vpack.c.b16 %v2766, %v2765
  %v2796 = vpack.c.b16 %v2768, %v2767
  %v2841 = vunpack.c.l.b16 %v2641
  %v2842 = vunpack.c.h.b16 %v2641
  %v2843 = vunpack.c.l.b16 %v2642
  %v2844 = vunpack.c.h.b16 %v2642
  %v2845 = vunpack.c.l.b16 %v2643
  %v2846 = vunpack.c.h.b16 %v2643
  %v2847 = vunpack.c.l.b16 %v2644
  %v2848 = vunpack.c.h.b16 %v2644
  %v2849 = vunpack.c.l.b16 %v2645
  %v2850 = vunpack.c.h.b16 %v2645
  %v2851 = vunpack.c.l.b16 %v2646
  %v2852 = vunpack.c.h.b16 %v2646
  %v2853 = vunpack.c.l.b16 %v2647
  %v2854 = vunpack.c.h.b16 %v2647
  %v2855 = vunpack.c.l.b16 %v2648
  %v2856 = vunpack.c.h.b16 %v2648
  %v2857 = vunpack.c.l.b16 %v2649
  %v2858 = vunpack.c.h.b16 %v2649
  %v2859 = vunpack.c.l.b16 %v2650
  %v2860 = vunpack.c.h.b16 %v2650
  %v2861 = vunpack.c.l.b16 %v2651
  %v2862 = vunpack.c.h.b16 %v2651
  %v2863 = vunpack.c.l.b16 %v2652
  %v2864 = vunpack.c.h.b16 %v2652
  %v2865 = vunpack.c.l.b16 %v2653
  %v2866 = vunpack.c.h.b16 %v2653
  %v2867 = vunpack.c.l.b16 %v2654
  %v2868 = vunpack.c.h.b16 %v2654
  %v2869 = vunpack.c.l.b16 %v2655
  %v2870 = vunpack.c.h.b16 %v2655
  %v2871 = vunpack.c.l.b16 %v2656
  %v2872 = vunpack.c.h.b16 %v2656
  %v2873 = vpack.c.b16 %v2843, %v2841
  %v2874 = vpack.c.b16 %v2844, %v2842
  %v2875 = vpack.c.b16 %v2847, %v2845
  %v2876 = vpack.c.b16 %v2848, %v2846
  %v2877 = vpack.c.b16 %v2851, %v2849
  %v2878 = vpack.c.b16 %v2852, %v2850
  %v2879 = vpack.c.b16 %v2855, %v2853
  %v2880 = vpack.c.b16 %v2856, %v2854
  %v2881 = vpack.c.b16 %v2859, %v2857
  %v2882 = vpack.c.b16 %v2860, %v2858
  %v2883 = vpack.c.b16 %v2863, %v2861
  %v2884 = vpack.c.b16 %v2864, %v2862
  %v2885 = vpack.c.b16 %v2867, %v2865
  %v2886 = vpack.c.b16 %v2868, %v2866
  %v2887 = vpack.c.b16 %v2871, %v2869
  %v2888 = vpack.c.b16 %v2872, %v2870
  %2905 = vmatprep.subr.bf16.mxu0 %v2874
  %2906 = vmatpush1.bf16.msra.mxu0 %v2873
  %2907 = vmatprep.subr.bf16.mxu0 %v2876
  %2908 = vmatpush1.bf16.msra.mxu0 %v2875
  %2909 = vmatprep.subr.bf16.mxu0 %v2878
  %2910 = vmatpush1.bf16.msra.mxu0 %v2877
  %2911 = vmatprep.subr.bf16.mxu0 %v2880
  %2912 = vmatpush1.bf16.msra.mxu0 %v2879
  %2913 = vmatprep.subr.bf16.mxu0 %v2882
  %2914 = vmatpush1.bf16.msra.mxu0 %v2881
  %2915 = vmatprep.subr.bf16.mxu0 %v2884
  %2916 = vmatpush1.bf16.msra.mxu0 %v2883
  %2917 = vmatprep.subr.bf16.mxu0 %v2886
  %2918 = vmatpush1.bf16.msra.mxu0 %v2885
  %2919 = vmatprep.subr.bf16.mxu0 %v2888
  %2920 = vmatpush1.bf16.msra.mxu0 %v2887
  %2921 = vmatprep.subr.bf16.mxu0 0
  %2922 = vmatpush1.bf16.msra.mxu0 0
  %2923 = vmatprep.subr.bf16.mxu0 0
  %2924 = vmatpush1.bf16.msra.mxu0 0
  %2925 = vmatprep.subr.bf16.mxu0 0
  %2926 = vmatpush1.bf16.msra.mxu0 0
  %2927 = vmatprep.subr.bf16.mxu0 0
  %2928 = vmatpush1.bf16.msra.mxu0 0
  %2929 = vmatprep.subr.bf16.mxu0 0
  %2930 = vmatpush1.bf16.msra.mxu0 0
  %2931 = vmatprep.subr.bf16.mxu0 0
  %2932 = vmatpush1.bf16.msra.mxu0 0
  %2933 = vmatprep.subr.bf16.mxu0 0
  %2934 = vmatpush1.bf16.msra.mxu0 0
  %2935 = vmatprep.subr.bf16.mxu0 0
  %2936 = vmatpush1.bf16.msra.mxu0 0
  %2937 = vmatprep.mubr.bf16.mxu0 0
  %2938 = vmatmul.mubr.bf16.gmra.mrb[0].mxu0 %v2769
  %v2939 = vpop.f32.mrb[0].mxu0
  %v2940 = vadd.f32 0.0, %v2939
  %v2941 = vpop.f32.mrb[0].mxu0
  %v2942 = vadd.f32 0.0, %v2941
  %v2943 = vpop.f32.mrb[0].mxu0
  %v2944 = vadd.f32 0.0, %v2943
  %v2945 = vpop.f32.mrb[0].mxu0
  %v2946 = vadd.f32 0.0, %v2945
  %2947 = vmatprep.mubr.bf16.mxu0 0
  %2948 = vmatmul.mubr.bf16.gmra.mrb[0].mxu0 %v2770
  %v2949 = vpop.f32.mrb[0].mxu0
  %v2950 = vadd.f32 0.0, %v2949
  %v2951 = vpop.f32.mrb[0].mxu0
  %v2952 = vadd.f32 0.0, %v2951
  %v2953 = vpop.f32.mrb[0].mxu0
  %v2954 = vadd.f32 0.0, %v2953
  %v2955 = vpop.f32.mrb[0].mxu0
  %v2956 = vadd.f32 0.0, %v2955
  %2957 = vmatprep.mubr.bf16.mxu0 0
  %2958 = vmatmul.mubr.bf16.gmra.mrb[0].mxu0 %v2771
  %v2959 = vpop.f32.mrb[0].mxu0
  %v2960 = vadd.f32 0.0, %v2959
  %v2961 = vpop.f32.mrb[0].mxu0
  %v2962 = vadd.f32 0.0, %v2961
  %v2963 = vpop.f32.mrb[0].mxu0
  %v2964 = vadd.f32 0.0, %v2963
  %v2965 = vpop.f32.mrb[0].mxu0
  %v2966 = vadd.f32 0.0, %v2965
  %2967 = vmatprep.mubr.bf16.mxu0 0
  %2968 = vmatmul.mubr.bf16.gmra.mrb[0].mxu0 %v2772
  %v2969 = vpop.f32.mrb[0].mxu0
  %v2970 = vadd.f32 0.0, %v2969
  %v2971 = vpop.f32.mrb[0].mxu0
  %v2972 = vadd.f32 0.0, %v2971
  %v2973 = vpop.f32.mrb[0].mxu0
  %v2974 = vadd.f32 0.0, %v2973
  %v2975 = vpop.f32.mrb[0].mxu0
  %v2976 = vadd.f32 0.0, %v2975
  %2977 = vmatprep.mubr.bf16.mxu0 0
  %2978 = vmatmul.mubr.bf16.gmra.mrb[0].mxu0 %v2773
  %v2979 = vpop.f32.mrb[0].mxu0
  %v2980 = vadd.f32 0.0, %v2979
  %v2981 = vpop.f32.mrb[0].mxu0
  %v2982 = vadd.f32 0.0, %v2981
  %v2983 = vpop.f32.mrb[0].mxu0
  %v2984 = vadd.f32 0.0, %v2983
  %v2985 = vpop.f32.mrb[0].mxu0
  %v2986 = vadd.f32 0.0, %v2985
  %2987 = vmatprep.mubr.bf16.mxu0 0
  %2988 = vmatmul.mubr.bf16.gmra.mrb[0].mxu0 %v2774
  %v2989 = vpop.f32.mrb[0].mxu0
  %v2990 = vadd.f32 0.0, %v2989
  %v2991 = vpop.f32.mrb[0].mxu0
  %v2992 = vadd.f32 0.0, %v2991
  %v2993 = vpop.f32.mrb[0].mxu0
  %v2994 = vadd.f32 0.0, %v2993
  %v2995 = vpop.f32.mrb[0].mxu0
  %v2996 = vadd.f32 0.0, %v2995
  %2997 = vmatprep.mubr.bf16.mxu0 0
  %2998 = vmatmul.mubr.bf16.gmra.mrb[0].mxu0 %v2775
  %v2999 = vpop.f32.mrb[0].mxu0
  %v3000 = vadd.f32 0.0, %v2999
  %v3001 = vpop.f32.mrb[0].mxu0
  %v3002 = vadd.f32 0.0, %v3001
  %v3003 = vpop.f32.mrb[0].mxu0
  %v3004 = vadd.f32 0.0, %v3003
  %v3005 = vpop.f32.mrb[0].mxu0
  %v3006 = vadd.f32 0.0, %v3005
  %3007 = vmatprep.mubr.bf16.mxu0 0
  %3008 = vmatmul.mubr.bf16.gmra.mrb[0].mxu0 %v2776
  %v3009 = vpop.f32.mrb[0].mxu0
  %v3010 = vadd.f32 0.0, %v3009
  %v3011 = vpop.f32.mrb[0].mxu0
  %v3012 = vadd.f32 0.0, %v3011
  %v3013 = vpop.f32.mrb[0].mxu0
  %v3014 = vadd.f32 0.0, %v3013
  %v3015 = vpop.f32.mrb[0].mxu0
  %v3016 = vadd.f32 0.0, %v3015
  %3017 = vmatprep.mubr.bf16.mxu0 0
  %3018 = vmatmul.mubr.bf16.gmra.mrb[0].mxu0 %v2777
  %v3019 = vpop.f32.mrb[0].mxu0
  %v3020 = vadd.f32 0.0, %v3019
  %v3021 = vpop.f32.mrb[0].mxu0
  %v3022 = vadd.f32 0.0, %v3021
  %v3023 = vpop.f32.mrb[0].mxu0
  %v3024 = vadd.f32 0.0, %v3023
  %v3025 = vpop.f32.mrb[0].mxu0
  %v3026 = vadd.f32 0.0, %v3025
  %3027 = vmatprep.mubr.bf16.mxu0 0
  %3028 = vmatmul.mubr.bf16.gmra.mrb[0].mxu0 %v2778
  %v3029 = vpop.f32.mrb[0].mxu0
  %v3030 = vadd.f32 0.0, %v3029
  %v3031 = vpop.f32.mrb[0].mxu0
  %v3032 = vadd.f32 0.0, %v3031
  %v3033 = vpop.f32.mrb[0].mxu0
  %v3034 = vadd.f32 0.0, %v3033
  %v3035 = vpop.f32.mrb[0].mxu0
  %v3036 = vadd.f32 0.0, %v3035
  %3037 = vmatprep.mubr.bf16.mxu0 0
  %3038 = vmatmul.mubr.bf16.gmra.mrb[0].mxu0 %v2779
  %v3039 = vpop.f32.mrb[0].mxu0
  %v3040 = vadd.f32 0.0, %v3039
  %v3041 = vpop.f32.mrb[0].mxu0
  %v3042 = vadd.f32 0.0, %v3041
  %v3043 = vpop.f32.mrb[0].mxu0
  %v3044 = vadd.f32 0.0, %v3043
  %v3045 = vpop.f32.mrb[0].mxu0
  %v3046 = vadd.f32 0.0, %v3045
  %3047 = vmatprep.mubr.bf16.mxu0 0
  %3048 = vmatmul.mubr.bf16.gmra.mrb[0].mxu0 %v2780
  %v3049 = vpop.f32.mrb[0].mxu0
  %v3050 = vadd.f32 0.0, %v3049
  %v3051 = vpop.f32.mrb[0].mxu0
  %v3052 = vadd.f32 0.0, %v3051
  %v3053 = vpop.f32.mrb[0].mxu0
  %v3054 = vadd.f32 0.0, %v3053
  %v3055 = vpop.f32.mrb[0].mxu0
  %v3056 = vadd.f32 0.0, %v3055
  %3057 = vmatprep.mubr.bf16.mxu0 0
  %3058 = vmatmul.mubr.bf16.gmra.mrb[0].mxu0 %v2781
  %v3059 = vpop.f32.mrb[0].mxu0
  %v3060 = vadd.f32 0.0, %v3059
  %v3061 = vpop.f32.mrb[0].mxu0
  %v3062 = vadd.f32 0.0, %v3061
  %v3063 = vpop.f32.mrb[0].mxu0
  %v3064 = vadd.f32 0.0, %v3063
  %v3065 = vpop.f32.mrb[0].mxu0
  %v3066 = vadd.f32 0.0, %v3065
  %3067 = vmatprep.mubr.bf16.mxu0 0
  %3068 = vmatmul.mubr.bf16.gmra.mrb[0].mxu0 %v2782
  %v3069 = vpop.f32.mrb[0].mxu0
  %v3070 = vadd.f32 0.0, %v3069
  %v3071 = vpop.f32.mrb[0].mxu0
  %v3072 = vadd.f32 0.0, %v3071
  %v3073 = vpop.f32.mrb[0].mxu0
  %v3074 = vadd.f32 0.0, %v3073
  %v3075 = vpop.f32.mrb[0].mxu0
  %v3076 = vadd.f32 0.0, %v3075
  %3077 = vmatprep.mubr.bf16.mxu0 0
  %3078 = vmatmul.mubr.bf16.gmra.mrb[0].mxu0 %v2783
  %v3079 = vpop.f32.mrb[0].mxu0
  %v3080 = vadd.f32 0.0, %v3079
  %v3081 = vpop.f32.mrb[0].mxu0
  %v3082 = vadd.f32 0.0, %v3081
  %v3083 = vpop.f32.mrb[0].mxu0
  %v3084 = vadd.f32 0.0, %v3083
  %v3085 = vpop.f32.mrb[0].mxu0
  %v3086 = vadd.f32 0.0, %v3085
  %3087 = vmatprep.mubr.bf16.mxu0 0
  %3088 = vmatmul.mubr.bf16.gmra.mrb[0].mxu0 %v2784
  %v3089 = vpop.f32.mrb[0].mxu0
  %v3090 = vadd.f32 0.0, %v3089
  %v3091 = vpop.f32.mrb[0].mxu0
  %v3092 = vadd.f32 0.0, %v3091
  %v3093 = vpop.f32.mrb[0].mxu0
  %v3094 = vadd.f32 0.0, %v3093
  %v3095 = vpop.f32.mrb[0].mxu0
  %v3096 = vadd.f32 0.0, %v3095
  %3097 = vmatprep.mubr.bf16.mxu0 0
  %3098 = vmatmul.mubr.bf16.gmra.mrb[0].mxu0 %v2785
  %v3099 = vpop.f32.mrb[0].mxu0
  %v3100 = vadd.f32 0.0, %v3099
  %v3101 = vpop.f32.mrb[0].mxu0
  %v3102 = vadd.f32 0.0, %v3101
  %v3103 = vpop.f32.mrb[0].mxu0
  %v3104 = vadd.f32 0.0, %v3103
  %v3105 = vpop.f32.mrb[0].mxu0
  %v3106 = vadd.f32 0.0, %v3105
  %3107 = vmatprep.mubr.bf16.mxu0 0
  %3108 = vmatmul.mubr.bf16.gmra.mrb[0].mxu0 %v2786
  %v3109 = vpop.f32.mrb[0].mxu0
  %v3110 = vadd.f32 0.0, %v3109
  %v3111 = vpop.f32.mrb[0].mxu0
  %v3112 = vadd.f32 0.0, %v3111
  %v3113 = vpop.f32.mrb[0].mxu0
  %v3114 = vadd.f32 0.0, %v3113
  %v3115 = vpop.f32.mrb[0].mxu0
  %v3116 = vadd.f32 0.0, %v3115
  %3117 = vmatprep.mubr.bf16.mxu0 0
  %3118 = vmatmul.mubr.bf16.gmra.mrb[0].mxu0 %v2787
  %v3119 = vpop.f32.mrb[0].mxu0
  %v3120 = vadd.f32 0.0, %v3119
  %v3121 = vpop.f32.mrb[0].mxu0
  %v3122 = vadd.f32 0.0, %v3121
  %v3123 = vpop.f32.mrb[0].mxu0
  %v3124 = vadd.f32 0.0, %v3123
  %v3125 = vpop.f32.mrb[0].mxu0
  %v3126 = vadd.f32 0.0, %v3125
  %3127 = vmatprep.mubr.bf16.mxu0 0
  %3128 = vmatmul.mubr.bf16.gmra.mrb[0].mxu0 %v2788
  %v3129 = vpop.f32.mrb[0].mxu0
  %v3130 = vadd.f32 0.0, %v3129
  %v3131 = vpop.f32.mrb[0].mxu0
  %v3132 = vadd.f32 0.0, %v3131
  %v3133 = vpop.f32.mrb[0].mxu0
  %v3134 = vadd.f32 0.0, %v3133
  %v3135 = vpop.f32.mrb[0].mxu0
  %v3136 = vadd.f32 0.0, %v3135
  %3137 = vmatprep.mubr.bf16.mxu0 0
  %3138 = vmatmul.mubr.bf16.gmra.mrb[0].mxu0 %v2789
  %v3139 = vpop.f32.mrb[0].mxu0
  %v3140 = vadd.f32 0.0, %v3139
  %v3141 = vpop.f32.mrb[0].mxu0
  %v3142 = vadd.f32 0.0, %v3141
  %v3143 = vpop.f32.mrb[0].mxu0
  %v3144 = vadd.f32 0.0, %v3143
  %v3145 = vpop.f32.mrb[0].mxu0
  %v3146 = vadd.f32 0.0, %v3145
  %3147 = vmatprep.mubr.bf16.mxu0 0
  %3148 = vmatmul.mubr.bf16.gmra.mrb[0].mxu0 %v2790
  %v3149 = vpop.f32.mrb[0].mxu0
  %v3150 = vadd.f32 0.0, %v3149
  %v3151 = vpop.f32.mrb[0].mxu0
  %v3152 = vadd.f32 0.0, %v3151
  %v3153 = vpop.f32.mrb[0].mxu0
  %v3154 = vadd.f32 0.0, %v3153
  %v3155 = vpop.f32.mrb[0].mxu0
  %v3156 = vadd.f32 0.0, %v3155
  %3157 = vmatprep.mubr.bf16.mxu0 0
  %3158 = vmatmul.mubr.bf16.gmra.mrb[0].mxu0 %v2791
  %v3159 = vpop.f32.mrb[0].mxu0
  %v3160 = vadd.f32 0.0, %v3159
  %v3161 = vpop.f32.mrb[0].mxu0
  %v3162 = vadd.f32 0.0, %v3161
  %v3163 = vpop.f32.mrb[0].mxu0
  %v3164 = vadd.f32 0.0, %v3163
  %v3165 = vpop.f32.mrb[0].mxu0
  %v3166 = vadd.f32 0.0, %v3165
  %3167 = vmatprep.mubr.bf16.mxu0 0
  %3168 = vmatmul.mubr.bf16.gmra.mrb[0].mxu0 %v2792
  %v3169 = vpop.f32.mrb[0].mxu0
  %v3170 = vadd.f32 0.0, %v3169
  %v3171 = vpop.f32.mrb[0].mxu0
  %v3172 = vadd.f32 0.0, %v3171
  %v3173 = vpop.f32.mrb[0].mxu0
  %v3174 = vadd.f32 0.0, %v3173
  %v3175 = vpop.f32.mrb[0].mxu0
  %v3176 = vadd.f32 0.0, %v3175
  %3177 = vmatprep.mubr.bf16.mxu0 0
  %3178 = vmatmul.mubr.bf16.gmra.mrb[0].mxu0 %v2793
  %v3179 = vpop.f32.mrb[0].mxu0
  %v3180 = vadd.f32 0.0, %v3179
  %v3181 = vpop.f32.mrb[0].mxu0
  %v3182 = vadd.f32 0.0, %v3181
  %v3183 = vpop.f32.mrb[0].mxu0
  %v3184 = vadd.f32 0.0, %v3183
  %v3185 = vpop.f32.mrb[0].mxu0
  %v3186 = vadd.f32 0.0, %v3185
  %3187 = vmatprep.mubr.bf16.mxu0 0
  %3188 = vmatmul.mubr.bf16.gmra.mrb[0].mxu0 %v2794
  %v3189 = vpop.f32.mrb[0].mxu0
  %v3190 = vadd.f32 0.0, %v3189
  %v3191 = vpop.f32.mrb[0].mxu0
  %v3192 = vadd.f32 0.0, %v3191
  %v3193 = vpop.f32.mrb[0].mxu0
  %v3194 = vadd.f32 0.0, %v3193
  %v3195 = vpop.f32.mrb[0].mxu0
  %v3196 = vadd.f32 0.0, %v3195
  %3197 = vmatprep.mubr.bf16.mxu0 0
  %3198 = vmatmul.mubr.bf16.gmra.mrb[0].mxu0 %v2795
  %v3199 = vpop.f32.mrb[0].mxu0
  %v3200 = vadd.f32 0.0, %v3199
  %v3201 = vpop.f32.mrb[0].mxu0
  %v3202 = vadd.f32 0.0, %v3201
  %v3203 = vpop.f32.mrb[0].mxu0
  %v3204 = vadd.f32 0.0, %v3203
  %v3205 = vpop.f32.mrb[0].mxu0
  %v3206 = vadd.f32 0.0, %v3205
  %3207 = vmatprep.mubr.bf16.mxu0 0
  %3208 = vmatmul.mubr.bf16.gmra.mrb[0].mxu0 %v2796
  %v3209 = vpop.f32.mrb[0].mxu0
  %v3210 = vadd.f32 0.0, %v3209
  %v3211 = vpop.f32.mrb[0].mxu0
  %v3212 = vadd.f32 0.0, %v3211
  %v3213 = vpop.f32.mrb[0].mxu0
  %v3214 = vadd.f32 0.0, %v3213
  %v3215 = vpop.f32.mrb[0].mxu0
  %v3216 = vadd.f32 0.0, %v3215
  %3217 = vdwg.mxu0
  %v3218 = vadd.f32 %v2473, %v2940
  %v3219 = vadd.f32 %v2474, %v2942
  %v3220 = vadd.f32 %v2475, %v2944
  %v3221 = vadd.f32 %v2476, %v2946
  %v3222 = vadd.f32 %v2477, %v2950
  %v3223 = vadd.f32 %v2478, %v2952
  %v3224 = vadd.f32 %v2479, %v2954
  %v3225 = vadd.f32 %v2480, %v2956
  %v3226 = vadd.f32 %v2481, %v2960
  %v3227 = vadd.f32 %v2482, %v2962
  %v3228 = vadd.f32 %v2483, %v2964
  %v3229 = vadd.f32 %v2484, %v2966
  %v3230 = vadd.f32 %v2485, %v2970
  %v3231 = vadd.f32 %v2486, %v2972
  %v3232 = vadd.f32 %v2487, %v2974
  %v3233 = vadd.f32 %v2488, %v2976
  %v3234 = vadd.f32 %v2489, %v2980
  %v3235 = vadd.f32 %v2490, %v2982
  %v3236 = vadd.f32 %v2491, %v2984
  %v3237 = vadd.f32 %v2492, %v2986
  %v3238 = vadd.f32 %v2493, %v2990
  %v3239 = vadd.f32 %v2494, %v2992
  %v3240 = vadd.f32 %v2495, %v2994
  %v3241 = vadd.f32 %v2496, %v2996
  %v3242 = vadd.f32 %v2497, %v3000
  %v3243 = vadd.f32 %v2498, %v3002
  %v3244 = vadd.f32 %v2499, %v3004
  %v3245 = vadd.f32 %v2500, %v3006
  %v3246 = vadd.f32 %v2501, %v3010
  %v3247 = vadd.f32 %v2502, %v3012
  %v3248 = vadd.f32 %v2503, %v3014
  %v3249 = vadd.f32 %v2504, %v3016
  %v3250 = vadd.f32 %v2505, %v3020
  %v3251 = vadd.f32 %v2506, %v3022
  %v3252 = vadd.f32 %v2507, %v3024
  %v3253 = vadd.f32 %v2508, %v3026
  %v3254 = vadd.f32 %v2509, %v3030
  %v3255 = vadd.f32 %v2510, %v3032
  %v3256 = vadd.f32 %v2511, %v3034
  %v3257 = vadd.f32 %v2512, %v3036
  %v3258 = vadd.f32 %v2513, %v3040
  %v3259 = vadd.f32 %v2514, %v3042
  %v3260 = vadd.f32 %v2515, %v3044
  %v3261 = vadd.f32 %v2516, %v3046
  %v3262 = vadd.f32 %v2517, %v3050
  %v3263 = vadd.f32 %v2518, %v3052
  %v3264 = vadd.f32 %v2519, %v3054
  %v3265 = vadd.f32 %v2520, %v3056
  %v3266 = vadd.f32 %v2521, %v3060
  %v3267 = vadd.f32 %v2522, %v3062
  %v3268 = vadd.f32 %v2523, %v3064
  %v3269 = vadd.f32 %v2524, %v3066
  %v3270 = vadd.f32 %v2525, %v3070
  %v3271 = vadd.f32 %v2526, %v3072
  %v3272 = vadd.f32 %v2527, %v3074
  %v3273 = vadd.f32 %v2528, %v3076
  %v3274 = vadd.f32 %v2529, %v3080
  %v3275 = vadd.f32 %v2530, %v3082
  %v3276 = vadd.f32 %v2531, %v3084
  %v3277 = vadd.f32 %v2532, %v3086
  %v3278 = vadd.f32 %v2533, %v3090
  %v3279 = vadd.f32 %v2534, %v3092
  %v3280 = vadd.f32 %v2535, %v3094
  %v3281 = vadd.f32 %v2536, %v3096
  %v3282 = vadd.f32 %v2537, %v3100
  %v3283 = vadd.f32 %v2538, %v3102
  %v3284 = vadd.f32 %v2539, %v3104
  %v3285 = vadd.f32 %v2540, %v3106
  %v3286 = vadd.f32 %v2541, %v3110
  %v3287 = vadd.f32 %v2542, %v3112
  %v3288 = vadd.f32 %v2543, %v3114
  %v3289 = vadd.f32 %v2544, %v3116
  %v3290 = vadd.f32 %v2545, %v3120
  %v3291 = vadd.f32 %v2546, %v3122
  %v3292 = vadd.f32 %v2547, %v3124
  %v3293 = vadd.f32 %v2548, %v3126
  %v3294 = vadd.f32 %v2549, %v3130
  %v3295 = vadd.f32 %v2550, %v3132
  %v3296 = vadd.f32 %v2551, %v3134
  %v3297 = vadd.f32 %v2552, %v3136
  %v3298 = vadd.f32 %v2553, %v3140
  %v3299 = vadd.f32 %v2554, %v3142
  %v3300 = vadd.f32 %v2555, %v3144
  %v3301 = vadd.f32 %v2556, %v3146
  %v3302 = vadd.f32 %v2557, %v3150
  %v3303 = vadd.f32 %v2558, %v3152
  %v3304 = vadd.f32 %v2559, %v3154
  %v3305 = vadd.f32 %v2560, %v3156
  %v3306 = vadd.f32 %v2561, %v3160
  %v3307 = vadd.f32 %v2562, %v3162
  %v3308 = vadd.f32 %v2563, %v3164
  %v3309 = vadd.f32 %v2564, %v3166
  %v3310 = vadd.f32 %v2565, %v3170
  %v3311 = vadd.f32 %v2566, %v3172
  %v3312 = vadd.f32 %v2567, %v3174
  %v3313 = vadd.f32 %v2568, %v3176
  %v3314 = vadd.f32 %v2569, %v3180
  %v3315 = vadd.f32 %v2570, %v3182
  %v3316 = vadd.f32 %v2571, %v3184
  %v3317 = vadd.f32 %v2572, %v3186
  %v3318 = vadd.f32 %v2573, %v3190
  %v3319 = vadd.f32 %v2574, %v3192
  %v3320 = vadd.f32 %v2575, %v3194
  %v3321 = vadd.f32 %v2576, %v3196
  %v3322 = vadd.f32 %v2577, %v3200
  %v3323 = vadd.f32 %v2578, %v3202
  %v3324 = vadd.f32 %v2579, %v3204
  %v3325 = vadd.f32 %v2580, %v3206
  %v3326 = vadd.f32 %v2581, %v3210
  %v3327 = vadd.f32 %v2582, %v3212
  %v3328 = vadd.f32 %v2583, %v3214
  %v3329 = vadd.f32 %v2584, %v3216
  %v3330 = vld [vmem:[%s2] sm:$0x3]
  %v3332 = vlaneseq
  %v3333 = vshrl.u32 %v3332, 7
  %v3334 = vsub.s32 0, %v3333
  %v3335 = vrot.slane %v3330, %v3334
  %v3336 = vlaneseq
  %v3337 = vshrl.u32 %v3336, 7
  %v3338 = vsub.s32 1, %v3337
  %v3339 = vrot.slane %v3330, %v3338
  %v3342 = vadd.f32 %v3218, %v3335
  %v3343 = vadd.f32 %v3219, %v3339
  %v3344 = vadd.f32 %v3220, %v3335
  %v3345 = vadd.f32 %v3221, %v3339
  %v3346 = vadd.f32 %v3222, %v3335
  %v3347 = vadd.f32 %v3223, %v3339
  %v3348 = vadd.f32 %v3224, %v3335
  %v3349 = vadd.f32 %v3225, %v3339
  %v3350 = vadd.f32 %v3226, %v3335
  %v3351 = vadd.f32 %v3227, %v3339
  %v3352 = vadd.f32 %v3228, %v3335
  %v3353 = vadd.f32 %v3229, %v3339
  %v3354 = vadd.f32 %v3230, %v3335
  %v3355 = vadd.f32 %v3231, %v3339
  %v3356 = vadd.f32 %v3232, %v3335
  %v3357 = vadd.f32 %v3233, %v3339
  %v3358 = vadd.f32 %v3234, %v3335
  %v3359 = vadd.f32 %v3235, %v3339
  %v3360 = vadd.f32 %v3236, %v3335
  %v3361 = vadd.f32 %v3237, %v3339
  %v3362 = vadd.f32 %v3238, %v3335
  %v3363 = vadd.f32 %v3239, %v3339
  %v3364 = vadd.f32 %v3240, %v3335
  %v3365 = vadd.f32 %v3241, %v3339
  %v3366 = vadd.f32 %v3242, %v3335
  %v3367 = vadd.f32 %v3243, %v3339
  %v3368 = vadd.f32 %v3244, %v3335
  %v3369 = vadd.f32 %v3245, %v3339
  %v3370 = vadd.f32 %v3246, %v3335
  %v3371 = vadd.f32 %v3247, %v3339
  %v3372 = vadd.f32 %v3248, %v3335
  %v3373 = vadd.f32 %v3249, %v3339
  %v3374 = vadd.f32 %v3250, %v3335
  %v3375 = vadd.f32 %v3251, %v3339
  %v3376 = vadd.f32 %v3252, %v3335
  %v3377 = vadd.f32 %v3253, %v3339
  %v3378 = vadd.f32 %v3254, %v3335
  %v3379 = vadd.f32 %v3255, %v3339
  %v3380 = vadd.f32 %v3256, %v3335
  %v3381 = vadd.f32 %v3257, %v3339
  %v3382 = vadd.f32 %v3258, %v3335
  %v3383 = vadd.f32 %v3259, %v3339
  %v3384 = vadd.f32 %v3260, %v3335
  %v3385 = vadd.f32 %v3261, %v3339
  %v3386 = vadd.f32 %v3262, %v3335
  %v3387 = vadd.f32 %v3263, %v3339
  %v3388 = vadd.f32 %v3264, %v3335
  %v3389 = vadd.f32 %v3265, %v3339
  %v3390 = vadd.f32 %v3266, %v3335
  %v3391 = vadd.f32 %v3267, %v3339
  %v3392 = vadd.f32 %v3268, %v3335
  %v3393 = vadd.f32 %v3269, %v3339
  %v3394 = vadd.f32 %v3270, %v3335
  %v3395 = vadd.f32 %v3271, %v3339
  %v3396 = vadd.f32 %v3272, %v3335
  %v3397 = vadd.f32 %v3273, %v3339
  %v3398 = vadd.f32 %v3274, %v3335
  %v3399 = vadd.f32 %v3275, %v3339
  %v3400 = vadd.f32 %v3276, %v3335
  %v3401 = vadd.f32 %v3277, %v3339
  %v3402 = vadd.f32 %v3278, %v3335
  %v3403 = vadd.f32 %v3279, %v3339
  %v3404 = vadd.f32 %v3280, %v3335
  %v3405 = vadd.f32 %v3281, %v3339
  %v3406 = vadd.f32 %v3282, %v3335
  %v3407 = vadd.f32 %v3283, %v3339
  %v3408 = vadd.f32 %v3284, %v3335
  %v3409 = vadd.f32 %v3285, %v3339
  %v3410 = vadd.f32 %v3286, %v3335
  %v3411 = vadd.f32 %v3287, %v3339
  %v3412 = vadd.f32 %v3288, %v3335
  %v3413 = vadd.f32 %v3289, %v3339
  %v3414 = vadd.f32 %v3290, %v3335
  %v3415 = vadd.f32 %v3291, %v3339
  %v3416 = vadd.f32 %v3292, %v3335
  %v3417 = vadd.f32 %v3293, %v3339
  %v3418 = vadd.f32 %v3294, %v3335
  %v3419 = vadd.f32 %v3295, %v3339
  %v3420 = vadd.f32 %v3296, %v3335
  %v3421 = vadd.f32 %v3297, %v3339
  %v3422 = vadd.f32 %v3298, %v3335
  %v3423 = vadd.f32 %v3299, %v3339
  %v3424 = vadd.f32 %v3300, %v3335
  %v3425 = vadd.f32 %v3301, %v3339
  %v3426 = vadd.f32 %v3302, %v3335
  %v3427 = vadd.f32 %v3303, %v3339
  %v3428 = vadd.f32 %v3304, %v3335
  %v3429 = vadd.f32 %v3305, %v3339
  %v3430 = vadd.f32 %v3306, %v3335
  %v3431 = vadd.f32 %v3307, %v3339
  %v3432 = vadd.f32 %v3308, %v3335
  %v3433 = vadd.f32 %v3309, %v3339
  %v3434 = vadd.f32 %v3310, %v3335
  %v3435 = vadd.f32 %v3311, %v3339
  %v3436 = vadd.f32 %v3312, %v3335
  %v3437 = vadd.f32 %v3313, %v3339
  %v3438 = vadd.f32 %v3314, %v3335
  %v3439 = vadd.f32 %v3315, %v3339
  %v3440 = vadd.f32 %v3316, %v3335
  %v3441 = vadd.f32 %v3317, %v3339
  %v3442 = vadd.f32 %v3318, %v3335
  %v3443 = vadd.f32 %v3319, %v3339
  %v3444 = vadd.f32 %v3320, %v3335
  %v3445 = vadd.f32 %v3321, %v3339
  %v3446 = vadd.f32 %v3322, %v3335
  %v3447 = vadd.f32 %v3323, %v3339
  %v3448 = vadd.f32 %v3324, %v3335
  %v3449 = vadd.f32 %v3325, %v3339
  %v3450 = vadd.f32 %v3326, %v3335
  %v3451 = vadd.f32 %v3327, %v3339
  %v3452 = vadd.f32 %v3328, %v3335
  %v3453 = vadd.f32 %v3329, %v3339
  %v3454 = vmax.f32 %v3342, 0.0
  %v3455 = vmax.f32 %v3343, 0.0
  %v3456 = vmax.f32 %v3344, 0.0
  %v3457 = vmax.f32 %v3345, 0.0
  %v3458 = vmax.f32 %v3346, 0.0
  %v3459 = vmax.f32 %v3347, 0.0
  %v3460 = vmax.f32 %v3348, 0.0
  %v3461 = vmax.f32 %v3349, 0.0
  %v3462 = vmax.f32 %v3350, 0.0
  %v3463 = vmax.f32 %v3351, 0.0
  %v3464 = vmax.f32 %v3352, 0.0
  %v3465 = vmax.f32 %v3353, 0.0
  %v3466 = vmax.f32 %v3354, 0.0
  %v3467 = vmax.f32 %v3355, 0.0
  %v3468 = vmax.f32 %v3356, 0.0
  %v3469 = vmax.f32 %v3357, 0.0
  %v3470 = vmax.f32 %v3358, 0.0
  %v3471 = vmax.f32 %v3359, 0.0
  %v3472 = vmax.f32 %v3360, 0.0
  %v3473 = vmax.f32 %v3361, 0.0
  %v3474 = vmax.f32 %v3362, 0.0
  %v3475 = vmax.f32 %v3363, 0.0
  %v3476 = vmax.f32 %v3364, 0.0
  %v3477 = vmax.f32 %v3365, 0.0
  %v3478 = vmax.f32 %v3366, 0.0
  %v3479 = vmax.f32 %v3367, 0.0
  %v3480 = vmax.f32 %v3368, 0.0
  %v3481 = vmax.f32 %v3369, 0.0
  %v3482 = vmax.f32 %v3370, 0.0
  %v3483 = vmax.f32 %v3371, 0.0
  %v3484 = vmax.f32 %v3372, 0.0
  %v3485 = vmax.f32 %v3373, 0.0
  %v3486 = vmax.f32 %v3374, 0.0
  %v3487 = vmax.f32 %v3375, 0.0
  %v3488 = vmax.f32 %v3376, 0.0
  %v3489 = vmax.f32 %v3377, 0.0
  %v3490 = vmax.f32 %v3378, 0.0
  %v3491 = vmax.f32 %v3379, 0.0
  %v3492 = vmax.f32 %v3380, 0.0
  %v3493 = vmax.f32 %v3381, 0.0
  %v3494 = vmax.f32 %v3382, 0.0
  %v3495 = vmax.f32 %v3383, 0.0
  %v3496 = vmax.f32 %v3384, 0.0
  %v3497 = vmax.f32 %v3385, 0.0
  %v3498 = vmax.f32 %v3386, 0.0
  %v3499 = vmax.f32 %v3387, 0.0
  %v3500 = vmax.f32 %v3388, 0.0
  %v3501 = vmax.f32 %v3389, 0.0
  %v3502 = vmax.f32 %v3390, 0.0
  %v3503 = vmax.f32 %v3391, 0.0
  %v3504 = vmax.f32 %v3392, 0.0
  %v3505 = vmax.f32 %v3393, 0.0
  %v3506 = vmax.f32 %v3394, 0.0
  %v3507 = vmax.f32 %v3395, 0.0
  %v3508 = vmax.f32 %v3396, 0.0
  %v3509 = vmax.f32 %v3397, 0.0
  %v3510 = vmax.f32 %v3398, 0.0
  %v3511 = vmax.f32 %v3399, 0.0
  %v3512 = vmax.f32 %v3400, 0.0
  %v3513 = vmax.f32 %v3401, 0.0
  %v3514 = vmax.f32 %v3402, 0.0
  %v3515 = vmax.f32 %v3403, 0.0
  %v3516 = vmax.f32 %v3404, 0.0
  %v3517 = vmax.f32 %v3405, 0.0
  %v3518 = vmax.f32 %v3406, 0.0
  %v3519 = vmax.f32 %v3407, 0.0
  %v3520 = vmax.f32 %v3408, 0.0
  %v3521 = vmax.f32 %v3409, 0.0
  %v3522 = vmax.f32 %v3410, 0.0
  %v3523 = vmax.f32 %v3411, 0.0
  %v3524 = vmax.f32 %v3412, 0.0
  %v3525 = vmax.f32 %v3413, 0.0
  %v3526 = vmax.f32 %v3414, 0.0
  %v3527 = vmax.f32 %v3415, 0.0
  %v3528 = vmax.f32 %v3416, 0.0
  %v3529 = vmax.f32 %v3417, 0.0
  %v3530 = vmax.f32 %v3418, 0.0
  %v3531 = vmax.f32 %v3419, 0.0
  %v3532 = vmax.f32 %v3420, 0.0
  %v3533 = vmax.f32 %v3421, 0.0
  %v3534 = vmax.f32 %v3422, 0.0
  %v3535 = vmax.f32 %v3423, 0.0
  %v3536 = vmax.f32 %v3424, 0.0
  %v3537 = vmax.f32 %v3425, 0.0
  %v3538 = vmax.f32 %v3426, 0.0
  %v3539 = vmax.f32 %v3427, 0.0
  %v3540 = vmax.f32 %v3428, 0.0
  %v3541 = vmax.f32 %v3429, 0.0
  %v3542 = vmax.f32 %v3430, 0.0
  %v3543 = vmax.f32 %v3431, 0.0
  %v3544 = vmax.f32 %v3432, 0.0
  %v3545 = vmax.f32 %v3433, 0.0
  %v3546 = vmax.f32 %v3434, 0.0
  %v3547 = vmax.f32 %v3435, 0.0
  %v3548 = vmax.f32 %v3436, 0.0
  %v3549 = vmax.f32 %v3437, 0.0
  %v3550 = vmax.f32 %v3438, 0.0
  %v3551 = vmax.f32 %v3439, 0.0
  %v3552 = vmax.f32 %v3440, 0.0
  %v3553 = vmax.f32 %v3441, 0.0
  %v3554 = vmax.f32 %v3442, 0.0
  %v3555 = vmax.f32 %v3443, 0.0
  %v3556 = vmax.f32 %v3444, 0.0
  %v3557 = vmax.f32 %v3445, 0.0
  %v3558 = vmax.f32 %v3446, 0.0
  %v3559 = vmax.f32 %v3447, 0.0
  %v3560 = vmax.f32 %v3448, 0.0
  %v3561 = vmax.f32 %v3449, 0.0
  %v3562 = vmax.f32 %v3450, 0.0
  %v3563 = vmax.f32 %v3451, 0.0
  %v3564 = vmax.f32 %v3452, 0.0
  %v3565 = vmax.f32 %v3453, 0.0
  %v3566 = vpack.c.bf16 %v3456, %v3454
  %v3567 = vpack.c.bf16 %v3457, %v3455
  %v3568 = vpack.c.bf16 %v3460, %v3458
  %v3569 = vpack.c.bf16 %v3461, %v3459
  %v3570 = vpack.c.bf16 %v3464, %v3462
  %v3571 = vpack.c.bf16 %v3465, %v3463
  %v3572 = vpack.c.bf16 %v3468, %v3466
  %v3573 = vpack.c.bf16 %v3469, %v3467
  %v3574 = vpack.c.bf16 %v3472, %v3470
  %v3575 = vpack.c.bf16 %v3473, %v3471
  %v3576 = vpack.c.bf16 %v3476, %v3474
  %v3577 = vpack.c.bf16 %v3477, %v3475
  %v3578 = vpack.c.bf16 %v3480, %v3478
  %v3579 = vpack.c.bf16 %v3481, %v3479
  %v3580 = vpack.c.bf16 %v3484, %v3482
  %v3581 = vpack.c.bf16 %v3485, %v3483
  %v3582 = vpack.c.bf16 %v3488, %v3486
  %v3583 = vpack.c.bf16 %v3489, %v3487
  %v3584 = vpack.c.bf16 %v3492, %v3490
  %v3585 = vpack.c.bf16 %v3493, %v3491
  %v3586 = vpack.c.bf16 %v3496, %v3494
  %v3587 = vpack.c.bf16 %v3497, %v3495
  %v3588 = vpack.c.bf16 %v3500, %v3498
  %v3589 = vpack.c.bf16 %v3501, %v3499
  %v3590 = vpack.c.bf16 %v3504, %v3502
  %v3591 = vpack.c.bf16 %v3505, %v3503
  %v3592 = vpack.c.bf16 %v3508, %v3506
  %v3593 = vpack.c.bf16 %v3509, %v3507
  %v3594 = vpack.c.bf16 %v3512, %v3510
  %v3595 = vpack.c.bf16 %v3513, %v3511
  %v3596 = vpack.c.bf16 %v3516, %v3514
  %v3597 = vpack.c.bf16 %v3517, %v3515
  %v3598 = vpack.c.bf16 %v3520, %v3518
  %v3599 = vpack.c.bf16 %v3521, %v3519
  %v3600 = vpack.c.bf16 %v3524, %v3522
  %v3601 = vpack.c.bf16 %v3525, %v3523
  %v3602 = vpack.c.bf16 %v3528, %v3526
  %v3603 = vpack.c.bf16 %v3529, %v3527
  %v3604 = vpack.c.bf16 %v3532, %v3530
  %v3605 = vpack.c.bf16 %v3533, %v3531
  %v3606 = vpack.c.bf16 %v3536, %v3534
  %v3607 = vpack.c.bf16 %v3537, %v3535
  %v3608 = vpack.c.bf16 %v3540, %v3538
  %v3609 = vpack.c.bf16 %v3541, %v3539
  %v3610 = vpack.c.bf16 %v3544, %v3542
  %v3611 = vpack.c.bf16 %v3545, %v3543
  %v3612 = vpack.c.bf16 %v3548, %v3546
  %v3613 = vpack.c.bf16 %v3549, %v3547
  %v3614 = vpack.c.bf16 %v3552, %v3550
  %v3615 = vpack.c.bf16 %v3553, %v3551
  %v3616 = vpack.c.bf16 %v3556, %v3554
  %v3617 = vpack.c.bf16 %v3557, %v3555
  %v3618 = vpack.c.bf16 %v3560, %v3558
  %v3619 = vpack.c.bf16 %v3561, %v3559
  %v3620 = vpack.c.bf16 %v3564, %v3562
  %v3621 = vpack.c.bf16 %v3565, %v3563
  %3622 = vst [vmem:[#allocation2] sm:$0xff] %v3566
  %vm3623 = vcmask 326656
  %3624 = vst.msk [vmem:[#allocation2 + $0x8] sm:$0xff] %vm3623, %v3567
  %3625 = vst [vmem:[#allocation2 + $0x10] sm:$0xff] %v3568
  %3626 = vst.msk [vmem:[#allocation2 + $0x18] sm:$0xff] %vm3623, %v3569
  %3627 = vst [vmem:[#allocation2 + $0x20] sm:$0xff] %v3570
  %3628 = vst.msk [vmem:[#allocation2 + $0x28] sm:$0xff] %vm3623, %v3571
  %3629 = vst [vmem:[#allocation2 + $0x30] sm:$0xff] %v3572
  %3630 = vst.msk [vmem:[#allocation2 + $0x38] sm:$0xff] %vm3623, %v3573
  %3631 = vst [vmem:[#allocation2 + $0x40] sm:$0xff] %v3574
  %3632 = vst.msk [vmem:[#allocation2 + $0x48] sm:$0xff] %vm3623, %v3575
  %3633 = vst [vmem:[#allocation2 + $0x50] sm:$0xff] %v3576
  %3634 = vst.msk [vmem:[#allocation2 + $0x58] sm:$0xff] %vm3623, %v3577
  %3635 = vst [vmem:[#allocation2 + $0x60] sm:$0xff] %v3578
  %3636 = vst.msk [vmem:[#allocation2 + $0x68] sm:$0xff] %vm3623, %v3579
  %3637 = vst [vmem:[#allocation2 + $0x70] sm:$0xff] %v3580
  %3638 = vst.msk [vmem:[#allocation2 + $0x78] sm:$0xff] %vm3623, %v3581
  %3639 = vst [vmem:[#allocation2 + $0x80] sm:$0xff] %v3582
  %3640 = vst.msk [vmem:[#allocation2 + $0x88] sm:$0xff] %vm3623, %v3583
  %3641 = vst [vmem:[#allocation2 + $0x90] sm:$0xff] %v3584
  %3642 = vst.msk [vmem:[#allocation2 + $0x98] sm:$0xff] %vm3623, %v3585
  %3643 = vst [vmem:[#allocation2 + $0xa0] sm:$0xff] %v3586
  %3644 = vst.msk [vmem:[#allocation2 + $0xa8] sm:$0xff] %vm3623, %v3587
  %3645 = vst [vmem:[#allocation2 + $0xb0] sm:$0xff] %v3588
  %3646 = vst.msk [vmem:[#allocation2 + $0xb8] sm:$0xff] %vm3623, %v3589
  %3647 = vst [vmem:[#allocation2 + $0xc0] sm:$0xff] %v3590
  %3648 = vst.msk [vmem:[#allocation2 + $0xc8] sm:$0xff] %vm3623, %v3591
  %3649 = vst [vmem:[#allocation2 + $0xd0] sm:$0xff] %v3592
  %3650 = vst.msk [vmem:[#allocation2 + $0xd8] sm:$0xff] %vm3623, %v3593
  %3651 = vst [vmem:[#allocation2 + $0xe0] sm:$0xff] %v3594
  %3652 = vst.msk [vmem:[#allocation2 + $0xe8] sm:$0xff] %vm3623, %v3595
  %3653 = vst [vmem:[#allocation2 + $0xf0] sm:$0xff] %v3596
  %3654 = vst.msk [vmem:[#allocation2 + $0xf8] sm:$0xff] %vm3623, %v3597
  %3655 = vst [vmem:[#allocation2 + $0x100] sm:$0xff] %v3598
  %3656 = vst.msk [vmem:[#allocation2 + $0x108] sm:$0xff] %vm3623, %v3599
  %3657 = vst [vmem:[#allocation2 + $0x110] sm:$0xff] %v3600
  %3658 = vst.msk [vmem:[#allocation2 + $0x118] sm:$0xff] %vm3623, %v3601
  %3659 = vst [vmem:[#allocation2 + $0x120] sm:$0xff] %v3602
  %3660 = vst.msk [vmem:[#allocation2 + $0x128] sm:$0xff] %vm3623, %v3603
  %3661 = vst [vmem:[#allocation2 + $0x130] sm:$0xff] %v3604
  %3662 = vst.msk [vmem:[#allocation2 + $0x138] sm:$0xff] %vm3623, %v3605
  %3663 = vst [vmem:[#allocation2 + $0x140] sm:$0xff] %v3606
  %3664 = vst.msk [vmem:[#allocation2 + $0x148] sm:$0xff] %vm3623, %v3607
  %3665 = vst [vmem:[#allocation2 + $0x150] sm:$0xff] %v3608
  %3666 = vst.msk [vmem:[#allocation2 + $0x158] sm:$0xff] %vm3623, %v3609
  %3667 = vst [vmem:[#allocation2 + $0x160] sm:$0xff] %v3610
  %3668 = vst.msk [vmem:[#allocation2 + $0x168] sm:$0xff] %vm3623, %v3611
  %3669 = vst [vmem:[#allocation2 + $0x170] sm:$0xff] %v3612
  %3670 = vst.msk [vmem:[#allocation2 + $0x178] sm:$0xff] %vm3623, %v3613
  %3671 = vst [vmem:[#allocation2 + $0x180] sm:$0xff] %v3614
  %3672 = vst.msk [vmem:[#allocation2 + $0x188] sm:$0xff] %vm3623, %v3615
  %3673 = vst [vmem:[#allocation2 + $0x190] sm:$0xff] %v3616
  %3674 = vst.msk [vmem:[#allocation2 + $0x198] sm:$0xff] %vm3623, %v3617
  %3675 = vst [vmem:[#allocation2 + $0x1a0] sm:$0xff] %v3618
  %3676 = vst.msk [vmem:[#allocation2 + $0x1a8] sm:$0xff] %vm3623, %v3619
  %3677 = vst [vmem:[#allocation2 + $0x1b0] sm:$0xff] %v3620
  %3678 = vst.msk [vmem:[#allocation2 + $0x1b8] sm:$0xff] %vm3623, %v3621
  %v3679 = vld [vmem:[#allocation2] sm:$0xff]
  %v3680 = vld [vmem:[#allocation2 + $0x8] sm:$0xff]
  %v3681 = vld [vmem:[#allocation2 + $0x10] sm:$0xff]
  %v3682 = vld [vmem:[#allocation2 + $0x18] sm:$0xff]
  %v3683 = vmax.bf16 %v3679, %v3681
  %v3684 = vmax.bf16 %v3680, %v3682
  %3685 = vst [vmem:[#allocation3] sm:$0xff] %v3683
  %3686 = vst.msk [vmem:[#allocation3 + $0x8] sm:$0xff] %vm3623, %v3684
  %v3687 = vld [vmem:[#allocation2 + $0x20] sm:$0xff]
  %v3688 = vld [vmem:[#allocation2 + $0x28] sm:$0xff]
  %v3689 = vld [vmem:[#allocation2 + $0x30] sm:$0xff]
  %v3690 = vld [vmem:[#allocation2 + $0x38] sm:$0xff]
  %v3691 = vmax.bf16 %v3687, %v3689
  %v3692 = vmax.bf16 %v3688, %v3690
  %3693 = vst [vmem:[#allocation3 + $0x10] sm:$0xff] %v3691
  %3694 = vst.msk [vmem:[#allocation3 + $0x18] sm:$0xff] %vm3623, %v3692
  %v3695 = vld [vmem:[#allocation2 + $0x40] sm:$0xff]
  %v3696 = vld [vmem:[#allocation2 + $0x48] sm:$0xff]
  %v3697 = vld [vmem:[#allocation2 + $0x50] sm:$0xff]
  %v3698 = vld [vmem:[#allocation2 + $0x58] sm:$0xff]
  %v3699 = vmax.bf16 %v3695, %v3697
  %v3700 = vmax.bf16 %v3696, %v3698
  %3701 = vst [vmem:[#allocation3 + $0x20] sm:$0xff] %v3699
  %3702 = vst.msk [vmem:[#allocation3 + $0x28] sm:$0xff] %vm3623, %v3700
  %v3703 = vld [vmem:[#allocation2 + $0x60] sm:$0xff]
  %v3704 = vld [vmem:[#allocation2 + $0x68] sm:$0xff]
  %v3705 = vld [vmem:[#allocation2 + $0x70] sm:$0xff]
  %v3706 = vld [vmem:[#allocation2 + $0x78] sm:$0xff]
  %v3707 = vmax.bf16 %v3703, %v3705
  %v3708 = vmax.bf16 %v3704, %v3706
  %3709 = vst [vmem:[#allocation3 + $0x30] sm:$0xff] %v3707
  %3710 = vst.msk [vmem:[#allocation3 + $0x38] sm:$0xff] %vm3623, %v3708
  %v3711 = vld [vmem:[#allocation2 + $0x80] sm:$0xff]
  %v3712 = vld [vmem:[#allocation2 + $0x88] sm:$0xff]
  %v3713 = vld [vmem:[#allocation2 + $0x90] sm:$0xff]
  %v3714 = vld [vmem:[#allocation2 + $0x98] sm:$0xff]
  %v3715 = vmax.bf16 %v3711, %v3713
  %v3716 = vmax.bf16 %v3712, %v3714
  %3717 = vst [vmem:[#allocation3 + $0x40] sm:$0xff] %v3715
  %3718 = vst.msk [vmem:[#allocation3 + $0x48] sm:$0xff] %vm3623, %v3716
  %v3719 = vld [vmem:[#allocation2 + $0xa0] sm:$0xff]
  %v3720 = vld [vmem:[#allocation2 + $0xa8] sm:$0xff]
  %v3721 = vld [vmem:[#allocation2 + $0xb0] sm:$0xff]
  %v3722 = vld [vmem:[#allocation2 + $0xb8] sm:$0xff]
  %v3723 = vmax.bf16 %v3719, %v3721
  %v3724 = vmax.bf16 %v3720, %v3722
  %3725 = vst [vmem:[#allocation3 + $0x50] sm:$0xff] %v3723
  %3726 = vst.msk [vmem:[#allocation3 + $0x58] sm:$0xff] %vm3623, %v3724
  %v3727 = vld [vmem:[#allocation2 + $0xc0] sm:$0xff]
  %v3728 = vld [vmem:[#allocation2 + $0xc8] sm:$0xff]
  %v3729 = vld [vmem:[#allocation2 + $0xd0] sm:$0xff]
  %v3730 = vld [vmem:[#allocation2 + $0xd8] sm:$0xff]
  %v3731 = vmax.bf16 %v3727, %v3729
  %v3732 = vmax.bf16 %v3728, %v3730
  %3733 = vst [vmem:[#allocation3 + $0x60] sm:$0xff] %v3731
  %3734 = vst.msk [vmem:[#allocation3 + $0x68] sm:$0xff] %vm3623, %v3732
  %v3735 = vld [vmem:[#allocation2 + $0xe0] sm:$0xff]
  %v3736 = vld [vmem:[#allocation2 + $0xe8] sm:$0xff]
  %v3737 = vld [vmem:[#allocation2 + $0xf0] sm:$0xff]
  %v3738 = vld [vmem:[#allocation2 + $0xf8] sm:$0xff]
  %v3739 = vmax.bf16 %v3735, %v3737
  %v3740 = vmax.bf16 %v3736, %v3738
  %3741 = vst [vmem:[#allocation3 + $0x70] sm:$0xff] %v3739
  %3742 = vst.msk [vmem:[#allocation3 + $0x78] sm:$0xff] %vm3623, %v3740
  %v3743 = vld [vmem:[#allocation2 + $0x100] sm:$0xff]
  %v3744 = vld [vmem:[#allocation2 + $0x108] sm:$0xff]
  %v3745 = vld [vmem:[#allocation2 + $0x110] sm:$0xff]
  %v3746 = vld [vmem:[#allocation2 + $0x118] sm:$0xff]
  %v3747 = vmax.bf16 %v3743, %v3745
  %v3748 = vmax.bf16 %v3744, %v3746
  %3749 = vst [vmem:[#allocation3 + $0x80] sm:$0xff] %v3747
  %3750 = vst.msk [vmem:[#allocation3 + $0x88] sm:$0xff] %vm3623, %v3748
  %v3751 = vld [vmem:[#allocation2 + $0x120] sm:$0xff]
  %v3752 = vld [vmem:[#allocation2 + $0x128] sm:$0xff]
  %v3753 = vld [vmem:[#allocation2 + $0x130] sm:$0xff]
  %v3754 = vld [vmem:[#allocation2 + $0x138] sm:$0xff]
  %v3755 = vmax.bf16 %v3751, %v3753
  %v3756 = vmax.bf16 %v3752, %v3754
  %3757 = vst [vmem:[#allocation3 + $0x90] sm:$0xff] %v3755
  %3758 = vst.msk [vmem:[#allocation3 + $0x98] sm:$0xff] %vm3623, %v3756
  %v3759 = vld [vmem:[#allocation2 + $0x140] sm:$0xff]
  %v3760 = vld [vmem:[#allocation2 + $0x148] sm:$0xff]
  %v3761 = vld [vmem:[#allocation2 + $0x150] sm:$0xff]
  %v3762 = vld [vmem:[#allocation2 + $0x158] sm:$0xff]
  %v3763 = vmax.bf16 %v3759, %v3761
  %v3764 = vmax.bf16 %v3760, %v3762
  %3765 = vst [vmem:[#allocation3 + $0xa0] sm:$0xff] %v3763
  %3766 = vst.msk [vmem:[#allocation3 + $0xa8] sm:$0xff] %vm3623, %v3764
  %v3767 = vld [vmem:[#allocation2 + $0x160] sm:$0xff]
  %v3768 = vld [vmem:[#allocation2 + $0x168] sm:$0xff]
  %v3769 = vld [vmem:[#allocation2 + $0x170] sm:$0xff]
  %v3770 = vld [vmem:[#allocation2 + $0x178] sm:$0xff]
  %v3771 = vmax.bf16 %v3767, %v3769
  %v3772 = vmax.bf16 %v3768, %v3770
  %3773 = vst [vmem:[#allocation3 + $0xb0] sm:$0xff] %v3771
  %3774 = vst.msk [vmem:[#allocation3 + $0xb8] sm:$0xff] %vm3623, %v3772
  %v3775 = vld [vmem:[#allocation2 + $0x180] sm:$0xff]
  %v3776 = vld [vmem:[#allocation2 + $0x188] sm:$0xff]
  %v3777 = vld [vmem:[#allocation2 + $0x190] sm:$0xff]
  %v3778 = vld [vmem:[#allocation2 + $0x198] sm:$0xff]
  %v3779 = vmax.bf16 %v3775, %v3777
  %v3780 = vmax.bf16 %v3776, %v3778
  %3781 = vst [vmem:[#allocation3 + $0xc0] sm:$0xff] %v3779
  %3782 = vst.msk [vmem:[#allocation3 + $0xc8] sm:$0xff] %vm3623, %v3780
  %v3783 = vld [vmem:[#allocation2 + $0x1a0] sm:$0xff]
  %v3784 = vld [vmem:[#allocation2 + $0x1a8] sm:$0xff]
  %v3785 = vld [vmem:[#allocation2 + $0x1b0] sm:$0xff]
  %v3786 = vld [vmem:[#allocation2 + $0x1b8] sm:$0xff]
  %v3787 = vmax.bf16 %v3783, %v3785
  %v3788 = vmax.bf16 %v3784, %v3786
  %3789 = vst [vmem:[#allocation3 + $0xd0] sm:$0xff] %v3787
  %3790 = vst.msk [vmem:[#allocation3 + $0xd8] sm:$0xff] %vm3623, %v3788
  %v3791 = vld [vmem:[#allocation3] sm:$0xff]
  %v3792 = vld [vmem:[#allocation3 + $0x8] sm:$0xff]
  %v3793 = vld [vmem:[#allocation3 + $0x10] sm:$0xff]
  %v3794 = vld [vmem:[#allocation3 + $0x18] sm:$0xff]
  %v3795 = vld [vmem:[#allocation3 + $0x20] sm:$0xff]
  %v3796 = vld [vmem:[#allocation3 + $0x28] sm:$0xff]
  %v3797 = vld [vmem:[#allocation3 + $0x30] sm:$0xff]
  %v3798 = vld [vmem:[#allocation3 + $0x38] sm:$0xff]
  %v3799 = vld [vmem:[#allocation3 + $0x40] sm:$0xff]
  %v3800 = vld [vmem:[#allocation3 + $0x48] sm:$0xff]
  %v3801 = vld [vmem:[#allocation3 + $0x50] sm:$0xff]
  %v3802 = vld [vmem:[#allocation3 + $0x58] sm:$0xff]
  %v3803 = vld [vmem:[#allocation3 + $0x60] sm:$0xff]
  %v3804 = vld [vmem:[#allocation3 + $0x68] sm:$0xff]
  %v3805 = vld [vmem:[#allocation3 + $0x70] sm:$0xff]
  %v3806 = vld [vmem:[#allocation3 + $0x78] sm:$0xff]
  %v3807 = vld [vmem:[#allocation3 + $0x80] sm:$0xff]
  %v3808 = vld [vmem:[#allocation3 + $0x88] sm:$0xff]
  %v3809 = vld [vmem:[#allocation3 + $0x90] sm:$0xff]
  %v3810 = vld [vmem:[#allocation3 + $0x98] sm:$0xff]
  %v3811 = vld [vmem:[#allocation3 + $0xa0] sm:$0xff]
  %v3812 = vld [vmem:[#allocation3 + $0xa8] sm:$0xff]
  %v3813 = vld [vmem:[#allocation3 + $0xb0] sm:$0xff]
  %v3814 = vld [vmem:[#allocation3 + $0xb8] sm:$0xff]
  %v3815 = vld [vmem:[#allocation3 + $0xc0] sm:$0xff]
  %v3816 = vld [vmem:[#allocation3 + $0xc8] sm:$0xff]
  %v3817 = vld [vmem:[#allocation3 + $0xd0] sm:$0xff]
  %v3818 = vld [vmem:[#allocation3 + $0xd8] sm:$0xff]
  %v3819 = vld [vmem:[%s3] sm:$0xf]
  %v3820 = vld [vmem:[%s3 + $0x4] sm:$0xf]
  %v3821 = vld [vmem:[%s3 + $0x8] sm:$0xf]
  %v3822 = vld [vmem:[%s3 + $0xc] sm:$0xf]
  %v3823 = vld [vmem:[%s3 + $0x10] sm:$0xf]
  %v3824 = vld [vmem:[%s3 + $0x14] sm:$0xf]
  %v3825 = vld [vmem:[%s3 + $0x18] sm:$0xf]
  %v3826 = vld [vmem:[%s3 + $0x1c] sm:$0xf]
  %v3827 = vld [vmem:[%s3 + $0x20] sm:$0xf]
  %v3828 = vld [vmem:[%s3 + $0x24] sm:$0xf]
  %v3829 = vld [vmem:[%s3 + $0x28] sm:$0xf]
  %v3830 = vld [vmem:[%s3 + $0x2c] sm:$0xf]
  %v3831 = vld [vmem:[%s3 + $0x30] sm:$0xf]
  %v3832 = vld [vmem:[%s3 + $0x34] sm:$0xf]
  %v3833 = vld [vmem:[%s3 + $0x38] sm:$0xf]
  %v3834 = vld [vmem:[%s3 + $0x3c] sm:$0xf]
  %v3835 = vld [vmem:[%s3 + $0x40] sm:$0xf]
  %v3836 = vld [vmem:[%s3 + $0x44] sm:$0xf]
  %v3837 = vld [vmem:[%s3 + $0x48] sm:$0xf]
  %v3838 = vld [vmem:[%s3 + $0x4c] sm:$0xf]
  %v3839 = vld [vmem:[%s3 + $0x50] sm:$0xf]
  %v3861 = vunpack.c.l.b16 %v3819
  %v3862 = vunpack.c.l.b16 %v3820
  %v3863 = vunpack.c.l.b16 %v3821
  %v3864 = vunpack.c.l.b16 %v3822
  %v3865 = vunpack.c.l.b16 %v3823
  %v3866 = vunpack.c.l.b16 %v3824
  %v3867 = vunpack.c.l.b16 %v3825
  %v3868 = vunpack.c.l.b16 %v3826
  %v3869 = vunpack.c.l.b16 %v3827
  %v3870 = vunpack.c.l.b16 %v3828
  %v3871 = vunpack.c.l.b16 %v3829
  %v3872 = vunpack.c.l.b16 %v3830
  %v3873 = vunpack.c.l.b16 %v3831
  %v3874 = vunpack.c.l.b16 %v3832
  %v3875 = vunpack.c.l.b16 %v3833
  %v3876 = vunpack.c.l.b16 %v3834
  %v3877 = vunpack.c.l.b16 %v3835
  %v3878 = vunpack.c.l.b16 %v3836
  %v3879 = vunpack.c.l.b16 %v3837
  %v3880 = vunpack.c.l.b16 %v3838
  %v3881 = vunpack.c.l.b16 %v3839
  %v3882 = vpack.c.b16 %v3862, %v3861
  %v3883 = vpack.c.b16 %v3864, %v3863
  %v3884 = vpack.c.b16 %v3866, %v3865
  %v3885 = vpack.c.b16 %v3868, %v3867
  %v3886 = vpack.c.b16 %v3870, %v3869
  %v3887 = vpack.c.b16 %v3872, %v3871
  %v3888 = vpack.c.b16 %v3874, %v3873
  %v3889 = vpack.c.b16 %v3876, %v3875
  %v3890 = vpack.c.b16 %v3878, %v3877
  %v3891 = vpack.c.b16 %v3880, %v3879
  %v3892 = vpack.c.b16 %v3881, %v3881
  %v3904 = vsel %vm3623, %v3792, 0
  %v3907 = vsel %vm3623, %v3794, 0
  %v3910 = vsel %vm3623, %v3796, 0
  %v3913 = vsel %vm3623, %v3798, 0
  %v3916 = vsel %vm3623, %v3800, 0
  %v3919 = vsel %vm3623, %v3802, 0
  %v3922 = vsel %vm3623, %v3804, 0
  %v3925 = vsel %vm3623, %v3806, 0
  %v3928 = vsel %vm3623, %v3808, 0
  %v3931 = vsel %vm3623, %v3810, 0
  %v3934 = vsel %vm3623, %v3812, 0
  %v3937 = vsel %vm3623, %v3814, 0
  %v3940 = vsel %vm3623, %v3816, 0
  %v3943 = vsel %vm3623, %v3818, 0
  %vm3945 = vcmask 1043456
  %v3947 = vsel %vm3945, %v3892, 0
  %3949 = vmatprep.subr.bf16.mxu0 0
  %3950 = vmatpush1.bf16.msra.mxu0 %v3882
  %3951 = vmatprep.subr.bf16.mxu0 0
  %3952 = vmatpush1.bf16.msra.mxu0 %v3883
  %3953 = vmatprep.subr.bf16.mxu0 0
  %3954 = vmatpush1.bf16.msra.mxu0 %v3884
  %3955 = vmatprep.subr.bf16.mxu0 0
  %3956 = vmatpush1.bf16.msra.mxu0 %v3885
  %3957 = vmatprep.subr.bf16.mxu0 0
  %3958 = vmatpush1.bf16.msra.mxu0 %v3886
  %3959 = vmatprep.subr.bf16.mxu0 0
  %3960 = vmatpush1.bf16.msra.mxu0 %v3887
  %3961 = vmatprep.subr.bf16.mxu0 0
  %3962 = vmatpush1.bf16.msra.mxu0 %v3888
  %3963 = vmatprep.subr.bf16.mxu0 0
  %3964 = vmatpush1.bf16.msra.mxu0 %v3889
  %3965 = vmatprep.subr.bf16.mxu0 0
  %3966 = vmatpush1.bf16.msra.mxu0 %v3890
  %3967 = vmatprep.subr.bf16.mxu0 0
  %3968 = vmatpush1.bf16.msra.mxu0 %v3891
  %3969 = vmatprep.subr.bf16.mxu0 0
  %3970 = vmatpush1.bf16.msra.mxu0 %v3947
  %3971 = vmatprep.subr.bf16.mxu0 0
  %3972 = vmatpush1.bf16.msra.mxu0 0
  %3973 = vmatprep.subr.bf16.mxu0 0
  %3974 = vmatpush1.bf16.msra.mxu0 0
  %3975 = vmatprep.subr.bf16.mxu0 0
  %3976 = vmatpush1.bf16.msra.mxu0 0
  %3977 = vmatprep.subr.bf16.mxu0 0
  %3978 = vmatpush1.bf16.msra.mxu0 0
  %3979 = vmatprep.subr.bf16.mxu0 0
  %3980 = vmatpush1.bf16.msra.mxu0 0
  %3981 = vmatprep.mubr.bf16.mxu0 %v3904
  %3982 = vmatmul.mubr.bf16.gmra.mrb[0].mxu0 %v3791
  %v3983 = vpop.f32.mrb[0].mxu0
  %v3984 = vadd.f32 0.0, %v3983
  %v3985 = vpop.f32.mrb[0].mxu0
  %v3986 = vpop.f32.mrb[0].mxu0
  %v3987 = vadd.f32 0.0, %v3986
  %v3988 = vpop.f32.mrb[0].mxu0
  %3989 = vmatprep.mubr.bf16.mxu0 %v3907
  %3990 = vmatmul.mubr.bf16.gmra.mrb[0].mxu0 %v3793
  %v3991 = vpop.f32.mrb[0].mxu0
  %v3992 = vadd.f32 0.0, %v3991
  %v3993 = vpop.f32.mrb[0].mxu0
  %v3994 = vpop.f32.mrb[0].mxu0
  %v3995 = vadd.f32 0.0, %v3994
  %v3996 = vpop.f32.mrb[0].mxu0
  %3997 = vmatprep.mubr.bf16.mxu0 %v3910
  %3998 = vmatmul.mubr.bf16.gmra.mrb[0].mxu0 %v3795
  %v3999 = vpop.f32.mrb[0].mxu0
  %v4000 = vadd.f32 0.0, %v3999
  %v4001 = vpop.f32.mrb[0].mxu0
  %v4002 = vpop.f32.mrb[0].mxu0
  %v4003 = vadd.f32 0.0, %v4002
  %v4004 = vpop.f32.mrb[0].mxu0
  %4005 = vmatprep.mubr.bf16.mxu0 %v3913
  %4006 = vmatmul.mubr.bf16.gmra.mrb[0].mxu0 %v3797
  %v4007 = vpop.f32.mrb[0].mxu0
  %v4008 = vadd.f32 0.0, %v4007
  %v4009 = vpop.f32.mrb[0].mxu0
  %v4010 = vpop.f32.mrb[0].mxu0
  %v4011 = vadd.f32 0.0, %v4010
  %v4012 = vpop.f32.mrb[0].mxu0
  %4013 = vmatprep.mubr.bf16.mxu0 %v3916
  %4014 = vmatmul.mubr.bf16.gmra.mrb[0].mxu0 %v3799
  %v4015 = vpop.f32.mrb[0].mxu0
  %v4016 = vadd.f32 0.0, %v4015
  %v4017 = vpop.f32.mrb[0].mxu0
  %v4018 = vpop.f32.mrb[0].mxu0
  %v4019 = vadd.f32 0.0, %v4018
  %v4020 = vpop.f32.mrb[0].mxu0
  %4021 = vmatprep.mubr.bf16.mxu0 %v3919
  %4022 = vmatmul.mubr.bf16.gmra.mrb[0].mxu0 %v3801
  %v4023 = vpop.f32.mrb[0].mxu0
  %v4024 = vadd.f32 0.0, %v4023
  %v4025 = vpop.f32.mrb[0].mxu0
  %v4026 = vpop.f32.mrb[0].mxu0
  %v4027 = vadd.f32 0.0, %v4026
  %v4028 = vpop.f32.mrb[0].mxu0
  %4029 = vmatprep.mubr.bf16.mxu0 %v3922
  %4030 = vmatmul.mubr.bf16.gmra.mrb[0].mxu0 %v3803
  %v4031 = vpop.f32.mrb[0].mxu0
  %v4032 = vadd.f32 0.0, %v4031
  %v4033 = vpop.f32.mrb[0].mxu0
  %v4034 = vpop.f32.mrb[0].mxu0
  %v4035 = vadd.f32 0.0, %v4034
  %v4036 = vpop.f32.mrb[0].mxu0
  %4037 = vmatprep.mubr.bf16.mxu0 %v3925
  %4038 = vmatmul.mubr.bf16.gmra.mrb[0].mxu0 %v3805
  %v4039 = vpop.f32.mrb[0].mxu0
  %v4040 = vadd.f32 0.0, %v4039
  %v4041 = vpop.f32.mrb[0].mxu0
  %v4042 = vpop.f32.mrb[0].mxu0
  %v4043 = vadd.f32 0.0, %v4042
  %v4044 = vpop.f32.mrb[0].mxu0
  %4045 = vmatprep.mubr.bf16.mxu0 %v3928
  %4046 = vmatmul.mubr.bf16.gmra.mrb[0].mxu0 %v3807
  %v4047 = vpop.f32.mrb[0].mxu0
  %v4048 = vadd.f32 0.0, %v4047
  %v4049 = vpop.f32.mrb[0].mxu0
  %v4050 = vpop.f32.mrb[0].mxu0
  %v4051 = vadd.f32 0.0, %v4050
  %v4052 = vpop.f32.mrb[0].mxu0
  %4053 = vmatprep.mubr.bf16.mxu0 %v3931
  %4054 = vmatmul.mubr.bf16.gmra.mrb[0].mxu0 %v3809
  %v4055 = vpop.f32.mrb[0].mxu0
  %v4056 = vadd.f32 0.0, %v4055
  %v4057 = vpop.f32.mrb[0].mxu0
  %v4058 = vpop.f32.mrb[0].mxu0
  %v4059 = vadd.f32 0.0, %v4058
  %v4060 = vpop.f32.mrb[0].mxu0
  %4061 = vmatprep.mubr.bf16.mxu0 %v3934
  %4062 = vmatmul.mubr.bf16.gmra.mrb[0].mxu0 %v3811
  %v4063 = vpop.f32.mrb[0].mxu0
  %v4064 = vadd.f32 0.0, %v4063
  %v4065 = vpop.f32.mrb[0].mxu0
  %v4066 = vpop.f32.mrb[0].mxu0
  %v4067 = vadd.f32 0.0, %v4066
  %v4068 = vpop.f32.mrb[0].mxu0
  %4069 = vmatprep.mubr.bf16.mxu0 %v3937
  %4070 = vmatmul.mubr.bf16.gmra.mrb[0].mxu0 %v3813
  %v4071 = vpop.f32.mrb[0].mxu0
  %v4072 = vadd.f32 0.0, %v4071
  %v4073 = vpop.f32.mrb[0].mxu0
  %v4074 = vpop.f32.mrb[0].mxu0
  %v4075 = vadd.f32 0.0, %v4074
  %v4076 = vpop.f32.mrb[0].mxu0
  %4077 = vmatprep.mubr.bf16.mxu0 %v3940
  %4078 = vmatmul.mubr.bf16.gmra.mrb[0].mxu0 %v3815
  %v4079 = vpop.f32.mrb[0].mxu0
  %v4080 = vadd.f32 0.0, %v4079
  %v4081 = vpop.f32.mrb[0].mxu0
  %v4082 = vpop.f32.mrb[0].mxu0
  %v4083 = vadd.f32 0.0, %v4082
  %v4084 = vpop.f32.mrb[0].mxu0
  %4085 = vmatprep.mubr.bf16.mxu0 %v3943
  %4086 = vmatmul.mubr.bf16.gmra.mrb[0].mxu0 %v3817
  %v4087 = vpop.f32.mrb[0].mxu0
  %v4088 = vadd.f32 0.0, %v4087
  %v4089 = vpop.f32.mrb[0].mxu0
  %v4090 = vpop.f32.mrb[0].mxu0
  %v4091 = vadd.f32 0.0, %v4090
  %v4092 = vpop.f32.mrb[0].mxu0
  %4093 = vdwg.mxu0
  %v4094 = vld [vmem:[%s4] sm:$0xf]
  %v4095 = vld [vmem:[%s4 + $0x4] sm:$0xf]
  %v4096 = vld [vmem:[%s4 + $0x8] sm:$0xf]
  %v4097 = vld [vmem:[%s4 + $0xc] sm:$0xf]
  %v4098 = vld [vmem:[%s4 + $0x10] sm:$0xf]
  %v4099 = vld [vmem:[%s4 + $0x14] sm:$0xf]
  %v4100 = vld [vmem:[%s4 + $0x18] sm:$0xf]
  %v4101 = vld [vmem:[%s4 + $0x1c] sm:$0xf]
  %v4102 = vld [vmem:[%s4 + $0x20] sm:$0xf]
  %v4103 = vld [vmem:[%s4 + $0x24] sm:$0xf]
  %v4104 = vld [vmem:[%s4 + $0x28] sm:$0xf]
  %v4105 = vld [vmem:[%s4 + $0x2c] sm:$0xf]
  %v4106 = vld [vmem:[%s4 + $0x30] sm:$0xf]
  %v4107 = vld [vmem:[%s4 + $0x34] sm:$0xf]
  %v4108 = vld [vmem:[%s4 + $0x38] sm:$0xf]
  %v4109 = vld [vmem:[%s4 + $0x3c] sm:$0xf]
  %v4110 = vld [vmem:[%s4 + $0x40] sm:$0xf]
  %v4111 = vld [vmem:[%s4 + $0x44] sm:$0xf]
  %v4112 = vld [vmem:[%s4 + $0x48] sm:$0xf]
  %v4113 = vld [vmem:[%s4 + $0x4c] sm:$0xf]
  %v4114 = vld [vmem:[%s4 + $0x50] sm:$0xf]
  %v4136 = vunpack.c.l.b16 %v4094
  %v4137 = vunpack.c.l.b16 %v4095
  %v4138 = vunpack.c.l.b16 %v4096
  %v4139 = vunpack.c.l.b16 %v4097
  %v4140 = vunpack.c.l.b16 %v4098
  %v4141 = vunpack.c.l.b16 %v4099
  %v4142 = vunpack.c.l.b16 %v4100
  %v4143 = vunpack.c.l.b16 %v4101
  %v4144 = vunpack.c.l.b16 %v4102
  %v4145 = vunpack.c.l.b16 %v4103
  %v4146 = vunpack.c.l.b16 %v4104
  %v4147 = vunpack.c.l.b16 %v4105
  %v4148 = vunpack.c.l.b16 %v4106
  %v4149 = vunpack.c.l.b16 %v4107
  %v4150 = vunpack.c.l.b16 %v4108
  %v4151 = vunpack.c.l.b16 %v4109
  %v4152 = vunpack.c.l.b16 %v4110
  %v4153 = vunpack.c.l.b16 %v4111
  %v4154 = vunpack.c.l.b16 %v4112
  %v4155 = vunpack.c.l.b16 %v4113
  %v4156 = vunpack.c.l.b16 %v4114
  %v4157 = vpack.c.b16 %v4137, %v4136
  %v4158 = vpack.c.b16 %v4139, %v4138
  %v4159 = vpack.c.b16 %v4141, %v4140
  %v4160 = vpack.c.b16 %v4143, %v4142
  %v4161 = vpack.c.b16 %v4145, %v4144
  %v4162 = vpack.c.b16 %v4147, %v4146
  %v4163 = vpack.c.b16 %v4149, %v4148
  %v4164 = vpack.c.b16 %v4151, %v4150
  %v4165 = vpack.c.b16 %v4153, %v4152
  %v4166 = vpack.c.b16 %v4155, %v4154
  %v4167 = vpack.c.b16 %v4156, %v4156
  %v4179 = vsel %vm3945, %v4167, 0
  %4181 = vmatprep.subr.bf16.mxu0 0
  %4182 = vmatpush1.bf16.msra.mxu0 %v4157
  %4183 = vmatprep.subr.bf16.mxu0 0
  %4184 = vmatpush1.bf16.msra.mxu0 %v4158
  %4185 = vmatprep.subr.bf16.mxu0 0
  %4186 = vmatpush1.bf16.msra.mxu0 %v4159
  %4187 = vmatprep.subr.bf16.mxu0 0
  %4188 = vmatpush1.bf16.msra.mxu0 %v4160
  %4189 = vmatprep.subr.bf16.mxu0 0
  %4190 = vmatpush1.bf16.msra.mxu0 %v4161
  %4191 = vmatprep.subr.bf16.mxu0 0
  %4192 = vmatpush1.bf16.msra.mxu0 %v4162
  %4193 = vmatprep.subr.bf16.mxu0 0
  %4194 = vmatpush1.bf16.msra.mxu0 %v4163
  %4195 = vmatprep.subr.bf16.mxu0 0
  %4196 = vmatpush1.bf16.msra.mxu0 %v4164
  %4197 = vmatprep.subr.bf16.mxu0 0
  %4198 = vmatpush1.bf16.msra.mxu0 %v4165
  %4199 = vmatprep.subr.bf16.mxu0 0
  %4200 = vmatpush1.bf16.msra.mxu0 %v4166
  %4201 = vmatprep.subr.bf16.mxu0 0
  %4202 = vmatpush1.bf16.msra.mxu0 %v4179
  %4203 = vmatprep.subr.bf16.mxu0 0
  %4204 = vmatpush1.bf16.msra.mxu0 0
  %4205 = vmatprep.subr.bf16.mxu0 0
  %4206 = vmatpush1.bf16.msra.mxu0 0
  %4207 = vmatprep.subr.bf16.mxu0 0
  %4208 = vmatpush1.bf16.msra.mxu0 0
  %4209 = vmatprep.subr.bf16.mxu0 0
  %4210 = vmatpush1.bf16.msra.mxu0 0
  %4211 = vmatprep.subr.bf16.mxu0 0
  %4212 = vmatpush1.bf16.msra.mxu0 0
  %4213 = vmatprep.mubr.bf16.mxu0 %v3904
  %4214 = vmatmul.mubr.bf16.gmra.mrb[0].mxu0 %v3791
  %v4215 = vpop.f32.mrb[0].mxu0
  %v4216 = vadd.f32 0.0, %v4215
  %v4217 = vpop.f32.mrb[0].mxu0
  %v4218 = vpop.f32.mrb[0].mxu0
  %v4219 = vadd.f32 0.0, %v4218
  %v4220 = vpop.f32.mrb[0].mxu0
  %4221 = vmatprep.mubr.bf16.mxu0 %v3907
  %4222 = vmatmul.mubr.bf16.gmra.mrb[0].mxu0 %v3793
  %v4223 = vpop.f32.mrb[0].mxu0
  %v4224 = vadd.f32 0.0, %v4223
  %v4225 = vpop.f32.mrb[0].mxu0
  %v4226 = vpop.f32.mrb[0].mxu0
  %v4227 = vadd.f32 0.0, %v4226
  %v4228 = vpop.f32.mrb[0].mxu0
  %4229 = vmatprep.mubr.bf16.mxu0 %v3910
  %4230 = vmatmul.mubr.bf16.gmra.mrb[0].mxu0 %v3795
  %v4231 = vpop.f32.mrb[0].mxu0
  %v4232 = vadd.f32 0.0, %v4231
  %v4233 = vpop.f32.mrb[0].mxu0
  %v4234 = vpop.f32.mrb[0].mxu0
  %v4235 = vadd.f32 0.0, %v4234
  %v4236 = vpop.f32.mrb[0].mxu0
  %4237 = vmatprep.mubr.bf16.mxu0 %v3913
  %4238 = vmatmul.mubr.bf16.gmra.mrb[0].mxu0 %v3797
  %v4239 = vpop.f32.mrb[0].mxu0
  %v4240 = vadd.f32 0.0, %v4239
  %v4241 = vpop.f32.mrb[0].mxu0
  %v4242 = vpop.f32.mrb[0].mxu0
  %v4243 = vadd.f32 0.0, %v4242
  %v4244 = vpop.f32.mrb[0].mxu0
  %4245 = vmatprep.mubr.bf16.mxu0 %v3916
  %4246 = vmatmul.mubr.bf16.gmra.mrb[0].mxu0 %v3799
  %v4247 = vpop.f32.mrb[0].mxu0
  %v4248 = vadd.f32 0.0, %v4247
  %v4249 = vpop.f32.mrb[0].mxu0
  %v4250 = vpop.f32.mrb[0].mxu0
  %v4251 = vadd.f32 0.0, %v4250
  %v4252 = vpop.f32.mrb[0].mxu0
  %4253 = vmatprep.mubr.bf16.mxu0 %v3919
  %4254 = vmatmul.mubr.bf16.gmra.mrb[0].mxu0 %v3801
  %v4255 = vpop.f32.mrb[0].mxu0
  %v4256 = vadd.f32 0.0, %v4255
  %v4257 = vpop.f32.mrb[0].mxu0
  %v4258 = vpop.f32.mrb[0].mxu0
  %v4259 = vadd.f32 0.0, %v4258
  %v4260 = vpop.f32.mrb[0].mxu0
  %4261 = vmatprep.mubr.bf16.mxu0 %v3922
  %4262 = vmatmul.mubr.bf16.gmra.mrb[0].mxu0 %v3803
  %v4263 = vpop.f32.mrb[0].mxu0
  %v4264 = vadd.f32 0.0, %v4263
  %v4265 = vpop.f32.mrb[0].mxu0
  %v4266 = vpop.f32.mrb[0].mxu0
  %v4267 = vadd.f32 0.0, %v4266
  %v4268 = vpop.f32.mrb[0].mxu0
  %4269 = vmatprep.mubr.bf16.mxu0 %v3925
  %4270 = vmatmul.mubr.bf16.gmra.mrb[0].mxu0 %v3805
  %v4271 = vpop.f32.mrb[0].mxu0
  %v4272 = vadd.f32 0.0, %v4271
  %v4273 = vpop.f32.mrb[0].mxu0
  %v4274 = vpop.f32.mrb[0].mxu0
  %v4275 = vadd.f32 0.0, %v4274
  %v4276 = vpop.f32.mrb[0].mxu0
  %4277 = vmatprep.mubr.bf16.mxu0 %v3928
  %4278 = vmatmul.mubr.bf16.gmra.mrb[0].mxu0 %v3807
  %v4279 = vpop.f32.mrb[0].mxu0
  %v4280 = vadd.f32 0.0, %v4279
  %v4281 = vpop.f32.mrb[0].mxu0
  %v4282 = vpop.f32.mrb[0].mxu0
  %v4283 = vadd.f32 0.0, %v4282
  %v4284 = vpop.f32.mrb[0].mxu0
  %4285 = vmatprep.mubr.bf16.mxu0 %v3931
  %4286 = vmatmul.mubr.bf16.gmra.mrb[0].mxu0 %v3809
  %v4287 = vpop.f32.mrb[0].mxu0
  %v4288 = vadd.f32 0.0, %v4287
  %v4289 = vpop.f32.mrb[0].mxu0
  %v4290 = vpop.f32.mrb[0].mxu0
  %v4291 = vadd.f32 0.0, %v4290
  %v4292 = vpop.f32.mrb[0].mxu0
  %4293 = vmatprep.mubr.bf16.mxu0 %v3934
  %4294 = vmatmul.mubr.bf16.gmra.mrb[0].mxu0 %v3811
  %v4295 = vpop.f32.mrb[0].mxu0
  %v4296 = vadd.f32 0.0, %v4295
  %v4297 = vpop.f32.mrb[0].mxu0
  %v4298 = vpop.f32.mrb[0].mxu0
  %v4299 = vadd.f32 0.0, %v4298
  %v4300 = vpop.f32.mrb[0].mxu0
  %4301 = vmatprep.mubr.bf16.mxu0 %v3937
  %4302 = vmatmul.mubr.bf16.gmra.mrb[0].mxu0 %v3813
  %v4303 = vpop.f32.mrb[0].mxu0
  %v4304 = vadd.f32 0.0, %v4303
  %v4305 = vpop.f32.mrb[0].mxu0
  %v4306 = vpop.f32.mrb[0].mxu0
  %v4307 = vadd.f32 0.0, %v4306
  %v4308 = vpop.f32.mrb[0].mxu0
  %4309 = vmatprep.mubr.bf16.mxu0 %v3940
  %4310 = vmatmul.mubr.bf16.gmra.mrb[0].mxu0 %v3815
  %v4311 = vpop.f32.mrb[0].mxu0
  %v4312 = vadd.f32 0.0, %v4311
  %v4313 = vpop.f32.mrb[0].mxu0
  %v4314 = vpop.f32.mrb[0].mxu0
  %v4315 = vadd.f32 0.0, %v4314
  %v4316 = vpop.f32.mrb[0].mxu0
  %4317 = vmatprep.mubr.bf16.mxu0 %v3943
  %4318 = vmatmul.mubr.bf16.gmra.mrb[0].mxu0 %v3817
  %v4319 = vpop.f32.mrb[0].mxu0
  %v4320 = vadd.f32 0.0, %v4319
  %v4321 = vpop.f32.mrb[0].mxu0
  %v4322 = vpop.f32.mrb[0].mxu0
  %v4323 = vadd.f32 0.0, %v4322
  %v4324 = vpop.f32.mrb[0].mxu0
  %4325 = vdwg.mxu0
  %v4326 = vmax.f32 %v3984, %v4216
  %v4327 = vmax.f32 %v3987, %v4219
  %v4328 = vmax.f32 %v3992, %v4224
  %v4329 = vmax.f32 %v3995, %v4227
  %v4330 = vmax.f32 %v4000, %v4232
  %v4331 = vmax.f32 %v4003, %v4235
  %v4332 = vmax.f32 %v4008, %v4240
  %v4333 = vmax.f32 %v4011, %v4243
  %v4334 = vmax.f32 %v4016, %v4248
  %v4335 = vmax.f32 %v4019, %v4251
  %v4336 = vmax.f32 %v4024, %v4256
  %v4337 = vmax.f32 %v4027, %v4259
  %v4338 = vmax.f32 %v4032, %v4264
  %v4339 = vmax.f32 %v4035, %v4267
  %v4340 = vmax.f32 %v4040, %v4272
  %v4341 = vmax.f32 %v4043, %v4275
  %v4342 = vmax.f32 %v4048, %v4280
  %v4343 = vmax.f32 %v4051, %v4283
  %v4344 = vmax.f32 %v4056, %v4288
  %v4345 = vmax.f32 %v4059, %v4291
  %v4346 = vmax.f32 %v4064, %v4296
  %v4347 = vmax.f32 %v4067, %v4299
  %v4348 = vmax.f32 %v4072, %v4304
  %v4349 = vmax.f32 %v4075, %v4307
  %v4350 = vmax.f32 %v4080, %v4312
  %v4351 = vmax.f32 %v4083, %v4315
  %v4352 = vmax.f32 %v4088, %v4320
  %v4353 = vmax.f32 %v4091, %v4323
  %v4354 = vpack.c.bf16 %v4327, %v4326
  %v4355 = vpack.c.bf16 %v4329, %v4328
  %v4356 = vpack.c.bf16 %v4331, %v4330
  %v4357 = vpack.c.bf16 %v4333, %v4332
  %v4358 = vpack.c.bf16 %v4335, %v4334
  %v4359 = vpack.c.bf16 %v4337, %v4336
  %v4360 = vpack.c.bf16 %v4339, %v4338
  %v4361 = vpack.c.bf16 %v4341, %v4340
  %v4362 = vpack.c.bf16 %v4343, %v4342
  %v4363 = vpack.c.bf16 %v4345, %v4344
  %v4364 = vpack.c.bf16 %v4347, %v4346
  %v4365 = vpack.c.bf16 %v4349, %v4348
  %v4366 = vpack.c.bf16 %v4351, %v4350
  %v4367 = vpack.c.bf16 %v4353, %v4352
  %4368 = vst [vmem:[#allocation4] sm:$0xff] %v4354
  %4369 = vst [vmem:[#allocation4 + $0x8] sm:$0xff] %v4355
  %4370 = vst [vmem:[#allocation4 + $0x10] sm:$0xff] %v4356
  %4371 = vst [vmem:[#allocation4 + $0x18] sm:$0xff] %v4357
  %4372 = vst [vmem:[#allocation4 + $0x20] sm:$0xff] %v4358
  %4373 = vst [vmem:[#allocation4 + $0x28] sm:$0xff] %v4359
  %4374 = vst [vmem:[#allocation4 + $0x30] sm:$0xff] %v4360
  %4375 = vst [vmem:[#allocation4 + $0x38] sm:$0xff] %v4361
  %4376 = vst [vmem:[#allocation4 + $0x40] sm:$0xff] %v4362
  %4377 = vst [vmem:[#allocation4 + $0x48] sm:$0xff] %v4363
  %4378 = vst [vmem:[#allocation4 + $0x50] sm:$0xff] %v4364
  %4379 = vst [vmem:[#allocation4 + $0x58] sm:$0xff] %v4365
  %4380 = vst [vmem:[#allocation4 + $0x60] sm:$0xff] %v4366
  %4381 = vst [vmem:[#allocation4 + $0x68] sm:$0xff] %v4367
  %v4382 = vld [vmem:[#allocation4] sm:$0xff]
  %v4383 = vld [vmem:[#allocation4 + $0x8] sm:$0xff]
  %v4384 = vld [vmem:[#allocation4 + $0x10] sm:$0xff]
  %v4385 = vld [vmem:[#allocation4 + $0x18] sm:$0xff]
  %v4386 = vld [vmem:[#allocation4 + $0x20] sm:$0xff]
  %v4387 = vld [vmem:[#allocation4 + $0x28] sm:$0xff]
  %v4388 = vld [vmem:[#allocation4 + $0x30] sm:$0xff]
  %v4389 = vld [vmem:[#allocation4 + $0x38] sm:$0xff]
  %v4390 = vld [vmem:[#allocation4 + $0x40] sm:$0xff]
  %v4391 = vld [vmem:[#allocation4 + $0x48] sm:$0xff]
  %v4392 = vld [vmem:[%s5] sm:$0xff]
  %v4393 = vld [vmem:[%s5 + $0x8] sm:$0xff]
  %v4394 = vld [vmem:[%s5 + $0x10] sm:$0xff]
  %v4395 = vld [vmem:[%s5 + $0x18] sm:$0xff]
  %v4396 = vld [vmem:[%s5 + $0x20] sm:$0xff]
  %v4397 = vld [vmem:[%s5 + $0x28] sm:$0xff]
  %v4398 = vld [vmem:[%s5 + $0x30] sm:$0xff]
  %v4399 = vld [vmem:[%s5 + $0x38] sm:$0xff]
  %v4400 = vld [vmem:[%s5 + $0x40] sm:$0xff]
  %v4401 = vld [vmem:[%s5 + $0x48] sm:$0xff]
  %v4402 = vld [vmem:[%s5 + $0x50] sm:$0xff]
  %v4403 = vld [vmem:[%s5 + $0x58] sm:$0xff]
  %v4404 = vld [vmem:[%s5 + $0x60] sm:$0xff]
  %v4405 = vld [vmem:[%s5 + $0x68] sm:$0xff]
  %v4406 = vld [vmem:[%s5 + $0x70] sm:$0xff]
  %v4407 = vld [vmem:[%s5 + $0x78] sm:$0xff]
  %v4408 = vld [vmem:[#allocation4 + $0x50] sm:$0xff]
  %v4409 = vld [vmem:[%s5 + $0x80] sm:$0xff]
  %v4410 = vld [vmem:[%s5 + $0x88] sm:$0xff]
  %v4411 = vld [vmem:[%s5 + $0x90] sm:$0xff]
  %v4412 = vld [vmem:[%s5 + $0x98] sm:$0xff]
  %v4413 = vld [vmem:[%s5 + $0xa0] sm:$0xff]
  %v4414 = vld [vmem:[%s5 + $0xa8] sm:$0xff]
  %v4415 = vld [vmem:[%s5 + $0xb0] sm:$0xff]
  %v4416 = vld [vmem:[%s5 + $0xb8] sm:$0xff]
  %v4417 = vld [vmem:[%s5 + $0xc0] sm:$0xff]
  %v4418 = vld [vmem:[%s5 + $0xc8] sm:$0xff]
  %v4419 = vld [vmem:[%s5 + $0xd0] sm:$0xff]
  %v4420 = vld [vmem:[%s5 + $0xd8] sm:$0xff]
  %v4421 = vld [vmem:[%s5 + $0xe0] sm:$0xff]
  %v4422 = vld [vmem:[%s5 + $0xe8] sm:$0xff]
  %v4423 = vld [vmem:[%s5 + $0xf0] sm:$0xff]
  %v4424 = vld [vmem:[%s5 + $0xf8] sm:$0xff]
  %v4441 = vunpack.c.l.b16 %v4409
  %v4442 = vunpack.c.h.b16 %v4409
  %v4443 = vunpack.c.l.b16 %v4410
  %v4444 = vunpack.c.h.b16 %v4410
  %v4445 = vunpack.c.l.b16 %v4411
  %v4446 = vunpack.c.h.b16 %v4411
  %v4447 = vunpack.c.l.b16 %v4412
  %v4448 = vunpack.c.h.b16 %v4412
  %v4449 = vunpack.c.l.b16 %v4413
  %v4450 = vunpack.c.h.b16 %v4413
  %v4451 = vunpack.c.l.b16 %v4414
  %v4452 = vunpack.c.h.b16 %v4414
  %v4453 = vunpack.c.l.b16 %v4415
  %v4454 = vunpack.c.h.b16 %v4415
  %v4455 = vunpack.c.l.b16 %v4416
  %v4456 = vunpack.c.h.b16 %v4416
  %v4457 = vunpack.c.l.b16 %v4417
  %v4458 = vunpack.c.h.b16 %v4417
  %v4459 = vunpack.c.l.b16 %v4418
  %v4460 = vunpack.c.h.b16 %v4418
  %v4461 = vunpack.c.l.b16 %v4419
  %v4462 = vunpack.c.h.b16 %v4419
  %v4463 = vunpack.c.l.b16 %v4420
  %v4464 = vunpack.c.h.b16 %v4420
  %v4465 = vunpack.c.l.b16 %v4421
  %v4466 = vunpack.c.h.b16 %v4421
  %v4467 = vunpack.c.l.b16 %v4422
  %v4468 = vunpack.c.h.b16 %v4422
  %v4469 = vunpack.c.l.b16 %v4423
  %v4470 = vunpack.c.h.b16 %v4423
  %v4471 = vunpack.c.l.b16 %v4424
  %v4472 = vunpack.c.h.b16 %v4424
  %v4473 = vpack.c.b16 %v4443, %v4441
  %v4474 = vpack.c.b16 %v4444, %v4442
  %v4475 = vpack.c.b16 %v4447, %v4445
  %v4476 = vpack.c.b16 %v4448, %v4446
  %v4477 = vpack.c.b16 %v4451, %v4449
  %v4478 = vpack.c.b16 %v4452, %v4450
  %v4479 = vpack.c.b16 %v4455, %v4453
  %v4480 = vpack.c.b16 %v4456, %v4454
  %v4481 = vpack.c.b16 %v4459, %v4457
  %v4482 = vpack.c.b16 %v4460, %v4458
  %v4483 = vpack.c.b16 %v4463, %v4461
  %v4484 = vpack.c.b16 %v4464, %v4462
  %v4485 = vpack.c.b16 %v4467, %v4465
  %v4486 = vpack.c.b16 %v4468, %v4466
  %v4487 = vpack.c.b16 %v4471, %v4469
  %v4488 = vpack.c.b16 %v4472, %v4470
  %4505 = vmatprep.subr.bf16.mxu0 %v4474
  %4506 = vmatpush1.bf16.msra.mxu0 %v4473
  %4507 = vmatprep.subr.bf16.mxu0 %v4476
  %4508 = vmatpush1.bf16.msra.mxu0 %v4475
  %4509 = vmatprep.subr.bf16.mxu0 %v4478
  %4510 = vmatpush1.bf16.msra.mxu0 %v4477
  %4511 = vmatprep.subr.bf16.mxu0 %v4480
  %4512 = vmatpush1.bf16.msra.mxu0 %v4479
  %4513 = vmatprep.subr.bf16.mxu0 %v4482
  %4514 = vmatpush1.bf16.msra.mxu0 %v4481
  %4515 = vmatprep.subr.bf16.mxu0 %v4484
  %4516 = vmatpush1.bf16.msra.mxu0 %v4483
  %4517 = vmatprep.subr.bf16.mxu0 %v4486
  %4518 = vmatpush1.bf16.msra.mxu0 %v4485
  %4519 = vmatprep.subr.bf16.mxu0 %v4488
  %4520 = vmatpush1.bf16.msra.mxu0 %v4487
  %4521 = vmatprep.subr.bf16.mxu0 0
  %4522 = vmatpush1.bf16.msra.mxu0 0
  %4523 = vmatprep.subr.bf16.mxu0 0
  %4524 = vmatpush1.bf16.msra.mxu0 0
  %4525 = vmatprep.subr.bf16.mxu0 0
  %4526 = vmatpush1.bf16.msra.mxu0 0
  %4527 = vmatprep.subr.bf16.mxu0 0
  %4528 = vmatpush1.bf16.msra.mxu0 0
  %4529 = vmatprep.subr.bf16.mxu0 0
  %4530 = vmatpush1.bf16.msra.mxu0 0
  %4531 = vmatprep.subr.bf16.mxu0 0
  %4532 = vmatpush1.bf16.msra.mxu0 0
  %4533 = vmatprep.subr.bf16.mxu0 0
  %4534 = vmatpush1.bf16.msra.mxu0 0
  %4535 = vmatprep.subr.bf16.mxu0 0
  %4536 = vmatpush1.bf16.msra.mxu0 0
  %4537 = vmatprep.mubr.bf16.mxu0 0
  %4538 = vmatmul.mubr.bf16.gmra.mrb[0].mxu0 %v4383
  %v4539 = vpop.f32.mrb[0].mxu0
  %v4540 = vadd.f32 0.0, %v4539
  %v4541 = vpop.f32.mrb[0].mxu0
  %v4542 = vadd.f32 0.0, %v4541
  %v4543 = vpop.f32.mrb[0].mxu0
  %v4544 = vadd.f32 0.0, %v4543
  %v4545 = vpop.f32.mrb[0].mxu0
  %v4546 = vadd.f32 0.0, %v4545
  %4547 = vmatprep.mubr.bf16.mxu0 0
  %4548 = vmatmul.mubr.bf16.gmra.mrb[0].mxu0 %v4384
  %v4549 = vpop.f32.mrb[0].mxu0
  %v4550 = vadd.f32 0.0, %v4549
  %v4551 = vpop.f32.mrb[0].mxu0
  %v4552 = vadd.f32 0.0, %v4551
  %v4553 = vpop.f32.mrb[0].mxu0
  %v4554 = vadd.f32 0.0, %v4553
  %v4555 = vpop.f32.mrb[0].mxu0
  %v4556 = vadd.f32 0.0, %v4555
  %4557 = vmatprep.mubr.bf16.mxu0 0
  %4558 = vmatmul.mubr.bf16.gmra.mrb[0].mxu0 %v4385
  %v4559 = vpop.f32.mrb[0].mxu0
  %v4560 = vadd.f32 0.0, %v4559
  %v4561 = vpop.f32.mrb[0].mxu0
  %v4562 = vadd.f32 0.0, %v4561
  %v4563 = vpop.f32.mrb[0].mxu0
  %v4564 = vadd.f32 0.0, %v4563
  %v4565 = vpop.f32.mrb[0].mxu0
  %v4566 = vadd.f32 0.0, %v4565
  %4567 = vmatprep.mubr.bf16.mxu0 0
  %4568 = vmatmul.mubr.bf16.gmra.mrb[0].mxu0 %v4386
  %v4569 = vpop.f32.mrb[0].mxu0
  %v4570 = vadd.f32 0.0, %v4569
  %v4571 = vpop.f32.mrb[0].mxu0
  %v4572 = vadd.f32 0.0, %v4571
  %v4573 = vpop.f32.mrb[0].mxu0
  %v4574 = vadd.f32 0.0, %v4573
  %v4575 = vpop.f32.mrb[0].mxu0
  %v4576 = vadd.f32 0.0, %v4575
  %4577 = vmatprep.mubr.bf16.mxu0 0
  %4578 = vmatmul.mubr.bf16.gmra.mrb[0].mxu0 %v4387
  %v4579 = vpop.f32.mrb[0].mxu0
  %v4580 = vadd.f32 0.0, %v4579
  %v4581 = vpop.f32.mrb[0].mxu0
  %v4582 = vadd.f32 0.0, %v4581
  %v4583 = vpop.f32.mrb[0].mxu0
  %v4584 = vadd.f32 0.0, %v4583
  %v4585 = vpop.f32.mrb[0].mxu0
  %v4586 = vadd.f32 0.0, %v4585
  %4587 = vmatprep.mubr.bf16.mxu0 0
  %4588 = vmatmul.mubr.bf16.gmra.mrb[0].mxu0 %v4388
  %v4589 = vpop.f32.mrb[0].mxu0
  %v4590 = vadd.f32 0.0, %v4589
  %v4591 = vpop.f32.mrb[0].mxu0
  %v4592 = vadd.f32 0.0, %v4591
  %v4593 = vpop.f32.mrb[0].mxu0
  %v4594 = vadd.f32 0.0, %v4593
  %v4595 = vpop.f32.mrb[0].mxu0
  %v4596 = vadd.f32 0.0, %v4595
  %4597 = vmatprep.mubr.bf16.mxu0 0
  %4598 = vmatmul.mubr.bf16.gmra.mrb[0].mxu0 %v4389
  %v4599 = vpop.f32.mrb[0].mxu0
  %v4600 = vadd.f32 0.0, %v4599
  %v4601 = vpop.f32.mrb[0].mxu0
  %v4602 = vadd.f32 0.0, %v4601
  %v4603 = vpop.f32.mrb[0].mxu0
  %v4604 = vadd.f32 0.0, %v4603
  %v4605 = vpop.f32.mrb[0].mxu0
  %v4606 = vadd.f32 0.0, %v4605
  %4607 = vmatprep.mubr.bf16.mxu0 0
  %4608 = vmatmul.mubr.bf16.gmra.mrb[0].mxu0 %v4390
  %v4609 = vpop.f32.mrb[0].mxu0
  %v4610 = vadd.f32 0.0, %v4609
  %v4611 = vpop.f32.mrb[0].mxu0
  %v4612 = vadd.f32 0.0, %v4611
  %v4613 = vpop.f32.mrb[0].mxu0
  %v4614 = vadd.f32 0.0, %v4613
  %v4615 = vpop.f32.mrb[0].mxu0
  %v4616 = vadd.f32 0.0, %v4615
  %4617 = vmatprep.mubr.bf16.mxu0 0
  %4618 = vmatmul.mubr.bf16.gmra.mrb[0].mxu0 %v4391
  %v4619 = vpop.f32.mrb[0].mxu0
  %v4620 = vadd.f32 0.0, %v4619
  %v4621 = vpop.f32.mrb[0].mxu0
  %v4622 = vadd.f32 0.0, %v4621
  %v4623 = vpop.f32.mrb[0].mxu0
  %v4624 = vadd.f32 0.0, %v4623
  %v4625 = vpop.f32.mrb[0].mxu0
  %v4626 = vadd.f32 0.0, %v4625
  %4627 = vmatprep.mubr.bf16.mxu0 0
  %4628 = vmatmul.mubr.bf16.gmra.mrb[0].mxu0 %v4408
  %v4629 = vpop.f32.mrb[0].mxu0
  %v4630 = vadd.f32 0.0, %v4629
  %v4631 = vpop.f32.mrb[0].mxu0
  %v4632 = vadd.f32 0.0, %v4631
  %v4633 = vpop.f32.mrb[0].mxu0
  %v4634 = vadd.f32 0.0, %v4633
  %v4635 = vpop.f32.mrb[0].mxu0
  %v4636 = vadd.f32 0.0, %v4635
  %4637 = vdwg.mxu0
  %v4654 = vunpack.c.l.b16 %v4392
  %v4655 = vunpack.c.h.b16 %v4392
  %v4656 = vunpack.c.l.b16 %v4393
  %v4657 = vunpack.c.h.b16 %v4393
  %v4658 = vunpack.c.l.b16 %v4394
  %v4659 = vunpack.c.h.b16 %v4394
  %v4660 = vunpack.c.l.b16 %v4395
  %v4661 = vunpack.c.h.b16 %v4395
  %v4662 = vunpack.c.l.b16 %v4396
  %v4663 = vunpack.c.h.b16 %v4396
  %v4664 = vunpack.c.l.b16 %v4397
  %v4665 = vunpack.c.h.b16 %v4397
  %v4666 = vunpack.c.l.b16 %v4398
  %v4667 = vunpack.c.h.b16 %v4398
  %v4668 = vunpack.c.l.b16 %v4399
  %v4669 = vunpack.c.h.b16 %v4399
  %v4670 = vunpack.c.l.b16 %v4400
  %v4671 = vunpack.c.h.b16 %v4400
  %v4672 = vunpack.c.l.b16 %v4401
  %v4673 = vunpack.c.h.b16 %v4401
  %v4674 = vunpack.c.l.b16 %v4402
  %v4675 = vunpack.c.h.b16 %v4402
  %v4676 = vunpack.c.l.b16 %v4403
  %v4677 = vunpack.c.h.b16 %v4403
  %v4678 = vunpack.c.l.b16 %v4404
  %v4679 = vunpack.c.h.b16 %v4404
  %v4680 = vunpack.c.l.b16 %v4405
  %v4681 = vunpack.c.h.b16 %v4405
  %v4682 = vunpack.c.l.b16 %v4406
  %v4683 = vunpack.c.h.b16 %v4406
  %v4684 = vunpack.c.l.b16 %v4407
  %v4685 = vunpack.c.h.b16 %v4407
  %v4686 = vpack.c.b16 %v4656, %v4654
  %v4687 = vpack.c.b16 %v4657, %v4655
  %v4688 = vpack.c.b16 %v4660, %v4658
  %v4689 = vpack.c.b16 %v4661, %v4659
  %v4690 = vpack.c.b16 %v4664, %v4662
  %v4691 = vpack.c.b16 %v4665, %v4663
  %v4692 = vpack.c.b16 %v4668, %v4666
  %v4693 = vpack.c.b16 %v4669, %v4667
  %v4694 = vpack.c.b16 %v4672, %v4670
  %v4695 = vpack.c.b16 %v4673, %v4671
  %v4696 = vpack.c.b16 %v4676, %v4674
  %v4697 = vpack.c.b16 %v4677, %v4675
  %v4698 = vpack.c.b16 %v4680, %v4678
  %v4699 = vpack.c.b16 %v4681, %v4679
  %v4700 = vpack.c.b16 %v4684, %v4682
  %v4701 = vpack.c.b16 %v4685, %v4683
  %4718 = vmatprep.subr.bf16.mxu0 %v4687
  %4719 = vmatpush1.bf16.msra.mxu0 %v4686
  %4720 = vmatprep.subr.bf16.mxu0 %v4689
  %4721 = vmatpush1.bf16.msra.mxu0 %v4688
  %4722 = vmatprep.subr.bf16.mxu0 %v4691
  %4723 = vmatpush1.bf16.msra.mxu0 %v4690
  %4724 = vmatprep.subr.bf16.mxu0 %v4693
  %4725 = vmatpush1.bf16.msra.mxu0 %v4692
  %4726 = vmatprep.subr.bf16.mxu0 %v4695
  %4727 = vmatpush1.bf16.msra.mxu0 %v4694
  %4728 = vmatprep.subr.bf16.mxu0 %v4697
  %4729 = vmatpush1.bf16.msra.mxu0 %v4696
  %4730 = vmatprep.subr.bf16.mxu0 %v4699
  %4731 = vmatpush1.bf16.msra.mxu0 %v4698
  %4732 = vmatprep.subr.bf16.mxu0 %v4701
  %4733 = vmatpush1.bf16.msra.mxu0 %v4700
  %4734 = vmatprep.subr.bf16.mxu0 0
  %4735 = vmatpush1.bf16.msra.mxu0 0
  %4736 = vmatprep.subr.bf16.mxu0 0
  %4737 = vmatpush1.bf16.msra.mxu0 0
  %4738 = vmatprep.subr.bf16.mxu0 0
  %4739 = vmatpush1.bf16.msra.mxu0 0
  %4740 = vmatprep.subr.bf16.mxu0 0
  %4741 = vmatpush1.bf16.msra.mxu0 0
  %4742 = vmatprep.subr.bf16.mxu0 0
  %4743 = vmatpush1.bf16.msra.mxu0 0
  %4744 = vmatprep.subr.bf16.mxu0 0
  %4745 = vmatpush1.bf16.msra.mxu0 0
  %4746 = vmatprep.subr.bf16.mxu0 0
  %4747 = vmatpush1.bf16.msra.mxu0 0
  %4748 = vmatprep.subr.bf16.mxu0 0
  %4749 = vmatpush1.bf16.msra.mxu0 0
  %4750 = vmatprep.mubr.bf16.mxu0 0
  %4751 = vmatmul.mubr.bf16.gmra.mrb[0].mxu0 %v4382
  %v4752 = vpop.f32.mrb[0].mxu0
  %v4753 = vadd.f32 %v4540, %v4752
  %v4754 = vpop.f32.mrb[0].mxu0
  %v4755 = vadd.f32 %v4542, %v4754
  %v4756 = vpop.f32.mrb[0].mxu0
  %v4757 = vadd.f32 %v4544, %v4756
  %v4758 = vpop.f32.mrb[0].mxu0
  %v4759 = vadd.f32 %v4546, %v4758
  %4760 = vmatprep.mubr.bf16.mxu0 0
  %4761 = vmatmul.mubr.bf16.gmra.mrb[0].mxu0 %v4383
  %v4762 = vpop.f32.mrb[0].mxu0
  %v4763 = vadd.f32 %v4550, %v4762
  %v4764 = vpop.f32.mrb[0].mxu0
  %v4765 = vadd.f32 %v4552, %v4764
  %v4766 = vpop.f32.mrb[0].mxu0
  %v4767 = vadd.f32 %v4554, %v4766
  %v4768 = vpop.f32.mrb[0].mxu0
  %v4769 = vadd.f32 %v4556, %v4768
  %4770 = vmatprep.mubr.bf16.mxu0 0
  %4771 = vmatmul.mubr.bf16.gmra.mrb[0].mxu0 %v4384
  %v4772 = vpop.f32.mrb[0].mxu0
  %v4773 = vadd.f32 %v4560, %v4772
  %v4774 = vpop.f32.mrb[0].mxu0
  %v4775 = vadd.f32 %v4562, %v4774
  %v4776 = vpop.f32.mrb[0].mxu0
  %v4777 = vadd.f32 %v4564, %v4776
  %v4778 = vpop.f32.mrb[0].mxu0
  %v4779 = vadd.f32 %v4566, %v4778
  %4780 = vmatprep.mubr.bf16.mxu0 0
  %4781 = vmatmul.mubr.bf16.gmra.mrb[0].mxu0 %v4385
  %v4782 = vpop.f32.mrb[0].mxu0
  %v4783 = vadd.f32 %v4570, %v4782
  %v4784 = vpop.f32.mrb[0].mxu0
  %v4785 = vadd.f32 %v4572, %v4784
  %v4786 = vpop.f32.mrb[0].mxu0
  %v4787 = vadd.f32 %v4574, %v4786
  %v4788 = vpop.f32.mrb[0].mxu0
  %v4789 = vadd.f32 %v4576, %v4788
  %4790 = vmatprep.mubr.bf16.mxu0 0
  %4791 = vmatmul.mubr.bf16.gmra.mrb[0].mxu0 %v4386
  %v4792 = vpop.f32.mrb[0].mxu0
  %v4793 = vadd.f32 %v4580, %v4792
  %v4794 = vpop.f32.mrb[0].mxu0
  %v4795 = vadd.f32 %v4582, %v4794
  %v4796 = vpop.f32.mrb[0].mxu0
  %v4797 = vadd.f32 %v4584, %v4796
  %v4798 = vpop.f32.mrb[0].mxu0
  %v4799 = vadd.f32 %v4586, %v4798
  %4800 = vmatprep.mubr.bf16.mxu0 0
  %4801 = vmatmul.mubr.bf16.gmra.mrb[0].mxu0 %v4387
  %v4802 = vpop.f32.mrb[0].mxu0
  %v4803 = vadd.f32 %v4590, %v4802
  %v4804 = vpop.f32.mrb[0].mxu0
  %v4805 = vadd.f32 %v4592, %v4804
  %v4806 = vpop.f32.mrb[0].mxu0
  %v4807 = vadd.f32 %v4594, %v4806
  %v4808 = vpop.f32.mrb[0].mxu0
  %v4809 = vadd.f32 %v4596, %v4808
  %4810 = vmatprep.mubr.bf16.mxu0 0
  %4811 = vmatmul.mubr.bf16.gmra.mrb[0].mxu0 %v4388
  %v4812 = vpop.f32.mrb[0].mxu0
  %v4813 = vadd.f32 %v4600, %v4812
  %v4814 = vpop.f32.mrb[0].mxu0
  %v4815 = vadd.f32 %v4602, %v4814
  %v4816 = vpop.f32.mrb[0].mxu0
  %v4817 = vadd.f32 %v4604, %v4816
  %v4818 = vpop.f32.mrb[0].mxu0
  %v4819 = vadd.f32 %v4606, %v4818
  %4820 = vmatprep.mubr.bf16.mxu0 0
  %4821 = vmatmul.mubr.bf16.gmra.mrb[0].mxu0 %v4389
  %v4822 = vpop.f32.mrb[0].mxu0
  %v4823 = vadd.f32 %v4610, %v4822
  %v4824 = vpop.f32.mrb[0].mxu0
  %v4825 = vadd.f32 %v4612, %v4824
  %v4826 = vpop.f32.mrb[0].mxu0
  %v4827 = vadd.f32 %v4614, %v4826
  %v4828 = vpop.f32.mrb[0].mxu0
  %v4829 = vadd.f32 %v4616, %v4828
  %4830 = vmatprep.mubr.bf16.mxu0 0
  %4831 = vmatmul.mubr.bf16.gmra.mrb[0].mxu0 %v4390
  %v4832 = vpop.f32.mrb[0].mxu0
  %v4833 = vadd.f32 %v4620, %v4832
  %v4834 = vpop.f32.mrb[0].mxu0
  %v4835 = vadd.f32 %v4622, %v4834
  %v4836 = vpop.f32.mrb[0].mxu0
  %v4837 = vadd.f32 %v4624, %v4836
  %v4838 = vpop.f32.mrb[0].mxu0
  %v4839 = vadd.f32 %v4626, %v4838
  %4840 = vmatprep.mubr.bf16.mxu0 0
  %4841 = vmatmul.mubr.bf16.gmra.mrb[0].mxu0 %v4391
  %v4842 = vpop.f32.mrb[0].mxu0
  %v4843 = vadd.f32 %v4630, %v4842
  %v4844 = vpop.f32.mrb[0].mxu0
  %v4845 = vadd.f32 %v4632, %v4844
  %v4846 = vpop.f32.mrb[0].mxu0
  %v4847 = vadd.f32 %v4634, %v4846
  %v4848 = vpop.f32.mrb[0].mxu0
  %v4849 = vadd.f32 %v4636, %v4848
  %4850 = vdwg.mxu0
  %v4851 = vld [vmem:[#allocation4 + $0x10] sm:$0xff]
  %v4852 = vld [vmem:[#allocation4 + $0x18] sm:$0xff]
  %v4853 = vld [vmem:[#allocation4 + $0x20] sm:$0xff]
  %v4854 = vld [vmem:[#allocation4 + $0x28] sm:$0xff]
  %v4855 = vld [vmem:[#allocation4 + $0x30] sm:$0xff]
  %v4856 = vld [vmem:[#allocation4 + $0x38] sm:$0xff]
  %v4857 = vld [vmem:[#allocation4 + $0x40] sm:$0xff]
  %v4858 = vld [vmem:[#allocation4 + $0x48] sm:$0xff]
  %v4859 = vld [vmem:[#allocation4 + $0x50] sm:$0xff]
  %v4860 = vld [vmem:[#allocation4 + $0x58] sm:$0xff]
  %v4861 = vld [vmem:[%s5 + $0x100] sm:$0xff]
  %v4862 = vld [vmem:[%s5 + $0x108] sm:$0xff]
  %v4863 = vld [vmem:[%s5 + $0x110] sm:$0xff]
  %v4864 = vld [vmem:[%s5 + $0x118] sm:$0xff]
  %v4865 = vld [vmem:[%s5 + $0x120] sm:$0xff]
  %v4866 = vld [vmem:[%s5 + $0x128] sm:$0xff]
  %v4867 = vld [vmem:[%s5 + $0x130] sm:$0xff]
  %v4868 = vld [vmem:[%s5 + $0x138] sm:$0xff]
  %v4869 = vld [vmem:[%s5 + $0x140] sm:$0xff]
  %v4870 = vld [vmem:[%s5 + $0x148] sm:$0xff]
  %v4871 = vld [vmem:[%s5 + $0x150] sm:$0xff]
  %v4872 = vld [vmem:[%s5 + $0x158] sm:$0xff]
  %v4873 = vld [vmem:[%s5 + $0x160] sm:$0xff]
  %v4874 = vld [vmem:[%s5 + $0x168] sm:$0xff]
  %v4875 = vld [vmem:[%s5 + $0x170] sm:$0xff]
  %v4876 = vld [vmem:[%s5 + $0x178] sm:$0xff]
  %v4893 = vunpack.c.l.b16 %v4861
  %v4894 = vunpack.c.h.b16 %v4861
  %v4895 = vunpack.c.l.b16 %v4862
  %v4896 = vunpack.c.h.b16 %v4862
  %v4897 = vunpack.c.l.b16 %v4863
  %v4898 = vunpack.c.h.b16 %v4863
  %v4899 = vunpack.c.l.b16 %v4864
  %v4900 = vunpack.c.h.b16 %v4864
  %v4901 = vunpack.c.l.b16 %v4865
  %v4902 = vunpack.c.h.b16 %v4865
  %v4903 = vunpack.c.l.b16 %v4866
  %v4904 = vunpack.c.h.b16 %v4866
  %v4905 = vunpack.c.l.b16 %v4867
  %v4906 = vunpack.c.h.b16 %v4867
  %v4907 = vunpack.c.l.b16 %v4868
  %v4908 = vunpack.c.h.b16 %v4868
  %v4909 = vunpack.c.l.b16 %v4869
  %v4910 = vunpack.c.h.b16 %v4869
  %v4911 = vunpack.c.l.b16 %v4870
  %v4912 = vunpack.c.h.b16 %v4870
  %v4913 = vunpack.c.l.b16 %v4871
  %v4914 = vunpack.c.h.b16 %v4871
  %v4915 = vunpack.c.l.b16 %v4872
  %v4916 = vunpack.c.h.b16 %v4872
  %v4917 = vunpack.c.l.b16 %v4873
  %v4918 = vunpack.c.h.b16 %v4873
  %v4919 = vunpack.c.l.b16 %v4874
  %v4920 = vunpack.c.h.b16 %v4874
  %v4921 = vunpack.c.l.b16 %v4875
  %v4922 = vunpack.c.h.b16 %v4875
  %v4923 = vunpack.c.l.b16 %v4876
  %v4924 = vunpack.c.h.b16 %v4876
  %v4925 = vpack.c.b16 %v4895, %v4893
  %v4926 = vpack.c.b16 %v4896, %v4894
  %v4927 = vpack.c.b16 %v4899, %v4897
  %v4928 = vpack.c.b16 %v4900, %v4898
  %v4929 = vpack.c.b16 %v4903, %v4901
  %v4930 = vpack.c.b16 %v4904, %v4902
  %v4931 = vpack.c.b16 %v4907, %v4905
  %v4932 = vpack.c.b16 %v4908, %v4906
  %v4933 = vpack.c.b16 %v4911, %v4909
  %v4934 = vpack.c.b16 %v4912, %v4910
  %v4935 = vpack.c.b16 %v4915, %v4913
  %v4936 = vpack.c.b16 %v4916, %v4914
  %v4937 = vpack.c.b16 %v4919, %v4917
  %v4938 = vpack.c.b16 %v4920, %v4918
  %v4939 = vpack.c.b16 %v4923, %v4921
  %v4940 = vpack.c.b16 %v4924, %v4922
  %4957 = vmatprep.subr.bf16.mxu0 %v4926
  %4958 = vmatpush1.bf16.msra.mxu0 %v4925
  %4959 = vmatprep.subr.bf16.mxu0 %v4928
  %4960 = vmatpush1.bf16.msra.mxu0 %v4927
  %4961 = vmatprep.subr.bf16.mxu0 %v4930
  %4962 = vmatpush1.bf16.msra.mxu0 %v4929
  %4963 = vmatprep.subr.bf16.mxu0 %v4932
  %4964 = vmatpush1.bf16.msra.mxu0 %v4931
  %4965 = vmatprep.subr.bf16.mxu0 %v4934
  %4966 = vmatpush1.bf16.msra.mxu0 %v4933
  %4967 = vmatprep.subr.bf16.mxu0 %v4936
  %4968 = vmatpush1.bf16.msra.mxu0 %v4935
  %4969 = vmatprep.subr.bf16.mxu0 %v4938
  %4970 = vmatpush1.bf16.msra.mxu0 %v4937
  %4971 = vmatprep.subr.bf16.mxu0 %v4940
  %4972 = vmatpush1.bf16.msra.mxu0 %v4939
  %4973 = vmatprep.subr.bf16.mxu0 0
  %4974 = vmatpush1.bf16.msra.mxu0 0
  %4975 = vmatprep.subr.bf16.mxu0 0
  %4976 = vmatpush1.bf16.msra.mxu0 0
  %4977 = vmatprep.subr.bf16.mxu0 0
  %4978 = vmatpush1.bf16.msra.mxu0 0
  %4979 = vmatprep.subr.bf16.mxu0 0
  %4980 = vmatpush1.bf16.msra.mxu0 0
  %4981 = vmatprep.subr.bf16.mxu0 0
  %4982 = vmatpush1.bf16.msra.mxu0 0
  %4983 = vmatprep.subr.bf16.mxu0 0
  %4984 = vmatpush1.bf16.msra.mxu0 0
  %4985 = vmatprep.subr.bf16.mxu0 0
  %4986 = vmatpush1.bf16.msra.mxu0 0
  %4987 = vmatprep.subr.bf16.mxu0 0
  %4988 = vmatpush1.bf16.msra.mxu0 0
  %4989 = vmatprep.mubr.bf16.mxu0 0
  %4990 = vmatmul.mubr.bf16.gmra.mrb[0].mxu0 %v4851
  %v4991 = vpop.f32.mrb[0].mxu0
  %v4992 = vadd.f32 0.0, %v4991
  %v4993 = vpop.f32.mrb[0].mxu0
  %v4994 = vadd.f32 0.0, %v4993
  %v4995 = vpop.f32.mrb[0].mxu0
  %v4996 = vadd.f32 0.0, %v4995
  %v4997 = vpop.f32.mrb[0].mxu0
  %v4998 = vadd.f32 0.0, %v4997
  %4999 = vmatprep.mubr.bf16.mxu0 0
  %5000 = vmatmul.mubr.bf16.gmra.mrb[0].mxu0 %v4852
  %v5001 = vpop.f32.mrb[0].mxu0
  %v5002 = vadd.f32 0.0, %v5001
  %v5003 = vpop.f32.mrb[0].mxu0
  %v5004 = vadd.f32 0.0, %v5003
  %v5005 = vpop.f32.mrb[0].mxu0
  %v5006 = vadd.f32 0.0, %v5005
  %v5007 = vpop.f32.mrb[0].mxu0
  %v5008 = vadd.f32 0.0, %v5007
  %5009 = vmatprep.mubr.bf16.mxu0 0
  %5010 = vmatmul.mubr.bf16.gmra.mrb[0].mxu0 %v4853
  %v5011 = vpop.f32.mrb[0].mxu0
  %v5012 = vadd.f32 0.0, %v5011
  %v5013 = vpop.f32.mrb[0].mxu0
  %v5014 = vadd.f32 0.0, %v5013
  %v5015 = vpop.f32.mrb[0].mxu0
  %v5016 = vadd.f32 0.0, %v5015
  %v5017 = vpop.f32.mrb[0].mxu0
  %v5018 = vadd.f32 0.0, %v5017
  %5019 = vmatprep.mubr.bf16.mxu0 0
  %5020 = vmatmul.mubr.bf16.gmra.mrb[0].mxu0 %v4854
  %v5021 = vpop.f32.mrb[0].mxu0
  %v5022 = vadd.f32 0.0, %v5021
  %v5023 = vpop.f32.mrb[0].mxu0
  %v5024 = vadd.f32 0.0, %v5023
  %v5025 = vpop.f32.mrb[0].mxu0
  %v5026 = vadd.f32 0.0, %v5025
  %v5027 = vpop.f32.mrb[0].mxu0
  %v5028 = vadd.f32 0.0, %v5027
  %5029 = vmatprep.mubr.bf16.mxu0 0
  %5030 = vmatmul.mubr.bf16.gmra.mrb[0].mxu0 %v4855
  %v5031 = vpop.f32.mrb[0].mxu0
  %v5032 = vadd.f32 0.0, %v5031
  %v5033 = vpop.f32.mrb[0].mxu0
  %v5034 = vadd.f32 0.0, %v5033
  %v5035 = vpop.f32.mrb[0].mxu0
  %v5036 = vadd.f32 0.0, %v5035
  %v5037 = vpop.f32.mrb[0].mxu0
  %v5038 = vadd.f32 0.0, %v5037
  %5039 = vmatprep.mubr.bf16.mxu0 0
  %5040 = vmatmul.mubr.bf16.gmra.mrb[0].mxu0 %v4856
  %v5041 = vpop.f32.mrb[0].mxu0
  %v5042 = vadd.f32 0.0, %v5041
  %v5043 = vpop.f32.mrb[0].mxu0
  %v5044 = vadd.f32 0.0, %v5043
  %v5045 = vpop.f32.mrb[0].mxu0
  %v5046 = vadd.f32 0.0, %v5045
  %v5047 = vpop.f32.mrb[0].mxu0
  %v5048 = vadd.f32 0.0, %v5047
  %5049 = vmatprep.mubr.bf16.mxu0 0
  %5050 = vmatmul.mubr.bf16.gmra.mrb[0].mxu0 %v4857
  %v5051 = vpop.f32.mrb[0].mxu0
  %v5052 = vadd.f32 0.0, %v5051
  %v5053 = vpop.f32.mrb[0].mxu0
  %v5054 = vadd.f32 0.0, %v5053
  %v5055 = vpop.f32.mrb[0].mxu0
  %v5056 = vadd.f32 0.0, %v5055
  %v5057 = vpop.f32.mrb[0].mxu0
  %v5058 = vadd.f32 0.0, %v5057
  %5059 = vmatprep.mubr.bf16.mxu0 0
  %5060 = vmatmul.mubr.bf16.gmra.mrb[0].mxu0 %v4858
  %v5061 = vpop.f32.mrb[0].mxu0
  %v5062 = vadd.f32 0.0, %v5061
  %v5063 = vpop.f32.mrb[0].mxu0
  %v5064 = vadd.f32 0.0, %v5063
  %v5065 = vpop.f32.mrb[0].mxu0
  %v5066 = vadd.f32 0.0, %v5065
  %v5067 = vpop.f32.mrb[0].mxu0
  %v5068 = vadd.f32 0.0, %v5067
  %5069 = vmatprep.mubr.bf16.mxu0 0
  %5070 = vmatmul.mubr.bf16.gmra.mrb[0].mxu0 %v4859
  %v5071 = vpop.f32.mrb[0].mxu0
  %v5072 = vadd.f32 0.0, %v5071
  %v5073 = vpop.f32.mrb[0].mxu0
  %v5074 = vadd.f32 0.0, %v5073
  %v5075 = vpop.f32.mrb[0].mxu0
  %v5076 = vadd.f32 0.0, %v5075
  %v5077 = vpop.f32.mrb[0].mxu0
  %v5078 = vadd.f32 0.0, %v5077
  %5079 = vmatprep.mubr.bf16.mxu0 0
  %5080 = vmatmul.mubr.bf16.gmra.mrb[0].mxu0 %v4860
  %v5081 = vpop.f32.mrb[0].mxu0
  %v5082 = vadd.f32 0.0, %v5081
  %v5083 = vpop.f32.mrb[0].mxu0
  %v5084 = vadd.f32 0.0, %v5083
  %v5085 = vpop.f32.mrb[0].mxu0
  %v5086 = vadd.f32 0.0, %v5085
  %v5087 = vpop.f32.mrb[0].mxu0
  %v5088 = vadd.f32 0.0, %v5087
  %5089 = vdwg.mxu0
  %v5090 = vadd.f32 %v4753, %v4992
  %v5091 = vadd.f32 %v4755, %v4994
  %v5092 = vadd.f32 %v4757, %v4996
  %v5093 = vadd.f32 %v4759, %v4998
  %v5094 = vadd.f32 %v4763, %v5002
  %v5095 = vadd.f32 %v4765, %v5004
  %v5096 = vadd.f32 %v4767, %v5006
  %v5097 = vadd.f32 %v4769, %v5008
  %v5098 = vadd.f32 %v4773, %v5012
  %v5099 = vadd.f32 %v4775, %v5014
  %v5100 = vadd.f32 %v4777, %v5016
  %v5101 = vadd.f32 %v4779, %v5018
  %v5102 = vadd.f32 %v4783, %v5022
  %v5103 = vadd.f32 %v4785, %v5024
  %v5104 = vadd.f32 %v4787, %v5026
  %v5105 = vadd.f32 %v4789, %v5028
  %v5106 = vadd.f32 %v4793, %v5032
  %v5107 = vadd.f32 %v4795, %v5034
  %v5108 = vadd.f32 %v4797, %v5036
  %v5109 = vadd.f32 %v4799, %v5038
  %v5110 = vadd.f32 %v4803, %v5042
  %v5111 = vadd.f32 %v4805, %v5044
  %v5112 = vadd.f32 %v4807, %v5046
  %v5113 = vadd.f32 %v4809, %v5048
  %v5114 = vadd.f32 %v4813, %v5052
  %v5115 = vadd.f32 %v4815, %v5054
  %v5116 = vadd.f32 %v4817, %v5056
  %v5117 = vadd.f32 %v4819, %v5058
  %v5118 = vadd.f32 %v4823, %v5062
  %v5119 = vadd.f32 %v4825, %v5064
  %v5120 = vadd.f32 %v4827, %v5066
  %v5121 = vadd.f32 %v4829, %v5068
  %v5122 = vadd.f32 %v4833, %v5072
  %v5123 = vadd.f32 %v4835, %v5074
  %v5124 = vadd.f32 %v4837, %v5076
  %v5125 = vadd.f32 %v4839, %v5078
  %v5126 = vadd.f32 %v4843, %v5082
  %v5127 = vadd.f32 %v4845, %v5084
  %v5128 = vadd.f32 %v4847, %v5086
  %v5129 = vadd.f32 %v4849, %v5088
  %v5130 = vld [vmem:[#allocation4 + $0x18] sm:$0xff]
  %v5131 = vld [vmem:[#allocation4 + $0x20] sm:$0xff]
  %v5132 = vld [vmem:[#allocation4 + $0x28] sm:$0xff]
  %v5133 = vld [vmem:[#allocation4 + $0x30] sm:$0xff]
  %v5134 = vld [vmem:[#allocation4 + $0x38] sm:$0xff]
  %v5135 = vld [vmem:[#allocation4 + $0x40] sm:$0xff]
  %v5136 = vld [vmem:[#allocation4 + $0x48] sm:$0xff]
  %v5137 = vld [vmem:[#allocation4 + $0x50] sm:$0xff]
  %v5138 = vld [vmem:[#allocation4 + $0x58] sm:$0xff]
  %v5139 = vld [vmem:[#allocation4 + $0x60] sm:$0xff]
  %v5140 = vld [vmem:[%s5 + $0x180] sm:$0xff]
  %v5141 = vld [vmem:[%s5 + $0x188] sm:$0xff]
  %v5142 = vld [vmem:[%s5 + $0x190] sm:$0xff]
  %v5143 = vld [vmem:[%s5 + $0x198] sm:$0xff]
  %v5144 = vld [vmem:[%s5 + $0x1a0] sm:$0xff]
  %v5145 = vld [vmem:[%s5 + $0x1a8] sm:$0xff]
  %v5146 = vld [vmem:[%s5 + $0x1b0] sm:$0xff]
  %v5147 = vld [vmem:[%s5 + $0x1b8] sm:$0xff]
  %v5148 = vld [vmem:[%s5 + $0x1c0] sm:$0xff]
  %v5149 = vld [vmem:[%s5 + $0x1c8] sm:$0xff]
  %v5150 = vld [vmem:[%s5 + $0x1d0] sm:$0xff]
  %v5151 = vld [vmem:[%s5 + $0x1d8] sm:$0xff]
  %v5152 = vld [vmem:[%s5 + $0x1e0] sm:$0xff]
  %v5153 = vld [vmem:[%s5 + $0x1e8] sm:$0xff]
  %v5154 = vld [vmem:[%s5 + $0x1f0] sm:$0xff]
  %v5155 = vld [vmem:[%s5 + $0x1f8] sm:$0xff]
  %v5172 = vunpack.c.l.b16 %v5140
  %v5173 = vunpack.c.h.b16 %v5140
  %v5174 = vunpack.c.l.b16 %v5141
  %v5175 = vunpack.c.h.b16 %v5141
  %v5176 = vunpack.c.l.b16 %v5142
  %v5177 = vunpack.c.h.b16 %v5142
  %v5178 = vunpack.c.l.b16 %v5143
  %v5179 = vunpack.c.h.b16 %v5143
  %v5180 = vunpack.c.l.b16 %v5144
  %v5181 = vunpack.c.h.b16 %v5144
  %v5182 = vunpack.c.l.b16 %v5145
  %v5183 = vunpack.c.h.b16 %v5145
  %v5184 = vunpack.c.l.b16 %v5146
  %v5185 = vunpack.c.h.b16 %v5146
  %v5186 = vunpack.c.l.b16 %v5147
  %v5187 = vunpack.c.h.b16 %v5147
  %v5188 = vunpack.c.l.b16 %v5148
  %v5189 = vunpack.c.h.b16 %v5148
  %v5190 = vunpack.c.l.b16 %v5149
  %v5191 = vunpack.c.h.b16 %v5149
  %v5192 = vunpack.c.l.b16 %v5150
  %v5193 = vunpack.c.h.b16 %v5150
  %v5194 = vunpack.c.l.b16 %v5151
  %v5195 = vunpack.c.h.b16 %v5151
  %v5196 = vunpack.c.l.b16 %v5152
  %v5197 = vunpack.c.h.b16 %v5152
  %v5198 = vunpack.c.l.b16 %v5153
  %v5199 = vunpack.c.h.b16 %v5153
  %v5200 = vunpack.c.l.b16 %v5154
  %v5201 = vunpack.c.h.b16 %v5154
  %v5202 = vunpack.c.l.b16 %v5155
  %v5203 = vunpack.c.h.b16 %v5155
  %v5204 = vpack.c.b16 %v5174, %v5172
  %v5205 = vpack.c.b16 %v5175, %v5173
  %v5206 = vpack.c.b16 %v5178, %v5176
  %v5207 = vpack.c.b16 %v5179, %v5177
  %v5208 = vpack.c.b16 %v5182, %v5180
  %v5209 = vpack.c.b16 %v5183, %v5181
  %v5210 = vpack.c.b16 %v5186, %v5184
  %v5211 = vpack.c.b16 %v5187, %v5185
  %v5212 = vpack.c.b16 %v5190, %v5188
  %v5213 = vpack.c.b16 %v5191, %v5189
  %v5214 = vpack.c.b16 %v5194, %v5192
  %v5215 = vpack.c.b16 %v5195, %v5193
  %v5216 = vpack.c.b16 %v5198, %v5196
  %v5217 = vpack.c.b16 %v5199, %v5197
  %v5218 = vpack.c.b16 %v5202, %v5200
  %v5219 = vpack.c.b16 %v5203, %v5201
  %5236 = vmatprep.subr.bf16.mxu0 %v5205
  %5237 = vmatpush1.bf16.msra.mxu0 %v5204
  %5238 = vmatprep.subr.bf16.mxu0 %v5207
  %5239 = vmatpush1.bf16.msra.mxu0 %v5206
  %5240 = vmatprep.subr.bf16.mxu0 %v5209
  %5241 = vmatpush1.bf16.msra.mxu0 %v5208
  %5242 = vmatprep.subr.bf16.mxu0 %v5211
  %5243 = vmatpush1.bf16.msra.mxu0 %v5210
  %5244 = vmatprep.subr.bf16.mxu0 %v5213
  %5245 = vmatpush1.bf16.msra.mxu0 %v5212
  %5246 = vmatprep.subr.bf16.mxu0 %v5215
  %5247 = vmatpush1.bf16.msra.mxu0 %v5214
  %5248 = vmatprep.subr.bf16.mxu0 %v5217
  %5249 = vmatpush1.bf16.msra.mxu0 %v5216
  %5250 = vmatprep.subr.bf16.mxu0 %v5219
  %5251 = vmatpush1.bf16.msra.mxu0 %v5218
  %5252 = vmatprep.subr.bf16.mxu0 0
  %5253 = vmatpush1.bf16.msra.mxu0 0
  %5254 = vmatprep.subr.bf16.mxu0 0
  %5255 = vmatpush1.bf16.msra.mxu0 0
  %5256 = vmatprep.subr.bf16.mxu0 0
  %5257 = vmatpush1.bf16.msra.mxu0 0
  %5258 = vmatprep.subr.bf16.mxu0 0
  %5259 = vmatpush1.bf16.msra.mxu0 0
  %5260 = vmatprep.subr.bf16.mxu0 0
  %5261 = vmatpush1.bf16.msra.mxu0 0
  %5262 = vmatprep.subr.bf16.mxu0 0
  %5263 = vmatpush1.bf16.msra.mxu0 0
  %5264 = vmatprep.subr.bf16.mxu0 0
  %5265 = vmatpush1.bf16.msra.mxu0 0
  %5266 = vmatprep.subr.bf16.mxu0 0
  %5267 = vmatpush1.bf16.msra.mxu0 0
  %5268 = vmatprep.mubr.bf16.mxu0 0
  %5269 = vmatmul.mubr.bf16.gmra.mrb[0].mxu0 %v5130
  %v5270 = vpop.f32.mrb[0].mxu0
  %v5271 = vadd.f32 0.0, %v5270
  %v5272 = vpop.f32.mrb[0].mxu0
  %v5273 = vadd.f32 0.0, %v5272
  %v5274 = vpop.f32.mrb[0].mxu0
  %v5275 = vadd.f32 0.0, %v5274
  %v5276 = vpop.f32.mrb[0].mxu0
  %v5277 = vadd.f32 0.0, %v5276
  %5278 = vmatprep.mubr.bf16.mxu0 0
  %5279 = vmatmul.mubr.bf16.gmra.mrb[0].mxu0 %v5131
  %v5280 = vpop.f32.mrb[0].mxu0
  %v5281 = vadd.f32 0.0, %v5280
  %v5282 = vpop.f32.mrb[0].mxu0
  %v5283 = vadd.f32 0.0, %v5282
  %v5284 = vpop.f32.mrb[0].mxu0
  %v5285 = vadd.f32 0.0, %v5284
  %v5286 = vpop.f32.mrb[0].mxu0
  %v5287 = vadd.f32 0.0, %v5286
  %5288 = vmatprep.mubr.bf16.mxu0 0
  %5289 = vmatmul.mubr.bf16.gmra.mrb[0].mxu0 %v5132
  %v5290 = vpop.f32.mrb[0].mxu0
  %v5291 = vadd.f32 0.0, %v5290
  %v5292 = vpop.f32.mrb[0].mxu0
  %v5293 = vadd.f32 0.0, %v5292
  %v5294 = vpop.f32.mrb[0].mxu0
  %v5295 = vadd.f32 0.0, %v5294
  %v5296 = vpop.f32.mrb[0].mxu0
  %v5297 = vadd.f32 0.0, %v5296
  %5298 = vmatprep.mubr.bf16.mxu0 0
  %5299 = vmatmul.mubr.bf16.gmra.mrb[0].mxu0 %v5133
  %v5300 = vpop.f32.mrb[0].mxu0
  %v5301 = vadd.f32 0.0, %v5300
  %v5302 = vpop.f32.mrb[0].mxu0
  %v5303 = vadd.f32 0.0, %v5302
  %v5304 = vpop.f32.mrb[0].mxu0
  %v5305 = vadd.f32 0.0, %v5304
  %v5306 = vpop.f32.mrb[0].mxu0
  %v5307 = vadd.f32 0.0, %v5306
  %5308 = vmatprep.mubr.bf16.mxu0 0
  %5309 = vmatmul.mubr.bf16.gmra.mrb[0].mxu0 %v5134
  %v5310 = vpop.f32.mrb[0].mxu0
  %v5311 = vadd.f32 0.0, %v5310
  %v5312 = vpop.f32.mrb[0].mxu0
  %v5313 = vadd.f32 0.0, %v5312
  %v5314 = vpop.f32.mrb[0].mxu0
  %v5315 = vadd.f32 0.0, %v5314
  %v5316 = vpop.f32.mrb[0].mxu0
  %v5317 = vadd.f32 0.0, %v5316
  %5318 = vmatprep.mubr.bf16.mxu0 0
  %5319 = vmatmul.mubr.bf16.gmra.mrb[0].mxu0 %v5135
  %v5320 = vpop.f32.mrb[0].mxu0
  %v5321 = vadd.f32 0.0, %v5320
  %v5322 = vpop.f32.mrb[0].mxu0
  %v5323 = vadd.f32 0.0, %v5322
  %v5324 = vpop.f32.mrb[0].mxu0
  %v5325 = vadd.f32 0.0, %v5324
  %v5326 = vpop.f32.mrb[0].mxu0
  %v5327 = vadd.f32 0.0, %v5326
  %5328 = vmatprep.mubr.bf16.mxu0 0
  %5329 = vmatmul.mubr.bf16.gmra.mrb[0].mxu0 %v5136
  %v5330 = vpop.f32.mrb[0].mxu0
  %v5331 = vadd.f32 0.0, %v5330
  %v5332 = vpop.f32.mrb[0].mxu0
  %v5333 = vadd.f32 0.0, %v5332
  %v5334 = vpop.f32.mrb[0].mxu0
  %v5335 = vadd.f32 0.0, %v5334
  %v5336 = vpop.f32.mrb[0].mxu0
  %v5337 = vadd.f32 0.0, %v5336
  %5338 = vmatprep.mubr.bf16.mxu0 0
  %5339 = vmatmul.mubr.bf16.gmra.mrb[0].mxu0 %v5137
  %v5340 = vpop.f32.mrb[0].mxu0
  %v5341 = vadd.f32 0.0, %v5340
  %v5342 = vpop.f32.mrb[0].mxu0
  %v5343 = vadd.f32 0.0, %v5342
  %v5344 = vpop.f32.mrb[0].mxu0
  %v5345 = vadd.f32 0.0, %v5344
  %v5346 = vpop.f32.mrb[0].mxu0
  %v5347 = vadd.f32 0.0, %v5346
  %5348 = vmatprep.mubr.bf16.mxu0 0
  %5349 = vmatmul.mubr.bf16.gmra.mrb[0].mxu0 %v5138
  %v5350 = vpop.f32.mrb[0].mxu0
  %v5351 = vadd.f32 0.0, %v5350
  %v5352 = vpop.f32.mrb[0].mxu0
  %v5353 = vadd.f32 0.0, %v5352
  %v5354 = vpop.f32.mrb[0].mxu0
  %v5355 = vadd.f32 0.0, %v5354
  %v5356 = vpop.f32.mrb[0].mxu0
  %v5357 = vadd.f32 0.0, %v5356
  %5358 = vmatprep.mubr.bf16.mxu0 0
  %5359 = vmatmul.mubr.bf16.gmra.mrb[0].mxu0 %v5139
  %v5360 = vpop.f32.mrb[0].mxu0
  %v5361 = vadd.f32 0.0, %v5360
  %v5362 = vpop.f32.mrb[0].mxu0
  %v5363 = vadd.f32 0.0, %v5362
  %v5364 = vpop.f32.mrb[0].mxu0
  %v5365 = vadd.f32 0.0, %v5364
  %v5366 = vpop.f32.mrb[0].mxu0
  %v5367 = vadd.f32 0.0, %v5366
  %5368 = vdwg.mxu0
  %v5369 = vadd.f32 %v5090, %v5271
  %v5370 = vadd.f32 %v5091, %v5273
  %v5371 = vadd.f32 %v5092, %v5275
  %v5372 = vadd.f32 %v5093, %v5277
  %v5373 = vadd.f32 %v5094, %v5281
  %v5374 = vadd.f32 %v5095, %v5283
  %v5375 = vadd.f32 %v5096, %v5285
  %v5376 = vadd.f32 %v5097, %v5287
  %v5377 = vadd.f32 %v5098, %v5291
  %v5378 = vadd.f32 %v5099, %v5293
  %v5379 = vadd.f32 %v5100, %v5295
  %v5380 = vadd.f32 %v5101, %v5297
  %v5381 = vadd.f32 %v5102, %v5301
  %v5382 = vadd.f32 %v5103, %v5303
  %v5383 = vadd.f32 %v5104, %v5305
  %v5384 = vadd.f32 %v5105, %v5307
  %v5385 = vadd.f32 %v5106, %v5311
  %v5386 = vadd.f32 %v5107, %v5313
  %v5387 = vadd.f32 %v5108, %v5315
  %v5388 = vadd.f32 %v5109, %v5317
  %v5389 = vadd.f32 %v5110, %v5321
  %v5390 = vadd.f32 %v5111, %v5323
  %v5391 = vadd.f32 %v5112, %v5325
  %v5392 = vadd.f32 %v5113, %v5327
  %v5393 = vadd.f32 %v5114, %v5331
  %v5394 = vadd.f32 %v5115, %v5333
  %v5395 = vadd.f32 %v5116, %v5335
  %v5396 = vadd.f32 %v5117, %v5337
  %v5397 = vadd.f32 %v5118, %v5341
  %v5398 = vadd.f32 %v5119, %v5343
  %v5399 = vadd.f32 %v5120, %v5345
  %v5400 = vadd.f32 %v5121, %v5347
  %v5401 = vadd.f32 %v5122, %v5351
  %v5402 = vadd.f32 %v5123, %v5353
  %v5403 = vadd.f32 %v5124, %v5355
  %v5404 = vadd.f32 %v5125, %v5357
  %v5405 = vadd.f32 %v5126, %v5361
  %v5406 = vadd.f32 %v5127, %v5363
  %v5407 = vadd.f32 %v5128, %v5365
  %v5408 = vadd.f32 %v5129, %v5367
  %v5409 = vld [vmem:[#allocation4 + $0x20] sm:$0xff]
  %v5410 = vld [vmem:[#allocation4 + $0x28] sm:$0xff]
  %v5411 = vld [vmem:[#allocation4 + $0x30] sm:$0xff]
  %v5412 = vld [vmem:[#allocation4 + $0x38] sm:$0xff]
  %v5413 = vld [vmem:[#allocation4 + $0x40] sm:$0xff]
  %v5414 = vld [vmem:[#allocation4 + $0x48] sm:$0xff]
  %v5415 = vld [vmem:[#allocation4 + $0x50] sm:$0xff]
  %v5416 = vld [vmem:[#allocation4 + $0x58] sm:$0xff]
  %v5417 = vld [vmem:[#allocation4 + $0x60] sm:$0xff]
  %v5418 = vld [vmem:[#allocation4 + $0x68] sm:$0xff]
  %v5419 = vld [vmem:[%s5 + $0x200] sm:$0xff]
  %v5420 = vld [vmem:[%s5 + $0x208] sm:$0xff]
  %v5421 = vld [vmem:[%s5 + $0x210] sm:$0xff]
  %v5422 = vld [vmem:[%s5 + $0x218] sm:$0xff]
  %v5423 = vld [vmem:[%s5 + $0x220] sm:$0xff]
  %v5424 = vld [vmem:[%s5 + $0x228] sm:$0xff]
  %v5425 = vld [vmem:[%s5 + $0x230] sm:$0xff]
  %v5426 = vld [vmem:[%s5 + $0x238] sm:$0xff]
  %v5427 = vld [vmem:[%s5 + $0x240] sm:$0xff]
  %v5428 = vld [vmem:[%s5 + $0x248] sm:$0xff]
  %v5429 = vld [vmem:[%s5 + $0x250] sm:$0xff]
  %v5430 = vld [vmem:[%s5 + $0x258] sm:$0xff]
  %v5431 = vld [vmem:[%s5 + $0x260] sm:$0xff]
  %v5432 = vld [vmem:[%s5 + $0x268] sm:$0xff]
  %v5433 = vld [vmem:[%s5 + $0x270] sm:$0xff]
  %v5434 = vld [vmem:[%s5 + $0x278] sm:$0xff]
  %v5451 = vunpack.c.l.b16 %v5419
  %v5452 = vunpack.c.h.b16 %v5419
  %v5453 = vunpack.c.l.b16 %v5420
  %v5454 = vunpack.c.h.b16 %v5420
  %v5455 = vunpack.c.l.b16 %v5421
  %v5456 = vunpack.c.h.b16 %v5421
  %v5457 = vunpack.c.l.b16 %v5422
  %v5458 = vunpack.c.h.b16 %v5422
  %v5459 = vunpack.c.l.b16 %v5423
  %v5460 = vunpack.c.h.b16 %v5423
  %v5461 = vunpack.c.l.b16 %v5424
  %v5462 = vunpack.c.h.b16 %v5424
  %v5463 = vunpack.c.l.b16 %v5425
  %v5464 = vunpack.c.h.b16 %v5425
  %v5465 = vunpack.c.l.b16 %v5426
  %v5466 = vunpack.c.h.b16 %v5426
  %v5467 = vunpack.c.l.b16 %v5427
  %v5468 = vunpack.c.h.b16 %v5427
  %v5469 = vunpack.c.l.b16 %v5428
  %v5470 = vunpack.c.h.b16 %v5428
  %v5471 = vunpack.c.l.b16 %v5429
  %v5472 = vunpack.c.h.b16 %v5429
  %v5473 = vunpack.c.l.b16 %v5430
  %v5474 = vunpack.c.h.b16 %v5430
  %v5475 = vunpack.c.l.b16 %v5431
  %v5476 = vunpack.c.h.b16 %v5431
  %v5477 = vunpack.c.l.b16 %v5432
  %v5478 = vunpack.c.h.b16 %v5432
  %v5479 = vunpack.c.l.b16 %v5433
  %v5480 = vunpack.c.h.b16 %v5433
  %v5481 = vunpack.c.l.b16 %v5434
  %v5482 = vunpack.c.h.b16 %v5434
  %v5483 = vpack.c.b16 %v5453, %v5451
  %v5484 = vpack.c.b16 %v5454, %v5452
  %v5485 = vpack.c.b16 %v5457, %v5455
  %v5486 = vpack.c.b16 %v5458, %v5456
  %v5487 = vpack.c.b16 %v5461, %v5459
  %v5488 = vpack.c.b16 %v5462, %v5460
  %v5489 = vpack.c.b16 %v5465, %v5463
  %v5490 = vpack.c.b16 %v5466, %v5464
  %v5491 = vpack.c.b16 %v5469, %v5467
  %v5492 = vpack.c.b16 %v5470, %v5468
  %v5493 = vpack.c.b16 %v5473, %v5471
  %v5494 = vpack.c.b16 %v5474, %v5472
  %v5495 = vpack.c.b16 %v5477, %v5475
  %v5496 = vpack.c.b16 %v5478, %v5476
  %v5497 = vpack.c.b16 %v5481, %v5479
  %v5498 = vpack.c.b16 %v5482, %v5480
  %5515 = vmatprep.subr.bf16.mxu0 %v5484
  %5516 = vmatpush1.bf16.msra.mxu0 %v5483
  %5517 = vmatprep.subr.bf16.mxu0 %v5486
  %5518 = vmatpush1.bf16.msra.mxu0 %v5485
  %5519 = vmatprep.subr.bf16.mxu0 %v5488
  %5520 = vmatpush1.bf16.msra.mxu0 %v5487
  %5521 = vmatprep.subr.bf16.mxu0 %v5490
  %5522 = vmatpush1.bf16.msra.mxu0 %v5489
  %5523 = vmatprep.subr.bf16.mxu0 %v5492
  %5524 = vmatpush1.bf16.msra.mxu0 %v5491
  %5525 = vmatprep.subr.bf16.mxu0 %v5494
  %5526 = vmatpush1.bf16.msra.mxu0 %v5493
  %5527 = vmatprep.subr.bf16.mxu0 %v5496
  %5528 = vmatpush1.bf16.msra.mxu0 %v5495
  %5529 = vmatprep.subr.bf16.mxu0 %v5498
  %5530 = vmatpush1.bf16.msra.mxu0 %v5497
  %5531 = vmatprep.subr.bf16.mxu0 0
  %5532 = vmatpush1.bf16.msra.mxu0 0
  %5533 = vmatprep.subr.bf16.mxu0 0
  %5534 = vmatpush1.bf16.msra.mxu0 0
  %5535 = vmatprep.subr.bf16.mxu0 0
  %5536 = vmatpush1.bf16.msra.mxu0 0
  %5537 = vmatprep.subr.bf16.mxu0 0
  %5538 = vmatpush1.bf16.msra.mxu0 0
  %5539 = vmatprep.subr.bf16.mxu0 0
  %5540 = vmatpush1.bf16.msra.mxu0 0
  %5541 = vmatprep.subr.bf16.mxu0 0
  %5542 = vmatpush1.bf16.msra.mxu0 0
  %5543 = vmatprep.subr.bf16.mxu0 0
  %5544 = vmatpush1.bf16.msra.mxu0 0
  %5545 = vmatprep.subr.bf16.mxu0 0
  %5546 = vmatpush1.bf16.msra.mxu0 0
  %5547 = vmatprep.mubr.bf16.mxu0 0
  %5548 = vmatmul.mubr.bf16.gmra.mrb[0].mxu0 %v5409
  %v5549 = vpop.f32.mrb[0].mxu0
  %v5550 = vadd.f32 0.0, %v5549
  %v5551 = vpop.f32.mrb[0].mxu0
  %v5552 = vadd.f32 0.0, %v5551
  %v5553 = vpop.f32.mrb[0].mxu0
  %v5554 = vadd.f32 0.0, %v5553
  %v5555 = vpop.f32.mrb[0].mxu0
  %v5556 = vadd.f32 0.0, %v5555
  %5557 = vmatprep.mubr.bf16.mxu0 0
  %5558 = vmatmul.mubr.bf16.gmra.mrb[0].mxu0 %v5410
  %v5559 = vpop.f32.mrb[0].mxu0
  %v5560 = vadd.f32 0.0, %v5559
  %v5561 = vpop.f32.mrb[0].mxu0
  %v5562 = vadd.f32 0.0, %v5561
  %v5563 = vpop.f32.mrb[0].mxu0
  %v5564 = vadd.f32 0.0, %v5563
  %v5565 = vpop.f32.mrb[0].mxu0
  %v5566 = vadd.f32 0.0, %v5565
  %5567 = vmatprep.mubr.bf16.mxu0 0
  %5568 = vmatmul.mubr.bf16.gmra.mrb[0].mxu0 %v5411
  %v5569 = vpop.f32.mrb[0].mxu0
  %v5570 = vadd.f32 0.0, %v5569
  %v5571 = vpop.f32.mrb[0].mxu0
  %v5572 = vadd.f32 0.0, %v5571
  %v5573 = vpop.f32.mrb[0].mxu0
  %v5574 = vadd.f32 0.0, %v5573
  %v5575 = vpop.f32.mrb[0].mxu0
  %v5576 = vadd.f32 0.0, %v5575
  %5577 = vmatprep.mubr.bf16.mxu0 0
  %5578 = vmatmul.mubr.bf16.gmra.mrb[0].mxu0 %v5412
  %v5579 = vpop.f32.mrb[0].mxu0
  %v5580 = vadd.f32 0.0, %v5579
  %v5581 = vpop.f32.mrb[0].mxu0
  %v5582 = vadd.f32 0.0, %v5581
  %v5583 = vpop.f32.mrb[0].mxu0
  %v5584 = vadd.f32 0.0, %v5583
  %v5585 = vpop.f32.mrb[0].mxu0
  %v5586 = vadd.f32 0.0, %v5585
  %5587 = vmatprep.mubr.bf16.mxu0 0
  %5588 = vmatmul.mubr.bf16.gmra.mrb[0].mxu0 %v5413
  %v5589 = vpop.f32.mrb[0].mxu0
  %v5590 = vadd.f32 0.0, %v5589
  %v5591 = vpop.f32.mrb[0].mxu0
  %v5592 = vadd.f32 0.0, %v5591
  %v5593 = vpop.f32.mrb[0].mxu0
  %v5594 = vadd.f32 0.0, %v5593
  %v5595 = vpop.f32.mrb[0].mxu0
  %v5596 = vadd.f32 0.0, %v5595
  %5597 = vmatprep.mubr.bf16.mxu0 0
  %5598 = vmatmul.mubr.bf16.gmra.mrb[0].mxu0 %v5414
  %v5599 = vpop.f32.mrb[0].mxu0
  %v5600 = vadd.f32 0.0, %v5599
  %v5601 = vpop.f32.mrb[0].mxu0
  %v5602 = vadd.f32 0.0, %v5601
  %v5603 = vpop.f32.mrb[0].mxu0
  %v5604 = vadd.f32 0.0, %v5603
  %v5605 = vpop.f32.mrb[0].mxu0
  %v5606 = vadd.f32 0.0, %v5605
  %5607 = vmatprep.mubr.bf16.mxu0 0
  %5608 = vmatmul.mubr.bf16.gmra.mrb[0].mxu0 %v5415
  %v5609 = vpop.f32.mrb[0].mxu0
  %v5610 = vadd.f32 0.0, %v5609
  %v5611 = vpop.f32.mrb[0].mxu0
  %v5612 = vadd.f32 0.0, %v5611
  %v5613 = vpop.f32.mrb[0].mxu0
  %v5614 = vadd.f32 0.0, %v5613
  %v5615 = vpop.f32.mrb[0].mxu0
  %v5616 = vadd.f32 0.0, %v5615
  %5617 = vmatprep.mubr.bf16.mxu0 0
  %5618 = vmatmul.mubr.bf16.gmra.mrb[0].mxu0 %v5416
  %v5619 = vpop.f32.mrb[0].mxu0
  %v5620 = vadd.f32 0.0, %v5619
  %v5621 = vpop.f32.mrb[0].mxu0
  %v5622 = vadd.f32 0.0, %v5621
  %v5623 = vpop.f32.mrb[0].mxu0
  %v5624 = vadd.f32 0.0, %v5623
  %v5625 = vpop.f32.mrb[0].mxu0
  %v5626 = vadd.f32 0.0, %v5625
  %5627 = vmatprep.mubr.bf16.mxu0 0
  %5628 = vmatmul.mubr.bf16.gmra.mrb[0].mxu0 %v5417
  %v5629 = vpop.f32.mrb[0].mxu0
  %v5630 = vadd.f32 0.0, %v5629
  %v5631 = vpop.f32.mrb[0].mxu0
  %v5632 = vadd.f32 0.0, %v5631
  %v5633 = vpop.f32.mrb[0].mxu0
  %v5634 = vadd.f32 0.0, %v5633
  %v5635 = vpop.f32.mrb[0].mxu0
  %v5636 = vadd.f32 0.0, %v5635
  %5637 = vmatprep.mubr.bf16.mxu0 0
  %5638 = vmatmul.mubr.bf16.gmra.mrb[0].mxu0 %v5418
  %v5639 = vpop.f32.mrb[0].mxu0
  %v5640 = vadd.f32 0.0, %v5639
  %v5641 = vpop.f32.mrb[0].mxu0
  %v5642 = vadd.f32 0.0, %v5641
  %v5643 = vpop.f32.mrb[0].mxu0
  %v5644 = vadd.f32 0.0, %v5643
  %v5645 = vpop.f32.mrb[0].mxu0
  %v5646 = vadd.f32 0.0, %v5645
  %5647 = vdwg.mxu0
  %v5648 = vadd.f32 %v5369, %v5550
  %v5649 = vadd.f32 %v5370, %v5552
  %v5650 = vadd.f32 %v5371, %v5554
  %v5651 = vadd.f32 %v5372, %v5556
  %v5652 = vadd.f32 %v5373, %v5560
  %v5653 = vadd.f32 %v5374, %v5562
  %v5654 = vadd.f32 %v5375, %v5564
  %v5655 = vadd.f32 %v5376, %v5566
  %v5656 = vadd.f32 %v5377, %v5570
  %v5657 = vadd.f32 %v5378, %v5572
  %v5658 = vadd.f32 %v5379, %v5574
  %v5659 = vadd.f32 %v5380, %v5576
  %v5660 = vadd.f32 %v5381, %v5580
  %v5661 = vadd.f32 %v5382, %v5582
  %v5662 = vadd.f32 %v5383, %v5584
  %v5663 = vadd.f32 %v5384, %v5586
  %v5664 = vadd.f32 %v5385, %v5590
  %v5665 = vadd.f32 %v5386, %v5592
  %v5666 = vadd.f32 %v5387, %v5594
  %v5667 = vadd.f32 %v5388, %v5596
  %v5668 = vadd.f32 %v5389, %v5600
  %v5669 = vadd.f32 %v5390, %v5602
  %v5670 = vadd.f32 %v5391, %v5604
  %v5671 = vadd.f32 %v5392, %v5606
  %v5672 = vadd.f32 %v5393, %v5610
  %v5673 = vadd.f32 %v5394, %v5612
  %v5674 = vadd.f32 %v5395, %v5614
  %v5675 = vadd.f32 %v5396, %v5616
  %v5676 = vadd.f32 %v5397, %v5620
  %v5677 = vadd.f32 %v5398, %v5622
  %v5678 = vadd.f32 %v5399, %v5624
  %v5679 = vadd.f32 %v5400, %v5626
  %v5680 = vadd.f32 %v5401, %v5630
  %v5681 = vadd.f32 %v5402, %v5632
  %v5682 = vadd.f32 %v5403, %v5634
  %v5683 = vadd.f32 %v5404, %v5636
  %v5684 = vadd.f32 %v5405, %v5640
  %v5685 = vadd.f32 %v5406, %v5642
  %v5686 = vadd.f32 %v5407, %v5644
  %v5687 = vadd.f32 %v5408, %v5646
  %v5688 = vld [vmem:[%s6] sm:$0x3]
  %v5690 = vlaneseq
  %v5691 = vshrl.u32 %v5690, 7
  %v5692 = vsub.s32 0, %v5691
  %v5693 = vrot.slane %v5688, %v5692
  %v5694 = vlaneseq
  %v5695 = vshrl.u32 %v5694, 7
  %v5696 = vsub.s32 1, %v5695
  %v5697 = vrot.slane %v5688, %v5696
  %v5700 = vadd.f32 %v5648, %v5693
  %v5701 = vadd.f32 %v5649, %v5697
  %v5702 = vadd.f32 %v5650, %v5693
  %v5703 = vadd.f32 %v5651, %v5697
  %v5704 = vadd.f32 %v5652, %v5693
  %v5705 = vadd.f32 %v5653, %v5697
  %v5706 = vadd.f32 %v5654, %v5693
  %v5707 = vadd.f32 %v5655, %v5697
  %v5708 = vadd.f32 %v5656, %v5693
  %v5709 = vadd.f32 %v5657, %v5697
  %v5710 = vadd.f32 %v5658, %v5693
  %v5711 = vadd.f32 %v5659, %v5697
  %v5712 = vadd.f32 %v5660, %v5693
  %v5713 = vadd.f32 %v5661, %v5697
  %v5714 = vadd.f32 %v5662, %v5693
  %v5715 = vadd.f32 %v5663, %v5697
  %v5716 = vadd.f32 %v5664, %v5693
  %v5717 = vadd.f32 %v5665, %v5697
  %v5718 = vadd.f32 %v5666, %v5693
  %v5719 = vadd.f32 %v5667, %v5697
  %v5720 = vadd.f32 %v5668, %v5693
  %v5721 = vadd.f32 %v5669, %v5697
  %v5722 = vadd.f32 %v5670, %v5693
  %v5723 = vadd.f32 %v5671, %v5697
  %v5724 = vadd.f32 %v5672, %v5693
  %v5725 = vadd.f32 %v5673, %v5697
  %v5726 = vadd.f32 %v5674, %v5693
  %v5727 = vadd.f32 %v5675, %v5697
  %v5728 = vadd.f32 %v5676, %v5693
  %v5729 = vadd.f32 %v5677, %v5697
  %v5730 = vadd.f32 %v5678, %v5693
  %v5731 = vadd.f32 %v5679, %v5697
  %v5732 = vadd.f32 %v5680, %v5693
  %v5733 = vadd.f32 %v5681, %v5697
  %v5734 = vadd.f32 %v5682, %v5693
  %v5735 = vadd.f32 %v5683, %v5697
  %v5736 = vadd.f32 %v5684, %v5693
  %v5737 = vadd.f32 %v5685, %v5697
  %v5738 = vadd.f32 %v5686, %v5693
  %v5739 = vadd.f32 %v5687, %v5697
  %v5740 = vmax.f32 %v5700, 0.0
  %v5741 = vmax.f32 %v5701, 0.0
  %v5742 = vmax.f32 %v5702, 0.0
  %v5743 = vmax.f32 %v5703, 0.0
  %v5744 = vmax.f32 %v5704, 0.0
  %v5745 = vmax.f32 %v5705, 0.0
  %v5746 = vmax.f32 %v5706, 0.0
  %v5747 = vmax.f32 %v5707, 0.0
  %v5748 = vmax.f32 %v5708, 0.0
  %v5749 = vmax.f32 %v5709, 0.0
  %v5750 = vmax.f32 %v5710, 0.0
  %v5751 = vmax.f32 %v5711, 0.0
  %v5752 = vmax.f32 %v5712, 0.0
  %v5753 = vmax.f32 %v5713, 0.0
  %v5754 = vmax.f32 %v5714, 0.0
  %v5755 = vmax.f32 %v5715, 0.0
  %v5756 = vmax.f32 %v5716, 0.0
  %v5757 = vmax.f32 %v5717, 0.0
  %v5758 = vmax.f32 %v5718, 0.0
  %v5759 = vmax.f32 %v5719, 0.0
  %v5760 = vmax.f32 %v5720, 0.0
  %v5761 = vmax.f32 %v5721, 0.0
  %v5762 = vmax.f32 %v5722, 0.0
  %v5763 = vmax.f32 %v5723, 0.0
  %v5764 = vmax.f32 %v5724, 0.0
  %v5765 = vmax.f32 %v5725, 0.0
  %v5766 = vmax.f32 %v5726, 0.0
  %v5767 = vmax.f32 %v5727, 0.0
  %v5768 = vmax.f32 %v5728, 0.0
  %v5769 = vmax.f32 %v5729, 0.0
  %v5770 = vmax.f32 %v5730, 0.0
  %v5771 = vmax.f32 %v5731, 0.0
  %v5772 = vmax.f32 %v5732, 0.0
  %v5773 = vmax.f32 %v5733, 0.0
  %v5774 = vmax.f32 %v5734, 0.0
  %v5775 = vmax.f32 %v5735, 0.0
  %v5776 = vmax.f32 %v5736, 0.0
  %v5777 = vmax.f32 %v5737, 0.0
  %v5778 = vmax.f32 %v5738, 0.0
  %v5779 = vmax.f32 %v5739, 0.0
  %v5780 = vpack.c.bf16 %v5742, %v5740
  %v5781 = vpack.c.bf16 %v5743, %v5741
  %v5782 = vpack.c.bf16 %v5746, %v5744
  %v5783 = vpack.c.bf16 %v5747, %v5745
  %v5784 = vpack.c.bf16 %v5750, %v5748
  %v5785 = vpack.c.bf16 %v5751, %v5749
  %v5786 = vpack.c.bf16 %v5754, %v5752
  %v5787 = vpack.c.bf16 %v5755, %v5753
  %v5788 = vpack.c.bf16 %v5758, %v5756
  %v5789 = vpack.c.bf16 %v5759, %v5757
  %v5790 = vpack.c.bf16 %v5762, %v5760
  %v5791 = vpack.c.bf16 %v5763, %v5761
  %v5792 = vpack.c.bf16 %v5766, %v5764
  %v5793 = vpack.c.bf16 %v5767, %v5765
  %v5794 = vpack.c.bf16 %v5770, %v5768
  %v5795 = vpack.c.bf16 %v5771, %v5769
  %v5796 = vpack.c.bf16 %v5774, %v5772
  %v5797 = vpack.c.bf16 %v5775, %v5773
  %v5798 = vpack.c.bf16 %v5778, %v5776
  %v5799 = vpack.c.bf16 %v5779, %v5777
  %5800 = vst [vmem:[#allocation5] sm:$0xff] %v5780
  %vm5801 = vcmask 261120
  %5802 = vst.msk [vmem:[#allocation5 + $0x8] sm:$0xff] %vm5801, %v5781
  %5803 = vst [vmem:[#allocation5 + $0x10] sm:$0xff] %v5782
  %5804 = vst.msk [vmem:[#allocation5 + $0x18] sm:$0xff] %vm5801, %v5783
  %5805 = vst [vmem:[#allocation5 + $0x20] sm:$0xff] %v5784
  %5806 = vst.msk [vmem:[#allocation5 + $0x28] sm:$0xff] %vm5801, %v5785
  %5807 = vst [vmem:[#allocation5 + $0x30] sm:$0xff] %v5786
  %5808 = vst.msk [vmem:[#allocation5 + $0x38] sm:$0xff] %vm5801, %v5787
  %5809 = vst [vmem:[#allocation5 + $0x40] sm:$0xff] %v5788
  %5810 = vst.msk [vmem:[#allocation5 + $0x48] sm:$0xff] %vm5801, %v5789
  %5811 = vst [vmem:[#allocation5 + $0x50] sm:$0xff] %v5790
  %5812 = vst.msk [vmem:[#allocation5 + $0x58] sm:$0xff] %vm5801, %v5791
  %5813 = vst [vmem:[#allocation5 + $0x60] sm:$0xff] %v5792
  %5814 = vst.msk [vmem:[#allocation5 + $0x68] sm:$0xff] %vm5801, %v5793
  %5815 = vst [vmem:[#allocation5 + $0x70] sm:$0xff] %v5794
  %5816 = vst.msk [vmem:[#allocation5 + $0x78] sm:$0xff] %vm5801, %v5795
  %5817 = vst [vmem:[#allocation5 + $0x80] sm:$0xff] %v5796
  %5818 = vst.msk [vmem:[#allocation5 + $0x88] sm:$0xff] %vm5801, %v5797
  %5819 = vst [vmem:[#allocation5 + $0x90] sm:$0xff] %v5798
  %5820 = vst.msk [vmem:[#allocation5 + $0x98] sm:$0xff] %vm5801, %v5799
  %v5821 = vld [vmem:[#allocation5] sm:$0xff]
  %v5822 = vld [vmem:[#allocation5 + $0x8] sm:$0xff]
  %v5823 = vld [vmem:[#allocation5 + $0x10] sm:$0xff]
  %v5824 = vld [vmem:[#allocation5 + $0x18] sm:$0xff]
  %v5825 = vmax.bf16 %v5821, %v5823
  %v5826 = vmax.bf16 %v5822, %v5824
  %5827 = vst [vmem:[#allocation6] sm:$0xff] %v5825
  %5828 = vst.msk [vmem:[#allocation6 + $0x8] sm:$0xff] %vm5801, %v5826
  %v5829 = vld [vmem:[#allocation5 + $0x20] sm:$0xff]
  %v5830 = vld [vmem:[#allocation5 + $0x28] sm:$0xff]
  %v5831 = vld [vmem:[#allocation5 + $0x30] sm:$0xff]
  %v5832 = vld [vmem:[#allocation5 + $0x38] sm:$0xff]
  %v5833 = vmax.bf16 %v5829, %v5831
  %v5834 = vmax.bf16 %v5830, %v5832
  %5835 = vst [vmem:[#allocation6 + $0x10] sm:$0xff] %v5833
  %5836 = vst.msk [vmem:[#allocation6 + $0x18] sm:$0xff] %vm5801, %v5834
  %v5837 = vld [vmem:[#allocation5 + $0x40] sm:$0xff]
  %v5838 = vld [vmem:[#allocation5 + $0x48] sm:$0xff]
  %v5839 = vld [vmem:[#allocation5 + $0x50] sm:$0xff]
  %v5840 = vld [vmem:[#allocation5 + $0x58] sm:$0xff]
  %v5841 = vmax.bf16 %v5837, %v5839
  %v5842 = vmax.bf16 %v5838, %v5840
  %5843 = vst [vmem:[#allocation6 + $0x20] sm:$0xff] %v5841
  %5844 = vst.msk [vmem:[#allocation6 + $0x28] sm:$0xff] %vm5801, %v5842
  %v5845 = vld [vmem:[#allocation5 + $0x60] sm:$0xff]
  %v5846 = vld [vmem:[#allocation5 + $0x68] sm:$0xff]
  %v5847 = vld [vmem:[#allocation5 + $0x70] sm:$0xff]
  %v5848 = vld [vmem:[#allocation5 + $0x78] sm:$0xff]
  %v5849 = vmax.bf16 %v5845, %v5847
  %v5850 = vmax.bf16 %v5846, %v5848
  %5851 = vst [vmem:[#allocation6 + $0x30] sm:$0xff] %v5849
  %5852 = vst.msk [vmem:[#allocation6 + $0x38] sm:$0xff] %vm5801, %v5850
  %v5853 = vld [vmem:[#allocation5 + $0x80] sm:$0xff]
  %v5854 = vld [vmem:[#allocation5 + $0x88] sm:$0xff]
  %v5855 = vld [vmem:[#allocation5 + $0x90] sm:$0xff]
  %v5856 = vld [vmem:[#allocation5 + $0x98] sm:$0xff]
  %v5857 = vmax.bf16 %v5853, %v5855
  %v5858 = vmax.bf16 %v5854, %v5856
  %5859 = vst [vmem:[#allocation6 + $0x40] sm:$0xff] %v5857
  %5860 = vst.msk [vmem:[#allocation6 + $0x48] sm:$0xff] %vm5801, %v5858
  %v5861 = vld [vmem:[#allocation6] sm:$0xff]
  %v5862 = vld [vmem:[#allocation6 + $0x8] sm:$0xff]
  %v5863 = vld [vmem:[#allocation6 + $0x10] sm:$0xff]
  %v5864 = vld [vmem:[#allocation6 + $0x18] sm:$0xff]
  %v5865 = vld [vmem:[#allocation6 + $0x20] sm:$0xff]
  %v5866 = vld [vmem:[#allocation6 + $0x28] sm:$0xff]
  %v5867 = vld [vmem:[#allocation6 + $0x30] sm:$0xff]
  %v5868 = vld [vmem:[#allocation6 + $0x38] sm:$0xff]
  %v5869 = vld [vmem:[#allocation6 + $0x40] sm:$0xff]
  %v5870 = vld [vmem:[#allocation6 + $0x48] sm:$0xff]
  %v5871 = vld [vmem:[%s7] sm:$0xf]
  %v5872 = vld [vmem:[%s7 + $0x4] sm:$0xf]
  %v5873 = vld [vmem:[%s7 + $0x8] sm:$0xf]
  %v5874 = vld [vmem:[%s7 + $0xc] sm:$0xf]
  %v5875 = vld [vmem:[%s7 + $0x10] sm:$0xf]
  %v5876 = vld [vmem:[%s7 + $0x14] sm:$0xf]
  %v5877 = vld [vmem:[%s7 + $0x18] sm:$0xf]
  %v5878 = vld [vmem:[%s7 + $0x1c] sm:$0xf]
  %v5879 = vld [vmem:[%s7 + $0x20] sm:$0xf]
  %v5880 = vld [vmem:[%s7 + $0x24] sm:$0xf]
  %v5881 = vld [vmem:[%s7 + $0x28] sm:$0xf]
  %v5882 = vld [vmem:[%s7 + $0x2c] sm:$0xf]
  %v5883 = vld [vmem:[%s7 + $0x30] sm:$0xf]
  %v5884 = vld [vmem:[%s7 + $0x34] sm:$0xf]
  %v5885 = vld [vmem:[%s7 + $0x38] sm:$0xf]
  %v5886 = vld [vmem:[%s7 + $0x3c] sm:$0xf]
  %v5887 = vld [vmem:[%s7 + $0x40] sm:$0xf]
  %v5888 = vld [vmem:[%s7 + $0x44] sm:$0xf]
  %v5889 = vld [vmem:[%s7 + $0x48] sm:$0xf]
  %v5890 = vld [vmem:[%s7 + $0x4c] sm:$0xf]
  %v5911 = vunpack.c.l.b16 %v5871
  %v5912 = vunpack.c.l.b16 %v5872
  %v5913 = vunpack.c.l.b16 %v5873
  %v5914 = vunpack.c.l.b16 %v5874
  %v5915 = vunpack.c.l.b16 %v5875
  %v5916 = vunpack.c.l.b16 %v5876
  %v5917 = vunpack.c.l.b16 %v5877
  %v5918 = vunpack.c.l.b16 %v5878
  %v5919 = vunpack.c.l.b16 %v5879
  %v5920 = vunpack.c.l.b16 %v5880
  %v5921 = vunpack.c.l.b16 %v5881
  %v5922 = vunpack.c.l.b16 %v5882
  %v5923 = vunpack.c.l.b16 %v5883
  %v5924 = vunpack.c.l.b16 %v5884
  %v5925 = vunpack.c.l.b16 %v5885
  %v5926 = vunpack.c.l.b16 %v5886
  %v5927 = vunpack.c.l.b16 %v5887
  %v5928 = vunpack.c.l.b16 %v5888
  %v5929 = vunpack.c.l.b16 %v5889
  %v5930 = vunpack.c.l.b16 %v5890
  %v5931 = vpack.c.b16 %v5912, %v5911
  %v5932 = vpack.c.b16 %v5914, %v5913
  %v5933 = vpack.c.b16 %v5916, %v5915
  %v5934 = vpack.c.b16 %v5918, %v5917
  %v5935 = vpack.c.b16 %v5920, %v5919
  %v5936 = vpack.c.b16 %v5922, %v5921
  %v5937 = vpack.c.b16 %v5924, %v5923
  %v5938 = vpack.c.b16 %v5926, %v5925
  %v5939 = vpack.c.b16 %v5928, %v5927
  %v5940 = vpack.c.b16 %v5930, %v5929
  %v5952 = vsel %vm5801, %v5862, 0
  %v5955 = vsel %vm5801, %v5864, 0
  %v5958 = vsel %vm5801, %v5866, 0
  %v5961 = vsel %vm5801, %v5868, 0
  %v5964 = vsel %vm5801, %v5870, 0
  %5966 = vmatprep.subr.bf16.mxu0 0
  %5967 = vmatpush1.bf16.msra.mxu0 %v5931
  %5968 = vmatprep.subr.bf16.mxu0 0
  %5969 = vmatpush1.bf16.msra.mxu0 %v5932
  %5970 = vmatprep.subr.bf16.mxu0 0
  %5971 = vmatpush1.bf16.msra.mxu0 %v5933
  %5972 = vmatprep.subr.bf16.mxu0 0
  %5973 = vmatpush1.bf16.msra.mxu0 %v5934
  %5974 = vmatprep.subr.bf16.mxu0 0
  %5975 = vmatpush1.bf16.msra.mxu0 %v5935
  %5976 = vmatprep.subr.bf16.mxu0 0
  %5977 = vmatpush1.bf16.msra.mxu0 %v5936
  %5978 = vmatprep.subr.bf16.mxu0 0
  %5979 = vmatpush1.bf16.msra.mxu0 %v5937
  %5980 = vmatprep.subr.bf16.mxu0 0
  %5981 = vmatpush1.bf16.msra.mxu0 %v5938
  %5982 = vmatprep.subr.bf16.mxu0 0
  %5983 = vmatpush1.bf16.msra.mxu0 %v5939
  %5984 = vmatprep.subr.bf16.mxu0 0
  %5985 = vmatpush1.bf16.msra.mxu0 %v5940
  %5986 = vmatprep.subr.bf16.mxu0 0
  %5987 = vmatpush1.bf16.msra.mxu0 0
  %5988 = vmatprep.subr.bf16.mxu0 0
  %5989 = vmatpush1.bf16.msra.mxu0 0
  %5990 = vmatprep.subr.bf16.mxu0 0
  %5991 = vmatpush1.bf16.msra.mxu0 0
  %5992 = vmatprep.subr.bf16.mxu0 0
  %5993 = vmatpush1.bf16.msra.mxu0 0
  %5994 = vmatprep.subr.bf16.mxu0 0
  %5995 = vmatpush1.bf16.msra.mxu0 0
  %5996 = vmatprep.subr.bf16.mxu0 0
  %5997 = vmatpush1.bf16.msra.mxu0 0
  %5998 = vmatprep.mubr.bf16.mxu0 %v5952
  %5999 = vmatmul.mubr.bf16.gmra.mrb[0].mxu0 %v5861
  %v6000 = vpop.f32.mrb[0].mxu0
  %v6001 = vadd.f32 0.0, %v6000
  %v6002 = vpop.f32.mrb[0].mxu0
  %v6003 = vpop.f32.mrb[0].mxu0
  %v6004 = vadd.f32 0.0, %v6003
  %v6005 = vpop.f32.mrb[0].mxu0
  %6006 = vmatprep.mubr.bf16.mxu0 %v5955
  %6007 = vmatmul.mubr.bf16.gmra.mrb[0].mxu0 %v5863
  %v6008 = vpop.f32.mrb[0].mxu0
  %v6009 = vadd.f32 0.0, %v6008
  %v6010 = vpop.f32.mrb[0].mxu0
  %v6011 = vpop.f32.mrb[0].mxu0
  %v6012 = vadd.f32 0.0, %v6011
  %v6013 = vpop.f32.mrb[0].mxu0
  %6014 = vmatprep.mubr.bf16.mxu0 %v5958
  %6015 = vmatmul.mubr.bf16.gmra.mrb[0].mxu0 %v5865
  %v6016 = vpop.f32.mrb[0].mxu0
  %v6017 = vadd.f32 0.0, %v6016
  %v6018 = vpop.f32.mrb[0].mxu0
  %v6019 = vpop.f32.mrb[0].mxu0
  %v6020 = vadd.f32 0.0, %v6019
  %v6021 = vpop.f32.mrb[0].mxu0
  %6022 = vmatprep.mubr.bf16.mxu0 %v5961
  %6023 = vmatmul.mubr.bf16.gmra.mrb[0].mxu0 %v5867
  %v6024 = vpop.f32.mrb[0].mxu0
  %v6025 = vadd.f32 0.0, %v6024
  %v6026 = vpop.f32.mrb[0].mxu0
  %v6027 = vpop.f32.mrb[0].mxu0
  %v6028 = vadd.f32 0.0, %v6027
  %v6029 = vpop.f32.mrb[0].mxu0
  %6030 = vmatprep.mubr.bf16.mxu0 %v5964
  %6031 = vmatmul.mubr.bf16.gmra.mrb[0].mxu0 %v5869
  %v6032 = vpop.f32.mrb[0].mxu0
  %v6033 = vadd.f32 0.0, %v6032
  %v6034 = vpop.f32.mrb[0].mxu0
  %v6035 = vpop.f32.mrb[0].mxu0
  %v6036 = vadd.f32 0.0, %v6035
  %v6037 = vpop.f32.mrb[0].mxu0
  %6038 = vdwg.mxu0
  %v6039 = vld [vmem:[%s8] sm:$0xf]
  %v6040 = vld [vmem:[%s8 + $0x4] sm:$0xf]
  %v6041 = vld [vmem:[%s8 + $0x8] sm:$0xf]
  %v6042 = vld [vmem:[%s8 + $0xc] sm:$0xf]
  %v6043 = vld [vmem:[%s8 + $0x10] sm:$0xf]
  %v6044 = vld [vmem:[%s8 + $0x14] sm:$0xf]
  %v6045 = vld [vmem:[%s8 + $0x18] sm:$0xf]
  %v6046 = vld [vmem:[%s8 + $0x1c] sm:$0xf]
  %v6047 = vld [vmem:[%s8 + $0x20] sm:$0xf]
  %v6048 = vld [vmem:[%s8 + $0x24] sm:$0xf]
  %v6049 = vld [vmem:[%s8 + $0x28] sm:$0xf]
  %v6050 = vld [vmem:[%s8 + $0x2c] sm:$0xf]
  %v6051 = vld [vmem:[%s8 + $0x30] sm:$0xf]
  %v6052 = vld [vmem:[%s8 + $0x34] sm:$0xf]
  %v6053 = vld [vmem:[%s8 + $0x38] sm:$0xf]
  %v6054 = vld [vmem:[%s8 + $0x3c] sm:$0xf]
  %v6055 = vld [vmem:[%s8 + $0x40] sm:$0xf]
  %v6056 = vld [vmem:[%s8 + $0x44] sm:$0xf]
  %v6057 = vld [vmem:[%s8 + $0x48] sm:$0xf]
  %v6058 = vld [vmem:[%s8 + $0x4c] sm:$0xf]
  %v6079 = vunpack.c.l.b16 %v6039
  %v6080 = vunpack.c.l.b16 %v6040
  %v6081 = vunpack.c.l.b16 %v6041
  %v6082 = vunpack.c.l.b16 %v6042
  %v6083 = vunpack.c.l.b16 %v6043
  %v6084 = vunpack.c.l.b16 %v6044
  %v6085 = vunpack.c.l.b16 %v6045
  %v6086 = vunpack.c.l.b16 %v6046
  %v6087 = vunpack.c.l.b16 %v6047
  %v6088 = vunpack.c.l.b16 %v6048
  %v6089 = vunpack.c.l.b16 %v6049
  %v6090 = vunpack.c.l.b16 %v6050
  %v6091 = vunpack.c.l.b16 %v6051
  %v6092 = vunpack.c.l.b16 %v6052
  %v6093 = vunpack.c.l.b16 %v6053
  %v6094 = vunpack.c.l.b16 %v6054
  %v6095 = vunpack.c.l.b16 %v6055
  %v6096 = vunpack.c.l.b16 %v6056
  %v6097 = vunpack.c.l.b16 %v6057
  %v6098 = vunpack.c.l.b16 %v6058
  %v6099 = vpack.c.b16 %v6080, %v6079
  %v6100 = vpack.c.b16 %v6082, %v6081
  %v6101 = vpack.c.b16 %v6084, %v6083
  %v6102 = vpack.c.b16 %v6086, %v6085
  %v6103 = vpack.c.b16 %v6088, %v6087
  %v6104 = vpack.c.b16 %v6090, %v6089
  %v6105 = vpack.c.b16 %v6092, %v6091
  %v6106 = vpack.c.b16 %v6094, %v6093
  %v6107 = vpack.c.b16 %v6096, %v6095
  %v6108 = vpack.c.b16 %v6098, %v6097
  %6119 = vmatprep.subr.bf16.mxu0 0
  %6120 = vmatpush1.bf16.msra.mxu0 %v6099
  %6121 = vmatprep.subr.bf16.mxu0 0
  %6122 = vmatpush1.bf16.msra.mxu0 %v6100
  %6123 = vmatprep.subr.bf16.mxu0 0
  %6124 = vmatpush1.bf16.msra.mxu0 %v6101
  %6125 = vmatprep.subr.bf16.mxu0 0
  %6126 = vmatpush1.bf16.msra.mxu0 %v6102
  %6127 = vmatprep.subr.bf16.mxu0 0
  %6128 = vmatpush1.bf16.msra.mxu0 %v6103
  %6129 = vmatprep.subr.bf16.mxu0 0
  %6130 = vmatpush1.bf16.msra.mxu0 %v6104
  %6131 = vmatprep.subr.bf16.mxu0 0
  %6132 = vmatpush1.bf16.msra.mxu0 %v6105
  %6133 = vmatprep.subr.bf16.mxu0 0
  %6134 = vmatpush1.bf16.msra.mxu0 %v6106
  %6135 = vmatprep.subr.bf16.mxu0 0
  %6136 = vmatpush1.bf16.msra.mxu0 %v6107
  %6137 = vmatprep.subr.bf16.mxu0 0
  %6138 = vmatpush1.bf16.msra.mxu0 %v6108
  %6139 = vmatprep.subr.bf16.mxu0 0
  %6140 = vmatpush1.bf16.msra.mxu0 0
  %6141 = vmatprep.subr.bf16.mxu0 0
  %6142 = vmatpush1.bf16.msra.mxu0 0
  %6143 = vmatprep.subr.bf16.mxu0 0
  %6144 = vmatpush1.bf16.msra.mxu0 0
  %6145 = vmatprep.subr.bf16.mxu0 0
  %6146 = vmatpush1.bf16.msra.mxu0 0
  %6147 = vmatprep.subr.bf16.mxu0 0
  %6148 = vmatpush1.bf16.msra.mxu0 0
  %6149 = vmatprep.subr.bf16.mxu0 0
  %6150 = vmatpush1.bf16.msra.mxu0 0
  %6151 = vmatprep.mubr.bf16.mxu0 %v5952
  %6152 = vmatmul.mubr.bf16.gmra.mrb[0].mxu0 %v5861
  %v6153 = vpop.f32.mrb[0].mxu0
  %v6154 = vadd.f32 0.0, %v6153
  %v6155 = vpop.f32.mrb[0].mxu0
  %v6156 = vpop.f32.mrb[0].mxu0
  %v6157 = vadd.f32 0.0, %v6156
  %v6158 = vpop.f32.mrb[0].mxu0
  %6159 = vmatprep.mubr.bf16.mxu0 %v5955
  %6160 = vmatmul.mubr.bf16.gmra.mrb[0].mxu0 %v5863
  %v6161 = vpop.f32.mrb[0].mxu0
  %v6162 = vadd.f32 0.0, %v6161
  %v6163 = vpop.f32.mrb[0].mxu0
  %v6164 = vpop.f32.mrb[0].mxu0
  %v6165 = vadd.f32 0.0, %v6164
  %v6166 = vpop.f32.mrb[0].mxu0
  %6167 = vmatprep.mubr.bf16.mxu0 %v5958
  %6168 = vmatmul.mubr.bf16.gmra.mrb[0].mxu0 %v5865
  %v6169 = vpop.f32.mrb[0].mxu0
  %v6170 = vadd.f32 0.0, %v6169
  %v6171 = vpop.f32.mrb[0].mxu0
  %v6172 = vpop.f32.mrb[0].mxu0
  %v6173 = vadd.f32 0.0, %v6172
  %v6174 = vpop.f32.mrb[0].mxu0
  %6175 = vmatprep.mubr.bf16.mxu0 %v5961
  %6176 = vmatmul.mubr.bf16.gmra.mrb[0].mxu0 %v5867
  %v6177 = vpop.f32.mrb[0].mxu0
  %v6178 = vadd.f32 0.0, %v6177
  %v6179 = vpop.f32.mrb[0].mxu0
  %v6180 = vpop.f32.mrb[0].mxu0
  %v6181 = vadd.f32 0.0, %v6180
  %v6182 = vpop.f32.mrb[0].mxu0
  %6183 = vmatprep.mubr.bf16.mxu0 %v5964
  %6184 = vmatmul.mubr.bf16.gmra.mrb[0].mxu0 %v5869
  %v6185 = vpop.f32.mrb[0].mxu0
  %v6186 = vadd.f32 0.0, %v6185
  %v6187 = vpop.f32.mrb[0].mxu0
  %v6188 = vpop.f32.mrb[0].mxu0
  %v6189 = vadd.f32 0.0, %v6188
  %v6190 = vpop.f32.mrb[0].mxu0
  %6191 = vdwg.mxu0
  %v6192 = vmax.f32 %v6001, %v6154
  %v6193 = vmax.f32 %v6004, %v6157
  %v6194 = vmax.f32 %v6009, %v6162
  %v6195 = vmax.f32 %v6012, %v6165
  %v6196 = vmax.f32 %v6017, %v6170
  %v6197 = vmax.f32 %v6020, %v6173
  %v6198 = vmax.f32 %v6025, %v6178
  %v6199 = vmax.f32 %v6028, %v6181
  %v6200 = vmax.f32 %v6033, %v6186
  %v6201 = vmax.f32 %v6036, %v6189
  %v6202 = vpack.c.bf16 %v6193, %v6192
  %v6203 = vpack.c.bf16 %v6195, %v6194
  %v6204 = vpack.c.bf16 %v6197, %v6196
  %v6205 = vpack.c.bf16 %v6199, %v6198
  %v6206 = vpack.c.bf16 %v6201, %v6200
  %6207 = vst [vmem:[#allocation7] sm:$0xff] %v6202
  %6208 = vst [vmem:[#allocation7 + $0x8] sm:$0xff] %v6203
  %6209 = vst [vmem:[#allocation7 + $0x10] sm:$0xff] %v6204
  %6210 = vst [vmem:[#allocation7 + $0x18] sm:$0xff] %v6205
  %6211 = vst [vmem:[#allocation7 + $0x20] sm:$0xff] %v6206
  %v6212 = vld [vmem:[#allocation7] sm:$0xff]
  %v6213 = vld [vmem:[%s9] sm:$0xf]
  %v6214 = vld [vmem:[%s9 + $0x4] sm:$0xf]
  %v6215 = vld [vmem:[%s9 + $0x8] sm:$0xf]
  %v6216 = vld [vmem:[%s9 + $0xc] sm:$0xf]
  %v6217 = vld [vmem:[%s9 + $0x10] sm:$0xf]
  %v6218 = vld [vmem:[%s9 + $0x14] sm:$0xf]
  %v6219 = vld [vmem:[%s9 + $0x18] sm:$0xf]
  %v6220 = vld [vmem:[%s9 + $0x1c] sm:$0xf]
  %v6221 = vld [vmem:[%s9 + $0x20] sm:$0xf]
  %v6222 = vld [vmem:[%s9 + $0x24] sm:$0xf]
  %v6223 = vld [vmem:[%s9 + $0x28] sm:$0xf]
  %v6224 = vld [vmem:[%s9 + $0x2c] sm:$0xf]
  %v6225 = vld [vmem:[%s9 + $0x30] sm:$0xf]
  %v6226 = vld [vmem:[%s9 + $0x34] sm:$0xf]
  %v6227 = vld [vmem:[%s9 + $0x38] sm:$0xf]
  %v6228 = vld [vmem:[%s9 + $0x3c] sm:$0xf]
  %v6229 = vld [vmem:[#allocation7 + $0x8] sm:$0xff]
  %v6230 = vld [vmem:[%s9 + $0x40] sm:$0xf]
  %v6231 = vld [vmem:[%s9 + $0x44] sm:$0xf]
  %v6232 = vld [vmem:[%s9 + $0x48] sm:$0xf]
  %v6233 = vld [vmem:[%s9 + $0x4c] sm:$0xf]
  %v6234 = vld [vmem:[%s9 + $0x50] sm:$0xf]
  %v6235 = vld [vmem:[%s9 + $0x54] sm:$0xf]
  %v6236 = vld [vmem:[%s9 + $0x58] sm:$0xf]
  %v6237 = vld [vmem:[%s9 + $0x5c] sm:$0xf]
  %v6238 = vld [vmem:[%s9 + $0x60] sm:$0xf]
  %v6239 = vld [vmem:[%s9 + $0x64] sm:$0xf]
  %v6240 = vld [vmem:[%s9 + $0x68] sm:$0xf]
  %v6241 = vld [vmem:[%s9 + $0x6c] sm:$0xf]
  %v6242 = vld [vmem:[%s9 + $0x70] sm:$0xf]
  %v6243 = vld [vmem:[%s9 + $0x74] sm:$0xf]
  %v6244 = vld [vmem:[%s9 + $0x78] sm:$0xf]
  %v6245 = vld [vmem:[%s9 + $0x7c] sm:$0xf]
  %v6262 = vunpack.c.l.b16 %v6230
  %v6263 = vunpack.c.l.b16 %v6231
  %v6264 = vunpack.c.l.b16 %v6232
  %v6265 = vunpack.c.l.b16 %v6233
  %v6266 = vunpack.c.l.b16 %v6234
  %v6267 = vunpack.c.l.b16 %v6235
  %v6268 = vunpack.c.l.b16 %v6236
  %v6269 = vunpack.c.l.b16 %v6237
  %v6270 = vunpack.c.l.b16 %v6238
  %v6271 = vunpack.c.l.b16 %v6239
  %v6272 = vunpack.c.l.b16 %v6240
  %v6273 = vunpack.c.l.b16 %v6241
  %v6274 = vunpack.c.l.b16 %v6242
  %v6275 = vunpack.c.l.b16 %v6243
  %v6276 = vunpack.c.l.b16 %v6244
  %v6277 = vunpack.c.l.b16 %v6245
  %v6278 = vpack.c.b16 %v6263, %v6262
  %v6279 = vpack.c.b16 %v6265, %v6264
  %v6280 = vpack.c.b16 %v6267, %v6266
  %v6281 = vpack.c.b16 %v6269, %v6268
  %v6282 = vpack.c.b16 %v6271, %v6270
  %v6283 = vpack.c.b16 %v6273, %v6272
  %v6284 = vpack.c.b16 %v6275, %v6274
  %v6285 = vpack.c.b16 %v6277, %v6276
  %6294 = vmatprep.subr.bf16.mxu0 0
  %6295 = vmatpush1.bf16.msra.mxu0 %v6278
  %6296 = vmatprep.subr.bf16.mxu0 0
  %6297 = vmatpush1.bf16.msra.mxu0 %v6279
  %6298 = vmatprep.subr.bf16.mxu0 0
  %6299 = vmatpush1.bf16.msra.mxu0 %v6280
  %6300 = vmatprep.subr.bf16.mxu0 0
  %6301 = vmatpush1.bf16.msra.mxu0 %v6281
  %6302 = vmatprep.subr.bf16.mxu0 0
  %6303 = vmatpush1.bf16.msra.mxu0 %v6282
  %6304 = vmatprep.subr.bf16.mxu0 0
  %6305 = vmatpush1.bf16.msra.mxu0 %v6283
  %6306 = vmatprep.subr.bf16.mxu0 0
  %6307 = vmatpush1.bf16.msra.mxu0 %v6284
  %6308 = vmatprep.subr.bf16.mxu0 0
  %6309 = vmatpush1.bf16.msra.mxu0 %v6285
  %6310 = vmatprep.subr.bf16.mxu0 0
  %6311 = vmatpush1.bf16.msra.mxu0 0
  %6312 = vmatprep.subr.bf16.mxu0 0
  %6313 = vmatpush1.bf16.msra.mxu0 0
  %6314 = vmatprep.subr.bf16.mxu0 0
  %6315 = vmatpush1.bf16.msra.mxu0 0
  %6316 = vmatprep.subr.bf16.mxu0 0
  %6317 = vmatpush1.bf16.msra.mxu0 0
  %6318 = vmatprep.subr.bf16.mxu0 0
  %6319 = vmatpush1.bf16.msra.mxu0 0
  %6320 = vmatprep.subr.bf16.mxu0 0
  %6321 = vmatpush1.bf16.msra.mxu0 0
  %6322 = vmatprep.subr.bf16.mxu0 0
  %6323 = vmatpush1.bf16.msra.mxu0 0
  %6324 = vmatprep.subr.bf16.mxu0 0
  %6325 = vmatpush1.bf16.msra.mxu0 0
  %6326 = vmatprep.mubr.bf16.mxu0 0
  %6327 = vmatmul.mubr.bf16.gmra.mrb[0].mxu0 %v6229
  %v6328 = vpop.f32.mrb[0].mxu0
  %v6329 = vadd.f32 0.0, %v6328
  %v6330 = vpop.f32.mrb[0].mxu0
  %v6331 = vpop.f32.mrb[0].mxu0
  %v6332 = vadd.f32 0.0, %v6331
  %v6333 = vpop.f32.mrb[0].mxu0
  %6334 = vdwg.mxu0
  %v6351 = vunpack.c.l.b16 %v6213
  %v6352 = vunpack.c.l.b16 %v6214
  %v6353 = vunpack.c.l.b16 %v6215
  %v6354 = vunpack.c.l.b16 %v6216
  %v6355 = vunpack.c.l.b16 %v6217
  %v6356 = vunpack.c.l.b16 %v6218
  %v6357 = vunpack.c.l.b16 %v6219
  %v6358 = vunpack.c.l.b16 %v6220
  %v6359 = vunpack.c.l.b16 %v6221
  %v6360 = vunpack.c.l.b16 %v6222
  %v6361 = vunpack.c.l.b16 %v6223
  %v6362 = vunpack.c.l.b16 %v6224
  %v6363 = vunpack.c.l.b16 %v6225
  %v6364 = vunpack.c.l.b16 %v6226
  %v6365 = vunpack.c.l.b16 %v6227
  %v6366 = vunpack.c.l.b16 %v6228
  %v6367 = vpack.c.b16 %v6352, %v6351
  %v6368 = vpack.c.b16 %v6354, %v6353
  %v6369 = vpack.c.b16 %v6356, %v6355
  %v6370 = vpack.c.b16 %v6358, %v6357
  %v6371 = vpack.c.b16 %v6360, %v6359
  %v6372 = vpack.c.b16 %v6362, %v6361
  %v6373 = vpack.c.b16 %v6364, %v6363
  %v6374 = vpack.c.b16 %v6366, %v6365
  %6383 = vmatprep.subr.bf16.mxu0 0
  %6384 = vmatpush1.bf16.msra.mxu0 %v6367
  %6385 = vmatprep.subr.bf16.mxu0 0
  %6386 = vmatpush1.bf16.msra.mxu0 %v6368
  %6387 = vmatprep.subr.bf16.mxu0 0
  %6388 = vmatpush1.bf16.msra.mxu0 %v6369
  %6389 = vmatprep.subr.bf16.mxu0 0
  %6390 = vmatpush1.bf16.msra.mxu0 %v6370
  %6391 = vmatprep.subr.bf16.mxu0 0
  %6392 = vmatpush1.bf16.msra.mxu0 %v6371
  %6393 = vmatprep.subr.bf16.mxu0 0
  %6394 = vmatpush1.bf16.msra.mxu0 %v6372
  %6395 = vmatprep.subr.bf16.mxu0 0
  %6396 = vmatpush1.bf16.msra.mxu0 %v6373
  %6397 = vmatprep.subr.bf16.mxu0 0
  %6398 = vmatpush1.bf16.msra.mxu0 %v6374
  %6399 = vmatprep.subr.bf16.mxu0 0
  %6400 = vmatpush1.bf16.msra.mxu0 0
  %6401 = vmatprep.subr.bf16.mxu0 0
  %6402 = vmatpush1.bf16.msra.mxu0 0
  %6403 = vmatprep.subr.bf16.mxu0 0
  %6404 = vmatpush1.bf16.msra.mxu0 0
  %6405 = vmatprep.subr.bf16.mxu0 0
  %6406 = vmatpush1.bf16.msra.mxu0 0
  %6407 = vmatprep.subr.bf16.mxu0 0
  %6408 = vmatpush1.bf16.msra.mxu0 0
  %6409 = vmatprep.subr.bf16.mxu0 0
  %6410 = vmatpush1.bf16.msra.mxu0 0
  %6411 = vmatprep.subr.bf16.mxu0 0
  %6412 = vmatpush1.bf16.msra.mxu0 0
  %6413 = vmatprep.subr.bf16.mxu0 0
  %6414 = vmatpush1.bf16.msra.mxu0 0
  %6415 = vmatprep.mubr.bf16.mxu0 0
  %6416 = vmatmul.mubr.bf16.gmra.mrb[0].mxu0 %v6212
  %v6417 = vpop.f32.mrb[0].mxu0
  %v6418 = vadd.f32 %v6329, %v6417
  %v6419 = vpop.f32.mrb[0].mxu0
  %v6420 = vpop.f32.mrb[0].mxu0
  %v6421 = vadd.f32 %v6332, %v6420
  %v6422 = vpop.f32.mrb[0].mxu0
  %6423 = vdwg.mxu0
  %v6424 = vld [vmem:[#allocation7 + $0x10] sm:$0xff]
  %v6425 = vld [vmem:[%s9 + $0x80] sm:$0xf]
  %v6426 = vld [vmem:[%s9 + $0x84] sm:$0xf]
  %v6427 = vld [vmem:[%s9 + $0x88] sm:$0xf]
  %v6428 = vld [vmem:[%s9 + $0x8c] sm:$0xf]
  %v6429 = vld [vmem:[%s9 + $0x90] sm:$0xf]
  %v6430 = vld [vmem:[%s9 + $0x94] sm:$0xf]
  %v6431 = vld [vmem:[%s9 + $0x98] sm:$0xf]
  %v6432 = vld [vmem:[%s9 + $0x9c] sm:$0xf]
  %v6433 = vld [vmem:[%s9 + $0xa0] sm:$0xf]
  %v6434 = vld [vmem:[%s9 + $0xa4] sm:$0xf]
  %v6435 = vld [vmem:[%s9 + $0xa8] sm:$0xf]
  %v6436 = vld [vmem:[%s9 + $0xac] sm:$0xf]
  %v6437 = vld [vmem:[%s9 + $0xb0] sm:$0xf]
  %v6438 = vld [vmem:[%s9 + $0xb4] sm:$0xf]
  %v6439 = vld [vmem:[%s9 + $0xb8] sm:$0xf]
  %v6440 = vld [vmem:[%s9 + $0xbc] sm:$0xf]
  %v6457 = vunpack.c.l.b16 %v6425
  %v6458 = vunpack.c.l.b16 %v6426
  %v6459 = vunpack.c.l.b16 %v6427
  %v6460 = vunpack.c.l.b16 %v6428
  %v6461 = vunpack.c.l.b16 %v6429
  %v6462 = vunpack.c.l.b16 %v6430
  %v6463 = vunpack.c.l.b16 %v6431
  %v6464 = vunpack.c.l.b16 %v6432
  %v6465 = vunpack.c.l.b16 %v6433
  %v6466 = vunpack.c.l.b16 %v6434
  %v6467 = vunpack.c.l.b16 %v6435
  %v6468 = vunpack.c.l.b16 %v6436
  %v6469 = vunpack.c.l.b16 %v6437
  %v6470 = vunpack.c.l.b16 %v6438
  %v6471 = vunpack.c.l.b16 %v6439
  %v6472 = vunpack.c.l.b16 %v6440
  %v6473 = vpack.c.b16 %v6458, %v6457
  %v6474 = vpack.c.b16 %v6460, %v6459
  %v6475 = vpack.c.b16 %v6462, %v6461
  %v6476 = vpack.c.b16 %v6464, %v6463
  %v6477 = vpack.c.b16 %v6466, %v6465
  %v6478 = vpack.c.b16 %v6468, %v6467
  %v6479 = vpack.c.b16 %v6470, %v6469
  %v6480 = vpack.c.b16 %v6472, %v6471
  %6489 = vmatprep.subr.bf16.mxu0 0
  %6490 = vmatpush1.bf16.msra.mxu0 %v6473
  %6491 = vmatprep.subr.bf16.mxu0 0
  %6492 = vmatpush1.bf16.msra.mxu0 %v6474
  %6493 = vmatprep.subr.bf16.mxu0 0
  %6494 = vmatpush1.bf16.msra.mxu0 %v6475
  %6495 = vmatprep.subr.bf16.mxu0 0
  %6496 = vmatpush1.bf16.msra.mxu0 %v6476
  %6497 = vmatprep.subr.bf16.mxu0 0
  %6498 = vmatpush1.bf16.msra.mxu0 %v6477
  %6499 = vmatprep.subr.bf16.mxu0 0
  %6500 = vmatpush1.bf16.msra.mxu0 %v6478
  %6501 = vmatprep.subr.bf16.mxu0 0
  %6502 = vmatpush1.bf16.msra.mxu0 %v6479
  %6503 = vmatprep.subr.bf16.mxu0 0
  %6504 = vmatpush1.bf16.msra.mxu0 %v6480
  %6505 = vmatprep.subr.bf16.mxu0 0
  %6506 = vmatpush1.bf16.msra.mxu0 0
  %6507 = vmatprep.subr.bf16.mxu0 0
  %6508 = vmatpush1.bf16.msra.mxu0 0
  %6509 = vmatprep.subr.bf16.mxu0 0
  %6510 = vmatpush1.bf16.msra.mxu0 0
  %6511 = vmatprep.subr.bf16.mxu0 0
  %6512 = vmatpush1.bf16.msra.mxu0 0
  %6513 = vmatprep.subr.bf16.mxu0 0
  %6514 = vmatpush1.bf16.msra.mxu0 0
  %6515 = vmatprep.subr.bf16.mxu0 0
  %6516 = vmatpush1.bf16.msra.mxu0 0
  %6517 = vmatprep.subr.bf16.mxu0 0
  %6518 = vmatpush1.bf16.msra.mxu0 0
  %6519 = vmatprep.subr.bf16.mxu0 0
  %6520 = vmatpush1.bf16.msra.mxu0 0
  %6521 = vmatprep.mubr.bf16.mxu0 0
  %6522 = vmatmul.mubr.bf16.gmra.mrb[0].mxu0 %v6424
  %v6523 = vpop.f32.mrb[0].mxu0
  %v6524 = vadd.f32 0.0, %v6523
  %v6525 = vpop.f32.mrb[0].mxu0
  %v6526 = vpop.f32.mrb[0].mxu0
  %v6527 = vadd.f32 0.0, %v6526
  %v6528 = vpop.f32.mrb[0].mxu0
  %6529 = vdwg.mxu0
  %v6530 = vadd.f32 %v6418, %v6524
  %v6531 = vadd.f32 %v6421, %v6527
  %v6532 = vld [vmem:[#allocation7 + $0x18] sm:$0xff]
  %v6533 = vld [vmem:[%s9 + $0xc0] sm:$0xf]
  %v6534 = vld [vmem:[%s9 + $0xc4] sm:$0xf]
  %v6535 = vld [vmem:[%s9 + $0xc8] sm:$0xf]
  %v6536 = vld [vmem:[%s9 + $0xcc] sm:$0xf]
  %v6537 = vld [vmem:[%s9 + $0xd0] sm:$0xf]
  %v6538 = vld [vmem:[%s9 + $0xd4] sm:$0xf]
  %v6539 = vld [vmem:[%s9 + $0xd8] sm:$0xf]
  %v6540 = vld [vmem:[%s9 + $0xdc] sm:$0xf]
  %v6541 = vld [vmem:[%s9 + $0xe0] sm:$0xf]
  %v6542 = vld [vmem:[%s9 + $0xe4] sm:$0xf]
  %v6543 = vld [vmem:[%s9 + $0xe8] sm:$0xf]
  %v6544 = vld [vmem:[%s9 + $0xec] sm:$0xf]
  %v6545 = vld [vmem:[%s9 + $0xf0] sm:$0xf]
  %v6546 = vld [vmem:[%s9 + $0xf4] sm:$0xf]
  %v6547 = vld [vmem:[%s9 + $0xf8] sm:$0xf]
  %v6548 = vld [vmem:[%s9 + $0xfc] sm:$0xf]
  %v6565 = vunpack.c.l.b16 %v6533
  %v6566 = vunpack.c.l.b16 %v6534
  %v6567 = vunpack.c.l.b16 %v6535
  %v6568 = vunpack.c.l.b16 %v6536
  %v6569 = vunpack.c.l.b16 %v6537
  %v6570 = vunpack.c.l.b16 %v6538
  %v6571 = vunpack.c.l.b16 %v6539
  %v6572 = vunpack.c.l.b16 %v6540
  %v6573 = vunpack.c.l.b16 %v6541
  %v6574 = vunpack.c.l.b16 %v6542
  %v6575 = vunpack.c.l.b16 %v6543
  %v6576 = vunpack.c.l.b16 %v6544
  %v6577 = vunpack.c.l.b16 %v6545
  %v6578 = vunpack.c.l.b16 %v6546
  %v6579 = vunpack.c.l.b16 %v6547
  %v6580 = vunpack.c.l.b16 %v6548
  %v6581 = vpack.c.b16 %v6566, %v6565
  %v6582 = vpack.c.b16 %v6568, %v6567
  %v6583 = vpack.c.b16 %v6570, %v6569
  %v6584 = vpack.c.b16 %v6572, %v6571
  %v6585 = vpack.c.b16 %v6574, %v6573
  %v6586 = vpack.c.b16 %v6576, %v6575
  %v6587 = vpack.c.b16 %v6578, %v6577
  %v6588 = vpack.c.b16 %v6580, %v6579
  %6597 = vmatprep.subr.bf16.mxu0 0
  %6598 = vmatpush1.bf16.msra.mxu0 %v6581
  %6599 = vmatprep.subr.bf16.mxu0 0
  %6600 = vmatpush1.bf16.msra.mxu0 %v6582
  %6601 = vmatprep.subr.bf16.mxu0 0
  %6602 = vmatpush1.bf16.msra.mxu0 %v6583
  %6603 = vmatprep.subr.bf16.mxu0 0
  %6604 = vmatpush1.bf16.msra.mxu0 %v6584
  %6605 = vmatprep.subr.bf16.mxu0 0
  %6606 = vmatpush1.bf16.msra.mxu0 %v6585
  %6607 = vmatprep.subr.bf16.mxu0 0
  %6608 = vmatpush1.bf16.msra.mxu0 %v6586
  %6609 = vmatprep.subr.bf16.mxu0 0
  %6610 = vmatpush1.bf16.msra.mxu0 %v6587
  %6611 = vmatprep.subr.bf16.mxu0 0
  %6612 = vmatpush1.bf16.msra.mxu0 %v6588
  %6613 = vmatprep.subr.bf16.mxu0 0
  %6614 = vmatpush1.bf16.msra.mxu0 0
  %6615 = vmatprep.subr.bf16.mxu0 0
  %6616 = vmatpush1.bf16.msra.mxu0 0
  %6617 = vmatprep.subr.bf16.mxu0 0
  %6618 = vmatpush1.bf16.msra.mxu0 0
  %6619 = vmatprep.subr.bf16.mxu0 0
  %6620 = vmatpush1.bf16.msra.mxu0 0
  %6621 = vmatprep.subr.bf16.mxu0 0
  %6622 = vmatpush1.bf16.msra.mxu0 0
  %6623 = vmatprep.subr.bf16.mxu0 0
  %6624 = vmatpush1.bf16.msra.mxu0 0
  %6625 = vmatprep.subr.bf16.mxu0 0
  %6626 = vmatpush1.bf16.msra.mxu0 0
  %6627 = vmatprep.subr.bf16.mxu0 0
  %6628 = vmatpush1.bf16.msra.mxu0 0
  %6629 = vmatprep.mubr.bf16.mxu0 0
  %6630 = vmatmul.mubr.bf16.gmra.mrb[0].mxu0 %v6532
  %v6631 = vpop.f32.mrb[0].mxu0
  %v6632 = vadd.f32 0.0, %v6631
  %v6633 = vpop.f32.mrb[0].mxu0
  %v6634 = vpop.f32.mrb[0].mxu0
  %v6635 = vadd.f32 0.0, %v6634
  %v6636 = vpop.f32.mrb[0].mxu0
  %6637 = vdwg.mxu0
  %v6638 = vadd.f32 %v6530, %v6632
  %v6639 = vadd.f32 %v6531, %v6635
  %v6640 = vld [vmem:[#allocation7 + $0x20] sm:$0xff]
  %v6641 = vld [vmem:[%s9 + $0x100] sm:$0xf]
  %v6642 = vld [vmem:[%s9 + $0x104] sm:$0xf]
  %v6643 = vld [vmem:[%s9 + $0x108] sm:$0xf]
  %v6644 = vld [vmem:[%s9 + $0x10c] sm:$0xf]
  %v6645 = vld [vmem:[%s9 + $0x110] sm:$0xf]
  %v6646 = vld [vmem:[%s9 + $0x114] sm:$0xf]
  %v6647 = vld [vmem:[%s9 + $0x118] sm:$0xf]
  %v6648 = vld [vmem:[%s9 + $0x11c] sm:$0xf]
  %v6649 = vld [vmem:[%s9 + $0x120] sm:$0xf]
  %v6650 = vld [vmem:[%s9 + $0x124] sm:$0xf]
  %v6651 = vld [vmem:[%s9 + $0x128] sm:$0xf]
  %v6652 = vld [vmem:[%s9 + $0x12c] sm:$0xf]
  %v6653 = vld [vmem:[%s9 + $0x130] sm:$0xf]
  %v6654 = vld [vmem:[%s9 + $0x134] sm:$0xf]
  %v6655 = vld [vmem:[%s9 + $0x138] sm:$0xf]
  %v6656 = vld [vmem:[%s9 + $0x13c] sm:$0xf]
  %v6673 = vunpack.c.l.b16 %v6641
  %v6674 = vunpack.c.l.b16 %v6642
  %v6675 = vunpack.c.l.b16 %v6643
  %v6676 = vunpack.c.l.b16 %v6644
  %v6677 = vunpack.c.l.b16 %v6645
  %v6678 = vunpack.c.l.b16 %v6646
  %v6679 = vunpack.c.l.b16 %v6647
  %v6680 = vunpack.c.l.b16 %v6648
  %v6681 = vunpack.c.l.b16 %v6649
  %v6682 = vunpack.c.l.b16 %v6650
  %v6683 = vunpack.c.l.b16 %v6651
  %v6684 = vunpack.c.l.b16 %v6652
  %v6685 = vunpack.c.l.b16 %v6653
  %v6686 = vunpack.c.l.b16 %v6654
  %v6687 = vunpack.c.l.b16 %v6655
  %v6688 = vunpack.c.l.b16 %v6656
  %v6689 = vpack.c.b16 %v6674, %v6673
  %v6690 = vpack.c.b16 %v6676, %v6675
  %v6691 = vpack.c.b16 %v6678, %v6677
  %v6692 = vpack.c.b16 %v6680, %v6679
  %v6693 = vpack.c.b16 %v6682, %v6681
  %v6694 = vpack.c.b16 %v6684, %v6683
  %v6695 = vpack.c.b16 %v6686, %v6685
  %v6696 = vpack.c.b16 %v6688, %v6687
  %6705 = vmatprep.subr.bf16.mxu0 0
  %6706 = vmatpush1.bf16.msra.mxu0 %v6689
  %6707 = vmatprep.subr.bf16.mxu0 0
  %6708 = vmatpush1.bf16.msra.mxu0 %v6690
  %6709 = vmatprep.subr.bf16.mxu0 0
  %6710 = vmatpush1.bf16.msra.mxu0 %v6691
  %6711 = vmatprep.subr.bf16.mxu0 0
  %6712 = vmatpush1.bf16.msra.mxu0 %v6692
  %6713 = vmatprep.subr.bf16.mxu0 0
  %6714 = vmatpush1.bf16.msra.mxu0 %v6693
  %6715 = vmatprep.subr.bf16.mxu0 0
  %6716 = vmatpush1.bf16.msra.mxu0 %v6694
  %6717 = vmatprep.subr.bf16.mxu0 0
  %6718 = vmatpush1.bf16.msra.mxu0 %v6695
  %6719 = vmatprep.subr.bf16.mxu0 0
  %6720 = vmatpush1.bf16.msra.mxu0 %v6696
  %6721 = vmatprep.subr.bf16.mxu0 0
  %6722 = vmatpush1.bf16.msra.mxu0 0
  %6723 = vmatprep.subr.bf16.mxu0 0
  %6724 = vmatpush1.bf16.msra.mxu0 0
  %6725 = vmatprep.subr.bf16.mxu0 0
  %6726 = vmatpush1.bf16.msra.mxu0 0
  %6727 = vmatprep.subr.bf16.mxu0 0
  %6728 = vmatpush1.bf16.msra.mxu0 0
  %6729 = vmatprep.subr.bf16.mxu0 0
  %6730 = vmatpush1.bf16.msra.mxu0 0
  %6731 = vmatprep.subr.bf16.mxu0 0
  %6732 = vmatpush1.bf16.msra.mxu0 0
  %6733 = vmatprep.subr.bf16.mxu0 0
  %6734 = vmatpush1.bf16.msra.mxu0 0
  %6735 = vmatprep.subr.bf16.mxu0 0
  %6736 = vmatpush1.bf16.msra.mxu0 0
  %6737 = vmatprep.mubr.bf16.mxu0 0
  %6738 = vmatmul.mubr.bf16.gmra.mrb[0].mxu0 %v6640
  %v6739 = vpop.f32.mrb[0].mxu0
  %v6740 = vadd.f32 0.0, %v6739
  %v6741 = vpop.f32.mrb[0].mxu0
  %v6742 = vpop.f32.mrb[0].mxu0
  %v6743 = vadd.f32 0.0, %v6742
  %v6744 = vpop.f32.mrb[0].mxu0
  %6745 = vdwg.mxu0
  %v6746 = vadd.f32 %v6638, %v6740
  %v6747 = vadd.f32 %v6639, %v6743
  %v6748 = vld [vmem:[%s10] sm:$0x1]
  %v6750 = vlaneseq
  %v6751 = vshrl.u32 %v6750, 7
  %v6752 = vsub.s32 0, %v6751
  %v6753 = vrot.slane %v6748, %v6752
  %v6755 = vadd.f32 %v6746, %v6753
  %v6756 = vadd.f32 %v6747, %v6753
  %v6757 = vmax.f32 %v6755, 0.0
  %v6758 = vmax.f32 %v6756, 0.0
  %v6759 = vpack.c.bf16 %v6758, %v6757
  %v6760 = vld [vmem:[%s11] sm:$0xf]
  %v6761 = vld [vmem:[%s11 + $0x4] sm:$0xf]
  %v6762 = vld [vmem:[%s11 + $0x8] sm:$0xf]
  %v6763 = vld [vmem:[%s11 + $0xc] sm:$0xf]
  %v6764 = vld [vmem:[%s11 + $0x10] sm:$0xf]
  %v6765 = vld [vmem:[%s11 + $0x14] sm:$0xf]
  %v6766 = vld [vmem:[%s11 + $0x18] sm:$0xf]
  %v6767 = vld [vmem:[%s11 + $0x1c] sm:$0xf]
  %v6768 = vld [vmem:[%s11 + $0x20] sm:$0xf]
  %v6769 = vld [vmem:[%s11 + $0x24] sm:$0xf]
  %v6770 = vld [vmem:[%s11 + $0x28] sm:$0xf]
  %v6771 = vld [vmem:[%s11 + $0x2c] sm:$0xf]
  %v6772 = vld [vmem:[%s11 + $0x30] sm:$0xf]
  %v6773 = vld [vmem:[%s11 + $0x34] sm:$0xf]
  %v6774 = vld [vmem:[%s11 + $0x38] sm:$0xf]
  %v6775 = vld [vmem:[%s11 + $0x3c] sm:$0xf]
  %v6776 = vld [vmem:[%s12] sm:$0x1]
  %v6778 = vlaneseq
  %v6779 = vshrl.u32 %v6778, 7
  %v6780 = vsub.s32 0, %v6779
  %v6781 = vrot.slane %v6776, %v6780
  %v6799 = vunpack.c.l.b16 %v6760
  %v6800 = vunpack.c.l.b16 %v6761
  %v6801 = vunpack.c.l.b16 %v6762
  %v6802 = vunpack.c.l.b16 %v6763
  %v6803 = vunpack.c.l.b16 %v6764
  %v6804 = vunpack.c.l.b16 %v6765
  %v6805 = vunpack.c.l.b16 %v6766
  %v6806 = vunpack.c.l.b16 %v6767
  %v6807 = vunpack.c.l.b16 %v6768
  %v6808 = vunpack.c.l.b16 %v6769
  %v6809 = vunpack.c.l.b16 %v6770
  %v6810 = vunpack.c.l.b16 %v6771
  %v6811 = vunpack.c.l.b16 %v6772
  %v6812 = vunpack.c.l.b16 %v6773
  %v6813 = vunpack.c.l.b16 %v6774
  %v6814 = vunpack.c.l.b16 %v6775
  %v6815 = vpack.c.b16 %v6800, %v6799
  %v6816 = vpack.c.b16 %v6802, %v6801
  %v6817 = vpack.c.b16 %v6804, %v6803
  %v6818 = vpack.c.b16 %v6806, %v6805
  %v6819 = vpack.c.b16 %v6808, %v6807
  %v6820 = vpack.c.b16 %v6810, %v6809
  %v6821 = vpack.c.b16 %v6812, %v6811
  %v6822 = vpack.c.b16 %v6814, %v6813
  %6831 = vmatprep.subr.bf16.mxu0 0
  %6832 = vmatpush1.bf16.msra.mxu0 %v6815
  %6833 = vmatprep.subr.bf16.mxu0 0
  %6834 = vmatpush1.bf16.msra.mxu0 %v6816
  %6835 = vmatprep.subr.bf16.mxu0 0
  %6836 = vmatpush1.bf16.msra.mxu0 %v6817
  %6837 = vmatprep.subr.bf16.mxu0 0
  %6838 = vmatpush1.bf16.msra.mxu0 %v6818
  %6839 = vmatprep.subr.bf16.mxu0 0
  %6840 = vmatpush1.bf16.msra.mxu0 %v6819
  %6841 = vmatprep.subr.bf16.mxu0 0
  %6842 = vmatpush1.bf16.msra.mxu0 %v6820
  %6843 = vmatprep.subr.bf16.mxu0 0
  %6844 = vmatpush1.bf16.msra.mxu0 %v6821
  %6845 = vmatprep.subr.bf16.mxu0 0
  %6846 = vmatpush1.bf16.msra.mxu0 %v6822
  %6847 = vmatprep.subr.bf16.mxu0 0
  %6848 = vmatpush1.bf16.msra.mxu0 0
  %6849 = vmatprep.subr.bf16.mxu0 0
  %6850 = vmatpush1.bf16.msra.mxu0 0
  %6851 = vmatprep.subr.bf16.mxu0 0
  %6852 = vmatpush1.bf16.msra.mxu0 0
  %6853 = vmatprep.subr.bf16.mxu0 0
  %6854 = vmatpush1.bf16.msra.mxu0 0
  %6855 = vmatprep.subr.bf16.mxu0 0
  %6856 = vmatpush1.bf16.msra.mxu0 0
  %6857 = vmatprep.subr.bf16.mxu0 0
  %6858 = vmatpush1.bf16.msra.mxu0 0
  %6859 = vmatprep.subr.bf16.mxu0 0
  %6860 = vmatpush1.bf16.msra.mxu0 0
  %6861 = vmatprep.subr.bf16.mxu0 0
  %6862 = vmatpush1.bf16.msra.mxu0 0
  %6863 = vmatprep.mubr.bf16.mxu0 0
  %6864 = vmatmul.mubr.bf16.gmra.mrb[0].mxu0 %v6759
  %v6865 = vpop.f32.mrb[0].mxu0
  %v6866 = vadd.f32 %v6781, %v6865
  %v6867 = vpop.f32.mrb[0].mxu0
  %v6868 = vpop.f32.mrb[0].mxu0
  %v6869 = vadd.f32 %v6781, %v6868
  %v6870 = vpop.f32.mrb[0].mxu0
  %6871 = vdwg.mxu0
  %v6872 = vmax.f32 %v6866, 0.0
  %v6873 = vmax.f32 %v6869, 0.0
  %6874 = vst [vmem:[%s13] sm:$0xff] %v6872
  %6875 = vst [vmem:[%s13 + $0x8] sm:$0xff] %v6873
  // Predicated region
  $region54: #{conv_module_forward.1} parent=0 // pred_check
    _
  $region55: #{conv_module_forward.1} parent=0 // pred_check_branch
    %6877 = sbr.rel (0) target = $region57
  $region56: #{conv_module_forward.1} parent=0 // pred_region
    _
  $region57: #{conv_module_forward.1} parent=0 // pred_fallthru
    _
  // Predicated region
  $region58: #{conv_module_forward.1} parent=0 // pred_check
    _
  $region59: #{conv_module_forward.1} parent=0 // pred_check_branch
    %6879 = sbr.rel (0) target = $region61
  $region60: #{conv_module_forward.1} parent=0 // pred_region
    _
  $region61: #{conv_module_forward.1} parent=0 // pred_fallthru
    _

</llo_original>
